<compile_context>
chip_gen: v7x
topology: tpu7x:2x2x1
jax: 0.10.0
libtpu: 0.0.40
codegen_flags: <defaults>
</compile_context>

<pallas_src>
import functools

import jax
import jax.numpy as jnp
import numpy as np
from jax import lax
from jax.experimental import pallas as pl
from jax.experimental.pallas import tpu as pltpu

LANE = 128
SUBL = 16          # bf16 sublane packing granularity


def _rup(x, m):
    return ((x + m - 1) // m) * m


def _cpad(c):
    return _rup(c, SUBL)


def _pad_left(W):
    # activation window starts at a 128-aligned lane offset >= W+1 so the 9 conv
    # taps are in-bounds static lane windows and the kernel's output store is aligned
    return _rup(W + 1, LANE)


def _hwpad(H, W):
    return _pad_left(W) + _rup(H * W + W + 1, LANE)


# ----------------------------------------------------------------------------
# XLA-side layout helpers (only used around XLA ops: pool / upsample / cascade input)
# ----------------------------------------------------------------------------
def pad_rows(x):
    """(B, C, H, W) -> bf16 (B, Cpad, HWPAD) row-zero-padded flat layout."""
    B, C, H, W = x.shape
    HW = H * W
    padl = _pad_left(W)
    total = _hwpad(H, W)
    flat = x.reshape(B, C, HW).astype(jnp.bfloat16)
    return jnp.pad(flat, ((0, 0), (0, _cpad(C) - C), (padl, total - padl - HW)))


def prep_w(w):
    """(Cout, Cin, 3, 3) -> bf16 (1, Cout, 9*Cin_pad), tap-major (kh, kw, cin_pad)."""
    cout, cin = w.shape[:2]
    cpin = _cpad(cin)
    wt = jnp.transpose(w, (0, 2, 3, 1))                       # (Cout, 3, 3, Cin)
    wt = jnp.pad(wt, ((0, 0), (0, 0), (0, 0), (0, cpin - cin)))
    return wt.reshape(1, cout, 9 * cpin).astype(jnp.bfloat16)


def prep_w_dyn(f):
    """(B, Cout, Cin, 3, 3) DWP filters -> bf16 (B, Cout, 9*Cin_pad)."""
    B, cout, cin = f.shape[:3]
    cpin = _cpad(cin)
    ft = jnp.transpose(f, (0, 1, 3, 4, 2))                    # (B, Cout, 3, 3, Cin)
    ft = jnp.pad(ft, ((0, 0), (0, 0), (0, 0), (0, 0), (0, cpin - cin)))
    return ft.reshape(B, cout, 9 * cpin).astype(jnp.bfloat16)


# ----------------------------------------------------------------------------
# Pallas kernels
# ----------------------------------------------------------------------------
def _conv_kernel(*refs, n_in, H, W, pad_left, has_bias, norm, affine, relu, eps,
                 emit_padded, emit_dense, tail):
    """Fused multi-input 3x3 conv (+bias)(+IN[+affine])(+ReLU)(+1x1-conv2+residual).

    inputs : x_0..x_{n_in-1}  (1, Cpad_i, HWPAD_in) bf16 row-padded flat
             w_cat            (1, Cout, K_total)    bf16  (K = sum 9*Cpad_i)
             [bias][gamma,beta]                     (Cout, 1) f32
             [w1,b1,w2,b2,w3,b3,xres]   1x1-conv tail params + residual (f32)
    outputs: [padded (1, Cpad_out, HWPAD_out) bf16] [dense (1, Cd, HW)]
    scratch: xcols (K_total, HW) bf16
    """
    HW = H * W
    n_out = int(emit_padded) + int(emit_dense)
    xcols_ref = refs[-1]
    out_refs = refs[-1 - n_out:-1]
    in_refs = refs[:-1 - n_out]

    x_refs = in_refs[:n_in]
    w_ref = in_refs[n_in]
    idx = n_in + 1
    b_ref = g_ref = be_ref = None
    if has_bias:
        b_ref = in_refs[idx]
        idx += 1
    if affine:
        g_ref, be_ref = in_refs[idx], in_refs[idx + 1]
        idx += 2
    tail_refs = in_refs[idx:] if tail else ()

    # hoisted column-edge masks (shared across inputs and taps)
    col = lax.broadcasted_iota(jnp.int32, (1, HW), 1) % W
    mask_l = (col >= 1).astype(jnp.bfloat16)
    mask_r = (col <= W - 2).astype(jnp.bfloat16)

    # im2col straight into VMEM scratch (all stores sublane-aligned: Cpad % 16 == 0)
    base = pad_left - (W + 1)
    row = 0
    for x_ref in x_refs:
        cpin = x_ref.shape[1]
        for kh in range(3):
            for kw in range(3):
                off = base + kh * W + kw
                t = x_ref[0, :, off:off + HW]                 # (Cpad_i, HW) bf16
                if kw == 0:                                   # source col = c - 1
                    t = t * mask_l
                elif kw == 2:                                 # source col = c + 1
                    t = t * mask_r
                xcols_ref[row:row + cpin, :] = t
                row += cpin

    # one MXU matmul over the full (merged) K
    acc = jnp.dot(w_ref[0], xcols_ref[...], preferred_element_type=jnp.float32)

    # f32 epilogue
    if has_bias:
        acc = acc + b_ref[...]
    if norm:
        mean = jnp.mean(acc, axis=1, keepdims=True)
        var = jnp.mean(jnp.square(acc - mean), axis=1, keepdims=True)
        acc = (acc - mean) * lax.rsqrt(var + eps)
        if affine:
            acc = acc * g_ref[...] + be_ref[...]
    if relu:
        acc = jnp.maximum(acc, 0.0)

    # fused conv2 (three 1x1 convs) + residual add
    if tail:
        w1_r, b1_r, w2_r, b2_r, w3_r, b3_r, xres_r = tail_refs
        y = jnp.dot(w1_r[...], acc.astype(jnp.bfloat16),
                    preferred_element_type=jnp.float32) + b1_r[...]
        y = jnp.dot(w2_r[...], y.astype(jnp.bfloat16),
                    preferred_element_type=jnp.float32) + b2_r[...]
        y = jnp.dot(w3_r[...], y.astype(jnp.bfloat16),
                    preferred_element_type=jnp.float32) + b3_r[...]
        acc = y + xres_r[0]

    oi = 0
    if emit_padded:
        pref = out_refs[oi]
        oi += 1
        cout = acc.shape[0]
        pref[0] = jnp.zeros(pref.shape[1:], pref.dtype)
        pref[0, 0:cout, pad_left:pad_left + HW] = acc.astype(pref.dtype)
    if emit_dense:
        dref = out_refs[oi]
        dref[0] = acc.astype(dref.dtype)


def conv_block(x_pads, w_cat, H, W, *, bias=None, gamma=None, beta=None,
               norm=False, relu=False, eps=1e-5,
               emit_padded=False, emit_dense=False,
               tail=None, xres=None, dense_dtype=jnp.bfloat16):
    """Fused conv block.  x_pads: list of (B, Cpad_i, HWPAD) bf16; w_cat: (1|B, Cout, K).

    Returns a tuple of the requested outputs in order (padded, dense)."""
    assert emit_padded or emit_dense
    B = x_pads[0].shape[0]
    HW = H * W
    Cout, K = w_cat.shape[1], w_cat.shape[2]
    assert K == sum(9 * xp.shape[1] for xp in x_pads)
    padl = _pad_left(W)
    hwpad_out = _hwpad(H, W)
    cpad_out = _cpad(Cout)

    inputs, in_specs = [], []
    for xp in x_pads:
        inputs.append(xp)
        in_specs.append(pl.BlockSpec((1,) + xp.shape[1:], lambda b: (b, 0, 0)))
    inputs.append(w_cat)
    if w_cat.shape[0] == 1:                                   # shared static weights
        in_specs.append(pl.BlockSpec((1, Cout, K), lambda b: (0, 0, 0)))
    else:                                                     # per-sample DWP weights
        in_specs.append(pl.BlockSpec((1, Cout, K), lambda b: (b, 0, 0)))

    has_bias = bias is not None
    if has_bias:
        inputs.append(bias.reshape(Cout, 1).astype(jnp.float32))
        in_specs.append(pl.BlockSpec((Cout, 1), lambda b: (0, 0)))
    affine = gamma is not None
    if affine:
        inputs.append(gamma.reshape(Cout, 1).astype(jnp.float32))
        in_specs.append(pl.BlockSpec((Cout, 1), lambda b: (0, 0)))
        inputs.append(beta.reshape(Cout, 1).astype(jnp.float32))
        in_specs.append(pl.BlockSpec((Cout, 1), lambda b: (0, 0)))

    has_tail = tail is not None
    dense_ch = Cout
    if has_tail:
        c_prev = Cout
        for cv_ in tail:
            cx = cv_["w"].shape[0]
            inputs.append(cv_["w"].reshape(cx, c_prev).astype(jnp.bfloat16))
            in_specs.append(pl.BlockSpec((cx, c_prev), lambda b: (0, 0)))
            inputs.append(cv_["b"].reshape(cx, 1).astype(jnp.float32))
            in_specs.append(pl.BlockSpec((cx, 1), lambda b: (0, 0)))
            c_prev = cx
        dense_ch = c_prev
        inputs.append(xres.astype(jnp.float32))               # (B, dense_ch, HW)
        in_specs.append(pl.BlockSpec((1, dense_ch, HW), lambda b: (b, 0, 0)))

    out_shapes, out_specs = [], []
    if emit_padded:
        out_shapes.append(jax.ShapeDtypeStruct((B, cpad_out, hwpad_out), jnp.bfloat16))
        out_specs.append(pl.BlockSpec((1, cpad_out, hwpad_out), lambda b: (b, 0, 0)))
    if emit_dense:
        out_shapes.append(jax.ShapeDtypeStruct((B, dense_ch, HW), dense_dtype))
        out_specs.append(pl.BlockSpec((1, dense_ch, HW), lambda b: (b, 0, 0)))

    kernel = functools.partial(
        _conv_kernel, n_in=len(x_pads), H=H, W=W, pad_left=padl,
        has_bias=has_bias, norm=norm, affine=affine, relu=relu, eps=eps,
        emit_padded=emit_padded, emit_dense=emit_dense, tail=has_tail)

    return pl.pallas_call(
        kernel,
        out_shape=tuple(out_shapes),
        grid=(B,),
        in_specs=in_specs,
        out_specs=tuple(out_specs),
        scratch_shapes=[pltpu.VMEM((K, HW), jnp.bfloat16)],
        compiler_params=pltpu.CompilerParams(dimension_semantics=("parallel",)),
    )(*inputs)


def _dwp_mlp_kernel(g_ref, w1_ref, b1_ref, w2_ref, b2_ref, w3_ref, b3_ref, out_ref):
    """Linear(cv,8)+ReLU -> Linear(8,8)+ReLU -> Linear(8,out), batched over B, fused."""
    h = jnp.dot(g_ref[...], w1_ref[...], preferred_element_type=jnp.float32) + b1_ref[...]
    h = jnp.maximum(h, 0.0)
    h = jnp.dot(h, w2_ref[...], preferred_element_type=jnp.float32) + b2_ref[...]
    h = jnp.maximum(h, 0.0)
    out_ref[...] = (jnp.dot(h, w3_ref[...], preferred_element_type=jnp.float32)
                    + b3_ref[...]).astype(out_ref.dtype)


def dwp_mlp(mlp, gamma_val):
    """gamma_val: (B, cv) -> (B, out_size) predicted filters (f32, one fused kernel)."""
    B = gamma_val.shape[0]
    out_size = mlp["l3"]["w"].shape[0]
    args = [gamma_val.astype(jnp.float32),
            mlp["l1"]["w"].T, mlp["l1"]["b"].reshape(1, -1),
            mlp["l2"]["w"].T, mlp["l2"]["b"].reshape(1, -1),
            mlp["l3"]["w"].T, mlp["l3"]["b"].reshape(1, -1)]
    return pl.pallas_call(
        _dwp_mlp_kernel,
        out_shape=jax.ShapeDtypeStruct((B, out_size), jnp.float32),
        in_specs=[pl.BlockSpec(memory_space=pltpu.MemorySpace.VMEM)] * len(args),
        out_specs=pl.BlockSpec(memory_space=pltpu.MemorySpace.VMEM),
    )(*args)


# ----------------------------------------------------------------------------
# XLA glue (pool / upsample / FFT data consistency)
# ----------------------------------------------------------------------------
def maxpool2(x):
    B, C, H, W = x.shape
    return jnp.max(x.reshape(B, C, H // 2, 2, W // 2, 2), axis=(3, 5))


def up2_bilinear(x):
    """F.interpolate(scale_factor=2, mode='bilinear', align_corners=False) on NCHW."""
    def up_axis(a, axis):
        n = a.shape[axis]
        first = lax.slice_in_dim(a, 0, 1, axis=axis)
        last = lax.slice_in_dim(a, n - 1, n, axis=axis)
        prev = jnp.concatenate([first, lax.slice_in_dim(a, 0, n - 1, axis=axis)], axis=axis)
        nxt = jnp.concatenate([lax.slice_in_dim(a, 1, n, axis=axis), last], axis=axis)
        even = 0.75 * a + 0.25 * prev        # out[2i]
        odd = 0.75 * a + 0.25 * nxt          # out[2i+1]
        stacked = jnp.stack([even, odd], axis=axis + 1)
        new_shape = list(a.shape)
        new_shape[axis] = 2 * n
        return stacked.reshape(new_shape)
    return up_axis(up_axis(x, 2), 3)


# ----------------------------------------------------------------------------
# UnetModelWithPyramidDWPAndDC forward (batched), DC_CNN forward
# ----------------------------------------------------------------------------
def unet_cascade(p, x, k, gamma_val, mask):
    """x: (B,1,H,W)  k: (B,1,H,W,2)  gamma_val: (B,cv)  mask: (B,H,W) -> (B,1,H,W)."""
    B, _, H, W = x.shape
    HW = H * W
    xres = x.reshape(B, 1, HW).astype(jnp.float32)

    # dynamic weight prediction: one fused 3-layer MLP kernel per filter bank,
    # for the whole batch, once per cascade.
    filterbank = []
    for mlp, (cout, cin) in zip(p["dwp"], p["weightsizes"]):
        f = dwp_mlp(mlp, gamma_val).reshape(B, cout, cin, 3, 3)
        filterbank.append(prep_w_dyn(f))
    lch = p["latent_ch"]
    lf = dwp_mlp(p["dwp_latent"], gamma_val).reshape(B, lch, lch, 3, 3)
    latent_w = prep_w_dyn(lf)

    # encoder: each conv emits the padded slab (skip) and a dense bf16 copy (pool)
    cur_pad = pad_rows(x)
    h, w = H, W
    stack = []
    for cb in p["down"]:
        cout = cb["w"].shape[0]
        padded, dense = conv_block([cur_pad], prep_w(cb["w"]), h, w,
                                   bias=cb["b"], norm=True, relu=True,
                                   emit_padded=True, emit_dense=True)
        stack.append((padded, h, w))
        pooled = maxpool2(dense.reshape(B, cout, h, w))
        h //= 2
        w //= 2
        cur_pad = pad_rows(pooled)

    # latent: conv (per-sample dynamic weights, no bias) + affine IN + ReLU
    (dense,) = conv_block([cur_pad], latent_w, h, w, norm=True,
                          gamma=p["in_gamma"], beta=p["in_beta"], relu=True,
                          emit_dense=True)
    out_dense = dense.reshape(B, lch, h, w)

    # decoder
    n_up = len(p["up"])
    final = None
    for li, cb in enumerate(p["up"]):
        up = up2_bilinear(out_dense)
        h *= 2
        w *= 2
        up_pad = pad_rows(up)
        enc_pad, eh, ew = stack.pop()
        filt = filterbank.pop()
        (encf_pad,) = conv_block([enc_pad], filt, eh, ew, emit_padded=True)

        c_up = out_dense.shape[1]
        cout = cb["w"].shape[0]
        w_cat = jnp.concatenate([prep_w(cb["w"][:, :c_up]),
                                 prep_w(cb["w"][:, c_up:])], axis=2)
        if li < n_up - 1:
            (dense,) = conv_block([up_pad, encf_pad], w_cat, h, w,
                                  bias=cb["b"], norm=True, relu=True,
                                  emit_dense=True)
            out_dense = dense.reshape(B, cout, h, w)
        else:
            # last decoder conv: fuse the three 1x1 convs of conv2 + residual add
            (final,) = conv_block([up_pad, encf_pad], w_cat, h, w,
                                  bias=cb["b"], norm=True, relu=True,
                                  emit_dense=True, dense_dtype=jnp.float32,
                                  tail=p["conv2"], xres=xres)

    out_chans = p["conv2"][-1]["w"].shape[0]
    out = final.reshape(B, out_chans, H, W)

    # --- DataConsistencyLayer: FFT + masked mix in plain XLA (fuses for free) ---
    # TODO(synk): the torch layer also np.load()s an undersampling mask from disk but
    # never uses it (dead code); the mask passed as an argument is what is applied here.
    pred = out[:, 0]                                      # (B, H, W) f32
    kspace_pred = jnp.fft.fft2(pred, norm="ortho")        # torch.rfft(_,2,True,False)
    k0 = k[:, 0]                                          # (B, H, W, 2)
    us_kspace = k0[..., 0] + 1j * k0[..., 1]
    updated = mask * us_kspace + (1.0 - mask) * kspace_pred
    rec = jnp.real(jnp.fft.ifft2(updated, norm="ortho"))  # torch.ifft(_,2,True)[...,0]
    return rec[:, None, :, :].astype(jnp.float32)


def dc_cnn_forward(params_list, x, k, gamma_val, mask):
    """x: (B,1,H,W)  k: (B,1,H,W,2)  gamma_val: (B,cv)  mask: (B,H,W) -> (B,1,H,W)."""
    x_cnn = x
    for p in params_list:                                 # nc cascades (sequential)
        x_cnn = unet_cascade(p, x_cnn, k, gamma_val, mask)
    return x_cnn


# ----------------------------------------------------------------------------
# Deterministic parameter initialization (mirrors the torch module's shapes)
# ----------------------------------------------------------------------------
def init_conv(key, cin, cout, ksz):
    kw, kb = jax.random.split(key)
    limit = 1.0 / np.sqrt(cin * ksz * ksz)
    return {"w": jax.random.uniform(kw, (cout, cin, ksz, ksz), jnp.float32, -limit, limit),
            "b": jax.random.uniform(kb, (cout,), jnp.float32, -limit, limit)}


def init_linear(key, fin, fout):
    kw, kb = jax.random.split(key)
    limit = 1.0 / np.sqrt(fin)
    return {"w": jax.random.uniform(kw, (fout, fin), jnp.float32, -limit, limit),
            "b": jax.random.uniform(kb, (fout,), jnp.float32, -limit, limit)}


def init_mlp(key, cv, out_size):
    k1, k2, k3 = jax.random.split(key, 3)
    return {"l1": init_linear(k1, cv, 8),
            "l2": init_linear(k2, 8, 8),
            "l3": init_linear(k3, 8, out_size)}


def init_unet(key, in_chans, out_chans, chans, num_pool_layers, cv):
    keys = iter(jax.random.split(key, 64))
    p = {"down": [init_conv(next(keys), in_chans, chans, 3)],
         "dwp": [init_mlp(next(keys), cv, chans * chans * 9)],
         "weightsizes": [(chans, chans)]}
    ch = chans
    for _ in range(num_pool_layers - 1):
        p["down"].append(init_conv(next(keys), ch, ch * 2, 3))
        p["dwp"].append(init_mlp(next(keys), cv, (ch * 2) * (ch * 2) * 9))
        p["weightsizes"].append((ch * 2, ch * 2))
        ch *= 2
    p["dwp_latent"] = init_mlp(next(keys), cv, ch * ch * 9)
    p["latent_ch"] = ch
    p["in_gamma"] = jnp.ones((ch,), jnp.float32)     # InstanceNorm2d(affine=True) init
    p["in_beta"] = jnp.zeros((ch,), jnp.float32)
    p["up"] = []
    for _ in range(num_pool_layers - 1):
        p["up"].append(init_conv(next(keys), ch * 2, ch // 2, 3))
        ch //= 2
    p["up"].append(init_conv(next(keys), ch * 2, ch, 3))
    p["conv2"] = [init_conv(next(keys), ch, ch // 2, 1),
                  init_conv(next(keys), ch // 2, out_chans, 1),
                  init_conv(next(keys), out_chans, out_chans, 1)]
    return p


# ----------------------------------------------------------------------------
if __name__ == "__main__":
    B, H, W = 2, 16, 16
    in_chans, out_chans, chans, num_pool_layers, cv, nc = 1, 1, 4, 2, 32, 2

    key = jax.random.PRNGKey(0)
    kp, kx, kk, kg, km = jax.random.split(key, 5)

    params = [init_unet(sk, in_chans, out_chans, chans, num_pool_layers, cv)
              for sk in jax.random.split(kp, nc)]

    x = jax.random.normal(kx, (B, 1, H, W), jnp.float32)
    kspace = jax.random.normal(kk, (B, 1, H, W, 2), jnp.float32)
    gamma_val = jax.random.normal(kg, (B, cv), jnp.float32)
    mask = (jax.random.uniform(km, (B, H, W)) > 0.5).astype(jnp.float32)

    fwd = jax.jit(lambda xx, kk_, gg, mm: dc_cnn_forward(params, xx, kk_, gg, mm))
    out = fwd(x, kspace, gamma_val, mask)
    jax.block_until_ready(out)
    assert out.shape == (B, 1, H, W) and out.dtype == jnp.float32
    print("KERNEL_OK")
</pallas_src>

<mosaic_0001>
module attributes {stable_mosaic.version = 11 : i64} {
  func.func @_conv_kernel(%arg0: i32, %arg1: memref<1x16x512xbf16, #tpu.memory_space<vmem>>, %arg2: memref<1x4x144xbf16, #tpu.memory_space<vmem>>, %arg3: memref<4x1xf32, #tpu.memory_space<vmem>>, %arg4: memref<1x16x512xbf16, #tpu.memory_space<vmem>>, %arg5: memref<1x4x256xbf16, #tpu.memory_space<vmem>>, %arg6: memref<144x256xbf16, #tpu.memory_space<vmem>>) attributes {dimension_semantics = [#tpu.dimension_semantics<parallel>], iteration_bounds = array<i64: 2>, scalar_prefetch = 0 : i64, scratch_operands = 1 : i64, tpu.core_type = #tpu.core_type<tc>, window_params = [{transform_indices = @transform_0, window_bounds = array<i64: 1, 16, 512>}, {pipeline_mode = #tpu.pipeline_mode<synchronous>, transform_indices = @transform_1, window_bounds = array<i64: 1, 4, 144>}, {pipeline_mode = #tpu.pipeline_mode<synchronous>, transform_indices = @transform_2, window_bounds = array<i64: 4, 1>}, {transform_indices = @transform_3, window_bounds = array<i64: 1, 16, 512>}, {transform_indices = @transform_4, window_bounds = array<i64: 1, 4, 256>}]} {
    %0 = tpu.iota {dimensions = array<i32: 1>} : vector<1x256xi32>
    %c16_i32 = arith.constant 16 : i32
    %c0_i32 = arith.constant 0 : i32
    %1 = arith.cmpi eq, %c16_i32, %c0_i32 : i32
    %c1_i32 = arith.constant 1 : i32
    %2 = arith.select %1, %c1_i32, %c16_i32 : i32
    %3 = vector.broadcast %2 : i32 to vector<1x256xi32>
    %4 = arith.remsi %0, %3 : vector<1x256xi32>
    %c0_i32_0 = arith.constant 0 : i32
    %5 = vector.broadcast %c0_i32_0 : i32 to vector<1x256xi32>
    %6 = arith.cmpi ne, %4, %5 : vector<1x256xi32>
    %c0_i32_1 = arith.constant 0 : i32
    %7 = vector.broadcast %c0_i32_1 : i32 to vector<1x256xi32>
    %8 = arith.cmpi slt, %4, %7 : vector<1x256xi32>
    %c0_i32_2 = arith.constant 0 : i32
    %9 = arith.cmpi slt, %2, %c0_i32_2 : i32
    %10 = vector.broadcast %9 : i1 to vector<1x256xi1>
    %11 = vector.broadcast %10 : vector<1x256xi1> to vector<1x256xi1>
    %12 = arith.xori %8, %11 : vector<1x256xi1>
    %13 = arith.andi %12, %6 : vector<1x256xi1>
    %14 = vector.broadcast %2 : i32 to vector<1x256xi32>
    %15 = arith.addi %4, %14 : vector<1x256xi32>
    %16 = arith.select %13, %15, %4 : vector<1x256xi1>, vector<1x256xi32>
    %c1_i32_3 = arith.constant 1 : i32
    %17 = vector.broadcast %c1_i32_3 : i32 to vector<1x256xi32>
    %18 = arith.cmpi sge, %16, %17 : vector<1x256xi32>
    %19 = arith.extui %18 : vector<1x256xi1> to vector<1x256xi32>
    %20 = arith.sitofp %19 : vector<1x256xi32> to vector<1x256xf32>
    %21 = arith.truncf %20 : vector<1x256xf32> to vector<1x256xbf16>
    %c14_i32 = arith.constant 14 : i32
    %22 = vector.broadcast %c14_i32 : i32 to vector<1x256xi32>
    %23 = arith.cmpi sle, %16, %22 : vector<1x256xi32>
    %24 = arith.extui %23 : vector<1x256xi1> to vector<1x256xi32>
    %25 = arith.sitofp %24 : vector<1x256xi32> to vector<1x256xf32>
    %26 = arith.truncf %25 : vector<1x256xf32> to vector<1x256xbf16>
    %c0 = arith.constant 0 : index
    %c0_4 = arith.constant 0 : index
    %c111 = arith.constant 111 : index
    %27 = vector.load %arg1[%c0, %c0_4, %c111] : memref<1x16x512xbf16, #tpu.memory_space<vmem>>, vector<1x16x256xbf16>
    %28 = vector.shape_cast %27 : vector<1x16x256xbf16> to vector<16x256xbf16>
    %29 = vector.broadcast %21 : vector<1x256xbf16> to vector<16x256xbf16>
    %30 = arith.mulf %28, %29 : vector<16x256xbf16>
    %c0_5 = arith.constant 0 : index
    %c0_6 = arith.constant 0 : index
    %31 = vector.load %arg6[%c0_5, %c0_6] : memref<144x256xbf16, #tpu.memory_space<vmem>>, vector<16x256xbf16>
    tpu.vector_store %arg6[%c0_5, %c0_6], %30 {strides = array<i32>} : memref<144x256xbf16, #tpu.memory_space<vmem>>, vector<16x256xbf16>,
    %c0_7 = arith.constant 0 : index
    %c0_8 = arith.constant 0 : index
    %c112 = arith.constant 112 : index
    %32 = vector.load %arg1[%c0_7, %c0_8, %c112] : memref<1x16x512xbf16, #tpu.memory_space<vmem>>, vector<1x16x256xbf16>
    %33 = vector.shape_cast %32 : vector<1x16x256xbf16> to vector<16x256xbf16>
    %c16 = arith.constant 16 : index
    %c0_9 = arith.constant 0 : index
    %34 = vector.load %arg6[%c16, %c0_9] : memref<144x256xbf16, #tpu.memory_space<vmem>>, vector<16x256xbf16>
    tpu.vector_store %arg6[%c16, %c0_9], %33 {strides = array<i32>} : memref<144x256xbf16, #tpu.memory_space<vmem>>, vector<16x256xbf16>,
    %c0_10 = arith.constant 0 : index
    %c0_11 = arith.constant 0 : index
    %c113 = arith.constant 113 : index
    %35 = vector.load %arg1[%c0_10, %c0_11, %c113] : memref<1x16x512xbf16, #tpu.memory_space<vmem>>, vector<1x16x256xbf16>
    %36 = vector.shape_cast %35 : vector<1x16x256xbf16> to vector<16x256xbf16>
    %37 = vector.broadcast %26 : vector<1x256xbf16> to vector<16x256xbf16>
    %38 = arith.mulf %36, %37 : vector<16x256xbf16>
    %c32 = arith.constant 32 : index
    %c0_12 = arith.constant 0 : index
    %39 = vector.load %arg6[%c32, %c0_12] : memref<144x256xbf16, #tpu.memory_space<vmem>>, vector<16x256xbf16>
    tpu.vector_store %arg6[%c32, %c0_12], %38 {strides = array<i32>} : memref<144x256xbf16, #tpu.memory_space<vmem>>, vector<16x256xbf16>,
    %c0_13 = arith.constant 0 : index
    %c0_14 = arith.constant 0 : index
    %c127 = arith.constant 127 : index
    %40 = vector.load %arg1[%c0_13, %c0_14, %c127] : memref<1x16x512xbf16, #tpu.memory_space<vmem>>, vector<1x16x256xbf16>
    %41 = vector.shape_cast %40 : vector<1x16x256xbf16> to vector<16x256xbf16>
    %42 = vector.broadcast %21 : vector<1x256xbf16> to vector<16x256xbf16>
    %43 = arith.mulf %41, %42 : vector<16x256xbf16>
    %c48 = arith.constant 48 : index
    %c0_15 = arith.constant 0 : index
    %44 = vector.load %arg6[%c48, %c0_15] : memref<144x256xbf16, #tpu.memory_space<vmem>>, vector<16x256xbf16>
    tpu.vector_store %arg6[%c48, %c0_15], %43 {strides = array<i32>} : memref<144x256xbf16, #tpu.memory_space<vmem>>, vector<16x256xbf16>,
    %c0_16 = arith.constant 0 : index
    %c0_17 = arith.constant 0 : index
    %c128 = arith.constant 128 : index
    %45 = vector.load %arg1[%c0_16, %c0_17, %c128] : memref<1x16x512xbf16, #tpu.memory_space<vmem>>, vector<1x16x256xbf16>
    %46 = vector.shape_cast %45 : vector<1x16x256xbf16> to vector<16x256xbf16>
    %c64 = arith.constant 64 : index
    %c0_18 = arith.constant 0 : index
    %47 = vector.load %arg6[%c64, %c0_18] : memref<144x256xbf16, #tpu.memory_space<vmem>>, vector<16x256xbf16>
    tpu.vector_store %arg6[%c64, %c0_18], %46 {strides = array<i32>} : memref<144x256xbf16, #tpu.memory_space<vmem>>, vector<16x256xbf16>,
    %c0_19 = arith.constant 0 : index
    %c0_20 = arith.constant 0 : index
    %c129 = arith.constant 129 : index
    %48 = vector.load %arg1[%c0_19, %c0_20, %c129] : memref<1x16x512xbf16, #tpu.memory_space<vmem>>, vector<1x16x256xbf16>
    %49 = vector.shape_cast %48 : vector<1x16x256xbf16> to vector<16x256xbf16>
    %50 = vector.broadcast %26 : vector<1x256xbf16> to vector<16x256xbf16>
    %51 = arith.mulf %49, %50 : vector<16x256xbf16>
    %c80 = arith.constant 80 : index
    %c0_21 = arith.constant 0 : index
    %52 = vector.load %arg6[%c80, %c0_21] : memref<144x256xbf16, #tpu.memory_space<vmem>>, vector<16x256xbf16>
    tpu.vector_store %arg6[%c80, %c0_21], %51 {strides = array<i32>} : memref<144x256xbf16, #tpu.memory_space<vmem>>, vector<16x256xbf16>,
    %c0_22 = arith.constant 0 : index
    %c0_23 = arith.constant 0 : index
    %c143 = arith.constant 143 : index
    %53 = vector.load %arg1[%c0_22, %c0_23, %c143] : memref<1x16x512xbf16, #tpu.memory_space<vmem>>, vector<1x16x256xbf16>
    %54 = vector.shape_cast %53 : vector<1x16x256xbf16> to vector<16x256xbf16>
    %55 = vector.broadcast %21 : vector<1x256xbf16> to vector<16x256xbf16>
    %56 = arith.mulf %54, %55 : vector<16x256xbf16>
    %c96 = arith.constant 96 : index
    %c0_24 = arith.constant 0 : index
    %57 = vector.load %arg6[%c96, %c0_24] : memref<144x256xbf16, #tpu.memory_space<vmem>>, vector<16x256xbf16>
    tpu.vector_store %arg6[%c96, %c0_24], %56 {strides = array<i32>} : memref<144x256xbf16, #tpu.memory_space<vmem>>, vector<16x256xbf16>,
    %c0_25 = arith.constant 0 : index
    %c0_26 = arith.constant 0 : index
    %c144 = arith.constant 144 : index
    %58 = vector.load %arg1[%c0_25, %c0_26, %c144] : memref<1x16x512xbf16, #tpu.memory_space<vmem>>, vector<1x16x256xbf16>
    %59 = vector.shape_cast %58 : vector<1x16x256xbf16> to vector<16x256xbf16>
    %c112_27 = arith.constant 112 : index
    %c0_28 = arith.constant 0 : index
    %60 = vector.load %arg6[%c112_27, %c0_28] : memref<144x256xbf16, #tpu.memory_space<vmem>>, vector<16x256xbf16>
    tpu.vector_store %arg6[%c112_27, %c0_28], %59 {strides = array<i32>} : memref<144x256xbf16, #tpu.memory_space<vmem>>, vector<16x256xbf16>,
    %c0_29 = arith.constant 0 : index
    %c0_30 = arith.constant 0 : index
    %c145 = arith.constant 145 : index
    %61 = vector.load %arg1[%c0_29, %c0_30, %c145] : memref<1x16x512xbf16, #tpu.memory_space<vmem>>, vector<1x16x256xbf16>
    %62 = vector.shape_cast %61 : vector<1x16x256xbf16> to vector<16x256xbf16>
    %63 = vector.broadcast %26 : vector<1x256xbf16> to vector<16x256xbf16>
    %64 = arith.mulf %62, %63 : vector<16x256xbf16>
    %c128_31 = arith.constant 128 : index
    %c0_32 = arith.constant 0 : index
    %65 = vector.load %arg6[%c128_31, %c0_32] : memref<144x256xbf16, #tpu.memory_space<vmem>>, vector<16x256xbf16>
    tpu.vector_store %arg6[%c128_31, %c0_32], %64 {strides = array<i32>} : memref<144x256xbf16, #tpu.memory_space<vmem>>, vector<16x256xbf16>,
    %c0_33 = arith.constant 0 : index
    %c0_34 = arith.constant 0 : index
    %c0_35 = arith.constant 0 : index
    %66 = vector.load %arg2[%c0_33, %c0_34, %c0_35] : memref<1x4x144xbf16, #tpu.memory_space<vmem>>, vector<1x4x144xbf16>
    %67 = vector.shape_cast %66 : vector<1x4x144xbf16> to vector<4x144xbf16>
    %c0_36 = arith.constant 0 : index
    %c0_37 = arith.constant 0 : index
    %68 = vector.load %arg6[%c0_36, %c0_37] : memref<144x256xbf16, #tpu.memory_space<vmem>>, vector<144x256xbf16>
    %cst = arith.constant dense<0.000000e+00> : vector<4x256xf32>
    %69 = tpu.matmul %67, %68, %cst {dimension_numbers = #tpu.dot_dimension_numbers<[1], [0], [0], [1], [0, 0, 1, 1], [], []>} : vector<4x144xbf16>, vector<144x256xbf16>, vector<4x256xf32> -> vector<4x256xf32>
    %c0_38 = arith.constant 0 : index
    %c0_39 = arith.constant 0 : index
    %70 = vector.load %arg3[%c0_38, %c0_39] : memref<4x1xf32, #tpu.memory_space<vmem>>, vector<4x1xf32>
    %71 = vector.broadcast %70 : vector<4x1xf32> to vector<4x256xf32>
    %72 = arith.addf %69, %71 : vector<4x256xf32>
    %cst_40 = arith.constant dense<0.000000e+00> : vector<4xf32>
    %73 = vector.multi_reduction <add>, %72, %cst_40 [1] : vector<4x256xf32> to vector<4xf32>
    %74 = vector.shape_cast %73 : vector<4xf32> to vector<4x1xf32>
    %cst_41 = arith.constant 2.560000e+02 : f32
    %75 = vector.broadcast %cst_41 : f32 to vector<4x1xf32>
    %76 = arith.divf %74, %75 : vector<4x1xf32>
    %77 = vector.broadcast %76 : vector<4x1xf32> to vector<4x256xf32>
    %78 = arith.subf %72, %77 : vector<4x256xf32>
    %79 = arith.mulf %78, %78 : vector<4x256xf32>
    %cst_42 = arith.constant dense<0.000000e+00> : vector<4xf32>
    %80 = vector.multi_reduction <add>, %79, %cst_42 [1] : vector<4x256xf32> to vector<4xf32>
    %81 = vector.shape_cast %80 : vector<4xf32> to vector<4x1xf32>
    %cst_43 = arith.constant 2.560000e+02 : f32
    %82 = vector.broadcast %cst_43 : f32 to vector<4x1xf32>
    %83 = arith.divf %81, %82 : vector<4x1xf32>
    %84 = vector.broadcast %76 : vector<4x1xf32> to vector<4x256xf32>
    %85 = arith.subf %72, %84 : vector<4x256xf32>
    %cst_44 = arith.constant 9.99999974E-6 : f32
    %86 = vector.broadcast %cst_44 : f32 to vector<4x1xf32>
    %87 = arith.addf %83, %86 : vector<4x1xf32>
    %88 = math.rsqrt %87 : vector<4x1xf32>
    %89 = vector.broadcast %88 : vector<4x1xf32> to vector<4x256xf32>
    %90 = arith.mulf %85, %89 : vector<4x256xf32>
    %cst_45 = arith.constant 0.000000e+00 : f32
    %91 = vector.broadcast %cst_45 : f32 to vector<4x256xf32>
    %92 = arith.maximumf %90, %91 : vector<4x256xf32>
    %cst_46 = arith.constant 0.000000e+00 : bf16
    %93 = vector.broadcast %cst_46 : bf16 to vector<16x512xbf16>
    %c0_47 = arith.constant 0 : index
    %c0_48 = arith.constant 0 : index
    %c0_49 = arith.constant 0 : index
    %94 = vector.load %arg4[%c0_47, %c0_48, %c0_49] : memref<1x16x512xbf16, #tpu.memory_space<vmem>>, vector<1x16x512xbf16>
    %95 = vector.shape_cast %94 : vector<1x16x512xbf16> to vector<16x512xbf16>
    %96 = vector.shape_cast %93 : vector<16x512xbf16> to vector<1x16x512xbf16>
    tpu.vector_store %arg4[%c0_47, %c0_48, %c0_49], %96 {strides = array<i32>} : memref<1x16x512xbf16, #tpu.memory_space<vmem>>, vector<1x16x512xbf16>,
    %97 = arith.truncf %92 : vector<4x256xf32> to vector<4x256xbf16>
    %c0_50 = arith.constant 0 : index
    %c0_51 = arith.constant 0 : index
    %c128_52 = arith.constant 128 : index
    %98 = vector.load %arg4[%c0_50, %c0_51, %c128_52] : memref<1x16x512xbf16, #tpu.memory_space<vmem>>, vector<1x4x256xbf16>
    %99 = vector.shape_cast %98 : vector<1x4x256xbf16> to vector<4x256xbf16>
    %100 = vector.shape_cast %97 : vector<4x256xbf16> to vector<1x4x256xbf16>
    tpu.vector_store %arg4[%c0_50, %c0_51, %c128_52], %100 {strides = array<i32>} : memref<1x16x512xbf16, #tpu.memory_space<vmem>>, vector<1x4x256xbf16>,
    %101 = arith.truncf %92 : vector<4x256xf32> to vector<4x256xbf16>
    %c0_53 = arith.constant 0 : index
    %c0_54 = arith.constant 0 : index
    %c0_55 = arith.constant 0 : index
    %102 = vector.load %arg5[%c0_53, %c0_54, %c0_55] : memref<1x4x256xbf16, #tpu.memory_space<vmem>>, vector<1x4x256xbf16>
    %103 = vector.shape_cast %102 : vector<1x4x256xbf16> to vector<4x256xbf16>
    %104 = vector.shape_cast %101 : vector<4x256xbf16> to vector<1x4x256xbf16>
    tpu.vector_store %arg5[%c0_53, %c0_54, %c0_55], %104 {strides = array<i32>} : memref<1x4x256xbf16, #tpu.memory_space<vmem>>, vector<1x4x256xbf16>,
    return
  }
  func.func @transform_0(%arg0: i32) -> (i32, i32, i32) {
    %c0_i32 = arith.constant 0 : i32
    %c0_i32_0 = arith.constant 0 : i32
    %c0_i32_1 = arith.constant 0 : i32
    return %arg0, %c0_i32, %c0_i32_0 : i32, i32, i32
  }
  func.func @transform_1(%arg0: i32) -> (i32, i32, i32) {
    %c0_i32 = arith.constant 0 : i32
    %c0_i32_0 = arith.constant 0 : i32
    %c0_i32_1 = arith.constant 0 : i32
    %c0_i32_2 = arith.constant 0 : i32
    return %c0_i32, %c0_i32_0, %c0_i32_1 : i32, i32, i32
  }
  func.func @transform_2(%arg0: i32) -> (i32, i32) {
    %c0_i32 = arith.constant 0 : i32
    %c0_i32_0 = arith.constant 0 : i32
    %c0_i32_1 = arith.constant 0 : i32
    return %c0_i32, %c0_i32_0 : i32, i32
  }
  func.func @transform_3(%arg0: i32) -> (i32, i32, i32) {
    %c0_i32 = arith.constant 0 : i32
    %c0_i32_0 = arith.constant 0 : i32
    %c0_i32_1 = arith.constant 0 : i32
    return %arg0, %c0_i32, %c0_i32_0 : i32, i32, i32
  }
  func.func @transform_4(%arg0: i32) -> (i32, i32, i32) {
    %c0_i32 = arith.constant 0 : i32
    %c0_i32_0 = arith.constant 0 : i32
    %c0_i32_1 = arith.constant 0 : i32
    return %arg0, %c0_i32, %c0_i32_0 : i32, i32, i32
  }
}

module attributes {stable_mosaic.version = 11 : i64} {
  func.func @_conv_kernel(%arg0: i32, %arg1: memref<1x16x256xbf16, #tpu.memory_space<vmem>>, %arg2: memref<1x8x144xbf16, #tpu.memory_space<vmem>>, %arg3: memref<8x1xf32, #tpu.memory_space<vmem>>, %arg4: memref<1x16x256xbf16, #tpu.memory_space<vmem>>, %arg5: memref<1x8x64xbf16, #tpu.memory_space<vmem>>, %arg6: memref<144x64xbf16, #tpu.memory_space<vmem>>) attributes {dimension_semantics = [#tpu.dimension_semantics<parallel>], iteration_bounds = array<i64: 2>, scalar_prefetch = 0 : i64, scratch_operands = 1 : i64, tpu.core_type = #tpu.core_type<tc>, window_params = [{transform_indices = @transform_0, window_bounds = array<i64: 1, 16, 256>}, {pipeline_mode = #tpu.pipeline_mode<synchronous>, transform_indices = @transform_1, window_bounds = array<i64: 1, 8, 144>}, {pipeline_mode = #tpu.pipeline_mode<synchronous>, transform_indices = @transform_2, window_bounds = array<i64: 8, 1>}, {transform_indices = @transform_3, window_bounds = array<i64: 1, 16, 256>}, {transform_indices = @transform_4, window_bounds = array<i64: 1, 8, 64>}]} {
    %0 = tpu.iota {dimensions = array<i32: 1>} : vector<1x64xi32>
    %c8_i32 = arith.constant 8 : i32
    %c0_i32 = arith.constant 0 : i32
    %1 = arith.cmpi eq, %c8_i32, %c0_i32 : i32
    %c1_i32 = arith.constant 1 : i32
    %2 = arith.select %1, %c1_i32, %c8_i32 : i32
    %3 = vector.broadcast %2 : i32 to vector<1x64xi32>
    %4 = arith.remsi %0, %3 : vector<1x64xi32>
    %c0_i32_0 = arith.constant 0 : i32
    %5 = vector.broadcast %c0_i32_0 : i32 to vector<1x64xi32>
    %6 = arith.cmpi ne, %4, %5 : vector<1x64xi32>
    %c0_i32_1 = arith.constant 0 : i32
    %7 = vector.broadcast %c0_i32_1 : i32 to vector<1x64xi32>
    %8 = arith.cmpi slt, %4, %7 : vector<1x64xi32>
    %c0_i32_2 = arith.constant 0 : i32
    %9 = arith.cmpi slt, %2, %c0_i32_2 : i32
    %10 = vector.broadcast %9 : i1 to vector<1x64xi1>
    %11 = vector.broadcast %10 : vector<1x64xi1> to vector<1x64xi1>
    %12 = arith.xori %8, %11 : vector<1x64xi1>
    %13 = arith.andi %12, %6 : vector<1x64xi1>
    %14 = vector.broadcast %2 : i32 to vector<1x64xi32>
    %15 = arith.addi %4, %14 : vector<1x64xi32>
    %16 = arith.select %13, %15, %4 : vector<1x64xi1>, vector<1x64xi32>
    %c1_i32_3 = arith.constant 1 : i32
    %17 = vector.broadcast %c1_i32_3 : i32 to vector<1x64xi32>
    %18 = arith.cmpi sge, %16, %17 : vector<1x64xi32>
    %19 = arith.extui %18 : vector<1x64xi1> to vector<1x64xi32>
    %20 = arith.sitofp %19 : vector<1x64xi32> to vector<1x64xf32>
    %21 = arith.truncf %20 : vector<1x64xf32> to vector<1x64xbf16>
    %c6_i32 = arith.constant 6 : i32
    %22 = vector.broadcast %c6_i32 : i32 to vector<1x64xi32>
    %23 = arith.cmpi sle, %16, %22 : vector<1x64xi32>
    %24 = arith.extui %23 : vector<1x64xi1> to vector<1x64xi32>
    %25 = arith.sitofp %24 : vector<1x64xi32> to vector<1x64xf32>
    %26 = arith.truncf %25 : vector<1x64xf32> to vector<1x64xbf16>
    %c0 = arith.constant 0 : index
    %c0_4 = arith.constant 0 : index
    %c119 = arith.constant 119 : index
    %27 = vector.load %arg1[%c0, %c0_4, %c119] : memref<1x16x256xbf16, #tpu.memory_space<vmem>>, vector<1x16x64xbf16>
    %28 = vector.shape_cast %27 : vector<1x16x64xbf16> to vector<16x64xbf16>
    %29 = vector.broadcast %21 : vector<1x64xbf16> to vector<16x64xbf16>
    %30 = arith.mulf %28, %29 : vector<16x64xbf16>
    %c0_5 = arith.constant 0 : index
    %c0_6 = arith.constant 0 : index
    %31 = vector.load %arg6[%c0_5, %c0_6] : memref<144x64xbf16, #tpu.memory_space<vmem>>, vector<16x64xbf16>
    tpu.vector_store %arg6[%c0_5, %c0_6], %30 {strides = array<i32>} : memref<144x64xbf16, #tpu.memory_space<vmem>>, vector<16x64xbf16>,
    %c0_7 = arith.constant 0 : index
    %c0_8 = arith.constant 0 : index
    %c120 = arith.constant 120 : index
    %32 = vector.load %arg1[%c0_7, %c0_8, %c120] : memref<1x16x256xbf16, #tpu.memory_space<vmem>>, vector<1x16x64xbf16>
    %33 = vector.shape_cast %32 : vector<1x16x64xbf16> to vector<16x64xbf16>
    %c16 = arith.constant 16 : index
    %c0_9 = arith.constant 0 : index
    %34 = vector.load %arg6[%c16, %c0_9] : memref<144x64xbf16, #tpu.memory_space<vmem>>, vector<16x64xbf16>
    tpu.vector_store %arg6[%c16, %c0_9], %33 {strides = array<i32>} : memref<144x64xbf16, #tpu.memory_space<vmem>>, vector<16x64xbf16>,
    %c0_10 = arith.constant 0 : index
    %c0_11 = arith.constant 0 : index
    %c121 = arith.constant 121 : index
    %35 = vector.load %arg1[%c0_10, %c0_11, %c121] : memref<1x16x256xbf16, #tpu.memory_space<vmem>>, vector<1x16x64xbf16>
    %36 = vector.shape_cast %35 : vector<1x16x64xbf16> to vector<16x64xbf16>
    %37 = vector.broadcast %26 : vector<1x64xbf16> to vector<16x64xbf16>
    %38 = arith.mulf %36, %37 : vector<16x64xbf16>
    %c32 = arith.constant 32 : index
    %c0_12 = arith.constant 0 : index
    %39 = vector.load %arg6[%c32, %c0_12] : memref<144x64xbf16, #tpu.memory_space<vmem>>, vector<16x64xbf16>
    tpu.vector_store %arg6[%c32, %c0_12], %38 {strides = array<i32>} : memref<144x64xbf16, #tpu.memory_space<vmem>>, vector<16x64xbf16>,
    %c0_13 = arith.constant 0 : index
    %c0_14 = arith.constant 0 : index
    %c127 = arith.constant 127 : index
    %40 = vector.load %arg1[%c0_13, %c0_14, %c127] : memref<1x16x256xbf16, #tpu.memory_space<vmem>>, vector<1x16x64xbf16>
    %41 = vector.shape_cast %40 : vector<1x16x64xbf16> to vector<16x64xbf16>
    %42 = vector.broadcast %21 : vector<1x64xbf16> to vector<16x64xbf16>
    %43 = arith.mulf %41, %42 : vector<16x64xbf16>
    %c48 = arith.constant 48 : index
    %c0_15 = arith.constant 0 : index
    %44 = vector.load %arg6[%c48, %c0_15] : memref<144x64xbf16, #tpu.memory_space<vmem>>, vector<16x64xbf16>
    tpu.vector_store %arg6[%c48, %c0_15], %43 {strides = array<i32>} : memref<144x64xbf16, #tpu.memory_space<vmem>>, vector<16x64xbf16>,
    %c0_16 = arith.constant 0 : index
    %c0_17 = arith.constant 0 : index
    %c128 = arith.constant 128 : index
    %45 = vector.load %arg1[%c0_16, %c0_17, %c128] : memref<1x16x256xbf16, #tpu.memory_space<vmem>>, vector<1x16x64xbf16>
    %46 = vector.shape_cast %45 : vector<1x16x64xbf16> to vector<16x64xbf16>
    %c64 = arith.constant 64 : index
    %c0_18 = arith.constant 0 : index
    %47 = vector.load %arg6[%c64, %c0_18] : memref<144x64xbf16, #tpu.memory_space<vmem>>, vector<16x64xbf16>
    tpu.vector_store %arg6[%c64, %c0_18], %46 {strides = array<i32>} : memref<144x64xbf16, #tpu.memory_space<vmem>>, vector<16x64xbf16>,
    %c0_19 = arith.constant 0 : index
    %c0_20 = arith.constant 0 : index
    %c129 = arith.constant 129 : index
    %48 = vector.load %arg1[%c0_19, %c0_20, %c129] : memref<1x16x256xbf16, #tpu.memory_space<vmem>>, vector<1x16x64xbf16>
    %49 = vector.shape_cast %48 : vector<1x16x64xbf16> to vector<16x64xbf16>
    %50 = vector.broadcast %26 : vector<1x64xbf16> to vector<16x64xbf16>
    %51 = arith.mulf %49, %50 : vector<16x64xbf16>
    %c80 = arith.constant 80 : index
    %c0_21 = arith.constant 0 : index
    %52 = vector.load %arg6[%c80, %c0_21] : memref<144x64xbf16, #tpu.memory_space<vmem>>, vector<16x64xbf16>
    tpu.vector_store %arg6[%c80, %c0_21], %51 {strides = array<i32>} : memref<144x64xbf16, #tpu.memory_space<vmem>>, vector<16x64xbf16>,
    %c0_22 = arith.constant 0 : index
    %c0_23 = arith.constant 0 : index
    %c135 = arith.constant 135 : index
    %53 = vector.load %arg1[%c0_22, %c0_23, %c135] : memref<1x16x256xbf16, #tpu.memory_space<vmem>>, vector<1x16x64xbf16>
    %54 = vector.shape_cast %53 : vector<1x16x64xbf16> to vector<16x64xbf16>
    %55 = vector.broadcast %21 : vector<1x64xbf16> to vector<16x64xbf16>
    %56 = arith.mulf %54, %55 : vector<16x64xbf16>
    %c96 = arith.constant 96 : index
    %c0_24 = arith.constant 0 : index
    %57 = vector.load %arg6[%c96, %c0_24] : memref<144x64xbf16, #tpu.memory_space<vmem>>, vector<16x64xbf16>
    tpu.vector_store %arg6[%c96, %c0_24], %56 {strides = array<i32>} : memref<144x64xbf16, #tpu.memory_space<vmem>>, vector<16x64xbf16>,
    %c0_25 = arith.constant 0 : index
    %c0_26 = arith.constant 0 : index
    %c136 = arith.constant 136 : index
    %58 = vector.load %arg1[%c0_25, %c0_26, %c136] : memref<1x16x256xbf16, #tpu.memory_space<vmem>>, vector<1x16x64xbf16>
    %59 = vector.shape_cast %58 : vector<1x16x64xbf16> to vector<16x64xbf16>
    %c112 = arith.constant 112 : index
    %c0_27 = arith.constant 0 : index
    %60 = vector.load %arg6[%c112, %c0_27] : memref<144x64xbf16, #tpu.memory_space<vmem>>, vector<16x64xbf16>
    tpu.vector_store %arg6[%c112, %c0_27], %59 {strides = array<i32>} : memref<144x64xbf16, #tpu.memory_space<vmem>>, vector<16x64xbf16>,
    %c0_28 = arith.constant 0 : index
    %c0_29 = arith.constant 0 : index
    %c137 = arith.constant 137 : index
    %61 = vector.load %arg1[%c0_28, %c0_29, %c137] : memref<1x16x256xbf16, #tpu.memory_space<vmem>>, vector<1x16x64xbf16>
    %62 = vector.shape_cast %61 : vector<1x16x64xbf16> to vector<16x64xbf16>
    %63 = vector.broadcast %26 : vector<1x64xbf16> to vector<16x64xbf16>
    %64 = arith.mulf %62, %63 : vector<16x64xbf16>
    %c128_30 = arith.constant 128 : index
    %c0_31 = arith.constant 0 : index
    %65 = vector.load %arg6[%c128_30, %c0_31] : memref<144x64xbf16, #tpu.memory_space<vmem>>, vector<16x64xbf16>
    tpu.vector_store %arg6[%c128_30, %c0_31], %64 {strides = array<i32>} : memref<144x64xbf16, #tpu.memory_space<vmem>>, vector<16x64xbf16>,
    %c0_32 = arith.constant 0 : index
    %c0_33 = arith.constant 0 : index
    %c0_34 = arith.constant 0 : index
    %66 = vector.load %arg2[%c0_32, %c0_33, %c0_34] : memref<1x8x144xbf16, #tpu.memory_space<vmem>>, vector<1x8x144xbf16>
    %67 = vector.shape_cast %66 : vector<1x8x144xbf16> to vector<8x144xbf16>
    %c0_35 = arith.constant 0 : index
    %c0_36 = arith.constant 0 : index
    %68 = vector.load %arg6[%c0_35, %c0_36] : memref<144x64xbf16, #tpu.memory_space<vmem>>, vector<144x64xbf16>
    %cst = arith.constant dense<0.000000e+00> : vector<8x64xf32>
    %69 = tpu.matmul %67, %68, %cst {dimension_numbers = #tpu.dot_dimension_numbers<[1], [0], [0], [1], [0, 0, 1, 1], [], []>} : vector<8x144xbf16>, vector<144x64xbf16>, vector<8x64xf32> -> vector<8x64xf32>
    %c0_37 = arith.constant 0 : index
    %c0_38 = arith.constant 0 : index
    %70 = vector.load %arg3[%c0_37, %c0_38] : memref<8x1xf32, #tpu.memory_space<vmem>>, vector<8x1xf32>
    %71 = vector.broadcast %70 : vector<8x1xf32> to vector<8x64xf32>
    %72 = arith.addf %69, %71 : vector<8x64xf32>
    %cst_39 = arith.constant dense<0.000000e+00> : vector<8xf32>
    %73 = vector.multi_reduction <add>, %72, %cst_39 [1] : vector<8x64xf32> to vector<8xf32>
    %74 = vector.shape_cast %73 : vector<8xf32> to vector<8x1xf32>
    %cst_40 = arith.constant 6.400000e+01 : f32
    %75 = vector.broadcast %cst_40 : f32 to vector<8x1xf32>
    %76 = arith.divf %74, %75 : vector<8x1xf32>
    %77 = vector.broadcast %76 : vector<8x1xf32> to vector<8x64xf32>
    %78 = arith.subf %72, %77 : vector<8x64xf32>
    %79 = arith.mulf %78, %78 : vector<8x64xf32>
    %cst_41 = arith.constant dense<0.000000e+00> : vector<8xf32>
    %80 = vector.multi_reduction <add>, %79, %cst_41 [1] : vector<8x64xf32> to vector<8xf32>
    %81 = vector.shape_cast %80 : vector<8xf32> to vector<8x1xf32>
    %cst_42 = arith.constant 6.400000e+01 : f32
    %82 = vector.broadcast %cst_42 : f32 to vector<8x1xf32>
    %83 = arith.divf %81, %82 : vector<8x1xf32>
    %84 = vector.broadcast %76 : vector<8x1xf32> to vector<8x64xf32>
    %85 = arith.subf %72, %84 : vector<8x64xf32>
    %cst_43 = arith.constant 9.99999974E-6 : f32
    %86 = vector.broadcast %cst_43 : f32 to vector<8x1xf32>
    %87 = arith.addf %83, %86 : vector<8x1xf32>
    %88 = math.rsqrt %87 : vector<8x1xf32>
    %89 = vector.broadcast %88 : vector<8x1xf32> to vector<8x64xf32>
    %90 = arith.mulf %85, %89 : vector<8x64xf32>
    %cst_44 = arith.constant 0.000000e+00 : f32
    %91 = vector.broadcast %cst_44 : f32 to vector<8x64xf32>
    %92 = arith.maximumf %90, %91 : vector<8x64xf32>
    %cst_45 = arith.constant 0.000000e+00 : bf16
    %93 = vector.broadcast %cst_45 : bf16 to vector<16x256xbf16>
    %c0_46 = arith.constant 0 : index
    %c0_47 = arith.constant 0 : index
    %c0_48 = arith.constant 0 : index
    %94 = vector.load %arg4[%c0_46, %c0_47, %c0_48] : memref<1x16x256xbf16, #tpu.memory_space<vmem>>, vector<1x16x256xbf16>
    %95 = vector.shape_cast %94 : vector<1x16x256xbf16> to vector<16x256xbf16>
    %96 = vector.shape_cast %93 : vector<16x256xbf16> to vector<1x16x256xbf16>
    tpu.vector_store %arg4[%c0_46, %c0_47, %c0_48], %96 {strides = array<i32>} : memref<1x16x256xbf16, #tpu.memory_space<vmem>>, vector<1x16x256xbf16>,
    %97 = arith.truncf %92 : vector<8x64xf32> to vector<8x64xbf16>
    %c0_49 = arith.constant 0 : index
    %c0_50 = arith.constant 0 : index
    %c128_51 = arith.constant 128 : index
    %98 = vector.load %arg4[%c0_49, %c0_50, %c128_51] : memref<1x16x256xbf16, #tpu.memory_space<vmem>>, vector<1x8x64xbf16>
    %99 = vector.shape_cast %98 : vector<1x8x64xbf16> to vector<8x64xbf16>
    %100 = vector.shape_cast %97 : vector<8x64xbf16> to vector<1x8x64xbf16>
    tpu.vector_store %arg4[%c0_49, %c0_50, %c128_51], %100 {strides = array<i32>} : memref<1x16x256xbf16, #tpu.memory_space<vmem>>, vector<1x8x64xbf16>,
    %101 = arith.truncf %92 : vector<8x64xf32> to vector<8x64xbf16>
    %c0_52 = arith.constant 0 : index
    %c0_53 = arith.constant 0 : index
    %c0_54 = arith.constant 0 : index
    %102 = vector.load %arg5[%c0_52, %c0_53, %c0_54] : memref<1x8x64xbf16, #tpu.memory_space<vmem>>, vector<1x8x64xbf16>
    %103 = vector.shape_cast %102 : vector<1x8x64xbf16> to vector<8x64xbf16>
    %104 = vector.shape_cast %101 : vector<8x64xbf16> to vector<1x8x64xbf16>
    tpu.vector_store %arg5[%c0_52, %c0_53, %c0_54], %104 {strides = array<i32>} : memref<1x8x64xbf16, #tpu.memory_space<vmem>>, vector<1x8x64xbf16>,
    return
  }
  func.func @transform_0(%arg0: i32) -> (i32, i32, i32) {
    %c0_i32 = arith.constant 0 : i32
    %c0_i32_0 = arith.constant 0 : i32
    %c0_i32_1 = arith.constant 0 : i32
    return %arg0, %c0_i32, %c0_i32_0 : i32, i32, i32
  }
  func.func @transform_1(%arg0: i32) -> (i32, i32, i32) {
    %c0_i32 = arith.constant 0 : i32
    %c0_i32_0 = arith.constant 0 : i32
    %c0_i32_1 = arith.constant 0 : i32
    %c0_i32_2 = arith.constant 0 : i32
    return %c0_i32, %c0_i32_0, %c0_i32_1 : i32, i32, i32
  }
  func.func @transform_2(%arg0: i32) -> (i32, i32) {
    %c0_i32 = arith.constant 0 : i32
    %c0_i32_0 = arith.constant 0 : i32
    %c0_i32_1 = arith.constant 0 : i32
    return %c0_i32, %c0_i32_0 : i32, i32
  }
  func.func @transform_3(%arg0: i32) -> (i32, i32, i32) {
    %c0_i32 = arith.constant 0 : i32
    %c0_i32_0 = arith.constant 0 : i32
    %c0_i32_1 = arith.constant 0 : i32
    return %arg0, %c0_i32, %c0_i32_0 : i32, i32, i32
  }
  func.func @transform_4(%arg0: i32) -> (i32, i32, i32) {
    %c0_i32 = arith.constant 0 : i32
    %c0_i32_0 = arith.constant 0 : i32
    %c0_i32_1 = arith.constant 0 : i32
    return %arg0, %c0_i32, %c0_i32_0 : i32, i32, i32
  }
}

module attributes {stable_mosaic.version = 11 : i64} {
  func.func @_dwp_mlp_kernel(%arg0: memref<2x32xf32, #tpu.memory_space<vmem>>, %arg1: memref<32x8xf32, #tpu.memory_space<vmem>>, %arg2: memref<1x8xf32, #tpu.memory_space<vmem>>, %arg3: memref<8x8xf32, #tpu.memory_space<vmem>>, %arg4: memref<1x8xf32, #tpu.memory_space<vmem>>, %arg5: memref<8x576xf32, #tpu.memory_space<vmem>>, %arg6: memref<1x576xf32, #tpu.memory_space<vmem>>, %arg7: memref<2x576xf32, #tpu.memory_space<vmem>>) attributes {dimension_semantics = [], scalar_prefetch = 0 : i64, scratch_operands = 0 : i64, tpu.core_type = #tpu.core_type<tc>} {
    %c0 = arith.constant 0 : index
    %c0_0 = arith.constant 0 : index
    %0 = vector.load %arg0[%c0, %c0_0] : memref<2x32xf32, #tpu.memory_space<vmem>>, vector<2x32xf32>
    %c0_1 = arith.constant 0 : index
    %c0_2 = arith.constant 0 : index
    %1 = vector.load %arg1[%c0_1, %c0_2] : memref<32x8xf32, #tpu.memory_space<vmem>>, vector<32x8xf32>
    %cst = arith.constant dense<0.000000e+00> : vector<2x8xf32>
    %2 = tpu.matmul %0, %1, %cst {dimension_numbers = #tpu.dot_dimension_numbers<[1], [0], [0], [1], [0, 0, 1, 1], [], []>} : vector<2x32xf32>, vector<32x8xf32>, vector<2x8xf32> -> vector<2x8xf32>
    %c0_3 = arith.constant 0 : index
    %c0_4 = arith.constant 0 : index
    %3 = vector.load %arg2[%c0_3, %c0_4] : memref<1x8xf32, #tpu.memory_space<vmem>>, vector<1x8xf32>
    %4 = vector.broadcast %3 : vector<1x8xf32> to vector<2x8xf32>
    %5 = arith.addf %2, %4 : vector<2x8xf32>
    %cst_5 = arith.constant 0.000000e+00 : f32
    %6 = vector.broadcast %cst_5 : f32 to vector<2x8xf32>
    %7 = arith.maximumf %5, %6 : vector<2x8xf32>
    %c0_6 = arith.constant 0 : index
    %c0_7 = arith.constant 0 : index
    %8 = vector.load %arg3[%c0_6, %c0_7] : memref<8x8xf32, #tpu.memory_space<vmem>>, vector<8x8xf32>
    %cst_8 = arith.constant dense<0.000000e+00> : vector<2x8xf32>
    %9 = tpu.matmul %7, %8, %cst_8 {dimension_numbers = #tpu.dot_dimension_numbers<[1], [0], [0], [1], [0, 0, 1, 1], [], []>} : vector<2x8xf32>, vector<8x8xf32>, vector<2x8xf32> -> vector<2x8xf32>
    %c0_9 = arith.constant 0 : index
    %c0_10 = arith.constant 0 : index
    %10 = vector.load %arg4[%c0_9, %c0_10] : memref<1x8xf32, #tpu.memory_space<vmem>>, vector<1x8xf32>
    %11 = vector.broadcast %10 : vector<1x8xf32> to vector<2x8xf32>
    %12 = arith.addf %9, %11 : vector<2x8xf32>
    %cst_11 = arith.constant 0.000000e+00 : f32
    %13 = vector.broadcast %cst_11 : f32 to vector<2x8xf32>
    %14 = arith.maximumf %12, %13 : vector<2x8xf32>
    %c0_12 = arith.constant 0 : index
    %c0_13 = arith.constant 0 : index
    %15 = vector.load %arg5[%c0_12, %c0_13] : memref<8x576xf32, #tpu.memory_space<vmem>>, vector<8x576xf32>
    %cst_14 = arith.constant dense<0.000000e+00> : vector<2x576xf32>
    %16 = tpu.matmul %14, %15, %cst_14 {dimension_numbers = #tpu.dot_dimension_numbers<[1], [0], [0], [1], [0, 0, 1, 1], [], []>} : vector<2x8xf32>, vector<8x576xf32>, vector<2x576xf32> -> vector<2x576xf32>
    %c0_15 = arith.constant 0 : index
    %c0_16 = arith.constant 0 : index
    %17 = vector.load %arg6[%c0_15, %c0_16] : memref<1x576xf32, #tpu.memory_space<vmem>>, vector<1x576xf32>
    %18 = vector.broadcast %17 : vector<1x576xf32> to vector<2x576xf32>
    %19 = arith.addf %16, %18 : vector<2x576xf32>
    %c0_17 = arith.constant 0 : index
    %c0_18 = arith.constant 0 : index
    %20 = vector.load %arg7[%c0_17, %c0_18] : memref<2x576xf32, #tpu.memory_space<vmem>>, vector<2x576xf32>
    tpu.vector_store %arg7[%c0_17, %c0_18], %19 {strides = array<i32>} : memref<2x576xf32, #tpu.memory_space<vmem>>, vector<2x576xf32>,
    return
  }
}

module attributes {stable_mosaic.version = 11 : i64} {
  func.func @_conv_kernel(%arg0: i32, %arg1: memref<1x16x256xbf16, #tpu.memory_space<vmem>>, %arg2: memref<1x8x144xbf16, #tpu.memory_space<vmem>>, %arg3: memref<8x1xf32, #tpu.memory_space<vmem>>, %arg4: memref<8x1xf32, #tpu.memory_space<vmem>>, %arg5: memref<1x8x16xbf16, #tpu.memory_space<vmem>>, %arg6: memref<144x16xbf16, #tpu.memory_space<vmem>>) attributes {dimension_semantics = [#tpu.dimension_semantics<parallel>], iteration_bounds = array<i64: 2>, scalar_prefetch = 0 : i64, scratch_operands = 1 : i64, tpu.core_type = #tpu.core_type<tc>, window_params = [{transform_indices = @transform_0, window_bounds = array<i64: 1, 16, 256>}, {transform_indices = @transform_1, window_bounds = array<i64: 1, 8, 144>}, {pipeline_mode = #tpu.pipeline_mode<synchronous>, transform_indices = @transform_2, window_bounds = array<i64: 8, 1>}, {pipeline_mode = #tpu.pipeline_mode<synchronous>, transform_indices = @transform_3, window_bounds = array<i64: 8, 1>}, {transform_indices = @transform_4, window_bounds = array<i64: 1, 8, 16>}]} {
    %0 = tpu.iota {dimensions = array<i32: 1>} : vector<1x16xi32>
    %c4_i32 = arith.constant 4 : i32
    %c0_i32 = arith.constant 0 : i32
    %1 = arith.cmpi eq, %c4_i32, %c0_i32 : i32
    %c1_i32 = arith.constant 1 : i32
    %2 = arith.select %1, %c1_i32, %c4_i32 : i32
    %3 = vector.broadcast %2 : i32 to vector<1x16xi32>
    %4 = arith.remsi %0, %3 : vector<1x16xi32>
    %c0_i32_0 = arith.constant 0 : i32
    %5 = vector.broadcast %c0_i32_0 : i32 to vector<1x16xi32>
    %6 = arith.cmpi ne, %4, %5 : vector<1x16xi32>
    %c0_i32_1 = arith.constant 0 : i32
    %7 = vector.broadcast %c0_i32_1 : i32 to vector<1x16xi32>
    %8 = arith.cmpi slt, %4, %7 : vector<1x16xi32>
    %c0_i32_2 = arith.constant 0 : i32
    %9 = arith.cmpi slt, %2, %c0_i32_2 : i32
    %10 = vector.broadcast %9 : i1 to vector<1x16xi1>
    %11 = vector.broadcast %10 : vector<1x16xi1> to vector<1x16xi1>
    %12 = arith.xori %8, %11 : vector<1x16xi1>
    %13 = arith.andi %12, %6 : vector<1x16xi1>
    %14 = vector.broadcast %2 : i32 to vector<1x16xi32>
    %15 = arith.addi %4, %14 : vector<1x16xi32>
    %16 = arith.select %13, %15, %4 : vector<1x16xi1>, vector<1x16xi32>
    %c1_i32_3 = arith.constant 1 : i32
    %17 = vector.broadcast %c1_i32_3 : i32 to vector<1x16xi32>
    %18 = arith.cmpi sge, %16, %17 : vector<1x16xi32>
    %19 = arith.extui %18 : vector<1x16xi1> to vector<1x16xi32>
    %20 = arith.sitofp %19 : vector<1x16xi32> to vector<1x16xf32>
    %21 = arith.truncf %20 : vector<1x16xf32> to vector<1x16xbf16>
    %c2_i32 = arith.constant 2 : i32
    %22 = vector.broadcast %c2_i32 : i32 to vector<1x16xi32>
    %23 = arith.cmpi sle, %16, %22 : vector<1x16xi32>
    %24 = arith.extui %23 : vector<1x16xi1> to vector<1x16xi32>
    %25 = arith.sitofp %24 : vector<1x16xi32> to vector<1x16xf32>
    %26 = arith.truncf %25 : vector<1x16xf32> to vector<1x16xbf16>
    %c0 = arith.constant 0 : index
    %c0_4 = arith.constant 0 : index
    %c123 = arith.constant 123 : index
    %27 = vector.load %arg1[%c0, %c0_4, %c123] : memref<1x16x256xbf16, #tpu.memory_space<vmem>>, vector<1x16x16xbf16>
    %28 = vector.shape_cast %27 : vector<1x16x16xbf16> to vector<16x16xbf16>
    %29 = vector.broadcast %21 : vector<1x16xbf16> to vector<16x16xbf16>
    %30 = arith.mulf %28, %29 : vector<16x16xbf16>
    %c0_5 = arith.constant 0 : index
    %c0_6 = arith.constant 0 : index
    %31 = vector.load %arg6[%c0_5, %c0_6] : memref<144x16xbf16, #tpu.memory_space<vmem>>, vector<16x16xbf16>
    tpu.vector_store %arg6[%c0_5, %c0_6], %30 {strides = array<i32>} : memref<144x16xbf16, #tpu.memory_space<vmem>>, vector<16x16xbf16>,
    %c0_7 = arith.constant 0 : index
    %c0_8 = arith.constant 0 : index
    %c124 = arith.constant 124 : index
    %32 = vector.load %arg1[%c0_7, %c0_8, %c124] : memref<1x16x256xbf16, #tpu.memory_space<vmem>>, vector<1x16x16xbf16>
    %33 = vector.shape_cast %32 : vector<1x16x16xbf16> to vector<16x16xbf16>
    %c16 = arith.constant 16 : index
    %c0_9 = arith.constant 0 : index
    %34 = vector.load %arg6[%c16, %c0_9] : memref<144x16xbf16, #tpu.memory_space<vmem>>, vector<16x16xbf16>
    tpu.vector_store %arg6[%c16, %c0_9], %33 {strides = array<i32>} : memref<144x16xbf16, #tpu.memory_space<vmem>>, vector<16x16xbf16>,
    %c0_10 = arith.constant 0 : index
    %c0_11 = arith.constant 0 : index
    %c125 = arith.constant 125 : index
    %35 = vector.load %arg1[%c0_10, %c0_11, %c125] : memref<1x16x256xbf16, #tpu.memory_space<vmem>>, vector<1x16x16xbf16>
    %36 = vector.shape_cast %35 : vector<1x16x16xbf16> to vector<16x16xbf16>
    %37 = vector.broadcast %26 : vector<1x16xbf16> to vector<16x16xbf16>
    %38 = arith.mulf %36, %37 : vector<16x16xbf16>
    %c32 = arith.constant 32 : index
    %c0_12 = arith.constant 0 : index
    %39 = vector.load %arg6[%c32, %c0_12] : memref<144x16xbf16, #tpu.memory_space<vmem>>, vector<16x16xbf16>
    tpu.vector_store %arg6[%c32, %c0_12], %38 {strides = array<i32>} : memref<144x16xbf16, #tpu.memory_space<vmem>>, vector<16x16xbf16>,
    %c0_13 = arith.constant 0 : index
    %c0_14 = arith.constant 0 : index
    %c127 = arith.constant 127 : index
    %40 = vector.load %arg1[%c0_13, %c0_14, %c127] : memref<1x16x256xbf16, #tpu.memory_space<vmem>>, vector<1x16x16xbf16>
    %41 = vector.shape_cast %40 : vector<1x16x16xbf16> to vector<16x16xbf16>
    %42 = vector.broadcast %21 : vector<1x16xbf16> to vector<16x16xbf16>
    %43 = arith.mulf %41, %42 : vector<16x16xbf16>
    %c48 = arith.constant 48 : index
    %c0_15 = arith.constant 0 : index
    %44 = vector.load %arg6[%c48, %c0_15] : memref<144x16xbf16, #tpu.memory_space<vmem>>, vector<16x16xbf16>
    tpu.vector_store %arg6[%c48, %c0_15], %43 {strides = array<i32>} : memref<144x16xbf16, #tpu.memory_space<vmem>>, vector<16x16xbf16>,
    %c0_16 = arith.constant 0 : index
    %c0_17 = arith.constant 0 : index
    %c128 = arith.constant 128 : index
    %45 = vector.load %arg1[%c0_16, %c0_17, %c128] : memref<1x16x256xbf16, #tpu.memory_space<vmem>>, vector<1x16x16xbf16>
    %46 = vector.shape_cast %45 : vector<1x16x16xbf16> to vector<16x16xbf16>
    %c64 = arith.constant 64 : index
    %c0_18 = arith.constant 0 : index
    %47 = vector.load %arg6[%c64, %c0_18] : memref<144x16xbf16, #tpu.memory_space<vmem>>, vector<16x16xbf16>
    tpu.vector_store %arg6[%c64, %c0_18], %46 {strides = array<i32>} : memref<144x16xbf16, #tpu.memory_space<vmem>>, vector<16x16xbf16>,
    %c0_19 = arith.constant 0 : index
    %c0_20 = arith.constant 0 : index
    %c129 = arith.constant 129 : index
    %48 = vector.load %arg1[%c0_19, %c0_20, %c129] : memref<1x16x256xbf16, #tpu.memory_space<vmem>>, vector<1x16x16xbf16>
    %49 = vector.shape_cast %48 : vector<1x16x16xbf16> to vector<16x16xbf16>
    %50 = vector.broadcast %26 : vector<1x16xbf16> to vector<16x16xbf16>
    %51 = arith.mulf %49, %50 : vector<16x16xbf16>
    %c80 = arith.constant 80 : index
    %c0_21 = arith.constant 0 : index
    %52 = vector.load %arg6[%c80, %c0_21] : memref<144x16xbf16, #tpu.memory_space<vmem>>, vector<16x16xbf16>
    tpu.vector_store %arg6[%c80, %c0_21], %51 {strides = array<i32>} : memref<144x16xbf16, #tpu.memory_space<vmem>>, vector<16x16xbf16>,
    %c0_22 = arith.constant 0 : index
    %c0_23 = arith.constant 0 : index
    %c131 = arith.constant 131 : index
    %53 = vector.load %arg1[%c0_22, %c0_23, %c131] : memref<1x16x256xbf16, #tpu.memory_space<vmem>>, vector<1x16x16xbf16>
    %54 = vector.shape_cast %53 : vector<1x16x16xbf16> to vector<16x16xbf16>
    %55 = vector.broadcast %21 : vector<1x16xbf16> to vector<16x16xbf16>
    %56 = arith.mulf %54, %55 : vector<16x16xbf16>
    %c96 = arith.constant 96 : index
    %c0_24 = arith.constant 0 : index
    %57 = vector.load %arg6[%c96, %c0_24] : memref<144x16xbf16, #tpu.memory_space<vmem>>, vector<16x16xbf16>
    tpu.vector_store %arg6[%c96, %c0_24], %56 {strides = array<i32>} : memref<144x16xbf16, #tpu.memory_space<vmem>>, vector<16x16xbf16>,
    %c0_25 = arith.constant 0 : index
    %c0_26 = arith.constant 0 : index
    %c132 = arith.constant 132 : index
    %58 = vector.load %arg1[%c0_25, %c0_26, %c132] : memref<1x16x256xbf16, #tpu.memory_space<vmem>>, vector<1x16x16xbf16>
    %59 = vector.shape_cast %58 : vector<1x16x16xbf16> to vector<16x16xbf16>
    %c112 = arith.constant 112 : index
    %c0_27 = arith.constant 0 : index
    %60 = vector.load %arg6[%c112, %c0_27] : memref<144x16xbf16, #tpu.memory_space<vmem>>, vector<16x16xbf16>
    tpu.vector_store %arg6[%c112, %c0_27], %59 {strides = array<i32>} : memref<144x16xbf16, #tpu.memory_space<vmem>>, vector<16x16xbf16>,
    %c0_28 = arith.constant 0 : index
    %c0_29 = arith.constant 0 : index
    %c133 = arith.constant 133 : index
    %61 = vector.load %arg1[%c0_28, %c0_29, %c133] : memref<1x16x256xbf16, #tpu.memory_space<vmem>>, vector<1x16x16xbf16>
    %62 = vector.shape_cast %61 : vector<1x16x16xbf16> to vector<16x16xbf16>
    %63 = vector.broadcast %26 : vector<1x16xbf16> to vector<16x16xbf16>
    %64 = arith.mulf %62, %63 : vector<16x16xbf16>
    %c128_30 = arith.constant 128 : index
    %c0_31 = arith.constant 0 : index
    %65 = vector.load %arg6[%c128_30, %c0_31] : memref<144x16xbf16, #tpu.memory_space<vmem>>, vector<16x16xbf16>
    tpu.vector_store %arg6[%c128_30, %c0_31], %64 {strides = array<i32>} : memref<144x16xbf16, #tpu.memory_space<vmem>>, vector<16x16xbf16>,
    %c0_32 = arith.constant 0 : index
    %c0_33 = arith.constant 0 : index
    %c0_34 = arith.constant 0 : index
    %66 = vector.load %arg2[%c0_32, %c0_33, %c0_34] : memref<1x8x144xbf16, #tpu.memory_space<vmem>>, vector<1x8x144xbf16>
    %67 = vector.shape_cast %66 : vector<1x8x144xbf16> to vector<8x144xbf16>
    %c0_35 = arith.constant 0 : index
    %c0_36 = arith.constant 0 : index
    %68 = vector.load %arg6[%c0_35, %c0_36] : memref<144x16xbf16, #tpu.memory_space<vmem>>, vector<144x16xbf16>
    %cst = arith.constant dense<0.000000e+00> : vector<8x16xf32>
    %69 = tpu.matmul %67, %68, %cst {dimension_numbers = #tpu.dot_dimension_numbers<[1], [0], [0], [1], [0, 0, 1, 1], [], []>} : vector<8x144xbf16>, vector<144x16xbf16>, vector<8x16xf32> -> vector<8x16xf32>
    %cst_37 = arith.constant dense<0.000000e+00> : vector<8xf32>
    %70 = vector.multi_reduction <add>, %69, %cst_37 [1] : vector<8x16xf32> to vector<8xf32>
    %71 = vector.shape_cast %70 : vector<8xf32> to vector<8x1xf32>
    %cst_38 = arith.constant 1.600000e+01 : f32
    %72 = vector.broadcast %cst_38 : f32 to vector<8x1xf32>
    %73 = arith.divf %71, %72 : vector<8x1xf32>
    %74 = vector.broadcast %73 : vector<8x1xf32> to vector<8x16xf32>
    %75 = arith.subf %69, %74 : vector<8x16xf32>
    %76 = arith.mulf %75, %75 : vector<8x16xf32>
    %cst_39 = arith.constant dense<0.000000e+00> : vector<8xf32>
    %77 = vector.multi_reduction <add>, %76, %cst_39 [1] : vector<8x16xf32> to vector<8xf32>
    %78 = vector.shape_cast %77 : vector<8xf32> to vector<8x1xf32>
    %cst_40 = arith.constant 1.600000e+01 : f32
    %79 = vector.broadcast %cst_40 : f32 to vector<8x1xf32>
    %80 = arith.divf %78, %79 : vector<8x1xf32>
    %81 = vector.broadcast %73 : vector<8x1xf32> to vector<8x16xf32>
    %82 = arith.subf %69, %81 : vector<8x16xf32>
    %cst_41 = arith.constant 9.99999974E-6 : f32
    %83 = vector.broadcast %cst_41 : f32 to vector<8x1xf32>
    %84 = arith.addf %80, %83 : vector<8x1xf32>
    %85 = math.rsqrt %84 : vector<8x1xf32>
    %86 = vector.broadcast %85 : vector<8x1xf32> to vector<8x16xf32>
    %87 = arith.mulf %82, %86 : vector<8x16xf32>
    %c0_42 = arith.constant 0 : index
    %c0_43 = arith.constant 0 : index
    %88 = vector.load %arg3[%c0_42, %c0_43] : memref<8x1xf32, #tpu.memory_space<vmem>>, vector<8x1xf32>
    %89 = vector.broadcast %88 : vector<8x1xf32> to vector<8x16xf32>
    %90 = arith.mulf %87, %89 : vector<8x16xf32>
    %c0_44 = arith.constant 0 : index
    %c0_45 = arith.constant 0 : index
    %91 = vector.load %arg4[%c0_44, %c0_45] : memref<8x1xf32, #tpu.memory_space<vmem>>, vector<8x1xf32>
    %92 = vector.broadcast %91 : vector<8x1xf32> to vector<8x16xf32>
    %93 = arith.addf %90, %92 : vector<8x16xf32>
    %cst_46 = arith.constant 0.000000e+00 : f32
    %94 = vector.broadcast %cst_46 : f32 to vector<8x16xf32>
    %95 = arith.maximumf %93, %94 : vector<8x16xf32>
    %96 = arith.truncf %95 : vector<8x16xf32> to vector<8x16xbf16>
    %c0_47 = arith.constant 0 : index
    %c0_48 = arith.constant 0 : index
    %c0_49 = arith.constant 0 : index
    %97 = vector.load %arg5[%c0_47, %c0_48, %c0_49] : memref<1x8x16xbf16, #tpu.memory_space<vmem>>, vector<1x8x16xbf16>
    %98 = vector.shape_cast %97 : vector<1x8x16xbf16> to vector<8x16xbf16>
    %99 = vector.shape_cast %96 : vector<8x16xbf16> to vector<1x8x16xbf16>
    tpu.vector_store %arg5[%c0_47, %c0_48, %c0_49], %99 {strides = array<i32>} : memref<1x8x16xbf16, #tpu.memory_space<vmem>>, vector<1x8x16xbf16>,
    return
  }
  func.func @transform_0(%arg0: i32) -> (i32, i32, i32) {
    %c0_i32 = arith.constant 0 : i32
    %c0_i32_0 = arith.constant 0 : i32
    %c0_i32_1 = arith.constant 0 : i32
    return %arg0, %c0_i32, %c0_i32_0 : i32, i32, i32
  }
  func.func @transform_1(%arg0: i32) -> (i32, i32, i32) {
    %c0_i32 = arith.constant 0 : i32
    %c0_i32_0 = arith.constant 0 : i32
    %c0_i32_1 = arith.constant 0 : i32
    return %arg0, %c0_i32, %c0_i32_0 : i32, i32, i32
  }
  func.func @transform_2(%arg0: i32) -> (i32, i32) {
    %c0_i32 = arith.constant 0 : i32
    %c0_i32_0 = arith.constant 0 : i32
    %c0_i32_1 = arith.constant 0 : i32
    return %c0_i32, %c0_i32_0 : i32, i32
  }
  func.func @transform_3(%arg0: i32) -> (i32, i32) {
    %c0_i32 = arith.constant 0 : i32
    %c0_i32_0 = arith.constant 0 : i32
    %c0_i32_1 = arith.constant 0 : i32
    return %c0_i32, %c0_i32_0 : i32, i32
  }
  func.func @transform_4(%arg0: i32) -> (i32, i32, i32) {
    %c0_i32 = arith.constant 0 : i32
    %c0_i32_0 = arith.constant 0 : i32
    %c0_i32_1 = arith.constant 0 : i32
    return %arg0, %c0_i32, %c0_i32_0 : i32, i32, i32
  }
}

module attributes {stable_mosaic.version = 11 : i64} {
  func.func @_conv_kernel(%arg0: i32, %arg1: memref<1x16x256xbf16, #tpu.memory_space<vmem>>, %arg2: memref<1x16x256xbf16, #tpu.memory_space<vmem>>, %arg3: memref<1x4x288xbf16, #tpu.memory_space<vmem>>, %arg4: memref<4x1xf32, #tpu.memory_space<vmem>>, %arg5: memref<1x4x64xbf16, #tpu.memory_space<vmem>>, %arg6: memref<288x64xbf16, #tpu.memory_space<vmem>>) attributes {dimension_semantics = [#tpu.dimension_semantics<parallel>], iteration_bounds = array<i64: 2>, scalar_prefetch = 0 : i64, scratch_operands = 1 : i64, tpu.core_type = #tpu.core_type<tc>, window_params = [{transform_indices = @transform_0, window_bounds = array<i64: 1, 16, 256>}, {transform_indices = @transform_1, window_bounds = array<i64: 1, 16, 256>}, {pipeline_mode = #tpu.pipeline_mode<synchronous>, transform_indices = @transform_2, window_bounds = array<i64: 1, 4, 288>}, {pipeline_mode = #tpu.pipeline_mode<synchronous>, transform_indices = @transform_3, window_bounds = array<i64: 4, 1>}, {transform_indices = @transform_4, window_bounds = array<i64: 1, 4, 64>}]} {
    %0 = tpu.iota {dimensions = array<i32: 1>} : vector<1x64xi32>
    %c8_i32 = arith.constant 8 : i32
    %c0_i32 = arith.constant 0 : i32
    %1 = arith.cmpi eq, %c8_i32, %c0_i32 : i32
    %c1_i32 = arith.constant 1 : i32
    %2 = arith.select %1, %c1_i32, %c8_i32 : i32
    %3 = vector.broadcast %2 : i32 to vector<1x64xi32>
    %4 = arith.remsi %0, %3 : vector<1x64xi32>
    %c0_i32_0 = arith.constant 0 : i32
    %5 = vector.broadcast %c0_i32_0 : i32 to vector<1x64xi32>
    %6 = arith.cmpi ne, %4, %5 : vector<1x64xi32>
    %c0_i32_1 = arith.constant 0 : i32
    %7 = vector.broadcast %c0_i32_1 : i32 to vector<1x64xi32>
    %8 = arith.cmpi slt, %4, %7 : vector<1x64xi32>
    %c0_i32_2 = arith.constant 0 : i32
    %9 = arith.cmpi slt, %2, %c0_i32_2 : i32
    %10 = vector.broadcast %9 : i1 to vector<1x64xi1>
    %11 = vector.broadcast %10 : vector<1x64xi1> to vector<1x64xi1>
    %12 = arith.xori %8, %11 : vector<1x64xi1>
    %13 = arith.andi %12, %6 : vector<1x64xi1>
    %14 = vector.broadcast %2 : i32 to vector<1x64xi32>
    %15 = arith.addi %4, %14 : vector<1x64xi32>
    %16 = arith.select %13, %15, %4 : vector<1x64xi1>, vector<1x64xi32>
    %c1_i32_3 = arith.constant 1 : i32
    %17 = vector.broadcast %c1_i32_3 : i32 to vector<1x64xi32>
    %18 = arith.cmpi sge, %16, %17 : vector<1x64xi32>
    %19 = arith.extui %18 : vector<1x64xi1> to vector<1x64xi32>
    %20 = arith.sitofp %19 : vector<1x64xi32> to vector<1x64xf32>
    %21 = arith.truncf %20 : vector<1x64xf32> to vector<1x64xbf16>
    %c6_i32 = arith.constant 6 : i32
    %22 = vector.broadcast %c6_i32 : i32 to vector<1x64xi32>
    %23 = arith.cmpi sle, %16, %22 : vector<1x64xi32>
    %24 = arith.extui %23 : vector<1x64xi1> to vector<1x64xi32>
    %25 = arith.sitofp %24 : vector<1x64xi32> to vector<1x64xf32>
    %26 = arith.truncf %25 : vector<1x64xf32> to vector<1x64xbf16>
    %c0 = arith.constant 0 : index
    %c0_4 = arith.constant 0 : index
    %c119 = arith.constant 119 : index
    %27 = vector.load %arg1[%c0, %c0_4, %c119] : memref<1x16x256xbf16, #tpu.memory_space<vmem>>, vector<1x16x64xbf16>
    %28 = vector.shape_cast %27 : vector<1x16x64xbf16> to vector<16x64xbf16>
    %29 = vector.broadcast %21 : vector<1x64xbf16> to vector<16x64xbf16>
    %30 = arith.mulf %28, %29 : vector<16x64xbf16>
    %c0_5 = arith.constant 0 : index
    %c0_6 = arith.constant 0 : index
    %31 = vector.load %arg6[%c0_5, %c0_6] : memref<288x64xbf16, #tpu.memory_space<vmem>>, vector<16x64xbf16>
    tpu.vector_store %arg6[%c0_5, %c0_6], %30 {strides = array<i32>} : memref<288x64xbf16, #tpu.memory_space<vmem>>, vector<16x64xbf16>,
    %c0_7 = arith.constant 0 : index
    %c0_8 = arith.constant 0 : index
    %c120 = arith.constant 120 : index
    %32 = vector.load %arg1[%c0_7, %c0_8, %c120] : memref<1x16x256xbf16, #tpu.memory_space<vmem>>, vector<1x16x64xbf16>
    %33 = vector.shape_cast %32 : vector<1x16x64xbf16> to vector<16x64xbf16>
    %c16 = arith.constant 16 : index
    %c0_9 = arith.constant 0 : index
    %34 = vector.load %arg6[%c16, %c0_9] : memref<288x64xbf16, #tpu.memory_space<vmem>>, vector<16x64xbf16>
    tpu.vector_store %arg6[%c16, %c0_9], %33 {strides = array<i32>} : memref<288x64xbf16, #tpu.memory_space<vmem>>, vector<16x64xbf16>,
    %c0_10 = arith.constant 0 : index
    %c0_11 = arith.constant 0 : index
    %c121 = arith.constant 121 : index
    %35 = vector.load %arg1[%c0_10, %c0_11, %c121] : memref<1x16x256xbf16, #tpu.memory_space<vmem>>, vector<1x16x64xbf16>
    %36 = vector.shape_cast %35 : vector<1x16x64xbf16> to vector<16x64xbf16>
    %37 = vector.broadcast %26 : vector<1x64xbf16> to vector<16x64xbf16>
    %38 = arith.mulf %36, %37 : vector<16x64xbf16>
    %c32 = arith.constant 32 : index
    %c0_12 = arith.constant 0 : index
    %39 = vector.load %arg6[%c32, %c0_12] : memref<288x64xbf16, #tpu.memory_space<vmem>>, vector<16x64xbf16>
    tpu.vector_store %arg6[%c32, %c0_12], %38 {strides = array<i32>} : memref<288x64xbf16, #tpu.memory_space<vmem>>, vector<16x64xbf16>,
    %c0_13 = arith.constant 0 : index
    %c0_14 = arith.constant 0 : index
    %c127 = arith.constant 127 : index
    %40 = vector.load %arg1[%c0_13, %c0_14, %c127] : memref<1x16x256xbf16, #tpu.memory_space<vmem>>, vector<1x16x64xbf16>
    %41 = vector.shape_cast %40 : vector<1x16x64xbf16> to vector<16x64xbf16>
    %42 = vector.broadcast %21 : vector<1x64xbf16> to vector<16x64xbf16>
    %43 = arith.mulf %41, %42 : vector<16x64xbf16>
    %c48 = arith.constant 48 : index
    %c0_15 = arith.constant 0 : index
    %44 = vector.load %arg6[%c48, %c0_15] : memref<288x64xbf16, #tpu.memory_space<vmem>>, vector<16x64xbf16>
    tpu.vector_store %arg6[%c48, %c0_15], %43 {strides = array<i32>} : memref<288x64xbf16, #tpu.memory_space<vmem>>, vector<16x64xbf16>,
    %c0_16 = arith.constant 0 : index
    %c0_17 = arith.constant 0 : index
    %c128 = arith.constant 128 : index
    %45 = vector.load %arg1[%c0_16, %c0_17, %c128] : memref<1x16x256xbf16, #tpu.memory_space<vmem>>, vector<1x16x64xbf16>
    %46 = vector.shape_cast %45 : vector<1x16x64xbf16> to vector<16x64xbf16>
    %c64 = arith.constant 64 : index
    %c0_18 = arith.constant 0 : index
    %47 = vector.load %arg6[%c64, %c0_18] : memref<288x64xbf16, #tpu.memory_space<vmem>>, vector<16x64xbf16>
    tpu.vector_store %arg6[%c64, %c0_18], %46 {strides = array<i32>} : memref<288x64xbf16, #tpu.memory_space<vmem>>, vector<16x64xbf16>,
    %c0_19 = arith.constant 0 : index
    %c0_20 = arith.constant 0 : index
    %c129 = arith.constant 129 : index
    %48 = vector.load %arg1[%c0_19, %c0_20, %c129] : memref<1x16x256xbf16, #tpu.memory_space<vmem>>, vector<1x16x64xbf16>
    %49 = vector.shape_cast %48 : vector<1x16x64xbf16> to vector<16x64xbf16>
    %50 = vector.broadcast %26 : vector<1x64xbf16> to vector<16x64xbf16>
    %51 = arith.mulf %49, %50 : vector<16x64xbf16>
    %c80 = arith.constant 80 : index
    %c0_21 = arith.constant 0 : index
    %52 = vector.load %arg6[%c80, %c0_21] : memref<288x64xbf16, #tpu.memory_space<vmem>>, vector<16x64xbf16>
    tpu.vector_store %arg6[%c80, %c0_21], %51 {strides = array<i32>} : memref<288x64xbf16, #tpu.memory_space<vmem>>, vector<16x64xbf16>,
    %c0_22 = arith.constant 0 : index
    %c0_23 = arith.constant 0 : index
    %c135 = arith.constant 135 : index
    %53 = vector.load %arg1[%c0_22, %c0_23, %c135] : memref<1x16x256xbf16, #tpu.memory_space<vmem>>, vector<1x16x64xbf16>
    %54 = vector.shape_cast %53 : vector<1x16x64xbf16> to vector<16x64xbf16>
    %55 = vector.broadcast %21 : vector<1x64xbf16> to vector<16x64xbf16>
    %56 = arith.mulf %54, %55 : vector<16x64xbf16>
    %c96 = arith.constant 96 : index
    %c0_24 = arith.constant 0 : index
    %57 = vector.load %arg6[%c96, %c0_24] : memref<288x64xbf16, #tpu.memory_space<vmem>>, vector<16x64xbf16>
    tpu.vector_store %arg6[%c96, %c0_24], %56 {strides = array<i32>} : memref<288x64xbf16, #tpu.memory_space<vmem>>, vector<16x64xbf16>,
    %c0_25 = arith.constant 0 : index
    %c0_26 = arith.constant 0 : index
    %c136 = arith.constant 136 : index
    %58 = vector.load %arg1[%c0_25, %c0_26, %c136] : memref<1x16x256xbf16, #tpu.memory_space<vmem>>, vector<1x16x64xbf16>
    %59 = vector.shape_cast %58 : vector<1x16x64xbf16> to vector<16x64xbf16>
    %c112 = arith.constant 112 : index
    %c0_27 = arith.constant 0 : index
    %60 = vector.load %arg6[%c112, %c0_27] : memref<288x64xbf16, #tpu.memory_space<vmem>>, vector<16x64xbf16>
    tpu.vector_store %arg6[%c112, %c0_27], %59 {strides = array<i32>} : memref<288x64xbf16, #tpu.memory_space<vmem>>, vector<16x64xbf16>,
    %c0_28 = arith.constant 0 : index
    %c0_29 = arith.constant 0 : index
    %c137 = arith.constant 137 : index
    %61 = vector.load %arg1[%c0_28, %c0_29, %c137] : memref<1x16x256xbf16, #tpu.memory_space<vmem>>, vector<1x16x64xbf16>
    %62 = vector.shape_cast %61 : vector<1x16x64xbf16> to vector<16x64xbf16>
    %63 = vector.broadcast %26 : vector<1x64xbf16> to vector<16x64xbf16>
    %64 = arith.mulf %62, %63 : vector<16x64xbf16>
    %c128_30 = arith.constant 128 : index
    %c0_31 = arith.constant 0 : index
    %65 = vector.load %arg6[%c128_30, %c0_31] : memref<288x64xbf16, #tpu.memory_space<vmem>>, vector<16x64xbf16>
    tpu.vector_store %arg6[%c128_30, %c0_31], %64 {strides = array<i32>} : memref<288x64xbf16, #tpu.memory_space<vmem>>, vector<16x64xbf16>,
    %c0_32 = arith.constant 0 : index
    %c0_33 = arith.constant 0 : index
    %c119_34 = arith.constant 119 : index
    %66 = vector.load %arg2[%c0_32, %c0_33, %c119_34] : memref<1x16x256xbf16, #tpu.memory_space<vmem>>, vector<1x16x64xbf16>
    %67 = vector.shape_cast %66 : vector<1x16x64xbf16> to vector<16x64xbf16>
    %68 = vector.broadcast %21 : vector<1x64xbf16> to vector<16x64xbf16>
    %69 = arith.mulf %67, %68 : vector<16x64xbf16>
    %c144 = arith.constant 144 : index
    %c0_35 = arith.constant 0 : index
    %70 = vector.load %arg6[%c144, %c0_35] : memref<288x64xbf16, #tpu.memory_space<vmem>>, vector<16x64xbf16>
    tpu.vector_store %arg6[%c144, %c0_35], %69 {strides = array<i32>} : memref<288x64xbf16, #tpu.memory_space<vmem>>, vector<16x64xbf16>,
    %c0_36 = arith.constant 0 : index
    %c0_37 = arith.constant 0 : index
    %c120_38 = arith.constant 120 : index
    %71 = vector.load %arg2[%c0_36, %c0_37, %c120_38] : memref<1x16x256xbf16, #tpu.memory_space<vmem>>, vector<1x16x64xbf16>
    %72 = vector.shape_cast %71 : vector<1x16x64xbf16> to vector<16x64xbf16>
    %c160 = arith.constant 160 : index
    %c0_39 = arith.constant 0 : index
    %73 = vector.load %arg6[%c160, %c0_39] : memref<288x64xbf16, #tpu.memory_space<vmem>>, vector<16x64xbf16>
    tpu.vector_store %arg6[%c160, %c0_39], %72 {strides = array<i32>} : memref<288x64xbf16, #tpu.memory_space<vmem>>, vector<16x64xbf16>,
    %c0_40 = arith.constant 0 : index
    %c0_41 = arith.constant 0 : index
    %c121_42 = arith.constant 121 : index
    %74 = vector.load %arg2[%c0_40, %c0_41, %c121_42] : memref<1x16x256xbf16, #tpu.memory_space<vmem>>, vector<1x16x64xbf16>
    %75 = vector.shape_cast %74 : vector<1x16x64xbf16> to vector<16x64xbf16>
    %76 = vector.broadcast %26 : vector<1x64xbf16> to vector<16x64xbf16>
    %77 = arith.mulf %75, %76 : vector<16x64xbf16>
    %c176 = arith.constant 176 : index
    %c0_43 = arith.constant 0 : index
    %78 = vector.load %arg6[%c176, %c0_43] : memref<288x64xbf16, #tpu.memory_space<vmem>>, vector<16x64xbf16>
    tpu.vector_store %arg6[%c176, %c0_43], %77 {strides = array<i32>} : memref<288x64xbf16, #tpu.memory_space<vmem>>, vector<16x64xbf16>,
    %c0_44 = arith.constant 0 : index
    %c0_45 = arith.constant 0 : index
    %c127_46 = arith.constant 127 : index
    %79 = vector.load %arg2[%c0_44, %c0_45, %c127_46] : memref<1x16x256xbf16, #tpu.memory_space<vmem>>, vector<1x16x64xbf16>
    %80 = vector.shape_cast %79 : vector<1x16x64xbf16> to vector<16x64xbf16>
    %81 = vector.broadcast %21 : vector<1x64xbf16> to vector<16x64xbf16>
    %82 = arith.mulf %80, %81 : vector<16x64xbf16>
    %c192 = arith.constant 192 : index
    %c0_47 = arith.constant 0 : index
    %83 = vector.load %arg6[%c192, %c0_47] : memref<288x64xbf16, #tpu.memory_space<vmem>>, vector<16x64xbf16>
    tpu.vector_store %arg6[%c192, %c0_47], %82 {strides = array<i32>} : memref<288x64xbf16, #tpu.memory_space<vmem>>, vector<16x64xbf16>,
    %c0_48 = arith.constant 0 : index
    %c0_49 = arith.constant 0 : index
    %c128_50 = arith.constant 128 : index
    %84 = vector.load %arg2[%c0_48, %c0_49, %c128_50] : memref<1x16x256xbf16, #tpu.memory_space<vmem>>, vector<1x16x64xbf16>
    %85 = vector.shape_cast %84 : vector<1x16x64xbf16> to vector<16x64xbf16>
    %c208 = arith.constant 208 : index
    %c0_51 = arith.constant 0 : index
    %86 = vector.load %arg6[%c208, %c0_51] : memref<288x64xbf16, #tpu.memory_space<vmem>>, vector<16x64xbf16>
    tpu.vector_store %arg6[%c208, %c0_51], %85 {strides = array<i32>} : memref<288x64xbf16, #tpu.memory_space<vmem>>, vector<16x64xbf16>,
    %c0_52 = arith.constant 0 : index
    %c0_53 = arith.constant 0 : index
    %c129_54 = arith.constant 129 : index
    %87 = vector.load %arg2[%c0_52, %c0_53, %c129_54] : memref<1x16x256xbf16, #tpu.memory_space<vmem>>, vector<1x16x64xbf16>
    %88 = vector.shape_cast %87 : vector<1x16x64xbf16> to vector<16x64xbf16>
    %89 = vector.broadcast %26 : vector<1x64xbf16> to vector<16x64xbf16>
    %90 = arith.mulf %88, %89 : vector<16x64xbf16>
    %c224 = arith.constant 224 : index
    %c0_55 = arith.constant 0 : index
    %91 = vector.load %arg6[%c224, %c0_55] : memref<288x64xbf16, #tpu.memory_space<vmem>>, vector<16x64xbf16>
    tpu.vector_store %arg6[%c224, %c0_55], %90 {strides = array<i32>} : memref<288x64xbf16, #tpu.memory_space<vmem>>, vector<16x64xbf16>,
    %c0_56 = arith.constant 0 : index
    %c0_57 = arith.constant 0 : index
    %c135_58 = arith.constant 135 : index
    %92 = vector.load %arg2[%c0_56, %c0_57, %c135_58] : memref<1x16x256xbf16, #tpu.memory_space<vmem>>, vector<1x16x64xbf16>
    %93 = vector.shape_cast %92 : vector<1x16x64xbf16> to vector<16x64xbf16>
    %94 = vector.broadcast %21 : vector<1x64xbf16> to vector<16x64xbf16>
    %95 = arith.mulf %93, %94 : vector<16x64xbf16>
    %c240 = arith.constant 240 : index
    %c0_59 = arith.constant 0 : index
    %96 = vector.load %arg6[%c240, %c0_59] : memref<288x64xbf16, #tpu.memory_space<vmem>>, vector<16x64xbf16>
    tpu.vector_store %arg6[%c240, %c0_59], %95 {strides = array<i32>} : memref<288x64xbf16, #tpu.memory_space<vmem>>, vector<16x64xbf16>,
    %c0_60 = arith.constant 0 : index
    %c0_61 = arith.constant 0 : index
    %c136_62 = arith.constant 136 : index
    %97 = vector.load %arg2[%c0_60, %c0_61, %c136_62] : memref<1x16x256xbf16, #tpu.memory_space<vmem>>, vector<1x16x64xbf16>
    %98 = vector.shape_cast %97 : vector<1x16x64xbf16> to vector<16x64xbf16>
    %c256 = arith.constant 256 : index
    %c0_63 = arith.constant 0 : index
    %99 = vector.load %arg6[%c256, %c0_63] : memref<288x64xbf16, #tpu.memory_space<vmem>>, vector<16x64xbf16>
    tpu.vector_store %arg6[%c256, %c0_63], %98 {strides = array<i32>} : memref<288x64xbf16, #tpu.memory_space<vmem>>, vector<16x64xbf16>,
    %c0_64 = arith.constant 0 : index
    %c0_65 = arith.constant 0 : index
    %c137_66 = arith.constant 137 : index
    %100 = vector.load %arg2[%c0_64, %c0_65, %c137_66] : memref<1x16x256xbf16, #tpu.memory_space<vmem>>, vector<1x16x64xbf16>
    %101 = vector.shape_cast %100 : vector<1x16x64xbf16> to vector<16x64xbf16>
    %102 = vector.broadcast %26 : vector<1x64xbf16> to vector<16x64xbf16>
    %103 = arith.mulf %101, %102 : vector<16x64xbf16>
    %c272 = arith.constant 272 : index
    %c0_67 = arith.constant 0 : index
    %104 = vector.load %arg6[%c272, %c0_67] : memref<288x64xbf16, #tpu.memory_space<vmem>>, vector<16x64xbf16>
    tpu.vector_store %arg6[%c272, %c0_67], %103 {strides = array<i32>} : memref<288x64xbf16, #tpu.memory_space<vmem>>, vector<16x64xbf16>,
    %c0_68 = arith.constant 0 : index
    %c0_69 = arith.constant 0 : index
    %c0_70 = arith.constant 0 : index
    %105 = vector.load %arg3[%c0_68, %c0_69, %c0_70] : memref<1x4x288xbf16, #tpu.memory_space<vmem>>, vector<1x4x288xbf16>
    %106 = vector.shape_cast %105 : vector<1x4x288xbf16> to vector<4x288xbf16>
    %c0_71 = arith.constant 0 : index
    %c0_72 = arith.constant 0 : index
    %107 = vector.load %arg6[%c0_71, %c0_72] : memref<288x64xbf16, #tpu.memory_space<vmem>>, vector<288x64xbf16>
    %cst = arith.constant dense<0.000000e+00> : vector<4x64xf32>
    %108 = tpu.matmul %106, %107, %cst {dimension_numbers = #tpu.dot_dimension_numbers<[1], [0], [0], [1], [0, 0, 1, 1], [], []>} : vector<4x288xbf16>, vector<288x64xbf16>, vector<4x64xf32> -> vector<4x64xf32>
    %c0_73 = arith.constant 0 : index
    %c0_74 = arith.constant 0 : index
    %109 = vector.load %arg4[%c0_73, %c0_74] : memref<4x1xf32, #tpu.memory_space<vmem>>, vector<4x1xf32>
    %110 = vector.broadcast %109 : vector<4x1xf32> to vector<4x64xf32>
    %111 = arith.addf %108, %110 : vector<4x64xf32>
    %cst_75 = arith.constant dense<0.000000e+00> : vector<4xf32>
    %112 = vector.multi_reduction <add>, %111, %cst_75 [1] : vector<4x64xf32> to vector<4xf32>
    %113 = vector.shape_cast %112 : vector<4xf32> to vector<4x1xf32>
    %cst_76 = arith.constant 6.400000e+01 : f32
    %114 = vector.broadcast %cst_76 : f32 to vector<4x1xf32>
    %115 = arith.divf %113, %114 : vector<4x1xf32>
    %116 = vector.broadcast %115 : vector<4x1xf32> to vector<4x64xf32>
    %117 = arith.subf %111, %116 : vector<4x64xf32>
    %118 = arith.mulf %117, %117 : vector<4x64xf32>
    %cst_77 = arith.constant dense<0.000000e+00> : vector<4xf32>
    %119 = vector.multi_reduction <add>, %118, %cst_77 [1] : vector<4x64xf32> to vector<4xf32>
    %120 = vector.shape_cast %119 : vector<4xf32> to vector<4x1xf32>
    %cst_78 = arith.constant 6.400000e+01 : f32
    %121 = vector.broadcast %cst_78 : f32 to vector<4x1xf32>
    %122 = arith.divf %120, %121 : vector<4x1xf32>
    %123 = vector.broadcast %115 : vector<4x1xf32> to vector<4x64xf32>
    %124 = arith.subf %111, %123 : vector<4x64xf32>
    %cst_79 = arith.constant 9.99999974E-6 : f32
    %125 = vector.broadcast %cst_79 : f32 to vector<4x1xf32>
    %126 = arith.addf %122, %125 : vector<4x1xf32>
    %127 = math.rsqrt %126 : vector<4x1xf32>
    %128 = vector.broadcast %127 : vector<4x1xf32> to vector<4x64xf32>
    %129 = arith.mulf %124, %128 : vector<4x64xf32>
    %cst_80 = arith.constant 0.000000e+00 : f32
    %130 = vector.broadcast %cst_80 : f32 to vector<4x64xf32>
    %131 = arith.maximumf %129, %130 : vector<4x64xf32>
    %132 = arith.truncf %131 : vector<4x64xf32> to vector<4x64xbf16>
    %c0_81 = arith.constant 0 : index
    %c0_82 = arith.constant 0 : index
    %c0_83 = arith.constant 0 : index
    %133 = vector.load %arg5[%c0_81, %c0_82, %c0_83] : memref<1x4x64xbf16, #tpu.memory_space<vmem>>, vector<1x4x64xbf16>
    %134 = vector.shape_cast %133 : vector<1x4x64xbf16> to vector<4x64xbf16>
    %135 = vector.shape_cast %132 : vector<4x64xbf16> to vector<1x4x64xbf16>
    tpu.vector_store %arg5[%c0_81, %c0_82, %c0_83], %135 {strides = array<i32>} : memref<1x4x64xbf16, #tpu.memory_space<vmem>>, vector<1x4x64xbf16>,
    return
  }
  func.func @transform_0(%arg0: i32) -> (i32, i32, i32) {
    %c0_i32 = arith.constant 0 : i32
    %c0_i32_0 = arith.constant 0 : i32
    %c0_i32_1 = arith.constant 0 : i32
    return %arg0, %c0_i32, %c0_i32_0 : i32, i32, i32
  }
  func.func @transform_1(%arg0: i32) -> (i32, i32, i32) {
    %c0_i32 = arith.constant 0 : i32
    %c0_i32_0 = arith.constant 0 : i32
    %c0_i32_1 = arith.constant 0 : i32
    return %arg0, %c0_i32, %c0_i32_0 : i32, i32, i32
  }
  func.func @transform_2(%arg0: i32) -> (i32, i32, i32) {
    %c0_i32 = arith.constant 0 : i32
    %c0_i32_0 = arith.constant 0 : i32
    %c0_i32_1 = arith.constant 0 : i32
    %c0_i32_2 = arith.constant 0 : i32
    return %c0_i32, %c0_i32_0, %c0_i32_1 : i32, i32, i32
  }
  func.func @transform_3(%arg0: i32) -> (i32, i32) {
    %c0_i32 = arith.constant 0 : i32
    %c0_i32_0 = arith.constant 0 : i32
    %c0_i32_1 = arith.constant 0 : i32
    return %c0_i32, %c0_i32_0 : i32, i32
  }
  func.func @transform_4(%arg0: i32) -> (i32, i32, i32) {
    %c0_i32 = arith.constant 0 : i32
    %c0_i32_0 = arith.constant 0 : i32
    %c0_i32_1 = arith.constant 0 : i32
    return %arg0, %c0_i32, %c0_i32_0 : i32, i32, i32
  }
}

module attributes {stable_mosaic.version = 11 : i64} {
  func.func @_conv_kernel(%arg0: i32, %arg1: memref<1x16x256xbf16, #tpu.memory_space<vmem>>, %arg2: memref<1x8x144xbf16, #tpu.memory_space<vmem>>, %arg3: memref<1x16x256xbf16, #tpu.memory_space<vmem>>, %arg4: memref<144x64xbf16, #tpu.memory_space<vmem>>) attributes {dimension_semantics = [#tpu.dimension_semantics<parallel>], iteration_bounds = array<i64: 2>, scalar_prefetch = 0 : i64, scratch_operands = 1 : i64, tpu.core_type = #tpu.core_type<tc>, window_params = [{transform_indices = @transform_0, window_bounds = array<i64: 1, 16, 256>}, {transform_indices = @transform_1, window_bounds = array<i64: 1, 8, 144>}, {transform_indices = @transform_2, window_bounds = array<i64: 1, 16, 256>}]} {
    %0 = tpu.iota {dimensions = array<i32: 1>} : vector<1x64xi32>
    %c8_i32 = arith.constant 8 : i32
    %c0_i32 = arith.constant 0 : i32
    %1 = arith.cmpi eq, %c8_i32, %c0_i32 : i32
    %c1_i32 = arith.constant 1 : i32
    %2 = arith.select %1, %c1_i32, %c8_i32 : i32
    %3 = vector.broadcast %2 : i32 to vector<1x64xi32>
    %4 = arith.remsi %0, %3 : vector<1x64xi32>
    %c0_i32_0 = arith.constant 0 : i32
    %5 = vector.broadcast %c0_i32_0 : i32 to vector<1x64xi32>
    %6 = arith.cmpi ne, %4, %5 : vector<1x64xi32>
    %c0_i32_1 = arith.constant 0 : i32
    %7 = vector.broadcast %c0_i32_1 : i32 to vector<1x64xi32>
    %8 = arith.cmpi slt, %4, %7 : vector<1x64xi32>
    %c0_i32_2 = arith.constant 0 : i32
    %9 = arith.cmpi slt, %2, %c0_i32_2 : i32
    %10 = vector.broadcast %9 : i1 to vector<1x64xi1>
    %11 = vector.broadcast %10 : vector<1x64xi1> to vector<1x64xi1>
    %12 = arith.xori %8, %11 : vector<1x64xi1>
    %13 = arith.andi %12, %6 : vector<1x64xi1>
    %14 = vector.broadcast %2 : i32 to vector<1x64xi32>
    %15 = arith.addi %4, %14 : vector<1x64xi32>
    %16 = arith.select %13, %15, %4 : vector<1x64xi1>, vector<1x64xi32>
    %c1_i32_3 = arith.constant 1 : i32
    %17 = vector.broadcast %c1_i32_3 : i32 to vector<1x64xi32>
    %18 = arith.cmpi sge, %16, %17 : vector<1x64xi32>
    %19 = arith.extui %18 : vector<1x64xi1> to vector<1x64xi32>
    %20 = arith.sitofp %19 : vector<1x64xi32> to vector<1x64xf32>
    %21 = arith.truncf %20 : vector<1x64xf32> to vector<1x64xbf16>
    %c6_i32 = arith.constant 6 : i32
    %22 = vector.broadcast %c6_i32 : i32 to vector<1x64xi32>
    %23 = arith.cmpi sle, %16, %22 : vector<1x64xi32>
    %24 = arith.extui %23 : vector<1x64xi1> to vector<1x64xi32>
    %25 = arith.sitofp %24 : vector<1x64xi32> to vector<1x64xf32>
    %26 = arith.truncf %25 : vector<1x64xf32> to vector<1x64xbf16>
    %c0 = arith.constant 0 : index
    %c0_4 = arith.constant 0 : index
    %c119 = arith.constant 119 : index
    %27 = vector.load %arg1[%c0, %c0_4, %c119] : memref<1x16x256xbf16, #tpu.memory_space<vmem>>, vector<1x16x64xbf16>
    %28 = vector.shape_cast %27 : vector<1x16x64xbf16> to vector<16x64xbf16>
    %29 = vector.broadcast %21 : vector<1x64xbf16> to vector<16x64xbf16>
    %30 = arith.mulf %28, %29 : vector<16x64xbf16>
    %c0_5 = arith.constant 0 : index
    %c0_6 = arith.constant 0 : index
    %31 = vector.load %arg4[%c0_5, %c0_6] : memref<144x64xbf16, #tpu.memory_space<vmem>>, vector<16x64xbf16>
    tpu.vector_store %arg4[%c0_5, %c0_6], %30 {strides = array<i32>} : memref<144x64xbf16, #tpu.memory_space<vmem>>, vector<16x64xbf16>,
    %c0_7 = arith.constant 0 : index
    %c0_8 = arith.constant 0 : index
    %c120 = arith.constant 120 : index
    %32 = vector.load %arg1[%c0_7, %c0_8, %c120] : memref<1x16x256xbf16, #tpu.memory_space<vmem>>, vector<1x16x64xbf16>
    %33 = vector.shape_cast %32 : vector<1x16x64xbf16> to vector<16x64xbf16>
    %c16 = arith.constant 16 : index
    %c0_9 = arith.constant 0 : index
    %34 = vector.load %arg4[%c16, %c0_9] : memref<144x64xbf16, #tpu.memory_space<vmem>>, vector<16x64xbf16>
    tpu.vector_store %arg4[%c16, %c0_9], %33 {strides = array<i32>} : memref<144x64xbf16, #tpu.memory_space<vmem>>, vector<16x64xbf16>,
    %c0_10 = arith.constant 0 : index
    %c0_11 = arith.constant 0 : index
    %c121 = arith.constant 121 : index
    %35 = vector.load %arg1[%c0_10, %c0_11, %c121] : memref<1x16x256xbf16, #tpu.memory_space<vmem>>, vector<1x16x64xbf16>
    %36 = vector.shape_cast %35 : vector<1x16x64xbf16> to vector<16x64xbf16>
    %37 = vector.broadcast %26 : vector<1x64xbf16> to vector<16x64xbf16>
    %38 = arith.mulf %36, %37 : vector<16x64xbf16>
    %c32 = arith.constant 32 : index
    %c0_12 = arith.constant 0 : index
    %39 = vector.load %arg4[%c32, %c0_12] : memref<144x64xbf16, #tpu.memory_space<vmem>>, vector<16x64xbf16>
    tpu.vector_store %arg4[%c32, %c0_12], %38 {strides = array<i32>} : memref<144x64xbf16, #tpu.memory_space<vmem>>, vector<16x64xbf16>,
    %c0_13 = arith.constant 0 : index
    %c0_14 = arith.constant 0 : index
    %c127 = arith.constant 127 : index
    %40 = vector.load %arg1[%c0_13, %c0_14, %c127] : memref<1x16x256xbf16, #tpu.memory_space<vmem>>, vector<1x16x64xbf16>
    %41 = vector.shape_cast %40 : vector<1x16x64xbf16> to vector<16x64xbf16>
    %42 = vector.broadcast %21 : vector<1x64xbf16> to vector<16x64xbf16>
    %43 = arith.mulf %41, %42 : vector<16x64xbf16>
    %c48 = arith.constant 48 : index
    %c0_15 = arith.constant 0 : index
    %44 = vector.load %arg4[%c48, %c0_15] : memref<144x64xbf16, #tpu.memory_space<vmem>>, vector<16x64xbf16>
    tpu.vector_store %arg4[%c48, %c0_15], %43 {strides = array<i32>} : memref<144x64xbf16, #tpu.memory_space<vmem>>, vector<16x64xbf16>,
    %c0_16 = arith.constant 0 : index
    %c0_17 = arith.constant 0 : index
    %c128 = arith.constant 128 : index
    %45 = vector.load %arg1[%c0_16, %c0_17, %c128] : memref<1x16x256xbf16, #tpu.memory_space<vmem>>, vector<1x16x64xbf16>
    %46 = vector.shape_cast %45 : vector<1x16x64xbf16> to vector<16x64xbf16>
    %c64 = arith.constant 64 : index
    %c0_18 = arith.constant 0 : index
    %47 = vector.load %arg4[%c64, %c0_18] : memref<144x64xbf16, #tpu.memory_space<vmem>>, vector<16x64xbf16>
    tpu.vector_store %arg4[%c64, %c0_18], %46 {strides = array<i32>} : memref<144x64xbf16, #tpu.memory_space<vmem>>, vector<16x64xbf16>,
    %c0_19 = arith.constant 0 : index
    %c0_20 = arith.constant 0 : index
    %c129 = arith.constant 129 : index
    %48 = vector.load %arg1[%c0_19, %c0_20, %c129] : memref<1x16x256xbf16, #tpu.memory_space<vmem>>, vector<1x16x64xbf16>
    %49 = vector.shape_cast %48 : vector<1x16x64xbf16> to vector<16x64xbf16>
    %50 = vector.broadcast %26 : vector<1x64xbf16> to vector<16x64xbf16>
    %51 = arith.mulf %49, %50 : vector<16x64xbf16>
    %c80 = arith.constant 80 : index
    %c0_21 = arith.constant 0 : index
    %52 = vector.load %arg4[%c80, %c0_21] : memref<144x64xbf16, #tpu.memory_space<vmem>>, vector<16x64xbf16>
    tpu.vector_store %arg4[%c80, %c0_21], %51 {strides = array<i32>} : memref<144x64xbf16, #tpu.memory_space<vmem>>, vector<16x64xbf16>,
    %c0_22 = arith.constant 0 : index
    %c0_23 = arith.constant 0 : index
    %c135 = arith.constant 135 : index
    %53 = vector.load %arg1[%c0_22, %c0_23, %c135] : memref<1x16x256xbf16, #tpu.memory_space<vmem>>, vector<1x16x64xbf16>
    %54 = vector.shape_cast %53 : vector<1x16x64xbf16> to vector<16x64xbf16>
    %55 = vector.broadcast %21 : vector<1x64xbf16> to vector<16x64xbf16>
    %56 = arith.mulf %54, %55 : vector<16x64xbf16>
    %c96 = arith.constant 96 : index
    %c0_24 = arith.constant 0 : index
    %57 = vector.load %arg4[%c96, %c0_24] : memref<144x64xbf16, #tpu.memory_space<vmem>>, vector<16x64xbf16>
    tpu.vector_store %arg4[%c96, %c0_24], %56 {strides = array<i32>} : memref<144x64xbf16, #tpu.memory_space<vmem>>, vector<16x64xbf16>,
    %c0_25 = arith.constant 0 : index
    %c0_26 = arith.constant 0 : index
    %c136 = arith.constant 136 : index
    %58 = vector.load %arg1[%c0_25, %c0_26, %c136] : memref<1x16x256xbf16, #tpu.memory_space<vmem>>, vector<1x16x64xbf16>
    %59 = vector.shape_cast %58 : vector<1x16x64xbf16> to vector<16x64xbf16>
    %c112 = arith.constant 112 : index
    %c0_27 = arith.constant 0 : index
    %60 = vector.load %arg4[%c112, %c0_27] : memref<144x64xbf16, #tpu.memory_space<vmem>>, vector<16x64xbf16>
    tpu.vector_store %arg4[%c112, %c0_27], %59 {strides = array<i32>} : memref<144x64xbf16, #tpu.memory_space<vmem>>, vector<16x64xbf16>,
    %c0_28 = arith.constant 0 : index
    %c0_29 = arith.constant 0 : index
    %c137 = arith.constant 137 : index
    %61 = vector.load %arg1[%c0_28, %c0_29, %c137] : memref<1x16x256xbf16, #tpu.memory_space<vmem>>, vector<1x16x64xbf16>
    %62 = vector.shape_cast %61 : vector<1x16x64xbf16> to vector<16x64xbf16>
    %63 = vector.broadcast %26 : vector<1x64xbf16> to vector<16x64xbf16>
    %64 = arith.mulf %62, %63 : vector<16x64xbf16>
    %c128_30 = arith.constant 128 : index
    %c0_31 = arith.constant 0 : index
    %65 = vector.load %arg4[%c128_30, %c0_31] : memref<144x64xbf16, #tpu.memory_space<vmem>>, vector<16x64xbf16>
    tpu.vector_store %arg4[%c128_30, %c0_31], %64 {strides = array<i32>} : memref<144x64xbf16, #tpu.memory_space<vmem>>, vector<16x64xbf16>,
    %c0_32 = arith.constant 0 : index
    %c0_33 = arith.constant 0 : index
    %c0_34 = arith.constant 0 : index
    %66 = vector.load %arg2[%c0_32, %c0_33, %c0_34] : memref<1x8x144xbf16, #tpu.memory_space<vmem>>, vector<1x8x144xbf16>
    %67 = vector.shape_cast %66 : vector<1x8x144xbf16> to vector<8x144xbf16>
    %c0_35 = arith.constant 0 : index
    %c0_36 = arith.constant 0 : index
    %68 = vector.load %arg4[%c0_35, %c0_36] : memref<144x64xbf16, #tpu.memory_space<vmem>>, vector<144x64xbf16>
    %cst = arith.constant dense<0.000000e+00> : vector<8x64xf32>
    %69 = tpu.matmul %67, %68, %cst {dimension_numbers = #tpu.dot_dimension_numbers<[1], [0], [0], [1], [0, 0, 1, 1], [], []>} : vector<8x144xbf16>, vector<144x64xbf16>, vector<8x64xf32> -> vector<8x64xf32>
    %cst_37 = arith.constant 0.000000e+00 : bf16
    %70 = vector.broadcast %cst_37 : bf16 to vector<16x256xbf16>
    %c0_38 = arith.constant 0 : index
    %c0_39 = arith.constant 0 : index
    %c0_40 = arith.constant 0 : index
    %71 = vector.load %arg3[%c0_38, %c0_39, %c0_40] : memref<1x16x256xbf16, #tpu.memory_space<vmem>>, vector<1x16x256xbf16>
    %72 = vector.shape_cast %71 : vector<1x16x256xbf16> to vector<16x256xbf16>
    %73 = vector.shape_cast %70 : vector<16x256xbf16> to vector<1x16x256xbf16>
    tpu.vector_store %arg3[%c0_38, %c0_39, %c0_40], %73 {strides = array<i32>} : memref<1x16x256xbf16, #tpu.memory_space<vmem>>, vector<1x16x256xbf16>,
    %74 = arith.truncf %69 : vector<8x64xf32> to vector<8x64xbf16>
    %c0_41 = arith.constant 0 : index
    %c0_42 = arith.constant 0 : index
    %c128_43 = arith.constant 128 : index
    %75 = vector.load %arg3[%c0_41, %c0_42, %c128_43] : memref<1x16x256xbf16, #tpu.memory_space<vmem>>, vector<1x8x64xbf16>
    %76 = vector.shape_cast %75 : vector<1x8x64xbf16> to vector<8x64xbf16>
    %77 = vector.shape_cast %74 : vector<8x64xbf16> to vector<1x8x64xbf16>
    tpu.vector_store %arg3[%c0_41, %c0_42, %c128_43], %77 {strides = array<i32>} : memref<1x16x256xbf16, #tpu.memory_space<vmem>>, vector<1x8x64xbf16>,
    return
  }
  func.func @transform_0(%arg0: i32) -> (i32, i32, i32) {
    %c0_i32 = arith.constant 0 : i32
    %c0_i32_0 = arith.constant 0 : i32
    %c0_i32_1 = arith.constant 0 : i32
    return %arg0, %c0_i32, %c0_i32_0 : i32, i32, i32
  }
  func.func @transform_1(%arg0: i32) -> (i32, i32, i32) {
    %c0_i32 = arith.constant 0 : i32
    %c0_i32_0 = arith.constant 0 : i32
    %c0_i32_1 = arith.constant 0 : i32
    return %arg0, %c0_i32, %c0_i32_0 : i32, i32, i32
  }
  func.func @transform_2(%arg0: i32) -> (i32, i32, i32) {
    %c0_i32 = arith.constant 0 : i32
    %c0_i32_0 = arith.constant 0 : i32
    %c0_i32_1 = arith.constant 0 : i32
    return %arg0, %c0_i32, %c0_i32_0 : i32, i32, i32
  }
}

module attributes {stable_mosaic.version = 11 : i64} {
  func.func @_dwp_mlp_kernel(%arg0: memref<2x32xf32, #tpu.memory_space<vmem>>, %arg1: memref<32x8xf32, #tpu.memory_space<vmem>>, %arg2: memref<1x8xf32, #tpu.memory_space<vmem>>, %arg3: memref<8x8xf32, #tpu.memory_space<vmem>>, %arg4: memref<1x8xf32, #tpu.memory_space<vmem>>, %arg5: memref<8x144xf32, #tpu.memory_space<vmem>>, %arg6: memref<1x144xf32, #tpu.memory_space<vmem>>, %arg7: memref<2x144xf32, #tpu.memory_space<vmem>>) attributes {dimension_semantics = [], scalar_prefetch = 0 : i64, scratch_operands = 0 : i64, tpu.core_type = #tpu.core_type<tc>} {
    %c0 = arith.constant 0 : index
    %c0_0 = arith.constant 0 : index
    %0 = vector.load %arg0[%c0, %c0_0] : memref<2x32xf32, #tpu.memory_space<vmem>>, vector<2x32xf32>
    %c0_1 = arith.constant 0 : index
    %c0_2 = arith.constant 0 : index
    %1 = vector.load %arg1[%c0_1, %c0_2] : memref<32x8xf32, #tpu.memory_space<vmem>>, vector<32x8xf32>
    %cst = arith.constant dense<0.000000e+00> : vector<2x8xf32>
    %2 = tpu.matmul %0, %1, %cst {dimension_numbers = #tpu.dot_dimension_numbers<[1], [0], [0], [1], [0, 0, 1, 1], [], []>} : vector<2x32xf32>, vector<32x8xf32>, vector<2x8xf32> -> vector<2x8xf32>
    %c0_3 = arith.constant 0 : index
    %c0_4 = arith.constant 0 : index
    %3 = vector.load %arg2[%c0_3, %c0_4] : memref<1x8xf32, #tpu.memory_space<vmem>>, vector<1x8xf32>
    %4 = vector.broadcast %3 : vector<1x8xf32> to vector<2x8xf32>
    %5 = arith.addf %2, %4 : vector<2x8xf32>
    %cst_5 = arith.constant 0.000000e+00 : f32
    %6 = vector.broadcast %cst_5 : f32 to vector<2x8xf32>
    %7 = arith.maximumf %5, %6 : vector<2x8xf32>
    %c0_6 = arith.constant 0 : index
    %c0_7 = arith.constant 0 : index
    %8 = vector.load %arg3[%c0_6, %c0_7] : memref<8x8xf32, #tpu.memory_space<vmem>>, vector<8x8xf32>
    %cst_8 = arith.constant dense<0.000000e+00> : vector<2x8xf32>
    %9 = tpu.matmul %7, %8, %cst_8 {dimension_numbers = #tpu.dot_dimension_numbers<[1], [0], [0], [1], [0, 0, 1, 1], [], []>} : vector<2x8xf32>, vector<8x8xf32>, vector<2x8xf32> -> vector<2x8xf32>
    %c0_9 = arith.constant 0 : index
    %c0_10 = arith.constant 0 : index
    %10 = vector.load %arg4[%c0_9, %c0_10] : memref<1x8xf32, #tpu.memory_space<vmem>>, vector<1x8xf32>
    %11 = vector.broadcast %10 : vector<1x8xf32> to vector<2x8xf32>
    %12 = arith.addf %9, %11 : vector<2x8xf32>
    %cst_11 = arith.constant 0.000000e+00 : f32
    %13 = vector.broadcast %cst_11 : f32 to vector<2x8xf32>
    %14 = arith.maximumf %12, %13 : vector<2x8xf32>
    %c0_12 = arith.constant 0 : index
    %c0_13 = arith.constant 0 : index
    %15 = vector.load %arg5[%c0_12, %c0_13] : memref<8x144xf32, #tpu.memory_space<vmem>>, vector<8x144xf32>
    %cst_14 = arith.constant dense<0.000000e+00> : vector<2x144xf32>
    %16 = tpu.matmul %14, %15, %cst_14 {dimension_numbers = #tpu.dot_dimension_numbers<[1], [0], [0], [1], [0, 0, 1, 1], [], []>} : vector<2x8xf32>, vector<8x144xf32>, vector<2x144xf32> -> vector<2x144xf32>
    %c0_15 = arith.constant 0 : index
    %c0_16 = arith.constant 0 : index
    %17 = vector.load %arg6[%c0_15, %c0_16] : memref<1x144xf32, #tpu.memory_space<vmem>>, vector<1x144xf32>
    %18 = vector.broadcast %17 : vector<1x144xf32> to vector<2x144xf32>
    %19 = arith.addf %16, %18 : vector<2x144xf32>
    %c0_17 = arith.constant 0 : index
    %c0_18 = arith.constant 0 : index
    %20 = vector.load %arg7[%c0_17, %c0_18] : memref<2x144xf32, #tpu.memory_space<vmem>>, vector<2x144xf32>
    tpu.vector_store %arg7[%c0_17, %c0_18], %19 {strides = array<i32>} : memref<2x144xf32, #tpu.memory_space<vmem>>, vector<2x144xf32>,
    return
  }
}

module attributes {stable_mosaic.version = 11 : i64} {
  func.func @_conv_kernel(%arg0: i32, %arg1: memref<1x16x512xbf16, #tpu.memory_space<vmem>>, %arg2: memref<1x16x512xbf16, #tpu.memory_space<vmem>>, %arg3: memref<1x4x288xbf16, #tpu.memory_space<vmem>>, %arg4: memref<4x1xf32, #tpu.memory_space<vmem>>, %arg5: memref<2x4xbf16, #tpu.memory_space<vmem>>, %arg6: memref<2x1xf32, #tpu.memory_space<vmem>>, %arg7: memref<1x2xbf16, #tpu.memory_space<vmem>>, %arg8: memref<1x1xf32, #tpu.memory_space<vmem>>, %arg9: memref<1x1xbf16, #tpu.memory_space<vmem>>, %arg10: memref<1x1xf32, #tpu.memory_space<vmem>>, %arg11: memref<1x1x256xf32, #tpu.memory_space<vmem>>, %arg12: memref<1x1x256xf32, #tpu.memory_space<vmem>>, %arg13: memref<288x256xbf16, #tpu.memory_space<vmem>>) attributes {dimension_semantics = [#tpu.dimension_semantics<parallel>], iteration_bounds = array<i64: 2>, scalar_prefetch = 0 : i64, scratch_operands = 1 : i64, tpu.core_type = #tpu.core_type<tc>, window_params = [{transform_indices = @transform_0, window_bounds = array<i64: 1, 16, 512>}, {transform_indices = @transform_1, window_bounds = array<i64: 1, 16, 512>}, {pipeline_mode = #tpu.pipeline_mode<synchronous>, transform_indices = @transform_2, window_bounds = array<i64: 1, 4, 288>}, {pipeline_mode = #tpu.pipeline_mode<synchronous>, transform_indices = @transform_3, window_bounds = array<i64: 4, 1>}, {pipeline_mode = #tpu.pipeline_mode<synchronous>, transform_indices = @transform_4, window_bounds = array<i64: 2, 4>}, {pipeline_mode = #tpu.pipeline_mode<synchronous>, transform_indices = @transform_5, window_bounds = array<i64: 2, 1>}, {pipeline_mode = #tpu.pipeline_mode<synchronous>, transform_indices = @transform_6, window_bounds = array<i64: 1, 2>}, {pipeline_mode = #tpu.pipeline_mode<synchronous>, transform_indices = @transform_7, window_bounds = array<i64: 1, 1>}, {pipeline_mode = #tpu.pipeline_mode<synchronous>, transform_indices = @transform_8, window_bounds = array<i64: 1, 1>}, {pipeline_mode = #tpu.pipeline_mode<synchronous>, transform_indices = @transform_9, window_bounds = array<i64: 1, 1>}, {transform_indices = @transform_10, window_bounds = array<i64: 1, 1, 256>}, {transform_indices = @transform_11, window_bounds = array<i64: 1, 1, 256>}]} {
    %0 = tpu.iota {dimensions = array<i32: 1>} : vector<1x256xi32>
    %c16_i32 = arith.constant 16 : i32
    %c0_i32 = arith.constant 0 : i32
    %1 = arith.cmpi eq, %c16_i32, %c0_i32 : i32
    %c1_i32 = arith.constant 1 : i32
    %2 = arith.select %1, %c1_i32, %c16_i32 : i32
    %3 = vector.broadcast %2 : i32 to vector<1x256xi32>
    %4 = arith.remsi %0, %3 : vector<1x256xi32>
    %c0_i32_0 = arith.constant 0 : i32
    %5 = vector.broadcast %c0_i32_0 : i32 to vector<1x256xi32>
    %6 = arith.cmpi ne, %4, %5 : vector<1x256xi32>
    %c0_i32_1 = arith.constant 0 : i32
    %7 = vector.broadcast %c0_i32_1 : i32 to vector<1x256xi32>
    %8 = arith.cmpi slt, %4, %7 : vector<1x256xi32>
    %c0_i32_2 = arith.constant 0 : i32
    %9 = arith.cmpi slt, %2, %c0_i32_2 : i32
    %10 = vector.broadcast %9 : i1 to vector<1x256xi1>
    %11 = vector.broadcast %10 : vector<1x256xi1> to vector<1x256xi1>
    %12 = arith.xori %8, %11 : vector<1x256xi1>
    %13 = arith.andi %12, %6 : vector<1x256xi1>
    %14 = vector.broadcast %2 : i32 to vector<1x256xi32>
    %15 = arith.addi %4, %14 : vector<1x256xi32>
    %16 = arith.select %13, %15, %4 : vector<1x256xi1>, vector<1x256xi32>
    %c1_i32_3 = arith.constant 1 : i32
    %17 = vector.broadcast %c1_i32_3 : i32 to vector<1x256xi32>
    %18 = arith.cmpi sge, %16, %17 : vector<1x256xi32>
    %19 = arith.extui %18 : vector<1x256xi1> to vector<1x256xi32>
    %20 = arith.sitofp %19 : vector<1x256xi32> to vector<1x256xf32>
    %21 = arith.truncf %20 : vector<1x256xf32> to vector<1x256xbf16>
    %c14_i32 = arith.constant 14 : i32
    %22 = vector.broadcast %c14_i32 : i32 to vector<1x256xi32>
    %23 = arith.cmpi sle, %16, %22 : vector<1x256xi32>
    %24 = arith.extui %23 : vector<1x256xi1> to vector<1x256xi32>
    %25 = arith.sitofp %24 : vector<1x256xi32> to vector<1x256xf32>
    %26 = arith.truncf %25 : vector<1x256xf32> to vector<1x256xbf16>
    %c0 = arith.constant 0 : index
    %c0_4 = arith.constant 0 : index
    %c111 = arith.constant 111 : index
    %27 = vector.load %arg1[%c0, %c0_4, %c111] : memref<1x16x512xbf16, #tpu.memory_space<vmem>>, vector<1x16x256xbf16>
    %28 = vector.shape_cast %27 : vector<1x16x256xbf16> to vector<16x256xbf16>
    %29 = vector.broadcast %21 : vector<1x256xbf16> to vector<16x256xbf16>
    %30 = arith.mulf %28, %29 : vector<16x256xbf16>
    %c0_5 = arith.constant 0 : index
    %c0_6 = arith.constant 0 : index
    %31 = vector.load %arg13[%c0_5, %c0_6] : memref<288x256xbf16, #tpu.memory_space<vmem>>, vector<16x256xbf16>
    tpu.vector_store %arg13[%c0_5, %c0_6], %30 {strides = array<i32>} : memref<288x256xbf16, #tpu.memory_space<vmem>>, vector<16x256xbf16>,
    %c0_7 = arith.constant 0 : index
    %c0_8 = arith.constant 0 : index
    %c112 = arith.constant 112 : index
    %32 = vector.load %arg1[%c0_7, %c0_8, %c112] : memref<1x16x512xbf16, #tpu.memory_space<vmem>>, vector<1x16x256xbf16>
    %33 = vector.shape_cast %32 : vector<1x16x256xbf16> to vector<16x256xbf16>
    %c16 = arith.constant 16 : index
    %c0_9 = arith.constant 0 : index
    %34 = vector.load %arg13[%c16, %c0_9] : memref<288x256xbf16, #tpu.memory_space<vmem>>, vector<16x256xbf16>
    tpu.vector_store %arg13[%c16, %c0_9], %33 {strides = array<i32>} : memref<288x256xbf16, #tpu.memory_space<vmem>>, vector<16x256xbf16>,
    %c0_10 = arith.constant 0 : index
    %c0_11 = arith.constant 0 : index
    %c113 = arith.constant 113 : index
    %35 = vector.load %arg1[%c0_10, %c0_11, %c113] : memref<1x16x512xbf16, #tpu.memory_space<vmem>>, vector<1x16x256xbf16>
    %36 = vector.shape_cast %35 : vector<1x16x256xbf16> to vector<16x256xbf16>
    %37 = vector.broadcast %26 : vector<1x256xbf16> to vector<16x256xbf16>
    %38 = arith.mulf %36, %37 : vector<16x256xbf16>
    %c32 = arith.constant 32 : index
    %c0_12 = arith.constant 0 : index
    %39 = vector.load %arg13[%c32, %c0_12] : memref<288x256xbf16, #tpu.memory_space<vmem>>, vector<16x256xbf16>
    tpu.vector_store %arg13[%c32, %c0_12], %38 {strides = array<i32>} : memref<288x256xbf16, #tpu.memory_space<vmem>>, vector<16x256xbf16>,
    %c0_13 = arith.constant 0 : index
    %c0_14 = arith.constant 0 : index
    %c127 = arith.constant 127 : index
    %40 = vector.load %arg1[%c0_13, %c0_14, %c127] : memref<1x16x512xbf16, #tpu.memory_space<vmem>>, vector<1x16x256xbf16>
    %41 = vector.shape_cast %40 : vector<1x16x256xbf16> to vector<16x256xbf16>
    %42 = vector.broadcast %21 : vector<1x256xbf16> to vector<16x256xbf16>
    %43 = arith.mulf %41, %42 : vector<16x256xbf16>
    %c48 = arith.constant 48 : index
    %c0_15 = arith.constant 0 : index
    %44 = vector.load %arg13[%c48, %c0_15] : memref<288x256xbf16, #tpu.memory_space<vmem>>, vector<16x256xbf16>
    tpu.vector_store %arg13[%c48, %c0_15], %43 {strides = array<i32>} : memref<288x256xbf16, #tpu.memory_space<vmem>>, vector<16x256xbf16>,
    %c0_16 = arith.constant 0 : index
    %c0_17 = arith.constant 0 : index
    %c128 = arith.constant 128 : index
    %45 = vector.load %arg1[%c0_16, %c0_17, %c128] : memref<1x16x512xbf16, #tpu.memory_space<vmem>>, vector<1x16x256xbf16>
    %46 = vector.shape_cast %45 : vector<1x16x256xbf16> to vector<16x256xbf16>
    %c64 = arith.constant 64 : index
    %c0_18 = arith.constant 0 : index
    %47 = vector.load %arg13[%c64, %c0_18] : memref<288x256xbf16, #tpu.memory_space<vmem>>, vector<16x256xbf16>
    tpu.vector_store %arg13[%c64, %c0_18], %46 {strides = array<i32>} : memref<288x256xbf16, #tpu.memory_space<vmem>>, vector<16x256xbf16>,
    %c0_19 = arith.constant 0 : index
    %c0_20 = arith.constant 0 : index
    %c129 = arith.constant 129 : index
    %48 = vector.load %arg1[%c0_19, %c0_20, %c129] : memref<1x16x512xbf16, #tpu.memory_space<vmem>>, vector<1x16x256xbf16>
    %49 = vector.shape_cast %48 : vector<1x16x256xbf16> to vector<16x256xbf16>
    %50 = vector.broadcast %26 : vector<1x256xbf16> to vector<16x256xbf16>
    %51 = arith.mulf %49, %50 : vector<16x256xbf16>
    %c80 = arith.constant 80 : index
    %c0_21 = arith.constant 0 : index
    %52 = vector.load %arg13[%c80, %c0_21] : memref<288x256xbf16, #tpu.memory_space<vmem>>, vector<16x256xbf16>
    tpu.vector_store %arg13[%c80, %c0_21], %51 {strides = array<i32>} : memref<288x256xbf16, #tpu.memory_space<vmem>>, vector<16x256xbf16>,
    %c0_22 = arith.constant 0 : index
    %c0_23 = arith.constant 0 : index
    %c143 = arith.constant 143 : index
    %53 = vector.load %arg1[%c0_22, %c0_23, %c143] : memref<1x16x512xbf16, #tpu.memory_space<vmem>>, vector<1x16x256xbf16>
    %54 = vector.shape_cast %53 : vector<1x16x256xbf16> to vector<16x256xbf16>
    %55 = vector.broadcast %21 : vector<1x256xbf16> to vector<16x256xbf16>
    %56 = arith.mulf %54, %55 : vector<16x256xbf16>
    %c96 = arith.constant 96 : index
    %c0_24 = arith.constant 0 : index
    %57 = vector.load %arg13[%c96, %c0_24] : memref<288x256xbf16, #tpu.memory_space<vmem>>, vector<16x256xbf16>
    tpu.vector_store %arg13[%c96, %c0_24], %56 {strides = array<i32>} : memref<288x256xbf16, #tpu.memory_space<vmem>>, vector<16x256xbf16>,
    %c0_25 = arith.constant 0 : index
    %c0_26 = arith.constant 0 : index
    %c144 = arith.constant 144 : index
    %58 = vector.load %arg1[%c0_25, %c0_26, %c144] : memref<1x16x512xbf16, #tpu.memory_space<vmem>>, vector<1x16x256xbf16>
    %59 = vector.shape_cast %58 : vector<1x16x256xbf16> to vector<16x256xbf16>
    %c112_27 = arith.constant 112 : index
    %c0_28 = arith.constant 0 : index
    %60 = vector.load %arg13[%c112_27, %c0_28] : memref<288x256xbf16, #tpu.memory_space<vmem>>, vector<16x256xbf16>
    tpu.vector_store %arg13[%c112_27, %c0_28], %59 {strides = array<i32>} : memref<288x256xbf16, #tpu.memory_space<vmem>>, vector<16x256xbf16>,
    %c0_29 = arith.constant 0 : index
    %c0_30 = arith.constant 0 : index
    %c145 = arith.constant 145 : index
    %61 = vector.load %arg1[%c0_29, %c0_30, %c145] : memref<1x16x512xbf16, #tpu.memory_space<vmem>>, vector<1x16x256xbf16>
    %62 = vector.shape_cast %61 : vector<1x16x256xbf16> to vector<16x256xbf16>
    %63 = vector.broadcast %26 : vector<1x256xbf16> to vector<16x256xbf16>
    %64 = arith.mulf %62, %63 : vector<16x256xbf16>
    %c128_31 = arith.constant 128 : index
    %c0_32 = arith.constant 0 : index
    %65 = vector.load %arg13[%c128_31, %c0_32] : memref<288x256xbf16, #tpu.memory_space<vmem>>, vector<16x256xbf16>
    tpu.vector_store %arg13[%c128_31, %c0_32], %64 {strides = array<i32>} : memref<288x256xbf16, #tpu.memory_space<vmem>>, vector<16x256xbf16>,
    %c0_33 = arith.constant 0 : index
    %c0_34 = arith.constant 0 : index
    %c111_35 = arith.constant 111 : index
    %66 = vector.load %arg2[%c0_33, %c0_34, %c111_35] : memref<1x16x512xbf16, #tpu.memory_space<vmem>>, vector<1x16x256xbf16>
    %67 = vector.shape_cast %66 : vector<1x16x256xbf16> to vector<16x256xbf16>
    %68 = vector.broadcast %21 : vector<1x256xbf16> to vector<16x256xbf16>
    %69 = arith.mulf %67, %68 : vector<16x256xbf16>
    %c144_36 = arith.constant 144 : index
    %c0_37 = arith.constant 0 : index
    %70 = vector.load %arg13[%c144_36, %c0_37] : memref<288x256xbf16, #tpu.memory_space<vmem>>, vector<16x256xbf16>
    tpu.vector_store %arg13[%c144_36, %c0_37], %69 {strides = array<i32>} : memref<288x256xbf16, #tpu.memory_space<vmem>>, vector<16x256xbf16>,
    %c0_38 = arith.constant 0 : index
    %c0_39 = arith.constant 0 : index
    %c112_40 = arith.constant 112 : index
    %71 = vector.load %arg2[%c0_38, %c0_39, %c112_40] : memref<1x16x512xbf16, #tpu.memory_space<vmem>>, vector<1x16x256xbf16>
    %72 = vector.shape_cast %71 : vector<1x16x256xbf16> to vector<16x256xbf16>
    %c160 = arith.constant 160 : index
    %c0_41 = arith.constant 0 : index
    %73 = vector.load %arg13[%c160, %c0_41] : memref<288x256xbf16, #tpu.memory_space<vmem>>, vector<16x256xbf16>
    tpu.vector_store %arg13[%c160, %c0_41], %72 {strides = array<i32>} : memref<288x256xbf16, #tpu.memory_space<vmem>>, vector<16x256xbf16>,
    %c0_42 = arith.constant 0 : index
    %c0_43 = arith.constant 0 : index
    %c113_44 = arith.constant 113 : index
    %74 = vector.load %arg2[%c0_42, %c0_43, %c113_44] : memref<1x16x512xbf16, #tpu.memory_space<vmem>>, vector<1x16x256xbf16>
    %75 = vector.shape_cast %74 : vector<1x16x256xbf16> to vector<16x256xbf16>
    %76 = vector.broadcast %26 : vector<1x256xbf16> to vector<16x256xbf16>
    %77 = arith.mulf %75, %76 : vector<16x256xbf16>
    %c176 = arith.constant 176 : index
    %c0_45 = arith.constant 0 : index
    %78 = vector.load %arg13[%c176, %c0_45] : memref<288x256xbf16, #tpu.memory_space<vmem>>, vector<16x256xbf16>
    tpu.vector_store %arg13[%c176, %c0_45], %77 {strides = array<i32>} : memref<288x256xbf16, #tpu.memory_space<vmem>>, vector<16x256xbf16>,
    %c0_46 = arith.constant 0 : index
    %c0_47 = arith.constant 0 : index
    %c127_48 = arith.constant 127 : index
    %79 = vector.load %arg2[%c0_46, %c0_47, %c127_48] : memref<1x16x512xbf16, #tpu.memory_space<vmem>>, vector<1x16x256xbf16>
    %80 = vector.shape_cast %79 : vector<1x16x256xbf16> to vector<16x256xbf16>
    %81 = vector.broadcast %21 : vector<1x256xbf16> to vector<16x256xbf16>
    %82 = arith.mulf %80, %81 : vector<16x256xbf16>
    %c192 = arith.constant 192 : index
    %c0_49 = arith.constant 0 : index
    %83 = vector.load %arg13[%c192, %c0_49] : memref<288x256xbf16, #tpu.memory_space<vmem>>, vector<16x256xbf16>
    tpu.vector_store %arg13[%c192, %c0_49], %82 {strides = array<i32>} : memref<288x256xbf16, #tpu.memory_space<vmem>>, vector<16x256xbf16>,
    %c0_50 = arith.constant 0 : index
    %c0_51 = arith.constant 0 : index
    %c128_52 = arith.constant 128 : index
    %84 = vector.load %arg2[%c0_50, %c0_51, %c128_52] : memref<1x16x512xbf16, #tpu.memory_space<vmem>>, vector<1x16x256xbf16>
    %85 = vector.shape_cast %84 : vector<1x16x256xbf16> to vector<16x256xbf16>
    %c208 = arith.constant 208 : index
    %c0_53 = arith.constant 0 : index
    %86 = vector.load %arg13[%c208, %c0_53] : memref<288x256xbf16, #tpu.memory_space<vmem>>, vector<16x256xbf16>
    tpu.vector_store %arg13[%c208, %c0_53], %85 {strides = array<i32>} : memref<288x256xbf16, #tpu.memory_space<vmem>>, vector<16x256xbf16>,
    %c0_54 = arith.constant 0 : index
    %c0_55 = arith.constant 0 : index
    %c129_56 = arith.constant 129 : index
    %87 = vector.load %arg2[%c0_54, %c0_55, %c129_56] : memref<1x16x512xbf16, #tpu.memory_space<vmem>>, vector<1x16x256xbf16>
    %88 = vector.shape_cast %87 : vector<1x16x256xbf16> to vector<16x256xbf16>
    %89 = vector.broadcast %26 : vector<1x256xbf16> to vector<16x256xbf16>
    %90 = arith.mulf %88, %89 : vector<16x256xbf16>
    %c224 = arith.constant 224 : index
    %c0_57 = arith.constant 0 : index
    %91 = vector.load %arg13[%c224, %c0_57] : memref<288x256xbf16, #tpu.memory_space<vmem>>, vector<16x256xbf16>
    tpu.vector_store %arg13[%c224, %c0_57], %90 {strides = array<i32>} : memref<288x256xbf16, #tpu.memory_space<vmem>>, vector<16x256xbf16>,
    %c0_58 = arith.constant 0 : index
    %c0_59 = arith.constant 0 : index
    %c143_60 = arith.constant 143 : index
    %92 = vector.load %arg2[%c0_58, %c0_59, %c143_60] : memref<1x16x512xbf16, #tpu.memory_space<vmem>>, vector<1x16x256xbf16>
    %93 = vector.shape_cast %92 : vector<1x16x256xbf16> to vector<16x256xbf16>
    %94 = vector.broadcast %21 : vector<1x256xbf16> to vector<16x256xbf16>
    %95 = arith.mulf %93, %94 : vector<16x256xbf16>
    %c240 = arith.constant 240 : index
    %c0_61 = arith.constant 0 : index
    %96 = vector.load %arg13[%c240, %c0_61] : memref<288x256xbf16, #tpu.memory_space<vmem>>, vector<16x256xbf16>
    tpu.vector_store %arg13[%c240, %c0_61], %95 {strides = array<i32>} : memref<288x256xbf16, #tpu.memory_space<vmem>>, vector<16x256xbf16>,
    %c0_62 = arith.constant 0 : index
    %c0_63 = arith.constant 0 : index
    %c144_64 = arith.constant 144 : index
    %97 = vector.load %arg2[%c0_62, %c0_63, %c144_64] : memref<1x16x512xbf16, #tpu.memory_space<vmem>>, vector<1x16x256xbf16>
    %98 = vector.shape_cast %97 : vector<1x16x256xbf16> to vector<16x256xbf16>
    %c256 = arith.constant 256 : index
    %c0_65 = arith.constant 0 : index
    %99 = vector.load %arg13[%c256, %c0_65] : memref<288x256xbf16, #tpu.memory_space<vmem>>, vector<16x256xbf16>
    tpu.vector_store %arg13[%c256, %c0_65], %98 {strides = array<i32>} : memref<288x256xbf16, #tpu.memory_space<vmem>>, vector<16x256xbf16>,
    %c0_66 = arith.constant 0 : index
    %c0_67 = arith.constant 0 : index
    %c145_68 = arith.constant 145 : index
    %100 = vector.load %arg2[%c0_66, %c0_67, %c145_68] : memref<1x16x512xbf16, #tpu.memory_space<vmem>>, vector<1x16x256xbf16>
    %101 = vector.shape_cast %100 : vector<1x16x256xbf16> to vector<16x256xbf16>
    %102 = vector.broadcast %26 : vector<1x256xbf16> to vector<16x256xbf16>
    %103 = arith.mulf %101, %102 : vector<16x256xbf16>
    %c272 = arith.constant 272 : index
    %c0_69 = arith.constant 0 : index
    %104 = vector.load %arg13[%c272, %c0_69] : memref<288x256xbf16, #tpu.memory_space<vmem>>, vector<16x256xbf16>
    tpu.vector_store %arg13[%c272, %c0_69], %103 {strides = array<i32>} : memref<288x256xbf16, #tpu.memory_space<vmem>>, vector<16x256xbf16>,
    %c0_70 = arith.constant 0 : index
    %c0_71 = arith.constant 0 : index
    %c0_72 = arith.constant 0 : index
    %105 = vector.load %arg3[%c0_70, %c0_71, %c0_72] : memref<1x4x288xbf16, #tpu.memory_space<vmem>>, vector<1x4x288xbf16>
    %106 = vector.shape_cast %105 : vector<1x4x288xbf16> to vector<4x288xbf16>
    %c0_73 = arith.constant 0 : index
    %c0_74 = arith.constant 0 : index
    %107 = vector.load %arg13[%c0_73, %c0_74] : memref<288x256xbf16, #tpu.memory_space<vmem>>, vector<288x256xbf16>
    %cst = arith.constant dense<0.000000e+00> : vector<4x256xf32>
    %108 = tpu.matmul %106, %107, %cst {dimension_numbers = #tpu.dot_dimension_numbers<[1], [0], [0], [1], [0, 0, 1, 1], [], []>} : vector<4x288xbf16>, vector<288x256xbf16>, vector<4x256xf32> -> vector<4x256xf32>
    %c0_75 = arith.constant 0 : index
    %c0_76 = arith.constant 0 : index
    %109 = vector.load %arg4[%c0_75, %c0_76] : memref<4x1xf32, #tpu.memory_space<vmem>>, vector<4x1xf32>
    %110 = vector.broadcast %109 : vector<4x1xf32> to vector<4x256xf32>
    %111 = arith.addf %108, %110 : vector<4x256xf32>
    %cst_77 = arith.constant dense<0.000000e+00> : vector<4xf32>
    %112 = vector.multi_reduction <add>, %111, %cst_77 [1] : vector<4x256xf32> to vector<4xf32>
    %113 = vector.shape_cast %112 : vector<4xf32> to vector<4x1xf32>
    %cst_78 = arith.constant 2.560000e+02 : f32
    %114 = vector.broadcast %cst_78 : f32 to vector<4x1xf32>
    %115 = arith.divf %113, %114 : vector<4x1xf32>
    %116 = vector.broadcast %115 : vector<4x1xf32> to vector<4x256xf32>
    %117 = arith.subf %111, %116 : vector<4x256xf32>
    %118 = arith.mulf %117, %117 : vector<4x256xf32>
    %cst_79 = arith.constant dense<0.000000e+00> : vector<4xf32>
    %119 = vector.multi_reduction <add>, %118, %cst_79 [1] : vector<4x256xf32> to vector<4xf32>
    %120 = vector.shape_cast %119 : vector<4xf32> to vector<4x1xf32>
    %cst_80 = arith.constant 2.560000e+02 : f32
    %121 = vector.broadcast %cst_80 : f32 to vector<4x1xf32>
    %122 = arith.divf %120, %121 : vector<4x1xf32>
    %123 = vector.broadcast %115 : vector<4x1xf32> to vector<4x256xf32>
    %124 = arith.subf %111, %123 : vector<4x256xf32>
    %cst_81 = arith.constant 9.99999974E-6 : f32
    %125 = vector.broadcast %cst_81 : f32 to vector<4x1xf32>
    %126 = arith.addf %122, %125 : vector<4x1xf32>
    %127 = math.rsqrt %126 : vector<4x1xf32>
    %128 = vector.broadcast %127 : vector<4x1xf32> to vector<4x256xf32>
    %129 = arith.mulf %124, %128 : vector<4x256xf32>
    %cst_82 = arith.constant 0.000000e+00 : f32
    %130 = vector.broadcast %cst_82 : f32 to vector<4x256xf32>
    %131 = arith.maximumf %129, %130 : vector<4x256xf32>
    %c0_83 = arith.constant 0 : index
    %c0_84 = arith.constant 0 : index
    %132 = vector.load %arg5[%c0_83, %c0_84] : memref<2x4xbf16, #tpu.memory_space<vmem>>, vector<2x4xbf16>
    %133 = arith.truncf %131 : vector<4x256xf32> to vector<4x256xbf16>
    %cst_85 = arith.constant dense<0.000000e+00> : vector<2x256xf32>
    %134 = tpu.matmul %132, %133, %cst_85 {dimension_numbers = #tpu.dot_dimension_numbers<[1], [0], [0], [1], [0, 0, 1, 1], [], []>} : vector<2x4xbf16>, vector<4x256xbf16>, vector<2x256xf32> -> vector<2x256xf32>
    %c0_86 = arith.constant 0 : index
    %c0_87 = arith.constant 0 : index
    %135 = vector.load %arg6[%c0_86, %c0_87] : memref<2x1xf32, #tpu.memory_space<vmem>>, vector<2x1xf32>
    %136 = vector.broadcast %135 : vector<2x1xf32> to vector<2x256xf32>
    %137 = arith.addf %134, %136 : vector<2x256xf32>
    %c0_88 = arith.constant 0 : index
    %c0_89 = arith.constant 0 : index
    %138 = vector.load %arg7[%c0_88, %c0_89] : memref<1x2xbf16, #tpu.memory_space<vmem>>, vector<1x2xbf16>
    %139 = arith.truncf %137 : vector<2x256xf32> to vector<2x256xbf16>
    %cst_90 = arith.constant dense<0.000000e+00> : vector<1x256xf32>
    %140 = tpu.matmul %138, %139, %cst_90 {dimension_numbers = #tpu.dot_dimension_numbers<[1], [0], [0], [1], [0, 0, 1, 1], [], []>} : vector<1x2xbf16>, vector<2x256xbf16>, vector<1x256xf32> -> vector<1x256xf32>
    %c0_91 = arith.constant 0 : index
    %c0_92 = arith.constant 0 : index
    %141 = vector.load %arg8[%c0_91, %c0_92] : memref<1x1xf32, #tpu.memory_space<vmem>>, vector<1x1xf32>
    %142 = vector.broadcast %141 : vector<1x1xf32> to vector<1x256xf32>
    %143 = arith.addf %140, %142 : vector<1x256xf32>
    %c0_93 = arith.constant 0 : index
    %c0_94 = arith.constant 0 : index
    %144 = vector.load %arg9[%c0_93, %c0_94] : memref<1x1xbf16, #tpu.memory_space<vmem>>, vector<1x1xbf16>
    %145 = arith.truncf %143 : vector<1x256xf32> to vector<1x256xbf16>
    %cst_95 = arith.constant dense<0.000000e+00> : vector<1x256xf32>
    %146 = tpu.matmul %144, %145, %cst_95 {dimension_numbers = #tpu.dot_dimension_numbers<[1], [0], [0], [1], [0, 0, 1, 1], [], []>} : vector<1x1xbf16>, vector<1x256xbf16>, vector<1x256xf32> -> vector<1x256xf32>
    %c0_96 = arith.constant 0 : index
    %c0_97 = arith.constant 0 : index
    %147 = vector.load %arg10[%c0_96, %c0_97] : memref<1x1xf32, #tpu.memory_space<vmem>>, vector<1x1xf32>
    %148 = vector.broadcast %147 : vector<1x1xf32> to vector<1x256xf32>
    %149 = arith.addf %146, %148 : vector<1x256xf32>
    %c0_98 = arith.constant 0 : index
    %c0_99 = arith.constant 0 : index
    %c0_100 = arith.constant 0 : index
    %150 = vector.load %arg11[%c0_98, %c0_99, %c0_100] : memref<1x1x256xf32, #tpu.memory_space<vmem>>, vector<1x1x256xf32>
    %151 = vector.shape_cast %150 : vector<1x1x256xf32> to vector<1x256xf32>
    %152 = arith.addf %149, %151 : vector<1x256xf32>
    %c0_101 = arith.constant 0 : index
    %c0_102 = arith.constant 0 : index
    %c0_103 = arith.constant 0 : index
    %153 = vector.load %arg12[%c0_101, %c0_102, %c0_103] : memref<1x1x256xf32, #tpu.memory_space<vmem>>, vector<1x1x256xf32>
    %154 = vector.shape_cast %153 : vector<1x1x256xf32> to vector<1x256xf32>
    %155 = vector.shape_cast %152 : vector<1x256xf32> to vector<1x1x256xf32>
    tpu.vector_store %arg12[%c0_101, %c0_102, %c0_103], %155 {strides = array<i32>} : memref<1x1x256xf32, #tpu.memory_space<vmem>>, vector<1x1x256xf32>,
    return
  }
  func.func @transform_0(%arg0: i32) -> (i32, i32, i32) {
    %c0_i32 = arith.constant 0 : i32
    %c0_i32_0 = arith.constant 0 : i32
    %c0_i32_1 = arith.constant 0 : i32
    return %arg0, %c0_i32, %c0_i32_0 : i32, i32, i32
  }
  func.func @transform_1(%arg0: i32) -> (i32, i32, i32) {
    %c0_i32 = arith.constant 0 : i32
    %c0_i32_0 = arith.constant 0 : i32
    %c0_i32_1 = arith.constant 0 : i32
    return %arg0, %c0_i32, %c0_i32_0 : i32, i32, i32
  }
  func.func @transform_2(%arg0: i32) -> (i32, i32, i32) {
    %c0_i32 = arith.constant 0 : i32
    %c0_i32_0 = arith.constant 0 : i32
    %c0_i32_1 = arith.constant 0 : i32
    %c0_i32_2 = arith.constant 0 : i32
    return %c0_i32, %c0_i32_0, %c0_i32_1 : i32, i32, i32
  }
  func.func @transform_3(%arg0: i32) -> (i32, i32) {
    %c0_i32 = arith.constant 0 : i32
    %c0_i32_0 = arith.constant 0 : i32
    %c0_i32_1 = arith.constant 0 : i32
    return %c0_i32, %c0_i32_0 : i32, i32
  }
  func.func @transform_4(%arg0: i32) -> (i32, i32) {
    %c0_i32 = arith.constant 0 : i32
    %c0_i32_0 = arith.constant 0 : i32
    %c0_i32_1 = arith.constant 0 : i32
    return %c0_i32, %c0_i32_0 : i32, i32
  }
  func.func @transform_5(%arg0: i32) -> (i32, i32) {
    %c0_i32 = arith.constant 0 : i32
    %c0_i32_0 = arith.constant 0 : i32
    %c0_i32_1 = arith.constant 0 : i32
    return %c0_i32, %c0_i32_0 : i32, i32
  }
  func.func @transform_6(%arg0: i32) -> (i32, i32) {
    %c0_i32 = arith.constant 0 : i32
    %c0_i32_0 = arith.constant 0 : i32
    %c0_i32_1 = arith.constant 0 : i32
    return %c0_i32, %c0_i32_0 : i32, i32
  }
  func.func @transform_7(%arg0: i32) -> (i32, i32) {
    %c0_i32 = arith.constant 0 : i32
    %c0_i32_0 = arith.constant 0 : i32
    %c0_i32_1 = arith.constant 0 : i32
    return %c0_i32, %c0_i32_0 : i32, i32
  }
  func.func @transform_8(%arg0: i32) -> (i32, i32) {
    %c0_i32 = arith.constant 0 : i32
    %c0_i32_0 = arith.constant 0 : i32
    %c0_i32_1 = arith.constant 0 : i32
    return %c0_i32, %c0_i32_0 : i32, i32
  }
  func.func @transform_9(%arg0: i32) -> (i32, i32) {
    %c0_i32 = arith.constant 0 : i32
    %c0_i32_0 = arith.constant 0 : i32
    %c0_i32_1 = arith.constant 0 : i32
    return %c0_i32, %c0_i32_0 : i32, i32
  }
  func.func @transform_10(%arg0: i32) -> (i32, i32, i32) {
    %c0_i32 = arith.constant 0 : i32
    %c0_i32_0 = arith.constant 0 : i32
    %c0_i32_1 = arith.constant 0 : i32
    return %arg0, %c0_i32, %c0_i32_0 : i32, i32, i32
  }
  func.func @transform_11(%arg0: i32) -> (i32, i32, i32) {
    %c0_i32 = arith.constant 0 : i32
    %c0_i32_0 = arith.constant 0 : i32
    %c0_i32_1 = arith.constant 0 : i32
    return %arg0, %c0_i32, %c0_i32_0 : i32, i32, i32
  }
}

module attributes {stable_mosaic.version = 11 : i64} {
  func.func @_conv_kernel(%arg0: i32, %arg1: memref<1x16x512xbf16, #tpu.memory_space<vmem>>, %arg2: memref<1x4x144xbf16, #tpu.memory_space<vmem>>, %arg3: memref<1x16x512xbf16, #tpu.memory_space<vmem>>, %arg4: memref<144x256xbf16, #tpu.memory_space<vmem>>) attributes {dimension_semantics = [#tpu.dimension_semantics<parallel>], iteration_bounds = array<i64: 2>, scalar_prefetch = 0 : i64, scratch_operands = 1 : i64, tpu.core_type = #tpu.core_type<tc>, window_params = [{transform_indices = @transform_0, window_bounds = array<i64: 1, 16, 512>}, {transform_indices = @transform_1, window_bounds = array<i64: 1, 4, 144>}, {transform_indices = @transform_2, window_bounds = array<i64: 1, 16, 512>}]} {
    %0 = tpu.iota {dimensions = array<i32: 1>} : vector<1x256xi32>
    %c16_i32 = arith.constant 16 : i32
    %c0_i32 = arith.constant 0 : i32
    %1 = arith.cmpi eq, %c16_i32, %c0_i32 : i32
    %c1_i32 = arith.constant 1 : i32
    %2 = arith.select %1, %c1_i32, %c16_i32 : i32
    %3 = vector.broadcast %2 : i32 to vector<1x256xi32>
    %4 = arith.remsi %0, %3 : vector<1x256xi32>
    %c0_i32_0 = arith.constant 0 : i32
    %5 = vector.broadcast %c0_i32_0 : i32 to vector<1x256xi32>
    %6 = arith.cmpi ne, %4, %5 : vector<1x256xi32>
    %c0_i32_1 = arith.constant 0 : i32
    %7 = vector.broadcast %c0_i32_1 : i32 to vector<1x256xi32>
    %8 = arith.cmpi slt, %4, %7 : vector<1x256xi32>
    %c0_i32_2 = arith.constant 0 : i32
    %9 = arith.cmpi slt, %2, %c0_i32_2 : i32
    %10 = vector.broadcast %9 : i1 to vector<1x256xi1>
    %11 = vector.broadcast %10 : vector<1x256xi1> to vector<1x256xi1>
    %12 = arith.xori %8, %11 : vector<1x256xi1>
    %13 = arith.andi %12, %6 : vector<1x256xi1>
    %14 = vector.broadcast %2 : i32 to vector<1x256xi32>
    %15 = arith.addi %4, %14 : vector<1x256xi32>
    %16 = arith.select %13, %15, %4 : vector<1x256xi1>, vector<1x256xi32>
    %c1_i32_3 = arith.constant 1 : i32
    %17 = vector.broadcast %c1_i32_3 : i32 to vector<1x256xi32>
    %18 = arith.cmpi sge, %16, %17 : vector<1x256xi32>
    %19 = arith.extui %18 : vector<1x256xi1> to vector<1x256xi32>
    %20 = arith.sitofp %19 : vector<1x256xi32> to vector<1x256xf32>
    %21 = arith.truncf %20 : vector<1x256xf32> to vector<1x256xbf16>
    %c14_i32 = arith.constant 14 : i32
    %22 = vector.broadcast %c14_i32 : i32 to vector<1x256xi32>
    %23 = arith.cmpi sle, %16, %22 : vector<1x256xi32>
    %24 = arith.extui %23 : vector<1x256xi1> to vector<1x256xi32>
    %25 = arith.sitofp %24 : vector<1x256xi32> to vector<1x256xf32>
    %26 = arith.truncf %25 : vector<1x256xf32> to vector<1x256xbf16>
    %c0 = arith.constant 0 : index
    %c0_4 = arith.constant 0 : index
    %c111 = arith.constant 111 : index
    %27 = vector.load %arg1[%c0, %c0_4, %c111] : memref<1x16x512xbf16, #tpu.memory_space<vmem>>, vector<1x16x256xbf16>
    %28 = vector.shape_cast %27 : vector<1x16x256xbf16> to vector<16x256xbf16>
    %29 = vector.broadcast %21 : vector<1x256xbf16> to vector<16x256xbf16>
    %30 = arith.mulf %28, %29 : vector<16x256xbf16>
    %c0_5 = arith.constant 0 : index
    %c0_6 = arith.constant 0 : index
    %31 = vector.load %arg4[%c0_5, %c0_6] : memref<144x256xbf16, #tpu.memory_space<vmem>>, vector<16x256xbf16>
    tpu.vector_store %arg4[%c0_5, %c0_6], %30 {strides = array<i32>} : memref<144x256xbf16, #tpu.memory_space<vmem>>, vector<16x256xbf16>,
    %c0_7 = arith.constant 0 : index
    %c0_8 = arith.constant 0 : index
    %c112 = arith.constant 112 : index
    %32 = vector.load %arg1[%c0_7, %c0_8, %c112] : memref<1x16x512xbf16, #tpu.memory_space<vmem>>, vector<1x16x256xbf16>
    %33 = vector.shape_cast %32 : vector<1x16x256xbf16> to vector<16x256xbf16>
    %c16 = arith.constant 16 : index
    %c0_9 = arith.constant 0 : index
    %34 = vector.load %arg4[%c16, %c0_9] : memref<144x256xbf16, #tpu.memory_space<vmem>>, vector<16x256xbf16>
    tpu.vector_store %arg4[%c16, %c0_9], %33 {strides = array<i32>} : memref<144x256xbf16, #tpu.memory_space<vmem>>, vector<16x256xbf16>,
    %c0_10 = arith.constant 0 : index
    %c0_11 = arith.constant 0 : index
    %c113 = arith.constant 113 : index
    %35 = vector.load %arg1[%c0_10, %c0_11, %c113] : memref<1x16x512xbf16, #tpu.memory_space<vmem>>, vector<1x16x256xbf16>
    %36 = vector.shape_cast %35 : vector<1x16x256xbf16> to vector<16x256xbf16>
    %37 = vector.broadcast %26 : vector<1x256xbf16> to vector<16x256xbf16>
    %38 = arith.mulf %36, %37 : vector<16x256xbf16>
    %c32 = arith.constant 32 : index
    %c0_12 = arith.constant 0 : index
    %39 = vector.load %arg4[%c32, %c0_12] : memref<144x256xbf16, #tpu.memory_space<vmem>>, vector<16x256xbf16>
    tpu.vector_store %arg4[%c32, %c0_12], %38 {strides = array<i32>} : memref<144x256xbf16, #tpu.memory_space<vmem>>, vector<16x256xbf16>,
    %c0_13 = arith.constant 0 : index
    %c0_14 = arith.constant 0 : index
    %c127 = arith.constant 127 : index
    %40 = vector.load %arg1[%c0_13, %c0_14, %c127] : memref<1x16x512xbf16, #tpu.memory_space<vmem>>, vector<1x16x256xbf16>
    %41 = vector.shape_cast %40 : vector<1x16x256xbf16> to vector<16x256xbf16>
    %42 = vector.broadcast %21 : vector<1x256xbf16> to vector<16x256xbf16>
    %43 = arith.mulf %41, %42 : vector<16x256xbf16>
    %c48 = arith.constant 48 : index
    %c0_15 = arith.constant 0 : index
    %44 = vector.load %arg4[%c48, %c0_15] : memref<144x256xbf16, #tpu.memory_space<vmem>>, vector<16x256xbf16>
    tpu.vector_store %arg4[%c48, %c0_15], %43 {strides = array<i32>} : memref<144x256xbf16, #tpu.memory_space<vmem>>, vector<16x256xbf16>,
    %c0_16 = arith.constant 0 : index
    %c0_17 = arith.constant 0 : index
    %c128 = arith.constant 128 : index
    %45 = vector.load %arg1[%c0_16, %c0_17, %c128] : memref<1x16x512xbf16, #tpu.memory_space<vmem>>, vector<1x16x256xbf16>
    %46 = vector.shape_cast %45 : vector<1x16x256xbf16> to vector<16x256xbf16>
    %c64 = arith.constant 64 : index
    %c0_18 = arith.constant 0 : index
    %47 = vector.load %arg4[%c64, %c0_18] : memref<144x256xbf16, #tpu.memory_space<vmem>>, vector<16x256xbf16>
    tpu.vector_store %arg4[%c64, %c0_18], %46 {strides = array<i32>} : memref<144x256xbf16, #tpu.memory_space<vmem>>, vector<16x256xbf16>,
    %c0_19 = arith.constant 0 : index
    %c0_20 = arith.constant 0 : index
    %c129 = arith.constant 129 : index
    %48 = vector.load %arg1[%c0_19, %c0_20, %c129] : memref<1x16x512xbf16, #tpu.memory_space<vmem>>, vector<1x16x256xbf16>
    %49 = vector.shape_cast %48 : vector<1x16x256xbf16> to vector<16x256xbf16>
    %50 = vector.broadcast %26 : vector<1x256xbf16> to vector<16x256xbf16>
    %51 = arith.mulf %49, %50 : vector<16x256xbf16>
    %c80 = arith.constant 80 : index
    %c0_21 = arith.constant 0 : index
    %52 = vector.load %arg4[%c80, %c0_21] : memref<144x256xbf16, #tpu.memory_space<vmem>>, vector<16x256xbf16>
    tpu.vector_store %arg4[%c80, %c0_21], %51 {strides = array<i32>} : memref<144x256xbf16, #tpu.memory_space<vmem>>, vector<16x256xbf16>,
    %c0_22 = arith.constant 0 : index
    %c0_23 = arith.constant 0 : index
    %c143 = arith.constant 143 : index
    %53 = vector.load %arg1[%c0_22, %c0_23, %c143] : memref<1x16x512xbf16, #tpu.memory_space<vmem>>, vector<1x16x256xbf16>
    %54 = vector.shape_cast %53 : vector<1x16x256xbf16> to vector<16x256xbf16>
    %55 = vector.broadcast %21 : vector<1x256xbf16> to vector<16x256xbf16>
    %56 = arith.mulf %54, %55 : vector<16x256xbf16>
    %c96 = arith.constant 96 : index
    %c0_24 = arith.constant 0 : index
    %57 = vector.load %arg4[%c96, %c0_24] : memref<144x256xbf16, #tpu.memory_space<vmem>>, vector<16x256xbf16>
    tpu.vector_store %arg4[%c96, %c0_24], %56 {strides = array<i32>} : memref<144x256xbf16, #tpu.memory_space<vmem>>, vector<16x256xbf16>,
    %c0_25 = arith.constant 0 : index
    %c0_26 = arith.constant 0 : index
    %c144 = arith.constant 144 : index
    %58 = vector.load %arg1[%c0_25, %c0_26, %c144] : memref<1x16x512xbf16, #tpu.memory_space<vmem>>, vector<1x16x256xbf16>
    %59 = vector.shape_cast %58 : vector<1x16x256xbf16> to vector<16x256xbf16>
    %c112_27 = arith.constant 112 : index
    %c0_28 = arith.constant 0 : index
    %60 = vector.load %arg4[%c112_27, %c0_28] : memref<144x256xbf16, #tpu.memory_space<vmem>>, vector<16x256xbf16>
    tpu.vector_store %arg4[%c112_27, %c0_28], %59 {strides = array<i32>} : memref<144x256xbf16, #tpu.memory_space<vmem>>, vector<16x256xbf16>,
    %c0_29 = arith.constant 0 : index
    %c0_30 = arith.constant 0 : index
    %c145 = arith.constant 145 : index
    %61 = vector.load %arg1[%c0_29, %c0_30, %c145] : memref<1x16x512xbf16, #tpu.memory_space<vmem>>, vector<1x16x256xbf16>
    %62 = vector.shape_cast %61 : vector<1x16x256xbf16> to vector<16x256xbf16>
    %63 = vector.broadcast %26 : vector<1x256xbf16> to vector<16x256xbf16>
    %64 = arith.mulf %62, %63 : vector<16x256xbf16>
    %c128_31 = arith.constant 128 : index
    %c0_32 = arith.constant 0 : index
    %65 = vector.load %arg4[%c128_31, %c0_32] : memref<144x256xbf16, #tpu.memory_space<vmem>>, vector<16x256xbf16>
    tpu.vector_store %arg4[%c128_31, %c0_32], %64 {strides = array<i32>} : memref<144x256xbf16, #tpu.memory_space<vmem>>, vector<16x256xbf16>,
    %c0_33 = arith.constant 0 : index
    %c0_34 = arith.constant 0 : index
    %c0_35 = arith.constant 0 : index
    %66 = vector.load %arg2[%c0_33, %c0_34, %c0_35] : memref<1x4x144xbf16, #tpu.memory_space<vmem>>, vector<1x4x144xbf16>
    %67 = vector.shape_cast %66 : vector<1x4x144xbf16> to vector<4x144xbf16>
    %c0_36 = arith.constant 0 : index
    %c0_37 = arith.constant 0 : index
    %68 = vector.load %arg4[%c0_36, %c0_37] : memref<144x256xbf16, #tpu.memory_space<vmem>>, vector<144x256xbf16>
    %cst = arith.constant dense<0.000000e+00> : vector<4x256xf32>
    %69 = tpu.matmul %67, %68, %cst {dimension_numbers = #tpu.dot_dimension_numbers<[1], [0], [0], [1], [0, 0, 1, 1], [], []>} : vector<4x144xbf16>, vector<144x256xbf16>, vector<4x256xf32> -> vector<4x256xf32>
    %cst_38 = arith.constant 0.000000e+00 : bf16
    %70 = vector.broadcast %cst_38 : bf16 to vector<16x512xbf16>
    %c0_39 = arith.constant 0 : index
    %c0_40 = arith.constant 0 : index
    %c0_41 = arith.constant 0 : index
    %71 = vector.load %arg3[%c0_39, %c0_40, %c0_41] : memref<1x16x512xbf16, #tpu.memory_space<vmem>>, vector<1x16x512xbf16>
    %72 = vector.shape_cast %71 : vector<1x16x512xbf16> to vector<16x512xbf16>
    %73 = vector.shape_cast %70 : vector<16x512xbf16> to vector<1x16x512xbf16>
    tpu.vector_store %arg3[%c0_39, %c0_40, %c0_41], %73 {strides = array<i32>} : memref<1x16x512xbf16, #tpu.memory_space<vmem>>, vector<1x16x512xbf16>,
    %74 = arith.truncf %69 : vector<4x256xf32> to vector<4x256xbf16>
    %c0_42 = arith.constant 0 : index
    %c0_43 = arith.constant 0 : index
    %c128_44 = arith.constant 128 : index
    %75 = vector.load %arg3[%c0_42, %c0_43, %c128_44] : memref<1x16x512xbf16, #tpu.memory_space<vmem>>, vector<1x4x256xbf16>
    %76 = vector.shape_cast %75 : vector<1x4x256xbf16> to vector<4x256xbf16>
    %77 = vector.shape_cast %74 : vector<4x256xbf16> to vector<1x4x256xbf16>
    tpu.vector_store %arg3[%c0_42, %c0_43, %c128_44], %77 {strides = array<i32>} : memref<1x16x512xbf16, #tpu.memory_space<vmem>>, vector<1x4x256xbf16>,
    return
  }
  func.func @transform_0(%arg0: i32) -> (i32, i32, i32) {
    %c0_i32 = arith.constant 0 : i32
    %c0_i32_0 = arith.constant 0 : i32
    %c0_i32_1 = arith.constant 0 : i32
    return %arg0, %c0_i32, %c0_i32_0 : i32, i32, i32
  }
  func.func @transform_1(%arg0: i32) -> (i32, i32, i32) {
    %c0_i32 = arith.constant 0 : i32
    %c0_i32_0 = arith.constant 0 : i32
    %c0_i32_1 = arith.constant 0 : i32
    return %arg0, %c0_i32, %c0_i32_0 : i32, i32, i32
  }
  func.func @transform_2(%arg0: i32) -> (i32, i32, i32) {
    %c0_i32 = arith.constant 0 : i32
    %c0_i32_0 = arith.constant 0 : i32
    %c0_i32_1 = arith.constant 0 : i32
    return %arg0, %c0_i32, %c0_i32_0 : i32, i32, i32
  }
}

</mosaic_0001>

<llo_original>
// kernel: _lambda_.20
$region0: #{_lambda_.20}
  #allocation0 [shape = 'u32[]', space=smem, size = 0x4, offset = 0x4, fixed_abs, tag = 'smem constant byte address 0x4 - core index']
  #allocation1 [shape = 'u32[144,128]{1,0:T(1,128)}', space=vmem, size = 0x12000, scoped, tag = 'internal scratch']
  #allocation2 [shape = 'bf16[144,256]{1,0:T(16,128)(2,1)}', space=vmem, size = 0x12000, scoped, tag = 'scratch operand']
  %s0 = inlined_call_operand.vmem [shape: bf16[2,16,512], index: 0, kind: input, shape index: {}]
  %s1 = inlined_call_operand.vmem [shape: bf16[1,4,144], index: 1, kind: input, shape index: {}]
  %s2 = inlined_call_operand.vmem [shape: f32[4,1], index: 2, kind: input, shape index: {}]
  %s3 = inlined_call_operand.vmem [shape: bf16[2,16,512], index: 3, kind: output, shape index: {0}]
  %s4 = inlined_call_operand.vmem [shape: bf16[2,4,256], index: 4, kind: output, shape index: {1}]
  %5 = xla_tuple %s3, %s4
  %s6 = sld [smem:[#allocation0]]
  $region53: #{_lambda_.20} parent=0
    _
  %s8 = ssub.s32 1, %s6
  %s9 = scalar_select 0, %s8, %s6
  loop: start=0, step=1, limit=4
  $region2: #{_lambda_.20} parent=0 // loop_pre_header
    _
  $region3: #{_lambda_.20} parent=0 // loop_header
    %s11 = sphi 0, %s15
    %p12 = scmp.ge.s32.totalorder %s11, 4
    %s21 = sphi 0, %s23
    %s24 = sphi 0, %s21
    %s25 = sphi 0, %s24
    %s41 = sphi 0, %s25
    %s45 = sphi 0, %s45
    %s47 = sphi 0, %s45
    %s48 = sphi 0, %s47
    %s62 = sphi 0, %s48
    %s66 = sphi 0, %s66
    %s68 = sphi 0, %s66
    %s69 = sphi 0, %s68
    %s83 = sphi 0, %s69
    %s89 = sphi 0, %s91
    %s92 = sphi 0, %s89
    %s93 = sphi 0, %s92
    %s109 = sphi 0, %s93
    %s115 = sphi 0, %s117
    %s118 = sphi 0, %s115
    %s119 = sphi 0, %s118
    %s135 = sphi 0, %s119
  $region4: #{_lambda_.20} parent=0 // loop_header_branch
    %14 = sbr.rel (%p12) target = $region8
  $region5: #{_lambda_.20} parent=0 // loop_body
    %s16 = ssub.s32 %s11, 1
    %s17 = ssub.s32 %s11, 2
    %s18 = sadd.s32 %s11, 1
    %s19 = ssub.s32 %s11, %s18
    %p20 = scmp.eq.s32.totalorder %s19, 0
    %s22 = sadd.s32 %s21, 1
    %s23 = scalar_select %p20, %s21, %s22
    %p26 = pneg %p20
    %p27 = scmp.eq.s32.totalorder %s11, 1
    %p28 = por %p26, %p27
    %p29 = scmp.ne.s32.totalorder %s21, %s24
    %p30 = scmp.eq.s32.totalorder %s11, 0
    %p31 = por %p29, %p30
    %p32 = scmp.ne.s32.totalorder %s21, %s24
    %p33 = scmp.eq.s32.totalorder %s16, 1
    %p34 = por %p32, %p33
    %p35 = scmp.ne.s32.totalorder %s24, %s25
    %p36 = scmp.eq.s32.totalorder %s16, 0
    %p37 = por %p35, %p36
    %p38 = scmp.ne.s32.totalorder %s24, %s25
    %p39 = scmp.eq.s32.totalorder %s17, 1
    %p40 = por %p38, %p39
    %p42 = scmp.ne.s32.totalorder %s25, %s41
    %p43 = scmp.eq.s32.totalorder %s17, 0
    %p44 = por %p42, %p43
    %s46 = sadd.s32 %s45, 1
    %p49 = scmp.eq.s32.totalorder %s11, 1
    %p50 = scmp.ne.s32.totalorder %s45, %s47
    %p51 = scmp.eq.s32.totalorder %s11, 0
    %p52 = por %p50, %p51
    %p53 = scmp.ne.s32.totalorder %s45, %s47
    %p54 = scmp.eq.s32.totalorder %s16, 1
    %p55 = por %p53, %p54
    %p56 = scmp.ne.s32.totalorder %s47, %s48
    %p57 = scmp.eq.s32.totalorder %s16, 0
    %p58 = por %p56, %p57
    %p59 = scmp.ne.s32.totalorder %s47, %s48
    %p60 = scmp.eq.s32.totalorder %s17, 1
    %p61 = por %p59, %p60
    %p63 = scmp.ne.s32.totalorder %s48, %s62
    %p64 = scmp.eq.s32.totalorder %s17, 0
    %p65 = por %p63, %p64
    %s67 = sadd.s32 %s66, 1
    %p70 = scmp.eq.s32.totalorder %s11, 1
    %p71 = scmp.ne.s32.totalorder %s66, %s68
    %p72 = scmp.eq.s32.totalorder %s11, 0
    %p73 = por %p71, %p72
    %p74 = scmp.ne.s32.totalorder %s66, %s68
    %p75 = scmp.eq.s32.totalorder %s16, 1
    %p76 = por %p74, %p75
    %p77 = scmp.ne.s32.totalorder %s68, %s69
    %p78 = scmp.eq.s32.totalorder %s16, 0
    %p79 = por %p77, %p78
    %p80 = scmp.ne.s32.totalorder %s68, %s69
    %p81 = scmp.eq.s32.totalorder %s17, 1
    %p82 = por %p80, %p81
    %p84 = scmp.ne.s32.totalorder %s69, %s83
    %p85 = scmp.eq.s32.totalorder %s17, 0
    %p86 = por %p84, %p85
    %s87 = ssub.s32 %s11, %s18
    %p88 = scmp.eq.s32.totalorder %s87, 0
    %s90 = sadd.s32 %s89, 1
    %s91 = scalar_select %p88, %s89, %s90
    %p94 = pneg %p88
    %p95 = scmp.eq.s32.totalorder %s11, 1
    %p96 = por %p94, %p95
    %p97 = scmp.ne.s32.totalorder %s89, %s92
    %p98 = scmp.eq.s32.totalorder %s11, 0
    %p99 = por %p97, %p98
    %p100 = scmp.ne.s32.totalorder %s89, %s92
    %p101 = scmp.eq.s32.totalorder %s16, 1
    %p102 = por %p100, %p101
    %p103 = scmp.ne.s32.totalorder %s92, %s93
    %p104 = scmp.eq.s32.totalorder %s16, 0
    %p105 = por %p103, %p104
    %p106 = scmp.ne.s32.totalorder %s92, %s93
    %p107 = scmp.eq.s32.totalorder %s17, 1
    %p108 = por %p106, %p107
    %p110 = scmp.ne.s32.totalorder %s93, %s109
    %p111 = scmp.eq.s32.totalorder %s17, 0
    %p112 = por %p110, %p111
    %s113 = ssub.s32 %s11, %s18
    %p114 = scmp.eq.s32.totalorder %s113, 0
    %s116 = sadd.s32 %s115, 1
    %s117 = scalar_select %p114, %s115, %s116
    %p120 = pneg %p114
    %p121 = scmp.eq.s32.totalorder %s11, 1
    %p122 = por %p120, %p121
    %p123 = scmp.ne.s32.totalorder %s115, %s118
    %p124 = scmp.eq.s32.totalorder %s11, 0
    %p125 = por %p123, %p124
    %p126 = scmp.ne.s32.totalorder %s115, %s118
    %p127 = scmp.eq.s32.totalorder %s16, 1
    %p128 = por %p126, %p127
    %p129 = scmp.ne.s32.totalorder %s118, %s119
    %p130 = scmp.eq.s32.totalorder %s16, 0
    %p131 = por %p129, %p130
    %p132 = scmp.ne.s32.totalorder %s118, %s119
    %p133 = scmp.eq.s32.totalorder %s17, 1
    %p134 = por %p132, %p133
    %p136 = scmp.ne.s32.totalorder %s119, %s135
    %p137 = scmp.eq.s32.totalorder %s17, 0
    %p138 = por %p136, %p137
    %p139 = scmp.le.s32.totalorder 1, %s11
    %p140 = scmp.lt.s32.totalorder %s11, 3
    %p141 = pnand %p139, %p140
    %p142 = pneg %p141
    // Predicated region
    $region9: #{_lambda_.20} parent=5 // pred_check
      _
    $region10: #{_lambda_.20} parent=5 // pred_check_branch
      %144 = sbr.rel (%p141) target = $region12
    $region11: #{_lambda_.20} parent=5 // pred_region
      %s145 = ssub.s32 %s11, 1
      // Predicated region
      $region13: #{_lambda_.20} parent=11 // pred_check
        %p146 = pneg %p58
      $region14: #{_lambda_.20} parent=11 // pred_check_branch
        %148 = sbr.rel (%p146) target = $region16
      $region15: #{_lambda_.20} parent=11 // pred_region
        _
      $region16: #{_lambda_.20} parent=11 // pred_fallthru
        _
      // Predicated region
      $region17: #{_lambda_.20} parent=11 // pred_check
        %p149 = pneg %p79
      $region18: #{_lambda_.20} parent=11 // pred_check_branch
        %151 = sbr.rel (%p149) target = $region20
      $region19: #{_lambda_.20} parent=11 // pred_region
        _
      $region20: #{_lambda_.20} parent=11 // pred_fallthru
        _
    $region12: #{_lambda_.20} parent=5 // pred_fallthru
      _
    %p152 = scmp.lt.s32.totalorder %s11, 2
    // Predicated region
    $region21: #{_lambda_.20} parent=5 // pred_check
      %p153 = pneg %p152
    $region22: #{_lambda_.20} parent=5 // pred_check_branch
      %155 = sbr.rel (%p153) target = $region24
    $region23: #{_lambda_.20} parent=5 // pred_region
      // Predicated region
      $region25: #{_lambda_.20} parent=23 // pred_check
        %p156 = pneg %p31
      $region26: #{_lambda_.20} parent=23 // pred_check_branch
        %158 = sbr.rel (%p156) target = $region28
      $region27: #{_lambda_.20} parent=23 // pred_region
        %p159 = scmp.lt.s32.totalorder %s11, 1
        %s160 = scalar_select %p159, %s11, 1
        %s161 = smul.addr %s160, 8
        %s162 = smul.addr %s161, 4
        %s163 = scalar_lea.vmem %s0, %s162
      $region28: #{_lambda_.20} parent=23 // pred_fallthru
        _
    $region24: #{_lambda_.20} parent=5 // pred_fallthru
      _
    %p164 = scmp.le.s32.totalorder 1, %s11
    %p165 = scmp.lt.s32.totalorder %s11, 3
    %p166 = pnand %p164, %p165
    %p167 = pneg %p166
    // Predicated region
    $region29: #{_lambda_.20} parent=5 // pred_check
      _
    $region30: #{_lambda_.20} parent=5 // pred_check_branch
      %169 = sbr.rel (%p166) target = $region32
    $region31: #{_lambda_.20} parent=5 // pred_region
      %s170 = ssub.s32 %s11, 1
      %p171 = scmp.lt.s32.totalorder %s16, 1
      %s172 = scalar_select %p171, %s16, 1
      %s173 = smul.addr %s172, 8
      %s174 = smul.addr %s173, 4
      %s175 = scalar_lea.vmem %s0, %s174
      %p176 = pneg %p37
      %p177 = pneg %p34
      %p178 = pneg %p58
      %p179 = pneg %p55
      %p180 = pneg %p79
      %p181 = pneg %p76
      %p182 = pneg %p105
      %p183 = pneg %p102
      %p184 = scmp.lt.s32.totalorder %s16, 1
      %s185 = scalar_select %p184, %s16, 1
      %s186 = smul.addr %s185, 8
      %s187 = smul.addr %s186, 4
      %s188 = scalar_lea.vmem %s3, %s187
      %p189 = pneg %p131
      %p190 = pneg %p128
      %p191 = scmp.lt.s32.totalorder %s16, 1
      %s192 = scalar_select %p191, %s16, 1
      %s193 = smul.addr %s192, 2
      %s194 = smul.addr %s193, 2
      %s195 = scalar_lea.vmem %s4, %s194
      %p196 = scmp.lt.s32.totalorder %s16, 1
      %s197 = scalar_select %p196, %s16, 1
      %s198 = smul.addr %s197, 8
      %s199 = smul.addr %s198, 4
      %s200 = scalar_lea.vmem %s0, %s199
      %p201 = scmp.lt.s32.totalorder %s16, 1
      %s202 = scalar_select %p201, %s16, 1
      %s203 = smul.addr %s202, 8
      %s204 = smul.addr %s203, 4
      %s205 = scalar_lea.vmem %s3, %s204
      %p206 = scmp.lt.s32.totalorder %s16, 1
      %s207 = scalar_select %p206, %s16, 1
      %s208 = smul.addr %s207, 2
      %s209 = smul.addr %s208, 2
      %s210 = scalar_lea.vmem %s4, %s209
      %v212 = vlaneseq
      %v213 = vand.u32 %v212, 127
      %v214 = vadd.s32 %v213, 128
      %vm215 = vcmp.lt.s32.totalorder %v213, 0
      %v216 = vsub.s32 0, %v213
      %v217 = vsel %vm215, %v216, %v213
      %v218 = vshrl.u32 %v217, 4
      %v219 = vand.u32 %v217, 15
      %v220 = vsub.s32 0, %v219
      %v221 = vsel %vm215, %v220, %v219
      %vm222 = vcmp.lt.s32.totalorder %v214, 0
      %v223 = vsub.s32 0, %v214
      %v224 = vsel %vm222, %v223, %v214
      %v225 = vshrl.u32 %v224, 4
      %v226 = vand.u32 %v224, 15
      %v227 = vsub.s32 0, %v226
      %v228 = vsel %vm222, %v227, %v226
      %vm229 = vcmp.ne.s32.totalorder %v221, 0
      %vm230 = vcmp.ne.s32.totalorder %v228, 0
      %vm231 = vcmp.lt.s32.totalorder %v221, 0
      %vm232 = vcmp.lt.s32.totalorder %v228, 0
      %vm233 = vmand %vm231, %vm229
      %vm234 = vmand %vm232, %vm230
      %v235 = vadd.s32 %v221, 16
      %v236 = vadd.s32 %v228, 16
      %v237 = vsel %vm233, %v235, %v221
      %v238 = vsel %vm234, %v236, %v228
      %vm239 = vcmp.ge.s32.totalorder %v237, 1
      %vm240 = vcmp.ge.s32.totalorder %v238, 1
      %v241 = vsel %vm239, 1, 0
      %v242 = vsel %vm240, 1, 0
      %v243 = vcvt.s32.f32 %v241
      %v244 = vcvt.s32.f32 %v242
      %v245 = vpack.c.bf16 %v243, %v243
      %v246 = vpack.c.bf16 %v244, %v244
      %vm247 = vcmp.le.s32.totalorder %v237, 14
      %vm248 = vcmp.le.s32.totalorder %v238, 14
      %v249 = vsel %vm247, 1, 0
      %v250 = vsel %vm248, 1, 0
      %v251 = vcvt.s32.f32 %v249
      %v252 = vcvt.s32.f32 %v250
      %v253 = vpack.c.bf16 %v251, %v251
      %v254 = vpack.c.bf16 %v252, %v252
      %v255 = vld [vmem:[%s200] sm:$0xff]
      %v256 = vld [vmem:[%s200 + $0x8] sm:$0xf]
      %v257 = vld [vmem:[%s200 + $0x10] sm:$0xff]
      %v258 = vld [vmem:[%s200 + $0x18] sm:$0xf]
      %v261 = vunpack.c.l.b16 %v245
      %v262 = vunpack.c.l.b16 %v246
      %v263 = vpack.c.b16 %v262, %v261
      %264 = vrot.lane.b32.xlu0 %v263, 111
      %v265 = vpop.permute.xlu0 %264
      %v266 = vrot.slane %v265, 4
      %vm267 = vcmask 908288
      %v268 = vsel %vm267, %v266, %v265
      %v271 = vmul.bf16 %v255, %v268
      %v272 = vmul.bf16 %v256, %v266
      %v273 = vmul.bf16 %v257, %v268
      %v274 = vmul.bf16 %v258, %v266
      %v279 = vunpack.c.l.b16 %v271
      %v280 = vunpack.c.h.b16 %v271
      %v281 = vunpack.c.l.b16 %v272
      %v282 = vunpack.c.l.b16 %v273
      %v283 = vunpack.c.h.b16 %v273
      %v284 = vunpack.c.l.b16 %v274
      %v285 = vpack.c.b16 %v282, %v279
      %v286 = vpack.c.b16 %v283, %v280
      %v287 = vpack.c.b16 %v284, %v281
      %288 = vrot.lane.b32.xlu0 %v285, 17
      %v289 = vpop.permute.xlu0 %288
      %290 = vrot.lane.b32.xlu0 %v286, 17
      %v291 = vpop.permute.xlu0 %290
      %292 = vrot.lane.b32.xlu0 %v287, 17
      %v293 = vpop.permute.xlu0 %292
      %vm294 = vcmask 138240
      %v295 = vsel %vm294, %v289, %v291
      %v296 = vsel %vm294, %v291, %v293
      %299 = vst [vmem:[#allocation2] sm:$0xff] %v295
      %300 = vst [vmem:[#allocation2 + $0x8] sm:$0xff] %v296
      %v301 = vld [vmem:[%s200] sm:$0xff]
      %v302 = vld [vmem:[%s200 + $0x8] sm:$0xf]
      %v303 = vld [vmem:[%s200 + $0x10] sm:$0xff]
      %v304 = vld [vmem:[%s200 + $0x18] sm:$0xf]
      %v309 = vunpack.c.l.b16 %v301
      %v310 = vunpack.c.h.b16 %v301
      %v311 = vunpack.c.l.b16 %v302
      %v312 = vunpack.c.l.b16 %v303
      %v313 = vunpack.c.h.b16 %v303
      %v314 = vunpack.c.l.b16 %v304
      %v315 = vpack.c.b16 %v312, %v309
      %v316 = vpack.c.b16 %v313, %v310
      %v317 = vpack.c.b16 %v314, %v311
      %318 = vrot.lane.b32.xlu0 %v315, 16
      %v319 = vpop.permute.xlu0 %318
      %320 = vrot.lane.b32.xlu0 %v316, 16
      %v321 = vpop.permute.xlu0 %320
      %322 = vrot.lane.b32.xlu0 %v317, 16
      %v323 = vpop.permute.xlu0 %322
      %vm324 = vcmask 130048
      %v325 = vsel %vm324, %v319, %v321
      %v326 = vsel %vm324, %v321, %v323
      %329 = vst [vmem:[#allocation2 + $0x10] sm:$0xff] %v325
      %330 = vst [vmem:[#allocation2 + $0x18] sm:$0xff] %v326
      %v331 = vld [vmem:[%s200] sm:$0xff]
      %v332 = vld [vmem:[%s200 + $0x8] sm:$0xf]
      %v333 = vld [vmem:[%s200 + $0x10] sm:$0xff]
      %v334 = vld [vmem:[%s200 + $0x18] sm:$0xf]
      %v337 = vunpack.c.l.b16 %v253
      %v338 = vunpack.c.l.b16 %v254
      %v339 = vpack.c.b16 %v338, %v337
      %340 = vrot.lane.b32.xlu0 %v339, 113
      %v341 = vpop.permute.xlu0 %340
      %v342 = vrot.slane %v341, 4
      %vm343 = vcmask 924672
      %v344 = vsel %vm343, %v342, %v341
      %v347 = vmul.bf16 %v331, %v344
      %v348 = vmul.bf16 %v332, %v342
      %v349 = vmul.bf16 %v333, %v344
      %v350 = vmul.bf16 %v334, %v342
      %v355 = vunpack.c.l.b16 %v347
      %v356 = vunpack.c.h.b16 %v347
      %v357 = vunpack.c.l.b16 %v348
      %v358 = vunpack.c.l.b16 %v349
      %v359 = vunpack.c.h.b16 %v349
      %v360 = vunpack.c.l.b16 %v350
      %v361 = vpack.c.b16 %v358, %v355
      %v362 = vpack.c.b16 %v359, %v356
      %v363 = vpack.c.b16 %v360, %v357
      %364 = vrot.lane.b32.xlu0 %v361, 15
      %v365 = vpop.permute.xlu0 %364
      %366 = vrot.lane.b32.xlu0 %v362, 15
      %v367 = vpop.permute.xlu0 %366
      %368 = vrot.lane.b32.xlu0 %v363, 15
      %v369 = vpop.permute.xlu0 %368
      %vm370 = vcmask 121856
      %v371 = vsel %vm370, %v365, %v367
      %v372 = vsel %vm370, %v367, %v369
      %375 = vst [vmem:[#allocation2 + $0x20] sm:$0xff] %v371
      %376 = vst [vmem:[#allocation2 + $0x28] sm:$0xff] %v372
      %v377 = vld [vmem:[%s200] sm:$0xff]
      %v378 = vld [vmem:[%s200 + $0x8] sm:$0xf]
      %v379 = vld [vmem:[%s200 + $0x10] sm:$0xff]
      %v380 = vld [vmem:[%s200 + $0x18] sm:$0xf]
      %381 = vrot.lane.b32.xlu0 %v263, 127
      %v382 = vpop.permute.xlu0 %381
      %v383 = vrot.slane %v382, 4
      %vm384 = vcmask 1039360
      %v385 = vsel %vm384, %v383, %v382
      %v388 = vmul.bf16 %v377, %v385
      %v389 = vmul.bf16 %v378, %v383
      %v390 = vmul.bf16 %v379, %v385
      %v391 = vmul.bf16 %v380, %v383
      %v396 = vunpack.c.l.b16 %v388
      %v397 = vunpack.c.h.b16 %v388
      %v398 = vunpack.c.l.b16 %v389
      %v399 = vunpack.c.l.b16 %v390
      %v400 = vunpack.c.h.b16 %v390
      %v401 = vunpack.c.l.b16 %v391
      %v402 = vpack.c.b16 %v399, %v396
      %v403 = vpack.c.b16 %v400, %v397
      %v404 = vpack.c.b16 %v401, %v398
      %405 = vrot.lane.b32.xlu0 %v402, 1
      %v406 = vpop.permute.xlu0 %405
      %407 = vrot.lane.b32.xlu0 %v403, 1
      %v408 = vpop.permute.xlu0 %407
      %409 = vrot.lane.b32.xlu0 %v404, 1
      %v410 = vpop.permute.xlu0 %409
      %vm411 = vcmask 7168
      %v412 = vsel %vm411, %v406, %v408
      %v413 = vsel %vm411, %v408, %v410
      %416 = vst [vmem:[#allocation2 + $0x30] sm:$0xff] %v412
      %417 = vst [vmem:[#allocation2 + $0x38] sm:$0xff] %v413
      %v418 = vld [vmem:[%s200 + $0x4] sm:$0xff]
      %v419 = vld [vmem:[%s200 + $0x14] sm:$0xff]
      %v422 = vunpack.c.l.b16 %v418
      %v423 = vunpack.c.h.b16 %v418
      %v424 = vunpack.c.l.b16 %v419
      %v425 = vunpack.c.h.b16 %v419
      %v426 = vpack.c.b16 %v424, %v422
      %v427 = vpack.c.b16 %v425, %v423
      %430 = vst [vmem:[#allocation2 + $0x40] sm:$0xff] %v426
      %431 = vst [vmem:[#allocation2 + $0x48] sm:$0xff] %v427
      %v432 = vld [vmem:[%s200 + $0x4] sm:$0xff]
      %v433 = vld [vmem:[%s200 + $0xc] sm:$0xf]
      %v434 = vld [vmem:[%s200 + $0x14] sm:$0xff]
      %v435 = vld [vmem:[%s200 + $0x1c] sm:$0xf]
      %436 = vrot.lane.b32.xlu0 %v339, 1
      %v437 = vpop.permute.xlu0 %436
      %v438 = vrot.slane %v437, 4
      %v439 = vsel %vm411, %v438, %v437
      %v442 = vmul.bf16 %v432, %v439
      %v443 = vmul.bf16 %v433, %v438
      %v444 = vmul.bf16 %v434, %v439
      %v445 = vmul.bf16 %v435, %v438
      %v450 = vunpack.c.l.b16 %v442
      %v451 = vunpack.c.h.b16 %v442
      %v452 = vunpack.c.l.b16 %v443
      %v453 = vunpack.c.l.b16 %v444
      %v454 = vunpack.c.h.b16 %v444
      %v455 = vunpack.c.l.b16 %v445
      %v456 = vpack.c.b16 %v453, %v450
      %v457 = vpack.c.b16 %v454, %v451
      %v458 = vpack.c.b16 %v455, %v452
      %459 = vrot.lane.b32.xlu0 %v456, 127
      %v460 = vpop.permute.xlu0 %459
      %461 = vrot.lane.b32.xlu0 %v457, 127
      %v462 = vpop.permute.xlu0 %461
      %463 = vrot.lane.b32.xlu0 %v458, 127
      %v464 = vpop.permute.xlu0 %463
      %v465 = vsel %vm384, %v460, %v462
      %v466 = vsel %vm384, %v462, %v464
      %469 = vst [vmem:[#allocation2 + $0x50] sm:$0xff] %v465
      %470 = vst [vmem:[#allocation2 + $0x58] sm:$0xff] %v466
      %v471 = vld [vmem:[%s200 + $0x4] sm:$0xff]
      %v472 = vld [vmem:[%s200 + $0xc] sm:$0xf]
      %v473 = vld [vmem:[%s200 + $0x14] sm:$0xff]
      %v474 = vld [vmem:[%s200 + $0x1c] sm:$0xf]
      %475 = vrot.lane.b32.xlu0 %v263, 15
      %v476 = vpop.permute.xlu0 %475
      %v477 = vrot.slane %v476, 4
      %v478 = vsel %vm370, %v477, %v476
      %v481 = vmul.bf16 %v471, %v478
      %v482 = vmul.bf16 %v472, %v477
      %v483 = vmul.bf16 %v473, %v478
      %v484 = vmul.bf16 %v474, %v477
      %v489 = vunpack.c.l.b16 %v481
      %v490 = vunpack.c.h.b16 %v481
      %v491 = vunpack.c.l.b16 %v482
      %v492 = vunpack.c.l.b16 %v483
      %v493 = vunpack.c.h.b16 %v483
      %v494 = vunpack.c.l.b16 %v484
      %v495 = vpack.c.b16 %v492, %v489
      %v496 = vpack.c.b16 %v493, %v490
      %v497 = vpack.c.b16 %v494, %v491
      %498 = vrot.lane.b32.xlu0 %v495, 113
      %v499 = vpop.permute.xlu0 %498
      %500 = vrot.lane.b32.xlu0 %v496, 113
      %v501 = vpop.permute.xlu0 %500
      %502 = vrot.lane.b32.xlu0 %v497, 113
      %v503 = vpop.permute.xlu0 %502
      %v504 = vsel %vm343, %v499, %v501
      %v505 = vsel %vm343, %v501, %v503
      %508 = vst [vmem:[#allocation2 + $0x60] sm:$0xff] %v504
      %509 = vst [vmem:[#allocation2 + $0x68] sm:$0xff] %v505
      %v510 = vld [vmem:[%s200 + $0x4] sm:$0xff]
      %v511 = vld [vmem:[%s200 + $0xc] sm:$0xf]
      %v512 = vld [vmem:[%s200 + $0x14] sm:$0xff]
      %v513 = vld [vmem:[%s200 + $0x1c] sm:$0xf]
      %v518 = vunpack.c.l.b16 %v510
      %v519 = vunpack.c.h.b16 %v510
      %v520 = vunpack.c.l.b16 %v511
      %v521 = vunpack.c.l.b16 %v512
      %v522 = vunpack.c.h.b16 %v512
      %v523 = vunpack.c.l.b16 %v513
      %v524 = vpack.c.b16 %v521, %v518
      %v525 = vpack.c.b16 %v522, %v519
      %v526 = vpack.c.b16 %v523, %v520
      %527 = vrot.lane.b32.xlu0 %v524, 112
      %v528 = vpop.permute.xlu0 %527
      %529 = vrot.lane.b32.xlu0 %v525, 112
      %v530 = vpop.permute.xlu0 %529
      %531 = vrot.lane.b32.xlu0 %v526, 112
      %v532 = vpop.permute.xlu0 %531
      %vm533 = vcmask 916480
      %v534 = vsel %vm533, %v528, %v530
      %v535 = vsel %vm533, %v530, %v532
      %538 = vst [vmem:[#allocation2 + $0x70] sm:$0xff] %v534
      %539 = vst [vmem:[#allocation2 + $0x78] sm:$0xff] %v535
      %v540 = vld [vmem:[%s200 + $0x4] sm:$0xff]
      %v541 = vld [vmem:[%s200 + $0xc] sm:$0xf]
      %v542 = vld [vmem:[%s200 + $0x14] sm:$0xff]
      %v543 = vld [vmem:[%s200 + $0x1c] sm:$0xf]
      %544 = vrot.lane.b32.xlu0 %v339, 17
      %v545 = vpop.permute.xlu0 %544
      %v546 = vrot.slane %v545, 4
      %v547 = vsel %vm294, %v546, %v545
      %v550 = vmul.bf16 %v540, %v547
      %v551 = vmul.bf16 %v541, %v546
      %v552 = vmul.bf16 %v542, %v547
      %v553 = vmul.bf16 %v543, %v546
      %v558 = vunpack.c.l.b16 %v550
      %v559 = vunpack.c.h.b16 %v550
      %v560 = vunpack.c.l.b16 %v551
      %v561 = vunpack.c.l.b16 %v552
      %v562 = vunpack.c.h.b16 %v552
      %v563 = vunpack.c.l.b16 %v553
      %v564 = vpack.c.b16 %v561, %v558
      %v565 = vpack.c.b16 %v562, %v559
      %v566 = vpack.c.b16 %v563, %v560
      %567 = vrot.lane.b32.xlu0 %v564, 111
      %v568 = vpop.permute.xlu0 %567
      %569 = vrot.lane.b32.xlu0 %v565, 111
      %v570 = vpop.permute.xlu0 %569
      %571 = vrot.lane.b32.xlu0 %v566, 111
      %v572 = vpop.permute.xlu0 %571
      %v573 = vsel %vm267, %v568, %v570
      %v574 = vsel %vm267, %v570, %v572
      %577 = vst [vmem:[#allocation2 + $0x80] sm:$0xff] %v573
      %578 = vst [vmem:[#allocation2 + $0x88] sm:$0xff] %v574
      %v579 = vld [vmem:[%s1] sm:$0xf]
      %v580 = vld [vmem:[#allocation2] sm:$0xff]
      %v581 = vld [vmem:[#allocation2 + $0x8] sm:$0xff]
      %v582 = vld [vmem:[#allocation2 + $0x10] sm:$0xff]
      %v583 = vld [vmem:[#allocation2 + $0x18] sm:$0xff]
      %v584 = vld [vmem:[#allocation2 + $0x20] sm:$0xff]
      %v585 = vld [vmem:[#allocation2 + $0x28] sm:$0xff]
      %v586 = vld [vmem:[#allocation2 + $0x30] sm:$0xff]
      %v587 = vld [vmem:[#allocation2 + $0x38] sm:$0xff]
      %v588 = vld [vmem:[#allocation2 + $0x40] sm:$0xff]
      %v589 = vld [vmem:[#allocation2 + $0x48] sm:$0xff]
      %v590 = vld [vmem:[#allocation2 + $0x50] sm:$0xff]
      %v591 = vld [vmem:[#allocation2 + $0x58] sm:$0xff]
      %v592 = vld [vmem:[#allocation2 + $0x60] sm:$0xff]
      %v593 = vld [vmem:[#allocation2 + $0x68] sm:$0xff]
      %v594 = vld [vmem:[#allocation2 + $0x70] sm:$0xff]
      %v595 = vld [vmem:[#allocation2 + $0x78] sm:$0xff]
      %v596 = vld [vmem:[#allocation2 + $0x80] sm:$0xff]
      %v597 = vld [vmem:[#allocation2 + $0x88] sm:$0xff]
      %v598 = vld [vmem:[%s2] sm:$0xf]
      %600 = vset.pattern.permute.xlu0 0
      %601 = vperm.xlu0 %600, %v598
      %v602 = vpop.permute.xlu0 %601
      %v606 = vunpack.c.l.s4 1983009808
      %v607 = vunpack.c.0.s8 %v606
      %v608 = vlaneseq
      %v609 = vshrl.u32 %v608, 7
      %v610 = vsub.s32 %v607, %v609
      %v611 = vrot.slane %v579, %v610
      %v612 = vcombine.high %v611, %v611
      %vm614 = vcmask 130048
      %v616 = vsel %vm614, %v612, 0
      %618 = vmatprep.subr.bf16.mxu0 %v581
      %619 = vmatpush1.bf16.msra.mxu0 %v580
      %620 = vmatprep.subr.bf16.mxu0 %v583
      %621 = vmatpush1.bf16.msra.mxu0 %v582
      %622 = vmatprep.subr.bf16.mxu0 %v585
      %623 = vmatpush1.bf16.msra.mxu0 %v584
      %624 = vmatprep.subr.bf16.mxu0 %v587
      %625 = vmatpush1.bf16.msra.mxu0 %v586
      %626 = vmatprep.subr.bf16.mxu0 %v589
      %627 = vmatpush1.bf16.msra.mxu0 %v588
      %628 = vmatprep.subr.bf16.mxu0 %v591
      %629 = vmatpush1.bf16.msra.mxu0 %v590
      %630 = vmatprep.subr.bf16.mxu0 %v593
      %631 = vmatpush1.bf16.msra.mxu0 %v592
      %632 = vmatprep.subr.bf16.mxu0 %v595
      %633 = vmatpush1.bf16.msra.mxu0 %v594
      %634 = vmatprep.subr.bf16.mxu0 %v597
      %635 = vmatpush1.bf16.msra.mxu0 %v596
      %636 = vmatprep.subr.bf16.mxu0 0
      %637 = vmatpush1.bf16.msra.mxu0 0
      %638 = vmatprep.subr.bf16.mxu0 0
      %639 = vmatpush1.bf16.msra.mxu0 0
      %640 = vmatprep.subr.bf16.mxu0 0
      %641 = vmatpush1.bf16.msra.mxu0 0
      %642 = vmatprep.subr.bf16.mxu0 0
      %643 = vmatpush1.bf16.msra.mxu0 0
      %644 = vmatprep.subr.bf16.mxu0 0
      %645 = vmatpush1.bf16.msra.mxu0 0
      %646 = vmatprep.subr.bf16.mxu0 0
      %647 = vmatpush1.bf16.msra.mxu0 0
      %648 = vmatprep.subr.bf16.mxu0 0
      %649 = vmatpush1.bf16.msra.mxu0 0
      %650 = vmatprep.mubr.bf16.mxu0 %v616
      %651 = vmatmul.mubr.bf16.gmra.mrb[0].mxu0 %v611
      %v652 = vpop.f32.mrb[0].mxu0
      %v653 = vadd.f32 %v602, %v652
      %v654 = vpop.f32.mrb[0].mxu0
      %v655 = vadd.f32 %v602, %v654
      %v656 = vpop.f32.mrb[0].mxu0
      %v657 = vpop.f32.mrb[0].mxu0
      %658 = vdwg.mxu0
      %vm659 = vcmask 1043456
      %v660 = vsel %vm659, %v653, 0.0
      %v661 = vsel %vm659, %v655, 0.0
      %v662 = vadd.f32 %v660, %v661
      %663 = vadd.xlane.f32.xlu0 %v662
      %v664 = vpop.xlane.xlu0 %663
      %v665 = vrcp.pop 256.0
      %v666 = vmul.f32 %v664, %v665
      %v667 = vsub.f32 %v653, %v666
      %v668 = vsub.f32 %v655, %v666
      %v669 = vmul.f32 %v667, %v667
      %v670 = vmul.f32 %v668, %v668
      %v671 = vsel %vm659, %v669, 0.0
      %v672 = vsel %vm659, %v670, 0.0
      %v673 = vadd.f32 %v671, %v672
      %674 = vadd.xlane.f32.xlu0 %v673
      %v675 = vpop.xlane.xlu0 %674
      %v676 = vmul.f32 %v675, %v665
      %v677 = vadd.f32 %v676, 1e-05
      %v678 = vrsqrt.pop %v677
      %v679 = vmul.f32 %v667, %v678
      %v680 = vmul.f32 %v668, %v678
      %v681 = vmax.f32 %v679, 0.0
      %v682 = vmax.f32 %v680, 0.0
      %683 = vst [vmem:[%s205] sm:$0xff] 0
      %684 = vst [vmem:[%s205 + $0x8] sm:$0xff] 0
      %685 = vst [vmem:[%s205 + $0x10] sm:$0xff] 0
      %686 = vst [vmem:[%s205 + $0x18] sm:$0xff] 0
      %v687 = vpack.c.bf16 %v681, %v681
      %v688 = vpack.c.bf16 %v682, %v682
      %v691 = vunpack.c.l.b16 %v687
      %v692 = vunpack.c.l.b16 %v688
      %v693 = vpack.c.b16 %v692, %v691
      %695 = vst [vmem:[%s205 + $0x4] sm:$0x33] %v693
      %v696 = vcombine.low %v687, %v688
      %v698 = vunpack.c.l.s4 1983009808
      %v699 = vunpack.c.0.s8 %v698
      %v700 = vlaneseq
      %v701 = vshrl.u32 %v700, 7
      %v702 = vsub.s32 %v699, %v701
      %v703 = vrot.slane %v696, %v702
      %705 = vst [vmem:[%s210] sm:$0xf] %v703
      %p706 = scmp.lt.s32.totalorder %s16, 1
      %s707 = scalar_select %p706, %s16, 1
      %s708 = smul.addr %s707, 8
      %s709 = smul.addr %s708, 4
      %s710 = scalar_lea.vmem %s3, %s709
      %p711 = scmp.lt.s32.totalorder %s16, 1
      %s712 = scalar_select %p711, %s16, 1
      %s713 = smul.addr %s712, 2
      %s714 = smul.addr %s713, 2
      %s715 = scalar_lea.vmem %s4, %s714
      // Predicated region
      $region33: #{_lambda_.20} parent=31 // pred_check
        %p716 = pneg %p102
      $region34: #{_lambda_.20} parent=31 // pred_check_branch
        %718 = sbr.rel (%p716) target = $region36
      $region35: #{_lambda_.20} parent=31 // pred_region
        _
      $region36: #{_lambda_.20} parent=31 // pred_fallthru
        _
      // Predicated region
      $region37: #{_lambda_.20} parent=31 // pred_check
        %p719 = pneg %p128
      $region38: #{_lambda_.20} parent=31 // pred_check_branch
        %721 = sbr.rel (%p719) target = $region40
      $region39: #{_lambda_.20} parent=31 // pred_region
        _
      $region40: #{_lambda_.20} parent=31 // pred_fallthru
        _
    $region32: #{_lambda_.20} parent=5 // pred_fallthru
      _
    %p722 = scmp.le.s32.totalorder 2, %s11
    // Predicated region
    $region41: #{_lambda_.20} parent=5 // pred_check
      %p723 = pneg %p722
    $region42: #{_lambda_.20} parent=5 // pred_check_branch
      %725 = sbr.rel (%p723) target = $region44
    $region43: #{_lambda_.20} parent=5 // pred_region
      %s726 = ssub.s32 %s11, 2
      // Predicated region
      $region45: #{_lambda_.20} parent=43 // pred_check
        %p727 = pneg %p108
      $region46: #{_lambda_.20} parent=43 // pred_check_branch
        %729 = sbr.rel (%p727) target = $region48
      $region47: #{_lambda_.20} parent=43 // pred_region
        %p730 = scmp.lt.s32.totalorder %s17, 1
        %s731 = scalar_select %p730, %s17, 1
        %s732 = smul.addr %s731, 8
        %s733 = smul.addr %s732, 4
        %s734 = scalar_lea.vmem %s3, %s733
      $region48: #{_lambda_.20} parent=43 // pred_fallthru
        _
      // Predicated region
      $region49: #{_lambda_.20} parent=43 // pred_check
        %p735 = pneg %p134
      $region50: #{_lambda_.20} parent=43 // pred_check_branch
        %737 = sbr.rel (%p735) target = $region52
      $region51: #{_lambda_.20} parent=43 // pred_region
        %p738 = scmp.lt.s32.totalorder %s17, 1
        %s739 = scalar_select %p738, %s17, 1
        %s740 = smul.addr %s739, 2
        %s741 = smul.addr %s740, 2
        %s742 = scalar_lea.vmem %s4, %s741
      $region52: #{_lambda_.20} parent=43 // pred_fallthru
        _
    $region44: #{_lambda_.20} parent=5 // pred_fallthru
      _
  $region6: #{_lambda_.20} parent=0 // loop_footer
    %s15 = sadd.s32 1, %s11
  $region7: #{_lambda_.20} parent=0 // loop_footer_branch
    %10 = sbr.rel target = $region3
  $region8: #{_lambda_.20} parent=0 // loop_exit
    _

// kernel: _lambda_.21
$region0: #{_lambda_.21}
  #allocation0 [shape = 'u32[]', space=smem, size = 0x4, offset = 0x4, fixed_abs, tag = 'smem constant byte address 0x4 - core index']
  #allocation1 [shape = 'u32[144,128]{1,0:T(1,128)}', space=vmem, size = 0x12000, scoped, tag = 'internal scratch']
  #allocation2 [shape = 'bf16[144,64]{1,0:T(16,128)(2,1)}', space=vmem, size = 0x9000, scoped, tag = 'scratch operand']
  %s0 = inlined_call_operand.vmem [shape: bf16[2,16,256], index: 0, kind: input, shape index: {}]
  %s1 = inlined_call_operand.vmem [shape: bf16[1,8,144], index: 1, kind: input, shape index: {}]
  %s2 = inlined_call_operand.vmem [shape: f32[8,1], index: 2, kind: input, shape index: {}]
  %s3 = inlined_call_operand.vmem [shape: bf16[2,16,256], index: 3, kind: output, shape index: {0}]
  %s4 = inlined_call_operand.vmem [shape: bf16[2,8,64], index: 4, kind: output, shape index: {1}]
  %5 = xla_tuple %s3, %s4
  %s6 = sld [smem:[#allocation0]]
  $region53: #{_lambda_.21} parent=0
    _
  %s8 = ssub.s32 1, %s6
  %s9 = scalar_select 0, %s8, %s6
  loop: start=0, step=1, limit=4
  $region2: #{_lambda_.21} parent=0 // loop_pre_header
    _
  $region3: #{_lambda_.21} parent=0 // loop_header
    %s11 = sphi 0, %s15
    %p12 = scmp.ge.s32.totalorder %s11, 4
    %s21 = sphi 0, %s23
    %s24 = sphi 0, %s21
    %s25 = sphi 0, %s24
    %s41 = sphi 0, %s25
    %s45 = sphi 0, %s45
    %s47 = sphi 0, %s45
    %s48 = sphi 0, %s47
    %s62 = sphi 0, %s48
    %s66 = sphi 0, %s66
    %s68 = sphi 0, %s66
    %s69 = sphi 0, %s68
    %s83 = sphi 0, %s69
    %s89 = sphi 0, %s91
    %s92 = sphi 0, %s89
    %s93 = sphi 0, %s92
    %s109 = sphi 0, %s93
    %s115 = sphi 0, %s117
    %s118 = sphi 0, %s115
    %s119 = sphi 0, %s118
    %s135 = sphi 0, %s119
  $region4: #{_lambda_.21} parent=0 // loop_header_branch
    %14 = sbr.rel (%p12) target = $region8
  $region5: #{_lambda_.21} parent=0 // loop_body
    %s16 = ssub.s32 %s11, 1
    %s17 = ssub.s32 %s11, 2
    %s18 = sadd.s32 %s11, 1
    %s19 = ssub.s32 %s11, %s18
    %p20 = scmp.eq.s32.totalorder %s19, 0
    %s22 = sadd.s32 %s21, 1
    %s23 = scalar_select %p20, %s21, %s22
    %p26 = pneg %p20
    %p27 = scmp.eq.s32.totalorder %s11, 1
    %p28 = por %p26, %p27
    %p29 = scmp.ne.s32.totalorder %s21, %s24
    %p30 = scmp.eq.s32.totalorder %s11, 0
    %p31 = por %p29, %p30
    %p32 = scmp.ne.s32.totalorder %s21, %s24
    %p33 = scmp.eq.s32.totalorder %s16, 1
    %p34 = por %p32, %p33
    %p35 = scmp.ne.s32.totalorder %s24, %s25
    %p36 = scmp.eq.s32.totalorder %s16, 0
    %p37 = por %p35, %p36
    %p38 = scmp.ne.s32.totalorder %s24, %s25
    %p39 = scmp.eq.s32.totalorder %s17, 1
    %p40 = por %p38, %p39
    %p42 = scmp.ne.s32.totalorder %s25, %s41
    %p43 = scmp.eq.s32.totalorder %s17, 0
    %p44 = por %p42, %p43
    %s46 = sadd.s32 %s45, 1
    %p49 = scmp.eq.s32.totalorder %s11, 1
    %p50 = scmp.ne.s32.totalorder %s45, %s47
    %p51 = scmp.eq.s32.totalorder %s11, 0
    %p52 = por %p50, %p51
    %p53 = scmp.ne.s32.totalorder %s45, %s47
    %p54 = scmp.eq.s32.totalorder %s16, 1
    %p55 = por %p53, %p54
    %p56 = scmp.ne.s32.totalorder %s47, %s48
    %p57 = scmp.eq.s32.totalorder %s16, 0
    %p58 = por %p56, %p57
    %p59 = scmp.ne.s32.totalorder %s47, %s48
    %p60 = scmp.eq.s32.totalorder %s17, 1
    %p61 = por %p59, %p60
    %p63 = scmp.ne.s32.totalorder %s48, %s62
    %p64 = scmp.eq.s32.totalorder %s17, 0
    %p65 = por %p63, %p64
    %s67 = sadd.s32 %s66, 1
    %p70 = scmp.eq.s32.totalorder %s11, 1
    %p71 = scmp.ne.s32.totalorder %s66, %s68
    %p72 = scmp.eq.s32.totalorder %s11, 0
    %p73 = por %p71, %p72
    %p74 = scmp.ne.s32.totalorder %s66, %s68
    %p75 = scmp.eq.s32.totalorder %s16, 1
    %p76 = por %p74, %p75
    %p77 = scmp.ne.s32.totalorder %s68, %s69
    %p78 = scmp.eq.s32.totalorder %s16, 0
    %p79 = por %p77, %p78
    %p80 = scmp.ne.s32.totalorder %s68, %s69
    %p81 = scmp.eq.s32.totalorder %s17, 1
    %p82 = por %p80, %p81
    %p84 = scmp.ne.s32.totalorder %s69, %s83
    %p85 = scmp.eq.s32.totalorder %s17, 0
    %p86 = por %p84, %p85
    %s87 = ssub.s32 %s11, %s18
    %p88 = scmp.eq.s32.totalorder %s87, 0
    %s90 = sadd.s32 %s89, 1
    %s91 = scalar_select %p88, %s89, %s90
    %p94 = pneg %p88
    %p95 = scmp.eq.s32.totalorder %s11, 1
    %p96 = por %p94, %p95
    %p97 = scmp.ne.s32.totalorder %s89, %s92
    %p98 = scmp.eq.s32.totalorder %s11, 0
    %p99 = por %p97, %p98
    %p100 = scmp.ne.s32.totalorder %s89, %s92
    %p101 = scmp.eq.s32.totalorder %s16, 1
    %p102 = por %p100, %p101
    %p103 = scmp.ne.s32.totalorder %s92, %s93
    %p104 = scmp.eq.s32.totalorder %s16, 0
    %p105 = por %p103, %p104
    %p106 = scmp.ne.s32.totalorder %s92, %s93
    %p107 = scmp.eq.s32.totalorder %s17, 1
    %p108 = por %p106, %p107
    %p110 = scmp.ne.s32.totalorder %s93, %s109
    %p111 = scmp.eq.s32.totalorder %s17, 0
    %p112 = por %p110, %p111
    %s113 = ssub.s32 %s11, %s18
    %p114 = scmp.eq.s32.totalorder %s113, 0
    %s116 = sadd.s32 %s115, 1
    %s117 = scalar_select %p114, %s115, %s116
    %p120 = pneg %p114
    %p121 = scmp.eq.s32.totalorder %s11, 1
    %p122 = por %p120, %p121
    %p123 = scmp.ne.s32.totalorder %s115, %s118
    %p124 = scmp.eq.s32.totalorder %s11, 0
    %p125 = por %p123, %p124
    %p126 = scmp.ne.s32.totalorder %s115, %s118
    %p127 = scmp.eq.s32.totalorder %s16, 1
    %p128 = por %p126, %p127
    %p129 = scmp.ne.s32.totalorder %s118, %s119
    %p130 = scmp.eq.s32.totalorder %s16, 0
    %p131 = por %p129, %p130
    %p132 = scmp.ne.s32.totalorder %s118, %s119
    %p133 = scmp.eq.s32.totalorder %s17, 1
    %p134 = por %p132, %p133
    %p136 = scmp.ne.s32.totalorder %s119, %s135
    %p137 = scmp.eq.s32.totalorder %s17, 0
    %p138 = por %p136, %p137
    %p139 = scmp.le.s32.totalorder 1, %s11
    %p140 = scmp.lt.s32.totalorder %s11, 3
    %p141 = pnand %p139, %p140
    %p142 = pneg %p141
    // Predicated region
    $region9: #{_lambda_.21} parent=5 // pred_check
      _
    $region10: #{_lambda_.21} parent=5 // pred_check_branch
      %144 = sbr.rel (%p141) target = $region12
    $region11: #{_lambda_.21} parent=5 // pred_region
      %s145 = ssub.s32 %s11, 1
      // Predicated region
      $region13: #{_lambda_.21} parent=11 // pred_check
        %p146 = pneg %p58
      $region14: #{_lambda_.21} parent=11 // pred_check_branch
        %148 = sbr.rel (%p146) target = $region16
      $region15: #{_lambda_.21} parent=11 // pred_region
        _
      $region16: #{_lambda_.21} parent=11 // pred_fallthru
        _
      // Predicated region
      $region17: #{_lambda_.21} parent=11 // pred_check
        %p149 = pneg %p79
      $region18: #{_lambda_.21} parent=11 // pred_check_branch
        %151 = sbr.rel (%p149) target = $region20
      $region19: #{_lambda_.21} parent=11 // pred_region
        _
      $region20: #{_lambda_.21} parent=11 // pred_fallthru
        _
    $region12: #{_lambda_.21} parent=5 // pred_fallthru
      _
    %p152 = scmp.lt.s32.totalorder %s11, 2
    // Predicated region
    $region21: #{_lambda_.21} parent=5 // pred_check
      %p153 = pneg %p152
    $region22: #{_lambda_.21} parent=5 // pred_check_branch
      %155 = sbr.rel (%p153) target = $region24
    $region23: #{_lambda_.21} parent=5 // pred_region
      // Predicated region
      $region25: #{_lambda_.21} parent=23 // pred_check
        %p156 = pneg %p31
      $region26: #{_lambda_.21} parent=23 // pred_check_branch
        %158 = sbr.rel (%p156) target = $region28
      $region27: #{_lambda_.21} parent=23 // pred_region
        %p159 = scmp.lt.s32.totalorder %s11, 1
        %s160 = scalar_select %p159, %s11, 1
        %s161 = smul.addr %s160, 4
        %s162 = smul.addr %s161, 4
        %s163 = scalar_lea.vmem %s0, %s162
      $region28: #{_lambda_.21} parent=23 // pred_fallthru
        _
    $region24: #{_lambda_.21} parent=5 // pred_fallthru
      _
    %p164 = scmp.le.s32.totalorder 1, %s11
    %p165 = scmp.lt.s32.totalorder %s11, 3
    %p166 = pnand %p164, %p165
    %p167 = pneg %p166
    // Predicated region
    $region29: #{_lambda_.21} parent=5 // pred_check
      _
    $region30: #{_lambda_.21} parent=5 // pred_check_branch
      %169 = sbr.rel (%p166) target = $region32
    $region31: #{_lambda_.21} parent=5 // pred_region
      %s170 = ssub.s32 %s11, 1
      %p171 = scmp.lt.s32.totalorder %s16, 1
      %s172 = scalar_select %p171, %s16, 1
      %s173 = smul.addr %s172, 4
      %s174 = smul.addr %s173, 4
      %s175 = scalar_lea.vmem %s0, %s174
      %p176 = pneg %p37
      %p177 = pneg %p34
      %p178 = pneg %p58
      %p179 = pneg %p55
      %p180 = pneg %p79
      %p181 = pneg %p76
      %p182 = pneg %p105
      %p183 = pneg %p102
      %p184 = scmp.lt.s32.totalorder %s16, 1
      %s185 = scalar_select %p184, %s16, 1
      %s186 = smul.addr %s185, 4
      %s187 = smul.addr %s186, 4
      %s188 = scalar_lea.vmem %s3, %s187
      %p189 = pneg %p131
      %p190 = pneg %p128
      %p191 = scmp.lt.s32.totalorder %s16, 1
      %s192 = scalar_select %p191, %s16, 1
      %s193 = smul.addr %s192, 4
      %s194 = scalar_lea.vmem %s4, %s193
      %p195 = scmp.lt.s32.totalorder %s16, 1
      %s196 = scalar_select %p195, %s16, 1
      %s197 = smul.addr %s196, 4
      %s198 = smul.addr %s197, 4
      %s199 = scalar_lea.vmem %s0, %s198
      %p200 = scmp.lt.s32.totalorder %s16, 1
      %s201 = scalar_select %p200, %s16, 1
      %s202 = smul.addr %s201, 4
      %s203 = smul.addr %s202, 4
      %s204 = scalar_lea.vmem %s3, %s203
      %p205 = scmp.lt.s32.totalorder %s16, 1
      %s206 = scalar_select %p205, %s16, 1
      %s207 = smul.addr %s206, 4
      %s208 = scalar_lea.vmem %s4, %s207
      %v210 = vlaneseq
      %v211 = vand.u32 %v210, 127
      %vm212 = vcmp.lt.s32.totalorder %v211, 0
      %v213 = vsub.s32 0, %v211
      %v214 = vsel %vm212, %v213, %v211
      %v215 = vshrl.u32 %v214, 3
      %v216 = vand.u32 %v214, 7
      %v217 = vsub.s32 0, %v216
      %v218 = vsel %vm212, %v217, %v216
      %vm219 = vcmp.ne.s32.totalorder %v218, 0
      %vm220 = vcmp.lt.s32.totalorder %v218, 0
      %vm221 = vmand %vm220, %vm219
      %v222 = vadd.s32 %v218, 8
      %v223 = vsel %vm221, %v222, %v218
      %vm224 = vcmp.ge.s32.totalorder %v223, 1
      %v225 = vsel %vm224, 1, 0
      %v226 = vcvt.s32.f32 %v225
      %v227 = vpack.c.bf16 %v226, %v226
      %vm228 = vcmp.le.s32.totalorder %v223, 6
      %v229 = vsel %vm228, 1, 0
      %v230 = vcvt.s32.f32 %v229
      %v231 = vpack.c.bf16 %v230, %v230
      %v232 = vld [vmem:[%s199] sm:$0xff]
      %v233 = vld [vmem:[%s199 + $0x8] sm:$0xff]
      %v235 = vunpack.c.l.b16 %v227
      %v236 = vpack.c.b16 %v235, %v235
      %237 = vrot.lane.b32.xlu0 %v236, 119
      %v238 = vpop.permute.xlu0 %237
      %v239 = vrot.slane %v238, 4
      %vm240 = vcmask 973824
      %v241 = vsel %vm240, %v239, %v238
      %v243 = vmul.bf16 %v232, %v241
      %v244 = vmul.bf16 %v233, %v241
      %v247 = vunpack.c.l.b16 %v243
      %v248 = vunpack.c.h.b16 %v243
      %v249 = vunpack.c.l.b16 %v244
      %v250 = vunpack.c.h.b16 %v244
      %v251 = vpack.c.b16 %v249, %v247
      %v252 = vpack.c.b16 %v250, %v248
      %253 = vrot.lane.b32.xlu0 %v251, 9
      %v254 = vpop.permute.xlu0 %253
      %255 = vrot.lane.b32.xlu0 %v252, 9
      %v256 = vpop.permute.xlu0 %255
      %vm257 = vcmask 72704
      %v258 = vsel %vm257, %v254, %v256
      %vm260 = vcmask 523264
      %261 = vst.msk [vmem:[#allocation2] sm:$0xff] %vm260, %v258
      %v262 = vld [vmem:[%s199] sm:$0xff]
      %v263 = vld [vmem:[%s199 + $0x8] sm:$0xff]
      %v266 = vunpack.c.l.b16 %v262
      %v267 = vunpack.c.h.b16 %v262
      %v268 = vunpack.c.l.b16 %v263
      %v269 = vunpack.c.h.b16 %v263
      %v270 = vpack.c.b16 %v268, %v266
      %v271 = vpack.c.b16 %v269, %v267
      %272 = vrot.lane.b32.xlu0 %v270, 8
      %v273 = vpop.permute.xlu0 %272
      %274 = vrot.lane.b32.xlu0 %v271, 8
      %v275 = vpop.permute.xlu0 %274
      %vm276 = vcmask 64512
      %v277 = vsel %vm276, %v273, %v275
      %279 = vst.msk [vmem:[#allocation2 + $0x8] sm:$0xff] %vm260, %v277
      %v280 = vld [vmem:[%s199] sm:$0xff]
      %v281 = vld [vmem:[%s199 + $0x8] sm:$0xff]
      %v283 = vunpack.c.l.b16 %v231
      %v284 = vpack.c.b16 %v283, %v283
      %285 = vrot.lane.b32.xlu0 %v284, 121
      %v286 = vpop.permute.xlu0 %285
      %v287 = vrot.slane %v286, 4
      %vm288 = vcmask 990208
      %v289 = vsel %vm288, %v287, %v286
      %v291 = vmul.bf16 %v280, %v289
      %v292 = vmul.bf16 %v281, %v289
      %v295 = vunpack.c.l.b16 %v291
      %v296 = vunpack.c.h.b16 %v291
      %v297 = vunpack.c.l.b16 %v292
      %v298 = vunpack.c.h.b16 %v292
      %v299 = vpack.c.b16 %v297, %v295
      %v300 = vpack.c.b16 %v298, %v296
      %301 = vrot.lane.b32.xlu0 %v299, 7
      %v302 = vpop.permute.xlu0 %301
      %303 = vrot.lane.b32.xlu0 %v300, 7
      %v304 = vpop.permute.xlu0 %303
      %vm305 = vcmask 56320
      %v306 = vsel %vm305, %v302, %v304
      %308 = vst.msk [vmem:[#allocation2 + $0x10] sm:$0xff] %vm260, %v306
      %v309 = vld [vmem:[%s199] sm:$0xff]
      %v310 = vld [vmem:[%s199 + $0x8] sm:$0xff]
      %311 = vrot.lane.b32.xlu0 %v236, 127
      %v312 = vpop.permute.xlu0 %311
      %v313 = vrot.slane %v312, 4
      %vm314 = vcmask 1039360
      %v315 = vsel %vm314, %v313, %v312
      %v317 = vmul.bf16 %v309, %v315
      %v318 = vmul.bf16 %v310, %v315
      %v321 = vunpack.c.l.b16 %v317
      %v322 = vunpack.c.h.b16 %v317
      %v323 = vunpack.c.l.b16 %v318
      %v324 = vunpack.c.h.b16 %v318
      %v325 = vpack.c.b16 %v323, %v321
      %v326 = vpack.c.b16 %v324, %v322
      %327 = vrot.lane.b32.xlu0 %v325, 1
      %v328 = vpop.permute.xlu0 %327
      %329 = vrot.lane.b32.xlu0 %v326, 1
      %v330 = vpop.permute.xlu0 %329
      %vm331 = vcmask 7168
      %v332 = vsel %vm331, %v328, %v330
      %334 = vst.msk [vmem:[#allocation2 + $0x18] sm:$0xff] %vm260, %v332
      %v335 = vld [vmem:[%s199 + $0x4] sm:$0xf]
      %v336 = vld [vmem:[%s199 + $0xc] sm:$0xf]
      %v339 = vunpack.c.l.b16 %v335
      %v340 = vunpack.c.l.b16 %v336
      %v341 = vpack.c.b16 %v340, %v339
      %343 = vst.msk [vmem:[#allocation2 + $0x20] sm:$0xff] %vm260, %v341
      %v344 = vld [vmem:[%s199 + $0x4] sm:$0xf]
      %v345 = vld [vmem:[%s199 + $0xc] sm:$0xf]
      %346 = vrot.lane.b32.xlu0 %v284, 1
      %v347 = vpop.permute.xlu0 %346
      %v349 = vmul.bf16 %v344, %v347
      %v350 = vmul.bf16 %v345, %v347
      %v353 = vunpack.c.l.b16 %v349
      %v354 = vunpack.c.l.b16 %v350
      %v355 = vpack.c.b16 %v354, %v353
      %356 = vrot.lane.b32.xlu0 %v355, 127
      %v357 = vpop.permute.xlu0 %356
      %359 = vst.msk [vmem:[#allocation2 + $0x28] sm:$0xff] %vm260, %v357
      %v360 = vld [vmem:[%s199 + $0x4] sm:$0xf]
      %v361 = vld [vmem:[%s199 + $0xc] sm:$0xf]
      %362 = vrot.lane.b32.xlu0 %v236, 7
      %v363 = vpop.permute.xlu0 %362
      %v365 = vmul.bf16 %v360, %v363
      %v366 = vmul.bf16 %v361, %v363
      %v369 = vunpack.c.l.b16 %v365
      %v370 = vunpack.c.l.b16 %v366
      %v371 = vpack.c.b16 %v370, %v369
      %372 = vrot.lane.b32.xlu0 %v371, 121
      %v373 = vpop.permute.xlu0 %372
      %375 = vst.msk [vmem:[#allocation2 + $0x30] sm:$0xff] %vm260, %v373
      %v376 = vld [vmem:[%s199 + $0x4] sm:$0xf]
      %v377 = vld [vmem:[%s199 + $0xc] sm:$0xf]
      %v380 = vunpack.c.l.b16 %v376
      %v381 = vunpack.c.l.b16 %v377
      %v382 = vpack.c.b16 %v381, %v380
      %383 = vrot.lane.b32.xlu0 %v382, 120
      %v384 = vpop.permute.xlu0 %383
      %386 = vst.msk [vmem:[#allocation2 + $0x38] sm:$0xff] %vm260, %v384
      %v387 = vld [vmem:[%s199 + $0x4] sm:$0xf]
      %v388 = vld [vmem:[%s199 + $0xc] sm:$0xf]
      %389 = vrot.lane.b32.xlu0 %v284, 9
      %v390 = vpop.permute.xlu0 %389
      %v392 = vmul.bf16 %v387, %v390
      %v393 = vmul.bf16 %v388, %v390
      %v396 = vunpack.c.l.b16 %v392
      %v397 = vunpack.c.l.b16 %v393
      %v398 = vpack.c.b16 %v397, %v396
      %399 = vrot.lane.b32.xlu0 %v398, 119
      %v400 = vpop.permute.xlu0 %399
      %402 = vst.msk [vmem:[#allocation2 + $0x40] sm:$0xff] %vm260, %v400
      %v403 = vld [vmem:[%s1] sm:$0xff]
      %v404 = vld [vmem:[#allocation2] sm:$0xff]
      %v405 = vld [vmem:[#allocation2 + $0x8] sm:$0xff]
      %v406 = vld [vmem:[#allocation2 + $0x10] sm:$0xff]
      %v407 = vld [vmem:[#allocation2 + $0x18] sm:$0xff]
      %v408 = vld [vmem:[#allocation2 + $0x20] sm:$0xff]
      %v409 = vld [vmem:[#allocation2 + $0x28] sm:$0xff]
      %v410 = vld [vmem:[#allocation2 + $0x30] sm:$0xff]
      %v411 = vld [vmem:[#allocation2 + $0x38] sm:$0xff]
      %v412 = vld [vmem:[#allocation2 + $0x40] sm:$0xff]
      %v413 = vld [vmem:[%s2] sm:$0xff]
      %415 = vset.pattern.permute.xlu0 0
      %416 = vperm.xlu0 %415, %v413
      %v417 = vpop.permute.xlu0 %416
      %v420 = vunpack.c.l.b16 %v403
      %v421 = vunpack.c.h.b16 %v403
      %v422 = vpack.c.b16 %v420, %v420
      %v423 = vpack.c.b16 %v421, %v421
      %vm425 = vcmask 130048
      %v427 = vsel %vm425, %v423, 0
      %429 = vmatprep.subr.bf16.mxu0 0
      %430 = vmatpush1.bf16.msra.mxu0 %v404
      %431 = vmatprep.subr.bf16.mxu0 0
      %432 = vmatpush1.bf16.msra.mxu0 %v405
      %433 = vmatprep.subr.bf16.mxu0 0
      %434 = vmatpush1.bf16.msra.mxu0 %v406
      %435 = vmatprep.subr.bf16.mxu0 0
      %436 = vmatpush1.bf16.msra.mxu0 %v407
      %437 = vmatprep.subr.bf16.mxu0 0
      %438 = vmatpush1.bf16.msra.mxu0 %v408
      %439 = vmatprep.subr.bf16.mxu0 0
      %440 = vmatpush1.bf16.msra.mxu0 %v409
      %441 = vmatprep.subr.bf16.mxu0 0
      %442 = vmatpush1.bf16.msra.mxu0 %v410
      %443 = vmatprep.subr.bf16.mxu0 0
      %444 = vmatpush1.bf16.msra.mxu0 %v411
      %445 = vmatprep.subr.bf16.mxu0 0
      %446 = vmatpush1.bf16.msra.mxu0 %v412
      %447 = vmatprep.subr.bf16.mxu0 0
      %448 = vmatpush1.bf16.msra.mxu0 0
      %449 = vmatprep.subr.bf16.mxu0 0
      %450 = vmatpush1.bf16.msra.mxu0 0
      %451 = vmatprep.subr.bf16.mxu0 0
      %452 = vmatpush1.bf16.msra.mxu0 0
      %453 = vmatprep.subr.bf16.mxu0 0
      %454 = vmatpush1.bf16.msra.mxu0 0
      %455 = vmatprep.subr.bf16.mxu0 0
      %456 = vmatpush1.bf16.msra.mxu0 0
      %457 = vmatprep.subr.bf16.mxu0 0
      %458 = vmatpush1.bf16.msra.mxu0 0
      %459 = vmatprep.subr.bf16.mxu0 0
      %460 = vmatpush1.bf16.msra.mxu0 0
      %461 = vmatprep.mubr.bf16.mxu0 %v427
      %462 = vmatmul.mubr.bf16.gmra.mrb[0].mxu0 %v422
      %v463 = vpop.f32.mrb[0].mxu0
      %v464 = vadd.f32 %v417, %v463
      %v465 = vpop.f32.mrb[0].mxu0
      %v466 = vpop.f32.mrb[0].mxu0
      %v467 = vpop.f32.mrb[0].mxu0
      %468 = vdwg.mxu0
      %v469 = vsel %vm260, %v464, 0.0
      %470 = vadd.xlane.f32.xlu0 %v469
      %v471 = vpop.xlane.xlu0 %470
      %v472 = vrcp.pop 64.0
      %v473 = vmul.f32 %v471, %v472
      %v474 = vsub.f32 %v464, %v473
      %v475 = vmul.f32 %v474, %v474
      %v476 = vsel %vm260, %v475, 0.0
      %477 = vadd.xlane.f32.xlu0 %v476
      %v478 = vpop.xlane.xlu0 %477
      %v479 = vmul.f32 %v478, %v472
      %v480 = vadd.f32 %v479, 1e-05
      %v481 = vrsqrt.pop %v480
      %v482 = vmul.f32 %v474, %v481
      %v483 = vmax.f32 %v482, 0.0
      %484 = vst [vmem:[%s204] sm:$0xff] 0
      %485 = vst [vmem:[%s204 + $0x8] sm:$0xff] 0
      %v486 = vpack.c.bf16 %v483, %v483
      %vm487 = vcmask 519168
      %488 = vst.msk [vmem:[%s204 + $0x4] sm:$0xf] %vm487, %v486
      %489 = vst.msk [vmem:[%s208] sm:$0xf] %vm487, %v486
      %p490 = scmp.lt.s32.totalorder %s16, 1
      %s491 = scalar_select %p490, %s16, 1
      %s492 = smul.addr %s491, 4
      %s493 = smul.addr %s492, 4
      %s494 = scalar_lea.vmem %s3, %s493
      %p495 = scmp.lt.s32.totalorder %s16, 1
      %s496 = scalar_select %p495, %s16, 1
      %s497 = smul.addr %s496, 4
      %s498 = scalar_lea.vmem %s4, %s497
      // Predicated region
      $region33: #{_lambda_.21} parent=31 // pred_check
        %p499 = pneg %p102
      $region34: #{_lambda_.21} parent=31 // pred_check_branch
        %501 = sbr.rel (%p499) target = $region36
      $region35: #{_lambda_.21} parent=31 // pred_region
        _
      $region36: #{_lambda_.21} parent=31 // pred_fallthru
        _
      // Predicated region
      $region37: #{_lambda_.21} parent=31 // pred_check
        %p502 = pneg %p128
      $region38: #{_lambda_.21} parent=31 // pred_check_branch
        %504 = sbr.rel (%p502) target = $region40
      $region39: #{_lambda_.21} parent=31 // pred_region
        _
      $region40: #{_lambda_.21} parent=31 // pred_fallthru
        _
    $region32: #{_lambda_.21} parent=5 // pred_fallthru
      _
    %p505 = scmp.le.s32.totalorder 2, %s11
    // Predicated region
    $region41: #{_lambda_.21} parent=5 // pred_check
      %p506 = pneg %p505
    $region42: #{_lambda_.21} parent=5 // pred_check_branch
      %508 = sbr.rel (%p506) target = $region44
    $region43: #{_lambda_.21} parent=5 // pred_region
      %s509 = ssub.s32 %s11, 2
      // Predicated region
      $region45: #{_lambda_.21} parent=43 // pred_check
        %p510 = pneg %p108
      $region46: #{_lambda_.21} parent=43 // pred_check_branch
        %512 = sbr.rel (%p510) target = $region48
      $region47: #{_lambda_.21} parent=43 // pred_region
        %p513 = scmp.lt.s32.totalorder %s17, 1
        %s514 = scalar_select %p513, %s17, 1
        %s515 = smul.addr %s514, 4
        %s516 = smul.addr %s515, 4
        %s517 = scalar_lea.vmem %s3, %s516
      $region48: #{_lambda_.21} parent=43 // pred_fallthru
        _
      // Predicated region
      $region49: #{_lambda_.21} parent=43 // pred_check
        %p518 = pneg %p134
      $region50: #{_lambda_.21} parent=43 // pred_check_branch
        %520 = sbr.rel (%p518) target = $region52
      $region51: #{_lambda_.21} parent=43 // pred_region
        %p521 = scmp.lt.s32.totalorder %s17, 1
        %s522 = scalar_select %p521, %s17, 1
        %s523 = smul.addr %s522, 4
        %s524 = scalar_lea.vmem %s4, %s523
      $region52: #{_lambda_.21} parent=43 // pred_fallthru
        _
    $region44: #{_lambda_.21} parent=5 // pred_fallthru
      _
  $region6: #{_lambda_.21} parent=0 // loop_footer
    %s15 = sadd.s32 1, %s11
  $region7: #{_lambda_.21} parent=0 // loop_footer_branch
    %10 = sbr.rel target = $region3
  $region8: #{_lambda_.21} parent=0 // loop_exit
    _

// kernel: _lambda_.22
$region0: #{_lambda_.22}
  #allocation0 [shape = 'u32[]', space=smem, size = 0x4, offset = 0x4, fixed_abs, tag = 'smem constant byte address 0x4 - core index']
  #allocation1 [shape = 'u32[144,128]{1,0:T(1,128)}', space=vmem, size = 0x12000, scoped, tag = 'internal scratch']
  %s0 = inlined_call_operand.vmem [shape: f32[2,32], index: 0, kind: input, shape index: {}]
  %s1 = inlined_call_operand.vmem [shape: f32[32,8], index: 1, kind: input, shape index: {}]
  %s2 = inlined_call_operand.vmem [shape: f32[1,8], index: 2, kind: input, shape index: {}]
  %s3 = inlined_call_operand.vmem [shape: f32[8,8], index: 3, kind: input, shape index: {}]
  %s4 = inlined_call_operand.vmem [shape: f32[1,8], index: 4, kind: input, shape index: {}]
  %s5 = inlined_call_operand.vmem [shape: f32[8,576], index: 5, kind: input, shape index: {}]
  %s6 = inlined_call_operand.vmem [shape: f32[1,576], index: 6, kind: input, shape index: {}]
  %s7 = inlined_call_operand.vmem [shape: f32[2,576], index: 7, kind: output, shape index: {}]
  %s8 = sld [smem:[#allocation0]]
  $region38: #{_lambda_.22} parent=0
    _
  %s10 = ssub.s32 1, %s8
  %s11 = scalar_select 0, %s10, %s8
  // Predicated region
  $region2: #{_lambda_.22} parent=0 // pred_check
    _
  $region3: #{_lambda_.22} parent=0 // pred_check_branch
    %13 = sbr.rel (0) target = $region5
  $region4: #{_lambda_.22} parent=0 // pred_region
    _
  $region5: #{_lambda_.22} parent=0 // pred_fallthru
    _
  // Predicated region
  $region6: #{_lambda_.22} parent=0 // pred_check
    _
  $region7: #{_lambda_.22} parent=0 // pred_check_branch
    %15 = sbr.rel (0) target = $region9
  $region8: #{_lambda_.22} parent=0 // pred_region
    _
  $region9: #{_lambda_.22} parent=0 // pred_fallthru
    _
  // Predicated region
  $region10: #{_lambda_.22} parent=0 // pred_check
    _
  $region11: #{_lambda_.22} parent=0 // pred_check_branch
    %17 = sbr.rel (0) target = $region13
  $region12: #{_lambda_.22} parent=0 // pred_region
    _
  $region13: #{_lambda_.22} parent=0 // pred_fallthru
    _
  // Predicated region
  $region14: #{_lambda_.22} parent=0 // pred_check
    _
  $region15: #{_lambda_.22} parent=0 // pred_check_branch
    %19 = sbr.rel (0) target = $region17
  $region16: #{_lambda_.22} parent=0 // pred_region
    _
  $region17: #{_lambda_.22} parent=0 // pred_fallthru
    _
  // Predicated region
  $region18: #{_lambda_.22} parent=0 // pred_check
    _
  $region19: #{_lambda_.22} parent=0 // pred_check_branch
    %21 = sbr.rel (0) target = $region21
  $region20: #{_lambda_.22} parent=0 // pred_region
    _
  $region21: #{_lambda_.22} parent=0 // pred_fallthru
    _
  // Predicated region
  $region22: #{_lambda_.22} parent=0 // pred_check
    _
  $region23: #{_lambda_.22} parent=0 // pred_check_branch
    %23 = sbr.rel (0) target = $region25
  $region24: #{_lambda_.22} parent=0 // pred_region
    _
  $region25: #{_lambda_.22} parent=0 // pred_fallthru
    _
  // Predicated region
  $region26: #{_lambda_.22} parent=0 // pred_check
    _
  $region27: #{_lambda_.22} parent=0 // pred_check_branch
    %25 = sbr.rel (0) target = $region29
  $region28: #{_lambda_.22} parent=0 // pred_region
    _
  $region29: #{_lambda_.22} parent=0 // pred_fallthru
    _
  %v26 = vld [vmem:[%s0] sm:$0x3]
  %v27 = vld [vmem:[%s1] sm:$0xff]
  %v28 = vld [vmem:[%s1 + $0x8] sm:$0xff]
  %v29 = vld [vmem:[%s1 + $0x10] sm:$0xff]
  %v30 = vld [vmem:[%s1 + $0x18] sm:$0xff]
  %v31 = vld [vmem:[%s2] sm:$0x1]
  %v33 = vlaneseq
  %v34 = vshrl.u32 %v33, 7
  %v35 = vsub.s32 0, %v34
  %v36 = vrot.slane %v31, %v35
  %vm38 = vcmask 261120
  %v40 = vsel %vm38, %v26, 0
  %42 = vmatprep.subr.mxu0 0.0
  %43 = vmatpush1.msra.mxu0 %v27
  %44 = vmatprep.subr.mxu0 0.0
  %45 = vmatpush1.msra.mxu0 %v28
  %46 = vmatprep.subr.mxu0 0.0
  %47 = vmatpush1.msra.mxu0 %v29
  %48 = vmatprep.subr.mxu0 0.0
  %49 = vmatpush1.msra.mxu0 %v30
  %50 = vmatprep.subr.mxu0 0.0
  %51 = vmatpush1.msra.mxu0 0.0
  %52 = vmatprep.subr.mxu0 0.0
  %53 = vmatpush1.msra.mxu0 0.0
  %54 = vmatprep.subr.mxu0 0.0
  %55 = vmatpush1.msra.mxu0 0.0
  %56 = vmatprep.subr.mxu0 0.0
  %57 = vmatpush1.msra.mxu0 0.0
  %58 = vmatprep.subr.mxu0 0.0
  %59 = vmatpush1.msra.mxu0 0.0
  %60 = vmatprep.subr.mxu0 0.0
  %61 = vmatpush1.msra.mxu0 0.0
  %62 = vmatprep.subr.mxu0 0.0
  %63 = vmatpush1.msra.mxu0 0.0
  %64 = vmatprep.subr.mxu0 0.0
  %65 = vmatpush1.msra.mxu0 0.0
  %66 = vmatprep.subr.mxu0 0.0
  %67 = vmatpush1.msra.mxu0 0.0
  %68 = vmatprep.subr.mxu0 0.0
  %69 = vmatpush1.msra.mxu0 0.0
  %70 = vmatprep.subr.mxu0 0.0
  %71 = vmatpush1.msra.mxu0 0.0
  %72 = vmatprep.subr.mxu0 0.0
  %73 = vmatpush1.msra.mxu0 0.0
  %74 = vmatprep.subr.mxu0 0.0
  %75 = vmatpush1.msra.mxu0 0.0
  %76 = vmatprep.subr.mxu0 0.0
  %77 = vmatpush1.msra.mxu0 0.0
  %78 = vmatprep.subr.mxu0 0.0
  %79 = vmatpush1.msra.mxu0 0.0
  %80 = vmatprep.subr.mxu0 0.0
  %81 = vmatpush1.msra.mxu0 0.0
  %82 = vmatprep.subr.mxu0 0.0
  %83 = vmatpush1.msra.mxu0 0.0
  %84 = vmatprep.subr.mxu0 0.0
  %85 = vmatpush1.msra.mxu0 0.0
  %86 = vmatprep.subr.mxu0 0.0
  %87 = vmatpush1.msra.mxu0 0.0
  %88 = vmatprep.subr.mxu0 0.0
  %89 = vmatpush1.msra.mxu0 0.0
  %90 = vmatprep.subr.mxu0 0.0
  %91 = vmatpush1.msra.mxu0 0.0
  %92 = vmatprep.subr.mxu0 0.0
  %93 = vmatpush1.msra.mxu0 0.0
  %94 = vmatprep.subr.mxu0 0.0
  %95 = vmatpush1.msra.mxu0 0.0
  %96 = vmatprep.subr.mxu0 0.0
  %97 = vmatpush1.msra.mxu0 0.0
  %98 = vmatprep.subr.mxu0 0.0
  %99 = vmatpush1.msra.mxu0 0.0
  %100 = vmatprep.subr.mxu0 0.0
  %101 = vmatpush1.msra.mxu0 0.0
  %102 = vmatprep.subr.mxu0 0.0
  %103 = vmatpush1.msra.mxu0 0.0
  %104 = vmatprep.subr.mxu0 0.0
  %105 = vmatpush1.msra.mxu0 0.0
  %106 = vmatprep.mubr.f32.mxu0 0.0
  %107 = vmatmul.mubr.f32.gmra.mrb[0].mxu0 %v40
  %v108 = vpop.f32.mrb[0].mxu0
  %v109 = vadd.f32 %v36, %v108
  %v110 = vpop.f32.mrb[0].mxu0
  %111 = vdwg.mxu0
  %v112 = vmax.f32 %v109, 0.0
  %v113 = vld [vmem:[%s3] sm:$0xff]
  %v114 = vld [vmem:[%s4] sm:$0x1]
  %v116 = vlaneseq
  %v117 = vshrl.u32 %v116, 7
  %v118 = vsub.s32 0, %v117
  %v119 = vrot.slane %v114, %v118
  %vm121 = vcmask 64512
  %v123 = vsel %vm121, %v112, 0
  %125 = vmatprep.subr.mxu0 0.0
  %126 = vmatpush1.msra.mxu0 %v113
  %127 = vmatprep.subr.mxu0 0.0
  %128 = vmatpush1.msra.mxu0 0.0
  %129 = vmatprep.subr.mxu0 0.0
  %130 = vmatpush1.msra.mxu0 0.0
  %131 = vmatprep.subr.mxu0 0.0
  %132 = vmatpush1.msra.mxu0 0.0
  %133 = vmatprep.subr.mxu0 0.0
  %134 = vmatpush1.msra.mxu0 0.0
  %135 = vmatprep.subr.mxu0 0.0
  %136 = vmatpush1.msra.mxu0 0.0
  %137 = vmatprep.subr.mxu0 0.0
  %138 = vmatpush1.msra.mxu0 0.0
  %139 = vmatprep.subr.mxu0 0.0
  %140 = vmatpush1.msra.mxu0 0.0
  %141 = vmatprep.subr.mxu0 0.0
  %142 = vmatpush1.msra.mxu0 0.0
  %143 = vmatprep.subr.mxu0 0.0
  %144 = vmatpush1.msra.mxu0 0.0
  %145 = vmatprep.subr.mxu0 0.0
  %146 = vmatpush1.msra.mxu0 0.0
  %147 = vmatprep.subr.mxu0 0.0
  %148 = vmatpush1.msra.mxu0 0.0
  %149 = vmatprep.subr.mxu0 0.0
  %150 = vmatpush1.msra.mxu0 0.0
  %151 = vmatprep.subr.mxu0 0.0
  %152 = vmatpush1.msra.mxu0 0.0
  %153 = vmatprep.subr.mxu0 0.0
  %154 = vmatpush1.msra.mxu0 0.0
  %155 = vmatprep.subr.mxu0 0.0
  %156 = vmatpush1.msra.mxu0 0.0
  %157 = vmatprep.subr.mxu0 0.0
  %158 = vmatpush1.msra.mxu0 0.0
  %159 = vmatprep.subr.mxu0 0.0
  %160 = vmatpush1.msra.mxu0 0.0
  %161 = vmatprep.subr.mxu0 0.0
  %162 = vmatpush1.msra.mxu0 0.0
  %163 = vmatprep.subr.mxu0 0.0
  %164 = vmatpush1.msra.mxu0 0.0
  %165 = vmatprep.subr.mxu0 0.0
  %166 = vmatpush1.msra.mxu0 0.0
  %167 = vmatprep.subr.mxu0 0.0
  %168 = vmatpush1.msra.mxu0 0.0
  %169 = vmatprep.subr.mxu0 0.0
  %170 = vmatpush1.msra.mxu0 0.0
  %171 = vmatprep.subr.mxu0 0.0
  %172 = vmatpush1.msra.mxu0 0.0
  %173 = vmatprep.subr.mxu0 0.0
  %174 = vmatpush1.msra.mxu0 0.0
  %175 = vmatprep.subr.mxu0 0.0
  %176 = vmatpush1.msra.mxu0 0.0
  %177 = vmatprep.subr.mxu0 0.0
  %178 = vmatpush1.msra.mxu0 0.0
  %179 = vmatprep.subr.mxu0 0.0
  %180 = vmatpush1.msra.mxu0 0.0
  %181 = vmatprep.subr.mxu0 0.0
  %182 = vmatpush1.msra.mxu0 0.0
  %183 = vmatprep.subr.mxu0 0.0
  %184 = vmatpush1.msra.mxu0 0.0
  %185 = vmatprep.subr.mxu0 0.0
  %186 = vmatpush1.msra.mxu0 0.0
  %187 = vmatprep.subr.mxu0 0.0
  %188 = vmatpush1.msra.mxu0 0.0
  %189 = vmatprep.mubr.f32.mxu0 0.0
  %190 = vmatmul.mubr.f32.gmra.mrb[0].mxu0 %v123
  %v191 = vpop.f32.mrb[0].mxu0
  %v192 = vadd.f32 %v119, %v191
  %v193 = vpop.f32.mrb[0].mxu0
  %194 = vdwg.mxu0
  %v195 = vmax.f32 %v192, 0.0
  %v196 = vld [vmem:[%s5] sm:$0xff]
  %v197 = vld [vmem:[%s5 + $0x8] sm:$0xff]
  %v198 = vld [vmem:[%s5 + $0x10] sm:$0xff]
  %v199 = vld [vmem:[%s5 + $0x18] sm:$0xff]
  %v200 = vld [vmem:[%s5 + $0x20] sm:$0xff]
  %v201 = vld [vmem:[%s6] sm:$0x1f]
  %v203 = vlaneseq
  %v204 = vshrl.u32 %v203, 7
  %v205 = vsub.s32 0, %v204
  %v206 = vrot.slane %v201, %v205
  %v207 = vlaneseq
  %v208 = vshrl.u32 %v207, 7
  %v209 = vsub.s32 1, %v208
  %v210 = vrot.slane %v201, %v209
  %v211 = vlaneseq
  %v212 = vshrl.u32 %v211, 7
  %v213 = vsub.s32 2, %v212
  %v214 = vrot.slane %v201, %v213
  %v215 = vlaneseq
  %v216 = vshrl.u32 %v215, 7
  %v217 = vsub.s32 3, %v216
  %v218 = vrot.slane %v201, %v217
  %v219 = vlaneseq
  %v220 = vshrl.u32 %v219, 7
  %v221 = vsub.s32 4, %v220
  %v222 = vrot.slane %v201, %v221
  %v229 = vsel %vm121, %v195, 0
  %231 = vmatprep.subr.mxu0 %v197
  %232 = vmatpush1.msra.mxu0 %v196
  %233 = vmatprep.subr.mxu0 0.0
  %234 = vmatpush1.msra.mxu0 0.0
  %235 = vmatprep.subr.mxu0 0.0
  %236 = vmatpush1.msra.mxu0 0.0
  %237 = vmatprep.subr.mxu0 0.0
  %238 = vmatpush1.msra.mxu0 0.0
  %239 = vmatprep.subr.mxu0 0.0
  %240 = vmatpush1.msra.mxu0 0.0
  %241 = vmatprep.subr.mxu0 0.0
  %242 = vmatpush1.msra.mxu0 0.0
  %243 = vmatprep.subr.mxu0 0.0
  %244 = vmatpush1.msra.mxu0 0.0
  %245 = vmatprep.subr.mxu0 0.0
  %246 = vmatpush1.msra.mxu0 0.0
  %247 = vmatprep.subr.mxu0 0.0
  %248 = vmatpush1.msra.mxu0 0.0
  %249 = vmatprep.subr.mxu0 0.0
  %250 = vmatpush1.msra.mxu0 0.0
  %251 = vmatprep.subr.mxu0 0.0
  %252 = vmatpush1.msra.mxu0 0.0
  %253 = vmatprep.subr.mxu0 0.0
  %254 = vmatpush1.msra.mxu0 0.0
  %255 = vmatprep.subr.mxu0 0.0
  %256 = vmatpush1.msra.mxu0 0.0
  %257 = vmatprep.subr.mxu0 0.0
  %258 = vmatpush1.msra.mxu0 0.0
  %259 = vmatprep.subr.mxu0 0.0
  %260 = vmatpush1.msra.mxu0 0.0
  %261 = vmatprep.subr.mxu0 0.0
  %262 = vmatpush1.msra.mxu0 0.0
  %263 = vmatprep.subr.mxu0 0.0
  %264 = vmatpush1.msra.mxu0 0.0
  %265 = vmatprep.subr.mxu0 0.0
  %266 = vmatpush1.msra.mxu0 0.0
  %267 = vmatprep.subr.mxu0 0.0
  %268 = vmatpush1.msra.mxu0 0.0
  %269 = vmatprep.subr.mxu0 0.0
  %270 = vmatpush1.msra.mxu0 0.0
  %271 = vmatprep.subr.mxu0 0.0
  %272 = vmatpush1.msra.mxu0 0.0
  %273 = vmatprep.subr.mxu0 0.0
  %274 = vmatpush1.msra.mxu0 0.0
  %275 = vmatprep.subr.mxu0 0.0
  %276 = vmatpush1.msra.mxu0 0.0
  %277 = vmatprep.subr.mxu0 0.0
  %278 = vmatpush1.msra.mxu0 0.0
  %279 = vmatprep.subr.mxu0 0.0
  %280 = vmatpush1.msra.mxu0 0.0
  %281 = vmatprep.subr.mxu0 0.0
  %282 = vmatpush1.msra.mxu0 0.0
  %283 = vmatprep.subr.mxu0 0.0
  %284 = vmatpush1.msra.mxu0 0.0
  %285 = vmatprep.subr.mxu0 0.0
  %286 = vmatpush1.msra.mxu0 0.0
  %287 = vmatprep.subr.mxu0 0.0
  %288 = vmatpush1.msra.mxu0 0.0
  %289 = vmatprep.subr.mxu0 0.0
  %290 = vmatpush1.msra.mxu0 0.0
  %291 = vmatprep.subr.mxu0 0.0
  %292 = vmatpush1.msra.mxu0 0.0
  %293 = vmatprep.subr.mxu0 0.0
  %294 = vmatpush1.msra.mxu0 0.0
  %295 = vmatprep.mubr.f32.mxu0 0.0
  %296 = vmatmul.mubr.f32.gmra.mrb[0].mxu0 %v229
  %v297 = vpop.f32.mrb[0].mxu0
  %v298 = vadd.f32 %v206, %v297
  %v299 = vpop.f32.mrb[0].mxu0
  %v300 = vadd.f32 %v210, %v299
  %301 = vdwg.mxu0
  %302 = vmatprep.subr.mxu0 %v199
  %303 = vmatpush1.msra.mxu0 %v198
  %304 = vmatprep.subr.mxu0 0.0
  %305 = vmatpush1.msra.mxu0 0.0
  %306 = vmatprep.subr.mxu0 0.0
  %307 = vmatpush1.msra.mxu0 0.0
  %308 = vmatprep.subr.mxu0 0.0
  %309 = vmatpush1.msra.mxu0 0.0
  %310 = vmatprep.subr.mxu0 0.0
  %311 = vmatpush1.msra.mxu0 0.0
  %312 = vmatprep.subr.mxu0 0.0
  %313 = vmatpush1.msra.mxu0 0.0
  %314 = vmatprep.subr.mxu0 0.0
  %315 = vmatpush1.msra.mxu0 0.0
  %316 = vmatprep.subr.mxu0 0.0
  %317 = vmatpush1.msra.mxu0 0.0
  %318 = vmatprep.subr.mxu0 0.0
  %319 = vmatpush1.msra.mxu0 0.0
  %320 = vmatprep.subr.mxu0 0.0
  %321 = vmatpush1.msra.mxu0 0.0
  %322 = vmatprep.subr.mxu0 0.0
  %323 = vmatpush1.msra.mxu0 0.0
  %324 = vmatprep.subr.mxu0 0.0
  %325 = vmatpush1.msra.mxu0 0.0
  %326 = vmatprep.subr.mxu0 0.0
  %327 = vmatpush1.msra.mxu0 0.0
  %328 = vmatprep.subr.mxu0 0.0
  %329 = vmatpush1.msra.mxu0 0.0
  %330 = vmatprep.subr.mxu0 0.0
  %331 = vmatpush1.msra.mxu0 0.0
  %332 = vmatprep.subr.mxu0 0.0
  %333 = vmatpush1.msra.mxu0 0.0
  %334 = vmatprep.subr.mxu0 0.0
  %335 = vmatpush1.msra.mxu0 0.0
  %336 = vmatprep.subr.mxu0 0.0
  %337 = vmatpush1.msra.mxu0 0.0
  %338 = vmatprep.subr.mxu0 0.0
  %339 = vmatpush1.msra.mxu0 0.0
  %340 = vmatprep.subr.mxu0 0.0
  %341 = vmatpush1.msra.mxu0 0.0
  %342 = vmatprep.subr.mxu0 0.0
  %343 = vmatpush1.msra.mxu0 0.0
  %344 = vmatprep.subr.mxu0 0.0
  %345 = vmatpush1.msra.mxu0 0.0
  %346 = vmatprep.subr.mxu0 0.0
  %347 = vmatpush1.msra.mxu0 0.0
  %348 = vmatprep.subr.mxu0 0.0
  %349 = vmatpush1.msra.mxu0 0.0
  %350 = vmatprep.subr.mxu0 0.0
  %351 = vmatpush1.msra.mxu0 0.0
  %352 = vmatprep.subr.mxu0 0.0
  %353 = vmatpush1.msra.mxu0 0.0
  %354 = vmatprep.subr.mxu0 0.0
  %355 = vmatpush1.msra.mxu0 0.0
  %356 = vmatprep.subr.mxu0 0.0
  %357 = vmatpush1.msra.mxu0 0.0
  %358 = vmatprep.subr.mxu0 0.0
  %359 = vmatpush1.msra.mxu0 0.0
  %360 = vmatprep.subr.mxu0 0.0
  %361 = vmatpush1.msra.mxu0 0.0
  %362 = vmatprep.subr.mxu0 0.0
  %363 = vmatpush1.msra.mxu0 0.0
  %364 = vmatprep.subr.mxu0 0.0
  %365 = vmatpush1.msra.mxu0 0.0
  %366 = vmatprep.mubr.f32.mxu0 0.0
  %367 = vmatmul.mubr.f32.gmra.mrb[0].mxu0 %v229
  %v368 = vpop.f32.mrb[0].mxu0
  %v369 = vadd.f32 %v214, %v368
  %v370 = vpop.f32.mrb[0].mxu0
  %v371 = vadd.f32 %v218, %v370
  %372 = vdwg.mxu0
  %373 = vmatprep.subr.mxu0 0.0
  %374 = vmatpush1.msra.mxu0 %v200
  %375 = vmatprep.subr.mxu0 0.0
  %376 = vmatpush1.msra.mxu0 0.0
  %377 = vmatprep.subr.mxu0 0.0
  %378 = vmatpush1.msra.mxu0 0.0
  %379 = vmatprep.subr.mxu0 0.0
  %380 = vmatpush1.msra.mxu0 0.0
  %381 = vmatprep.subr.mxu0 0.0
  %382 = vmatpush1.msra.mxu0 0.0
  %383 = vmatprep.subr.mxu0 0.0
  %384 = vmatpush1.msra.mxu0 0.0
  %385 = vmatprep.subr.mxu0 0.0
  %386 = vmatpush1.msra.mxu0 0.0
  %387 = vmatprep.subr.mxu0 0.0
  %388 = vmatpush1.msra.mxu0 0.0
  %389 = vmatprep.subr.mxu0 0.0
  %390 = vmatpush1.msra.mxu0 0.0
  %391 = vmatprep.subr.mxu0 0.0
  %392 = vmatpush1.msra.mxu0 0.0
  %393 = vmatprep.subr.mxu0 0.0
  %394 = vmatpush1.msra.mxu0 0.0
  %395 = vmatprep.subr.mxu0 0.0
  %396 = vmatpush1.msra.mxu0 0.0
  %397 = vmatprep.subr.mxu0 0.0
  %398 = vmatpush1.msra.mxu0 0.0
  %399 = vmatprep.subr.mxu0 0.0
  %400 = vmatpush1.msra.mxu0 0.0
  %401 = vmatprep.subr.mxu0 0.0
  %402 = vmatpush1.msra.mxu0 0.0
  %403 = vmatprep.subr.mxu0 0.0
  %404 = vmatpush1.msra.mxu0 0.0
  %405 = vmatprep.subr.mxu0 0.0
  %406 = vmatpush1.msra.mxu0 0.0
  %407 = vmatprep.subr.mxu0 0.0
  %408 = vmatpush1.msra.mxu0 0.0
  %409 = vmatprep.subr.mxu0 0.0
  %410 = vmatpush1.msra.mxu0 0.0
  %411 = vmatprep.subr.mxu0 0.0
  %412 = vmatpush1.msra.mxu0 0.0
  %413 = vmatprep.subr.mxu0 0.0
  %414 = vmatpush1.msra.mxu0 0.0
  %415 = vmatprep.subr.mxu0 0.0
  %416 = vmatpush1.msra.mxu0 0.0
  %417 = vmatprep.subr.mxu0 0.0
  %418 = vmatpush1.msra.mxu0 0.0
  %419 = vmatprep.subr.mxu0 0.0
  %420 = vmatpush1.msra.mxu0 0.0
  %421 = vmatprep.subr.mxu0 0.0
  %422 = vmatpush1.msra.mxu0 0.0
  %423 = vmatprep.subr.mxu0 0.0
  %424 = vmatpush1.msra.mxu0 0.0
  %425 = vmatprep.subr.mxu0 0.0
  %426 = vmatpush1.msra.mxu0 0.0
  %427 = vmatprep.subr.mxu0 0.0
  %428 = vmatpush1.msra.mxu0 0.0
  %429 = vmatprep.subr.mxu0 0.0
  %430 = vmatpush1.msra.mxu0 0.0
  %431 = vmatprep.subr.mxu0 0.0
  %432 = vmatpush1.msra.mxu0 0.0
  %433 = vmatprep.subr.mxu0 0.0
  %434 = vmatpush1.msra.mxu0 0.0
  %435 = vmatprep.subr.mxu0 0.0
  %436 = vmatpush1.msra.mxu0 0.0
  %437 = vmatprep.mubr.f32.mxu0 0.0
  %438 = vmatmul.mubr.f32.gmra.mrb[0].mxu0 %v229
  %v439 = vpop.f32.mrb[0].mxu0
  %v440 = vadd.f32 %v222, %v439
  %v441 = vpop.f32.mrb[0].mxu0
  %442 = vdwg.mxu0
  %v448 = vcombine.low %v298, %v300
  %v449 = vcombine.low %v369, %v371
  %v451 = vunpack.c.l.s4 1983009808
  %v452 = vunpack.c.0.s8 %v451
  %v453 = vlaneseq
  %v454 = vshrl.u32 %v453, 7
  %v455 = vsub.s32 %v452, %v454
  %v456 = vrot.slane %v448, %v455
  %v458 = vunpack.c.l.s4 1983009808
  %v459 = vunpack.c.0.s8 %v458
  %v460 = vlaneseq
  %v461 = vshrl.u32 %v460, 7
  %v462 = vsub.s32 %v459, %v461
  %v463 = vrot.slane %v449, %v462
  %v464 = vcombine.low %v456, %v463
  %v466 = vunpack.c.l.s4 1983009808
  %v467 = vunpack.c.0.s8 %v466
  %v468 = vlaneseq
  %v469 = vshrl.u32 %v468, 7
  %v470 = vsub.s32 %v467, %v469
  %v471 = vrot.slane %v440, %v470
  %474 = vst [vmem:[%s7] sm:$0xff] %v464
  %vm475 = vcmask 517120
  %476 = vst.msk [vmem:[%s7 + $0x8] sm:$0x3] %vm475, %v471
  // Predicated region
  $region30: #{_lambda_.22} parent=0 // pred_check
    _
  $region31: #{_lambda_.22} parent=0 // pred_check_branch
    %478 = sbr.rel (0) target = $region33
  $region32: #{_lambda_.22} parent=0 // pred_region
    _
  $region33: #{_lambda_.22} parent=0 // pred_fallthru
    _
  // Predicated region
  $region34: #{_lambda_.22} parent=0 // pred_check
    _
  $region35: #{_lambda_.22} parent=0 // pred_check_branch
    %480 = sbr.rel (0) target = $region37
  $region36: #{_lambda_.22} parent=0 // pred_region
    _
  $region37: #{_lambda_.22} parent=0 // pred_fallthru
    _

// kernel: _lambda_.23
$region0: #{_lambda_.23}
  #allocation0 [shape = 'u32[]', space=smem, size = 0x4, offset = 0x4, fixed_abs, tag = 'smem constant byte address 0x4 - core index']
  #allocation1 [shape = 'u32[144,128]{1,0:T(1,128)}', space=vmem, size = 0x12000, scoped, tag = 'internal scratch']
  #allocation2 [shape = 'bf16[144,16]{1,0:T(16,128)(2,1)}', space=vmem, size = 0x9000, scoped, tag = 'scratch operand']
  %s0 = inlined_call_operand.vmem [shape: bf16[2,16,256], index: 0, kind: input, shape index: {}]
  %s1 = inlined_call_operand.vmem [shape: bf16[2,8,144], index: 1, kind: input, shape index: {}]
  %s2 = inlined_call_operand.vmem [shape: f32[8,1], index: 2, kind: input, shape index: {}]
  %s3 = inlined_call_operand.vmem [shape: f32[8,1], index: 3, kind: input, shape index: {}]
  %s4 = inlined_call_operand.vmem [shape: bf16[2,8,16], index: 4, kind: output, shape index: {}]
  %s5 = sld [smem:[#allocation0]]
  $region49: #{_lambda_.23} parent=0
    _
  %s7 = ssub.s32 1, %s5
  %s8 = scalar_select 0, %s7, %s5
  loop: start=0, step=1, limit=4
  $region2: #{_lambda_.23} parent=0 // loop_pre_header
    _
  $region3: #{_lambda_.23} parent=0 // loop_header
    %s10 = sphi 0, %s14
    %p11 = scmp.ge.s32.totalorder %s10, 4
    %s20 = sphi 0, %s22
    %s23 = sphi 0, %s20
    %s24 = sphi 0, %s23
    %s40 = sphi 0, %s24
    %s46 = sphi 0, %s48
    %s49 = sphi 0, %s46
    %s50 = sphi 0, %s49
    %s66 = sphi 0, %s50
    %s70 = sphi 0, %s70
    %s72 = sphi 0, %s70
    %s73 = sphi 0, %s72
    %s87 = sphi 0, %s73
    %s91 = sphi 0, %s91
    %s93 = sphi 0, %s91
    %s94 = sphi 0, %s93
    %s108 = sphi 0, %s94
    %s114 = sphi 0, %s116
    %s117 = sphi 0, %s114
    %s118 = sphi 0, %s117
    %s134 = sphi 0, %s118
  $region4: #{_lambda_.23} parent=0 // loop_header_branch
    %13 = sbr.rel (%p11) target = $region8
  $region5: #{_lambda_.23} parent=0 // loop_body
    %s15 = ssub.s32 %s10, 1
    %s16 = ssub.s32 %s10, 2
    %s17 = sadd.s32 %s10, 1
    %s18 = ssub.s32 %s10, %s17
    %p19 = scmp.eq.s32.totalorder %s18, 0
    %s21 = sadd.s32 %s20, 1
    %s22 = scalar_select %p19, %s20, %s21
    %p25 = pneg %p19
    %p26 = scmp.eq.s32.totalorder %s10, 1
    %p27 = por %p25, %p26
    %p28 = scmp.ne.s32.totalorder %s20, %s23
    %p29 = scmp.eq.s32.totalorder %s10, 0
    %p30 = por %p28, %p29
    %p31 = scmp.ne.s32.totalorder %s20, %s23
    %p32 = scmp.eq.s32.totalorder %s15, 1
    %p33 = por %p31, %p32
    %p34 = scmp.ne.s32.totalorder %s23, %s24
    %p35 = scmp.eq.s32.totalorder %s15, 0
    %p36 = por %p34, %p35
    %p37 = scmp.ne.s32.totalorder %s23, %s24
    %p38 = scmp.eq.s32.totalorder %s16, 1
    %p39 = por %p37, %p38
    %p41 = scmp.ne.s32.totalorder %s24, %s40
    %p42 = scmp.eq.s32.totalorder %s16, 0
    %p43 = por %p41, %p42
    %s44 = ssub.s32 %s10, %s17
    %p45 = scmp.eq.s32.totalorder %s44, 0
    %s47 = sadd.s32 %s46, 1
    %s48 = scalar_select %p45, %s46, %s47
    %p51 = pneg %p45
    %p52 = scmp.eq.s32.totalorder %s10, 1
    %p53 = por %p51, %p52
    %p54 = scmp.ne.s32.totalorder %s46, %s49
    %p55 = scmp.eq.s32.totalorder %s10, 0
    %p56 = por %p54, %p55
    %p57 = scmp.ne.s32.totalorder %s46, %s49
    %p58 = scmp.eq.s32.totalorder %s15, 1
    %p59 = por %p57, %p58
    %p60 = scmp.ne.s32.totalorder %s49, %s50
    %p61 = scmp.eq.s32.totalorder %s15, 0
    %p62 = por %p60, %p61
    %p63 = scmp.ne.s32.totalorder %s49, %s50
    %p64 = scmp.eq.s32.totalorder %s16, 1
    %p65 = por %p63, %p64
    %p67 = scmp.ne.s32.totalorder %s50, %s66
    %p68 = scmp.eq.s32.totalorder %s16, 0
    %p69 = por %p67, %p68
    %s71 = sadd.s32 %s70, 1
    %p74 = scmp.eq.s32.totalorder %s10, 1
    %p75 = scmp.ne.s32.totalorder %s70, %s72
    %p76 = scmp.eq.s32.totalorder %s10, 0
    %p77 = por %p75, %p76
    %p78 = scmp.ne.s32.totalorder %s70, %s72
    %p79 = scmp.eq.s32.totalorder %s15, 1
    %p80 = por %p78, %p79
    %p81 = scmp.ne.s32.totalorder %s72, %s73
    %p82 = scmp.eq.s32.totalorder %s15, 0
    %p83 = por %p81, %p82
    %p84 = scmp.ne.s32.totalorder %s72, %s73
    %p85 = scmp.eq.s32.totalorder %s16, 1
    %p86 = por %p84, %p85
    %p88 = scmp.ne.s32.totalorder %s73, %s87
    %p89 = scmp.eq.s32.totalorder %s16, 0
    %p90 = por %p88, %p89
    %s92 = sadd.s32 %s91, 1
    %p95 = scmp.eq.s32.totalorder %s10, 1
    %p96 = scmp.ne.s32.totalorder %s91, %s93
    %p97 = scmp.eq.s32.totalorder %s10, 0
    %p98 = por %p96, %p97
    %p99 = scmp.ne.s32.totalorder %s91, %s93
    %p100 = scmp.eq.s32.totalorder %s15, 1
    %p101 = por %p99, %p100
    %p102 = scmp.ne.s32.totalorder %s93, %s94
    %p103 = scmp.eq.s32.totalorder %s15, 0
    %p104 = por %p102, %p103
    %p105 = scmp.ne.s32.totalorder %s93, %s94
    %p106 = scmp.eq.s32.totalorder %s16, 1
    %p107 = por %p105, %p106
    %p109 = scmp.ne.s32.totalorder %s94, %s108
    %p110 = scmp.eq.s32.totalorder %s16, 0
    %p111 = por %p109, %p110
    %s112 = ssub.s32 %s10, %s17
    %p113 = scmp.eq.s32.totalorder %s112, 0
    %s115 = sadd.s32 %s114, 1
    %s116 = scalar_select %p113, %s114, %s115
    %p119 = pneg %p113
    %p120 = scmp.eq.s32.totalorder %s10, 1
    %p121 = por %p119, %p120
    %p122 = scmp.ne.s32.totalorder %s114, %s117
    %p123 = scmp.eq.s32.totalorder %s10, 0
    %p124 = por %p122, %p123
    %p125 = scmp.ne.s32.totalorder %s114, %s117
    %p126 = scmp.eq.s32.totalorder %s15, 1
    %p127 = por %p125, %p126
    %p128 = scmp.ne.s32.totalorder %s117, %s118
    %p129 = scmp.eq.s32.totalorder %s15, 0
    %p130 = por %p128, %p129
    %p131 = scmp.ne.s32.totalorder %s117, %s118
    %p132 = scmp.eq.s32.totalorder %s16, 1
    %p133 = por %p131, %p132
    %p135 = scmp.ne.s32.totalorder %s118, %s134
    %p136 = scmp.eq.s32.totalorder %s16, 0
    %p137 = por %p135, %p136
    %p138 = scmp.le.s32.totalorder 1, %s10
    %p139 = scmp.lt.s32.totalorder %s10, 3
    %p140 = pnand %p138, %p139
    %p141 = pneg %p140
    // Predicated region
    $region9: #{_lambda_.23} parent=5 // pred_check
      _
    $region10: #{_lambda_.23} parent=5 // pred_check_branch
      %143 = sbr.rel (%p140) target = $region12
    $region11: #{_lambda_.23} parent=5 // pred_region
      %s144 = ssub.s32 %s10, 1
      // Predicated region
      $region13: #{_lambda_.23} parent=11 // pred_check
        %p145 = pneg %p83
      $region14: #{_lambda_.23} parent=11 // pred_check_branch
        %147 = sbr.rel (%p145) target = $region16
      $region15: #{_lambda_.23} parent=11 // pred_region
        _
      $region16: #{_lambda_.23} parent=11 // pred_fallthru
        _
      // Predicated region
      $region17: #{_lambda_.23} parent=11 // pred_check
        %p148 = pneg %p104
      $region18: #{_lambda_.23} parent=11 // pred_check_branch
        %150 = sbr.rel (%p148) target = $region20
      $region19: #{_lambda_.23} parent=11 // pred_region
        _
      $region20: #{_lambda_.23} parent=11 // pred_fallthru
        _
    $region12: #{_lambda_.23} parent=5 // pred_fallthru
      _
    %p151 = scmp.lt.s32.totalorder %s10, 2
    // Predicated region
    $region21: #{_lambda_.23} parent=5 // pred_check
      %p152 = pneg %p151
    $region22: #{_lambda_.23} parent=5 // pred_check_branch
      %154 = sbr.rel (%p152) target = $region24
    $region23: #{_lambda_.23} parent=5 // pred_region
      // Predicated region
      $region25: #{_lambda_.23} parent=23 // pred_check
        %p155 = pneg %p30
      $region26: #{_lambda_.23} parent=23 // pred_check_branch
        %157 = sbr.rel (%p155) target = $region28
      $region27: #{_lambda_.23} parent=23 // pred_region
        %p158 = scmp.lt.s32.totalorder %s10, 1
        %s159 = scalar_select %p158, %s10, 1
        %s160 = smul.addr %s159, 4
        %s161 = smul.addr %s160, 4
        %s162 = scalar_lea.vmem %s0, %s161
      $region28: #{_lambda_.23} parent=23 // pred_fallthru
        _
      // Predicated region
      $region29: #{_lambda_.23} parent=23 // pred_check
        %p163 = pneg %p56
      $region30: #{_lambda_.23} parent=23 // pred_check_branch
        %165 = sbr.rel (%p163) target = $region32
      $region31: #{_lambda_.23} parent=23 // pred_region
        %p166 = scmp.lt.s32.totalorder %s10, 1
        %s167 = scalar_select %p166, %s10, 1
        %s168 = smul.addr %s167, 2
        %s169 = smul.addr %s168, 4
        %s170 = scalar_lea.vmem %s1, %s169
      $region32: #{_lambda_.23} parent=23 // pred_fallthru
        _
    $region24: #{_lambda_.23} parent=5 // pred_fallthru
      _
    %p171 = scmp.le.s32.totalorder 1, %s10
    %p172 = scmp.lt.s32.totalorder %s10, 3
    %p173 = pnand %p171, %p172
    %p174 = pneg %p173
    // Predicated region
    $region33: #{_lambda_.23} parent=5 // pred_check
      _
    $region34: #{_lambda_.23} parent=5 // pred_check_branch
      %176 = sbr.rel (%p173) target = $region36
    $region35: #{_lambda_.23} parent=5 // pred_region
      %s177 = ssub.s32 %s10, 1
      %p178 = scmp.lt.s32.totalorder %s15, 1
      %s179 = scalar_select %p178, %s15, 1
      %s180 = smul.addr %s179, 4
      %s181 = smul.addr %s180, 4
      %s182 = scalar_lea.vmem %s0, %s181
      %p183 = pneg %p36
      %p184 = pneg %p33
      %p185 = scmp.lt.s32.totalorder %s15, 1
      %s186 = scalar_select %p185, %s15, 1
      %s187 = smul.addr %s186, 2
      %s188 = smul.addr %s187, 4
      %s189 = scalar_lea.vmem %s1, %s188
      %p190 = pneg %p62
      %p191 = pneg %p59
      %p192 = pneg %p83
      %p193 = pneg %p80
      %p194 = pneg %p104
      %p195 = pneg %p101
      %p196 = pneg %p130
      %p197 = pneg %p127
      %p198 = scmp.lt.s32.totalorder %s15, 1
      %s199 = scalar_select %p198, %s15, 1
      %s200 = smul.addr %s199, 4
      %s201 = scalar_lea.vmem %s4, %s200
      %p202 = scmp.lt.s32.totalorder %s15, 1
      %s203 = scalar_select %p202, %s15, 1
      %s204 = smul.addr %s203, 4
      %s205 = smul.addr %s204, 4
      %s206 = scalar_lea.vmem %s0, %s205
      %p207 = scmp.lt.s32.totalorder %s15, 1
      %s208 = scalar_select %p207, %s15, 1
      %s209 = smul.addr %s208, 2
      %s210 = smul.addr %s209, 4
      %s211 = scalar_lea.vmem %s1, %s210
      %p212 = scmp.lt.s32.totalorder %s15, 1
      %s213 = scalar_select %p212, %s15, 1
      %s214 = smul.addr %s213, 4
      %s215 = scalar_lea.vmem %s4, %s214
      %v217 = vlaneseq
      %v218 = vand.u32 %v217, 127
      %vm219 = vcmp.lt.s32.totalorder %v218, 0
      %v220 = vsub.s32 0, %v218
      %v221 = vsel %vm219, %v220, %v218
      %v222 = vshrl.u32 %v221, 2
      %v223 = vand.u32 %v221, 3
      %v224 = vsub.s32 0, %v223
      %v225 = vsel %vm219, %v224, %v223
      %vm226 = vcmp.ne.s32.totalorder %v225, 0
      %vm227 = vcmp.lt.s32.totalorder %v225, 0
      %vm228 = vmand %vm227, %vm226
      %v229 = vadd.s32 %v225, 4
      %v230 = vsel %vm228, %v229, %v225
      %vm231 = vcmp.ge.s32.totalorder %v230, 1
      %v232 = vsel %vm231, 1, 0
      %v233 = vcvt.s32.f32 %v232
      %v234 = vpack.c.bf16 %v233, %v233
      %vm235 = vcmp.le.s32.totalorder %v230, 2
      %v236 = vsel %vm235, 1, 0
      %v237 = vcvt.s32.f32 %v236
      %v238 = vpack.c.bf16 %v237, %v237
      %v239 = vld [vmem:[%s206] sm:$0xff]
      %v240 = vld [vmem:[%s206 + $0x8] sm:$0xff]
      %v242 = vunpack.c.l.b16 %v234
      %v243 = vpack.c.b16 %v242, %v242
      %244 = vrot.lane.b32.xlu0 %v243, 123
      %v245 = vpop.permute.xlu0 %244
      %v246 = vrot.slane %v245, 4
      %vm247 = vcmask 1006592
      %v248 = vsel %vm247, %v246, %v245
      %v250 = vmul.bf16 %v239, %v248
      %v251 = vmul.bf16 %v240, %v248
      %v254 = vunpack.c.l.b16 %v250
      %v255 = vunpack.c.h.b16 %v250
      %v256 = vunpack.c.l.b16 %v251
      %v257 = vunpack.c.h.b16 %v251
      %v258 = vpack.c.b16 %v256, %v254
      %v259 = vpack.c.b16 %v257, %v255
      %260 = vrot.lane.b32.xlu0 %v258, 5
      %v261 = vpop.permute.xlu0 %260
      %262 = vrot.lane.b32.xlu0 %v259, 5
      %v263 = vpop.permute.xlu0 %262
      %vm264 = vcmask 39936
      %v265 = vsel %vm264, %v261, %v263
      %vm267 = vcmask 130048
      %268 = vst.msk [vmem:[#allocation2] sm:$0xff] %vm267, %v265
      %v269 = vld [vmem:[%s206] sm:$0xff]
      %v270 = vld [vmem:[%s206 + $0x8] sm:$0xff]
      %v273 = vunpack.c.l.b16 %v269
      %v274 = vunpack.c.h.b16 %v269
      %v275 = vunpack.c.l.b16 %v270
      %v276 = vunpack.c.h.b16 %v270
      %v277 = vpack.c.b16 %v275, %v273
      %v278 = vpack.c.b16 %v276, %v274
      %279 = vrot.lane.b32.xlu0 %v277, 4
      %v280 = vpop.permute.xlu0 %279
      %281 = vrot.lane.b32.xlu0 %v278, 4
      %v282 = vpop.permute.xlu0 %281
      %vm283 = vcmask 31744
      %v284 = vsel %vm283, %v280, %v282
      %286 = vst.msk [vmem:[#allocation2 + $0x8] sm:$0xff] %vm267, %v284
      %v287 = vld [vmem:[%s206] sm:$0xff]
      %v288 = vld [vmem:[%s206 + $0x8] sm:$0xff]
      %v290 = vunpack.c.l.b16 %v238
      %v291 = vpack.c.b16 %v290, %v290
      %292 = vrot.lane.b32.xlu0 %v291, 125
      %v293 = vpop.permute.xlu0 %292
      %v294 = vrot.slane %v293, 4
      %vm295 = vcmask 1022976
      %v296 = vsel %vm295, %v294, %v293
      %v298 = vmul.bf16 %v287, %v296
      %v299 = vmul.bf16 %v288, %v296
      %v302 = vunpack.c.l.b16 %v298
      %v303 = vunpack.c.h.b16 %v298
      %v304 = vunpack.c.l.b16 %v299
      %v305 = vunpack.c.h.b16 %v299
      %v306 = vpack.c.b16 %v304, %v302
      %v307 = vpack.c.b16 %v305, %v303
      %308 = vrot.lane.b32.xlu0 %v306, 3
      %v309 = vpop.permute.xlu0 %308
      %310 = vrot.lane.b32.xlu0 %v307, 3
      %v311 = vpop.permute.xlu0 %310
      %vm312 = vcmask 23552
      %v313 = vsel %vm312, %v309, %v311
      %315 = vst.msk [vmem:[#allocation2 + $0x10] sm:$0xff] %vm267, %v313
      %v316 = vld [vmem:[%s206] sm:$0xff]
      %v317 = vld [vmem:[%s206 + $0x8] sm:$0xff]
      %318 = vrot.lane.b32.xlu0 %v243, 127
      %v319 = vpop.permute.xlu0 %318
      %v320 = vrot.slane %v319, 4
      %vm321 = vcmask 1039360
      %v322 = vsel %vm321, %v320, %v319
      %v324 = vmul.bf16 %v316, %v322
      %v325 = vmul.bf16 %v317, %v322
      %v328 = vunpack.c.l.b16 %v324
      %v329 = vunpack.c.h.b16 %v324
      %v330 = vunpack.c.l.b16 %v325
      %v331 = vunpack.c.h.b16 %v325
      %v332 = vpack.c.b16 %v330, %v328
      %v333 = vpack.c.b16 %v331, %v329
      %334 = vrot.lane.b32.xlu0 %v332, 1
      %v335 = vpop.permute.xlu0 %334
      %336 = vrot.lane.b32.xlu0 %v333, 1
      %v337 = vpop.permute.xlu0 %336
      %vm338 = vcmask 7168
      %v339 = vsel %vm338, %v335, %v337
      %341 = vst.msk [vmem:[#allocation2 + $0x18] sm:$0xff] %vm267, %v339
      %v342 = vld [vmem:[%s206 + $0x4] sm:$0xf]
      %v343 = vld [vmem:[%s206 + $0xc] sm:$0xf]
      %v346 = vunpack.c.l.b16 %v342
      %v347 = vunpack.c.l.b16 %v343
      %v348 = vpack.c.b16 %v347, %v346
      %350 = vst.msk [vmem:[#allocation2 + $0x20] sm:$0xff] %vm267, %v348
      %v351 = vld [vmem:[%s206 + $0x4] sm:$0xf]
      %v352 = vld [vmem:[%s206 + $0xc] sm:$0xf]
      %353 = vrot.lane.b32.xlu0 %v291, 1
      %v354 = vpop.permute.xlu0 %353
      %v356 = vmul.bf16 %v351, %v354
      %v357 = vmul.bf16 %v352, %v354
      %v360 = vunpack.c.l.b16 %v356
      %v361 = vunpack.c.l.b16 %v357
      %v362 = vpack.c.b16 %v361, %v360
      %363 = vrot.lane.b32.xlu0 %v362, 127
      %v364 = vpop.permute.xlu0 %363
      %366 = vst.msk [vmem:[#allocation2 + $0x28] sm:$0xff] %vm267, %v364
      %v367 = vld [vmem:[%s206 + $0x4] sm:$0xf]
      %v368 = vld [vmem:[%s206 + $0xc] sm:$0xf]
      %369 = vrot.lane.b32.xlu0 %v243, 3
      %v370 = vpop.permute.xlu0 %369
      %v372 = vmul.bf16 %v367, %v370
      %v373 = vmul.bf16 %v368, %v370
      %v376 = vunpack.c.l.b16 %v372
      %v377 = vunpack.c.l.b16 %v373
      %v378 = vpack.c.b16 %v377, %v376
      %379 = vrot.lane.b32.xlu0 %v378, 125
      %v380 = vpop.permute.xlu0 %379
      %382 = vst.msk [vmem:[#allocation2 + $0x30] sm:$0xff] %vm267, %v380
      %v383 = vld [vmem:[%s206 + $0x4] sm:$0xf]
      %v384 = vld [vmem:[%s206 + $0xc] sm:$0xf]
      %v387 = vunpack.c.l.b16 %v383
      %v388 = vunpack.c.l.b16 %v384
      %v389 = vpack.c.b16 %v388, %v387
      %390 = vrot.lane.b32.xlu0 %v389, 124
      %v391 = vpop.permute.xlu0 %390
      %393 = vst.msk [vmem:[#allocation2 + $0x38] sm:$0xff] %vm267, %v391
      %v394 = vld [vmem:[%s206 + $0x4] sm:$0xf]
      %v395 = vld [vmem:[%s206 + $0xc] sm:$0xf]
      %396 = vrot.lane.b32.xlu0 %v291, 5
      %v397 = vpop.permute.xlu0 %396
      %v399 = vmul.bf16 %v394, %v397
      %v400 = vmul.bf16 %v395, %v397
      %v403 = vunpack.c.l.b16 %v399
      %v404 = vunpack.c.l.b16 %v400
      %v405 = vpack.c.b16 %v404, %v403
      %406 = vrot.lane.b32.xlu0 %v405, 123
      %v407 = vpop.permute.xlu0 %406
      %409 = vst.msk [vmem:[#allocation2 + $0x40] sm:$0xff] %vm267, %v407
      %v410 = vld [vmem:[%s211] sm:$0xff]
      %v411 = vld [vmem:[#allocation2] sm:$0xff]
      %v412 = vld [vmem:[#allocation2 + $0x8] sm:$0xff]
      %v413 = vld [vmem:[#allocation2 + $0x10] sm:$0xff]
      %v414 = vld [vmem:[#allocation2 + $0x18] sm:$0xff]
      %v415 = vld [vmem:[#allocation2 + $0x20] sm:$0xff]
      %v416 = vld [vmem:[#allocation2 + $0x28] sm:$0xff]
      %v417 = vld [vmem:[#allocation2 + $0x30] sm:$0xff]
      %v418 = vld [vmem:[#allocation2 + $0x38] sm:$0xff]
      %v419 = vld [vmem:[#allocation2 + $0x40] sm:$0xff]
      %v421 = vunpack.c.l.b16 %v410
      %v422 = vunpack.c.h.b16 %v410
      %v423 = vpack.c.b16 %v421, %v421
      %v424 = vpack.c.b16 %v422, %v422
      %v427 = vsel %vm267, %v424, 0
      %429 = vmatprep.subr.bf16.mxu0 0
      %430 = vmatpush1.bf16.msra.mxu0 %v411
      %431 = vmatprep.subr.bf16.mxu0 0
      %432 = vmatpush1.bf16.msra.mxu0 %v412
      %433 = vmatprep.subr.bf16.mxu0 0
      %434 = vmatpush1.bf16.msra.mxu0 %v413
      %435 = vmatprep.subr.bf16.mxu0 0
      %436 = vmatpush1.bf16.msra.mxu0 %v414
      %437 = vmatprep.subr.bf16.mxu0 0
      %438 = vmatpush1.bf16.msra.mxu0 %v415
      %439 = vmatprep.subr.bf16.mxu0 0
      %440 = vmatpush1.bf16.msra.mxu0 %v416
      %441 = vmatprep.subr.bf16.mxu0 0
      %442 = vmatpush1.bf16.msra.mxu0 %v417
      %443 = vmatprep.subr.bf16.mxu0 0
      %444 = vmatpush1.bf16.msra.mxu0 %v418
      %445 = vmatprep.subr.bf16.mxu0 0
      %446 = vmatpush1.bf16.msra.mxu0 %v419
      %447 = vmatprep.subr.bf16.mxu0 0
      %448 = vmatpush1.bf16.msra.mxu0 0
      %449 = vmatprep.subr.bf16.mxu0 0
      %450 = vmatpush1.bf16.msra.mxu0 0
      %451 = vmatprep.subr.bf16.mxu0 0
      %452 = vmatpush1.bf16.msra.mxu0 0
      %453 = vmatprep.subr.bf16.mxu0 0
      %454 = vmatpush1.bf16.msra.mxu0 0
      %455 = vmatprep.subr.bf16.mxu0 0
      %456 = vmatpush1.bf16.msra.mxu0 0
      %457 = vmatprep.subr.bf16.mxu0 0
      %458 = vmatpush1.bf16.msra.mxu0 0
      %459 = vmatprep.subr.bf16.mxu0 0
      %460 = vmatpush1.bf16.msra.mxu0 0
      %461 = vmatprep.mubr.bf16.mxu0 %v427
      %462 = vmatmul.mubr.bf16.gmra.mrb[0].mxu0 %v423
      %v463 = vpop.f32.mrb[0].mxu0
      %v464 = vadd.f32 0.0, %v463
      %v465 = vpop.f32.mrb[0].mxu0
      %v466 = vpop.f32.mrb[0].mxu0
      %v467 = vpop.f32.mrb[0].mxu0
      %468 = vdwg.mxu0
      %v469 = vsel %vm267, %v464, 0.0
      %470 = vadd.xlane.f32.xlu0 %v469
      %v471 = vpop.xlane.xlu0 %470
      %v472 = vrcp.pop 16.0
      %v473 = vmul.f32 %v471, %v472
      %v474 = vsub.f32 %v464, %v473
      %v475 = vmul.f32 %v474, %v474
      %v476 = vsel %vm267, %v475, 0.0
      %477 = vadd.xlane.f32.xlu0 %v476
      %v478 = vpop.xlane.xlu0 %477
      %v479 = vmul.f32 %v478, %v472
      %v480 = vadd.f32 %v479, 1e-05
      %v481 = vrsqrt.pop %v480
      %v482 = vmul.f32 %v474, %v481
      %v483 = vld [vmem:[%s2] sm:$0xff]
      %485 = vset.pattern.permute.xlu0 0
      %486 = vperm.xlu0 %485, %v483
      %v487 = vpop.permute.xlu0 %486
      %v489 = vmul.f32 %v482, %v487
      %v490 = vld [vmem:[%s3] sm:$0xff]
      %492 = vset.pattern.permute.xlu0 0
      %493 = vperm.xlu0 %492, %v490
      %v494 = vpop.permute.xlu0 %493
      %v496 = vadd.f32 %v489, %v494
      %v497 = vmax.f32 %v496, 0.0
      %v498 = vpack.c.bf16 %v497, %v497
      %vm499 = vcmask 125952
      %500 = vst.msk [vmem:[%s215] sm:$0xf] %vm499, %v498
      %p501 = scmp.lt.s32.totalorder %s15, 1
      %s502 = scalar_select %p501, %s15, 1
      %s503 = smul.addr %s502, 4
      %s504 = scalar_lea.vmem %s4, %s503
      // Predicated region
      $region37: #{_lambda_.23} parent=35 // pred_check
        %p505 = pneg %p127
      $region38: #{_lambda_.23} parent=35 // pred_check_branch
        %507 = sbr.rel (%p505) target = $region40
      $region39: #{_lambda_.23} parent=35 // pred_region
        _
      $region40: #{_lambda_.23} parent=35 // pred_fallthru
        _
    $region36: #{_lambda_.23} parent=5 // pred_fallthru
      _
    %p508 = scmp.le.s32.totalorder 2, %s10
    // Predicated region
    $region41: #{_lambda_.23} parent=5 // pred_check
      %p509 = pneg %p508
    $region42: #{_lambda_.23} parent=5 // pred_check_branch
      %511 = sbr.rel (%p509) target = $region44
    $region43: #{_lambda_.23} parent=5 // pred_region
      %s512 = ssub.s32 %s10, 2
      // Predicated region
      $region45: #{_lambda_.23} parent=43 // pred_check
        %p513 = pneg %p133
      $region46: #{_lambda_.23} parent=43 // pred_check_branch
        %515 = sbr.rel (%p513) target = $region48
      $region47: #{_lambda_.23} parent=43 // pred_region
        %p516 = scmp.lt.s32.totalorder %s16, 1
        %s517 = scalar_select %p516, %s16, 1
        %s518 = smul.addr %s517, 4
        %s519 = scalar_lea.vmem %s4, %s518
      $region48: #{_lambda_.23} parent=43 // pred_fallthru
        _
    $region44: #{_lambda_.23} parent=5 // pred_fallthru
      _
  $region6: #{_lambda_.23} parent=0 // loop_footer
    %s14 = sadd.s32 1, %s10
  $region7: #{_lambda_.23} parent=0 // loop_footer_branch
    %9 = sbr.rel target = $region3
  $region8: #{_lambda_.23} parent=0 // loop_exit
    _

// kernel: _lambda_.25
$region0: #{_lambda_.25}
  #allocation0 [shape = 'u32[]', space=smem, size = 0x4, offset = 0x4, fixed_abs, tag = 'smem constant byte address 0x4 - core index']
  #allocation1 [shape = 'u32[144,128]{1,0:T(1,128)}', space=vmem, size = 0x12000, scoped, tag = 'internal scratch']
  #allocation2 [shape = 'bf16[144,64]{1,0:T(16,128)(2,1)}', space=vmem, size = 0x9000, scoped, tag = 'scratch operand']
  %s0 = inlined_call_operand.vmem [shape: bf16[2,16,256], index: 0, kind: input, shape index: {}]
  %s1 = inlined_call_operand.vmem [shape: bf16[2,8,144], index: 1, kind: input, shape index: {}]
  %s2 = inlined_call_operand.vmem [shape: bf16[2,16,256], index: 2, kind: output, shape index: {}]
  %s3 = sld [smem:[#allocation0]]
  $region41: #{_lambda_.25} parent=0
    _
  %s5 = ssub.s32 1, %s3
  %s6 = scalar_select 0, %s5, %s3
  loop: start=0, step=1, limit=4
  $region2: #{_lambda_.25} parent=0 // loop_pre_header
    _
  $region3: #{_lambda_.25} parent=0 // loop_header
    %s8 = sphi 0, %s12
    %p9 = scmp.ge.s32.totalorder %s8, 4
    %s18 = sphi 0, %s20
    %s21 = sphi 0, %s18
    %s22 = sphi 0, %s21
    %s38 = sphi 0, %s22
    %s44 = sphi 0, %s46
    %s47 = sphi 0, %s44
    %s48 = sphi 0, %s47
    %s64 = sphi 0, %s48
    %s70 = sphi 0, %s72
    %s73 = sphi 0, %s70
    %s74 = sphi 0, %s73
    %s90 = sphi 0, %s74
  $region4: #{_lambda_.25} parent=0 // loop_header_branch
    %11 = sbr.rel (%p9) target = $region8
  $region5: #{_lambda_.25} parent=0 // loop_body
    %s13 = ssub.s32 %s8, 1
    %s14 = ssub.s32 %s8, 2
    %s15 = sadd.s32 %s8, 1
    %s16 = ssub.s32 %s8, %s15
    %p17 = scmp.eq.s32.totalorder %s16, 0
    %s19 = sadd.s32 %s18, 1
    %s20 = scalar_select %p17, %s18, %s19
    %p23 = pneg %p17
    %p24 = scmp.eq.s32.totalorder %s8, 1
    %p25 = por %p23, %p24
    %p26 = scmp.ne.s32.totalorder %s18, %s21
    %p27 = scmp.eq.s32.totalorder %s8, 0
    %p28 = por %p26, %p27
    %p29 = scmp.ne.s32.totalorder %s18, %s21
    %p30 = scmp.eq.s32.totalorder %s13, 1
    %p31 = por %p29, %p30
    %p32 = scmp.ne.s32.totalorder %s21, %s22
    %p33 = scmp.eq.s32.totalorder %s13, 0
    %p34 = por %p32, %p33
    %p35 = scmp.ne.s32.totalorder %s21, %s22
    %p36 = scmp.eq.s32.totalorder %s14, 1
    %p37 = por %p35, %p36
    %p39 = scmp.ne.s32.totalorder %s22, %s38
    %p40 = scmp.eq.s32.totalorder %s14, 0
    %p41 = por %p39, %p40
    %s42 = ssub.s32 %s8, %s15
    %p43 = scmp.eq.s32.totalorder %s42, 0
    %s45 = sadd.s32 %s44, 1
    %s46 = scalar_select %p43, %s44, %s45
    %p49 = pneg %p43
    %p50 = scmp.eq.s32.totalorder %s8, 1
    %p51 = por %p49, %p50
    %p52 = scmp.ne.s32.totalorder %s44, %s47
    %p53 = scmp.eq.s32.totalorder %s8, 0
    %p54 = por %p52, %p53
    %p55 = scmp.ne.s32.totalorder %s44, %s47
    %p56 = scmp.eq.s32.totalorder %s13, 1
    %p57 = por %p55, %p56
    %p58 = scmp.ne.s32.totalorder %s47, %s48
    %p59 = scmp.eq.s32.totalorder %s13, 0
    %p60 = por %p58, %p59
    %p61 = scmp.ne.s32.totalorder %s47, %s48
    %p62 = scmp.eq.s32.totalorder %s14, 1
    %p63 = por %p61, %p62
    %p65 = scmp.ne.s32.totalorder %s48, %s64
    %p66 = scmp.eq.s32.totalorder %s14, 0
    %p67 = por %p65, %p66
    %s68 = ssub.s32 %s8, %s15
    %p69 = scmp.eq.s32.totalorder %s68, 0
    %s71 = sadd.s32 %s70, 1
    %s72 = scalar_select %p69, %s70, %s71
    %p75 = pneg %p69
    %p76 = scmp.eq.s32.totalorder %s8, 1
    %p77 = por %p75, %p76
    %p78 = scmp.ne.s32.totalorder %s70, %s73
    %p79 = scmp.eq.s32.totalorder %s8, 0
    %p80 = por %p78, %p79
    %p81 = scmp.ne.s32.totalorder %s70, %s73
    %p82 = scmp.eq.s32.totalorder %s13, 1
    %p83 = por %p81, %p82
    %p84 = scmp.ne.s32.totalorder %s73, %s74
    %p85 = scmp.eq.s32.totalorder %s13, 0
    %p86 = por %p84, %p85
    %p87 = scmp.ne.s32.totalorder %s73, %s74
    %p88 = scmp.eq.s32.totalorder %s14, 1
    %p89 = por %p87, %p88
    %p91 = scmp.ne.s32.totalorder %s74, %s90
    %p92 = scmp.eq.s32.totalorder %s14, 0
    %p93 = por %p91, %p92
    %p94 = scmp.le.s32.totalorder 1, %s8
    %p95 = scmp.lt.s32.totalorder %s8, 3
    %p96 = pnand %p94, %p95
    %p97 = pneg %p96
    // Predicated region
    $region9: #{_lambda_.25} parent=5 // pred_check
      _
    $region10: #{_lambda_.25} parent=5 // pred_check_branch
      %99 = sbr.rel (%p96) target = $region12
    $region11: #{_lambda_.25} parent=5 // pred_region
      %s100 = ssub.s32 %s8, 1
    $region12: #{_lambda_.25} parent=5 // pred_fallthru
      _
    %p101 = scmp.lt.s32.totalorder %s8, 2
    // Predicated region
    $region13: #{_lambda_.25} parent=5 // pred_check
      %p102 = pneg %p101
    $region14: #{_lambda_.25} parent=5 // pred_check_branch
      %104 = sbr.rel (%p102) target = $region16
    $region15: #{_lambda_.25} parent=5 // pred_region
      // Predicated region
      $region17: #{_lambda_.25} parent=15 // pred_check
        %p105 = pneg %p28
      $region18: #{_lambda_.25} parent=15 // pred_check_branch
        %107 = sbr.rel (%p105) target = $region20
      $region19: #{_lambda_.25} parent=15 // pred_region
        %p108 = scmp.lt.s32.totalorder %s8, 1
        %s109 = scalar_select %p108, %s8, 1
        %s110 = smul.addr %s109, 4
        %s111 = smul.addr %s110, 4
        %s112 = scalar_lea.vmem %s0, %s111
      $region20: #{_lambda_.25} parent=15 // pred_fallthru
        _
      // Predicated region
      $region21: #{_lambda_.25} parent=15 // pred_check
        %p113 = pneg %p54
      $region22: #{_lambda_.25} parent=15 // pred_check_branch
        %115 = sbr.rel (%p113) target = $region24
      $region23: #{_lambda_.25} parent=15 // pred_region
        %p116 = scmp.lt.s32.totalorder %s8, 1
        %s117 = scalar_select %p116, %s8, 1
        %s118 = smul.addr %s117, 2
        %s119 = smul.addr %s118, 4
        %s120 = scalar_lea.vmem %s1, %s119
      $region24: #{_lambda_.25} parent=15 // pred_fallthru
        _
    $region16: #{_lambda_.25} parent=5 // pred_fallthru
      _
    %p121 = scmp.le.s32.totalorder 1, %s8
    %p122 = scmp.lt.s32.totalorder %s8, 3
    %p123 = pnand %p121, %p122
    %p124 = pneg %p123
    // Predicated region
    $region25: #{_lambda_.25} parent=5 // pred_check
      _
    $region26: #{_lambda_.25} parent=5 // pred_check_branch
      %126 = sbr.rel (%p123) target = $region28
    $region27: #{_lambda_.25} parent=5 // pred_region
      %s127 = ssub.s32 %s8, 1
      %p128 = scmp.lt.s32.totalorder %s13, 1
      %s129 = scalar_select %p128, %s13, 1
      %s130 = smul.addr %s129, 4
      %s131 = smul.addr %s130, 4
      %s132 = scalar_lea.vmem %s0, %s131
      %p133 = pneg %p34
      %p134 = pneg %p31
      %p135 = scmp.lt.s32.totalorder %s13, 1
      %s136 = scalar_select %p135, %s13, 1
      %s137 = smul.addr %s136, 2
      %s138 = smul.addr %s137, 4
      %s139 = scalar_lea.vmem %s1, %s138
      %p140 = pneg %p60
      %p141 = pneg %p57
      %p142 = pneg %p86
      %p143 = pneg %p83
      %p144 = scmp.lt.s32.totalorder %s13, 1
      %s145 = scalar_select %p144, %s13, 1
      %s146 = smul.addr %s145, 4
      %s147 = smul.addr %s146, 4
      %s148 = scalar_lea.vmem %s2, %s147
      %p149 = scmp.lt.s32.totalorder %s13, 1
      %s150 = scalar_select %p149, %s13, 1
      %s151 = smul.addr %s150, 4
      %s152 = smul.addr %s151, 4
      %s153 = scalar_lea.vmem %s0, %s152
      %p154 = scmp.lt.s32.totalorder %s13, 1
      %s155 = scalar_select %p154, %s13, 1
      %s156 = smul.addr %s155, 2
      %s157 = smul.addr %s156, 4
      %s158 = scalar_lea.vmem %s1, %s157
      %p159 = scmp.lt.s32.totalorder %s13, 1
      %s160 = scalar_select %p159, %s13, 1
      %s161 = smul.addr %s160, 4
      %s162 = smul.addr %s161, 4
      %s163 = scalar_lea.vmem %s2, %s162
      %v165 = vlaneseq
      %v166 = vand.u32 %v165, 127
      %vm167 = vcmp.lt.s32.totalorder %v166, 0
      %v168 = vsub.s32 0, %v166
      %v169 = vsel %vm167, %v168, %v166
      %v170 = vshrl.u32 %v169, 3
      %v171 = vand.u32 %v169, 7
      %v172 = vsub.s32 0, %v171
      %v173 = vsel %vm167, %v172, %v171
      %vm174 = vcmp.ne.s32.totalorder %v173, 0
      %vm175 = vcmp.lt.s32.totalorder %v173, 0
      %vm176 = vmand %vm175, %vm174
      %v177 = vadd.s32 %v173, 8
      %v178 = vsel %vm176, %v177, %v173
      %vm179 = vcmp.ge.s32.totalorder %v178, 1
      %v180 = vsel %vm179, 1, 0
      %v181 = vcvt.s32.f32 %v180
      %v182 = vpack.c.bf16 %v181, %v181
      %vm183 = vcmp.le.s32.totalorder %v178, 6
      %v184 = vsel %vm183, 1, 0
      %v185 = vcvt.s32.f32 %v184
      %v186 = vpack.c.bf16 %v185, %v185
      %v187 = vld [vmem:[%s153] sm:$0xff]
      %v188 = vld [vmem:[%s153 + $0x8] sm:$0xff]
      %v190 = vunpack.c.l.b16 %v182
      %v191 = vpack.c.b16 %v190, %v190
      %192 = vrot.lane.b32.xlu0 %v191, 119
      %v193 = vpop.permute.xlu0 %192
      %v194 = vrot.slane %v193, 4
      %vm195 = vcmask 973824
      %v196 = vsel %vm195, %v194, %v193
      %v198 = vmul.bf16 %v187, %v196
      %v199 = vmul.bf16 %v188, %v196
      %v202 = vunpack.c.l.b16 %v198
      %v203 = vunpack.c.h.b16 %v198
      %v204 = vunpack.c.l.b16 %v199
      %v205 = vunpack.c.h.b16 %v199
      %v206 = vpack.c.b16 %v204, %v202
      %v207 = vpack.c.b16 %v205, %v203
      %208 = vrot.lane.b32.xlu0 %v206, 9
      %v209 = vpop.permute.xlu0 %208
      %210 = vrot.lane.b32.xlu0 %v207, 9
      %v211 = vpop.permute.xlu0 %210
      %vm212 = vcmask 72704
      %v213 = vsel %vm212, %v209, %v211
      %vm215 = vcmask 523264
      %216 = vst.msk [vmem:[#allocation2] sm:$0xff] %vm215, %v213
      %v217 = vld [vmem:[%s153] sm:$0xff]
      %v218 = vld [vmem:[%s153 + $0x8] sm:$0xff]
      %v221 = vunpack.c.l.b16 %v217
      %v222 = vunpack.c.h.b16 %v217
      %v223 = vunpack.c.l.b16 %v218
      %v224 = vunpack.c.h.b16 %v218
      %v225 = vpack.c.b16 %v223, %v221
      %v226 = vpack.c.b16 %v224, %v222
      %227 = vrot.lane.b32.xlu0 %v225, 8
      %v228 = vpop.permute.xlu0 %227
      %229 = vrot.lane.b32.xlu0 %v226, 8
      %v230 = vpop.permute.xlu0 %229
      %vm231 = vcmask 64512
      %v232 = vsel %vm231, %v228, %v230
      %234 = vst.msk [vmem:[#allocation2 + $0x8] sm:$0xff] %vm215, %v232
      %v235 = vld [vmem:[%s153] sm:$0xff]
      %v236 = vld [vmem:[%s153 + $0x8] sm:$0xff]
      %v238 = vunpack.c.l.b16 %v186
      %v239 = vpack.c.b16 %v238, %v238
      %240 = vrot.lane.b32.xlu0 %v239, 121
      %v241 = vpop.permute.xlu0 %240
      %v242 = vrot.slane %v241, 4
      %vm243 = vcmask 990208
      %v244 = vsel %vm243, %v242, %v241
      %v246 = vmul.bf16 %v235, %v244
      %v247 = vmul.bf16 %v236, %v244
      %v250 = vunpack.c.l.b16 %v246
      %v251 = vunpack.c.h.b16 %v246
      %v252 = vunpack.c.l.b16 %v247
      %v253 = vunpack.c.h.b16 %v247
      %v254 = vpack.c.b16 %v252, %v250
      %v255 = vpack.c.b16 %v253, %v251
      %256 = vrot.lane.b32.xlu0 %v254, 7
      %v257 = vpop.permute.xlu0 %256
      %258 = vrot.lane.b32.xlu0 %v255, 7
      %v259 = vpop.permute.xlu0 %258
      %vm260 = vcmask 56320
      %v261 = vsel %vm260, %v257, %v259
      %263 = vst.msk [vmem:[#allocation2 + $0x10] sm:$0xff] %vm215, %v261
      %v264 = vld [vmem:[%s153] sm:$0xff]
      %v265 = vld [vmem:[%s153 + $0x8] sm:$0xff]
      %266 = vrot.lane.b32.xlu0 %v191, 127
      %v267 = vpop.permute.xlu0 %266
      %v268 = vrot.slane %v267, 4
      %vm269 = vcmask 1039360
      %v270 = vsel %vm269, %v268, %v267
      %v272 = vmul.bf16 %v264, %v270
      %v273 = vmul.bf16 %v265, %v270
      %v276 = vunpack.c.l.b16 %v272
      %v277 = vunpack.c.h.b16 %v272
      %v278 = vunpack.c.l.b16 %v273
      %v279 = vunpack.c.h.b16 %v273
      %v280 = vpack.c.b16 %v278, %v276
      %v281 = vpack.c.b16 %v279, %v277
      %282 = vrot.lane.b32.xlu0 %v280, 1
      %v283 = vpop.permute.xlu0 %282
      %284 = vrot.lane.b32.xlu0 %v281, 1
      %v285 = vpop.permute.xlu0 %284
      %vm286 = vcmask 7168
      %v287 = vsel %vm286, %v283, %v285
      %289 = vst.msk [vmem:[#allocation2 + $0x18] sm:$0xff] %vm215, %v287
      %v290 = vld [vmem:[%s153 + $0x4] sm:$0xf]
      %v291 = vld [vmem:[%s153 + $0xc] sm:$0xf]
      %v294 = vunpack.c.l.b16 %v290
      %v295 = vunpack.c.l.b16 %v291
      %v296 = vpack.c.b16 %v295, %v294
      %298 = vst.msk [vmem:[#allocation2 + $0x20] sm:$0xff] %vm215, %v296
      %v299 = vld [vmem:[%s153 + $0x4] sm:$0xf]
      %v300 = vld [vmem:[%s153 + $0xc] sm:$0xf]
      %301 = vrot.lane.b32.xlu0 %v239, 1
      %v302 = vpop.permute.xlu0 %301
      %v304 = vmul.bf16 %v299, %v302
      %v305 = vmul.bf16 %v300, %v302
      %v308 = vunpack.c.l.b16 %v304
      %v309 = vunpack.c.l.b16 %v305
      %v310 = vpack.c.b16 %v309, %v308
      %311 = vrot.lane.b32.xlu0 %v310, 127
      %v312 = vpop.permute.xlu0 %311
      %314 = vst.msk [vmem:[#allocation2 + $0x28] sm:$0xff] %vm215, %v312
      %v315 = vld [vmem:[%s153 + $0x4] sm:$0xf]
      %v316 = vld [vmem:[%s153 + $0xc] sm:$0xf]
      %317 = vrot.lane.b32.xlu0 %v191, 7
      %v318 = vpop.permute.xlu0 %317
      %v320 = vmul.bf16 %v315, %v318
      %v321 = vmul.bf16 %v316, %v318
      %v324 = vunpack.c.l.b16 %v320
      %v325 = vunpack.c.l.b16 %v321
      %v326 = vpack.c.b16 %v325, %v324
      %327 = vrot.lane.b32.xlu0 %v326, 121
      %v328 = vpop.permute.xlu0 %327
      %330 = vst.msk [vmem:[#allocation2 + $0x30] sm:$0xff] %vm215, %v328
      %v331 = vld [vmem:[%s153 + $0x4] sm:$0xf]
      %v332 = vld [vmem:[%s153 + $0xc] sm:$0xf]
      %v335 = vunpack.c.l.b16 %v331
      %v336 = vunpack.c.l.b16 %v332
      %v337 = vpack.c.b16 %v336, %v335
      %338 = vrot.lane.b32.xlu0 %v337, 120
      %v339 = vpop.permute.xlu0 %338
      %341 = vst.msk [vmem:[#allocation2 + $0x38] sm:$0xff] %vm215, %v339
      %v342 = vld [vmem:[%s153 + $0x4] sm:$0xf]
      %v343 = vld [vmem:[%s153 + $0xc] sm:$0xf]
      %344 = vrot.lane.b32.xlu0 %v239, 9
      %v345 = vpop.permute.xlu0 %344
      %v347 = vmul.bf16 %v342, %v345
      %v348 = vmul.bf16 %v343, %v345
      %v351 = vunpack.c.l.b16 %v347
      %v352 = vunpack.c.l.b16 %v348
      %v353 = vpack.c.b16 %v352, %v351
      %354 = vrot.lane.b32.xlu0 %v353, 119
      %v355 = vpop.permute.xlu0 %354
      %357 = vst.msk [vmem:[#allocation2 + $0x40] sm:$0xff] %vm215, %v355
      %v358 = vld [vmem:[%s158] sm:$0xff]
      %v359 = vld [vmem:[#allocation2] sm:$0xff]
      %v360 = vld [vmem:[#allocation2 + $0x8] sm:$0xff]
      %v361 = vld [vmem:[#allocation2 + $0x10] sm:$0xff]
      %v362 = vld [vmem:[#allocation2 + $0x18] sm:$0xff]
      %v363 = vld [vmem:[#allocation2 + $0x20] sm:$0xff]
      %v364 = vld [vmem:[#allocation2 + $0x28] sm:$0xff]
      %v365 = vld [vmem:[#allocation2 + $0x30] sm:$0xff]
      %v366 = vld [vmem:[#allocation2 + $0x38] sm:$0xff]
      %v367 = vld [vmem:[#allocation2 + $0x40] sm:$0xff]
      %v369 = vunpack.c.l.b16 %v358
      %v370 = vunpack.c.h.b16 %v358
      %v371 = vpack.c.b16 %v369, %v369
      %v372 = vpack.c.b16 %v370, %v370
      %vm374 = vcmask 130048
      %v376 = vsel %vm374, %v372, 0
      %378 = vmatprep.subr.bf16.mxu0 0
      %379 = vmatpush1.bf16.msra.mxu0 %v359
      %380 = vmatprep.subr.bf16.mxu0 0
      %381 = vmatpush1.bf16.msra.mxu0 %v360
      %382 = vmatprep.subr.bf16.mxu0 0
      %383 = vmatpush1.bf16.msra.mxu0 %v361
      %384 = vmatprep.subr.bf16.mxu0 0
      %385 = vmatpush1.bf16.msra.mxu0 %v362
      %386 = vmatprep.subr.bf16.mxu0 0
      %387 = vmatpush1.bf16.msra.mxu0 %v363
      %388 = vmatprep.subr.bf16.mxu0 0
      %389 = vmatpush1.bf16.msra.mxu0 %v364
      %390 = vmatprep.subr.bf16.mxu0 0
      %391 = vmatpush1.bf16.msra.mxu0 %v365
      %392 = vmatprep.subr.bf16.mxu0 0
      %393 = vmatpush1.bf16.msra.mxu0 %v366
      %394 = vmatprep.subr.bf16.mxu0 0
      %395 = vmatpush1.bf16.msra.mxu0 %v367
      %396 = vmatprep.subr.bf16.mxu0 0
      %397 = vmatpush1.bf16.msra.mxu0 0
      %398 = vmatprep.subr.bf16.mxu0 0
      %399 = vmatpush1.bf16.msra.mxu0 0
      %400 = vmatprep.subr.bf16.mxu0 0
      %401 = vmatpush1.bf16.msra.mxu0 0
      %402 = vmatprep.subr.bf16.mxu0 0
      %403 = vmatpush1.bf16.msra.mxu0 0
      %404 = vmatprep.subr.bf16.mxu0 0
      %405 = vmatpush1.bf16.msra.mxu0 0
      %406 = vmatprep.subr.bf16.mxu0 0
      %407 = vmatpush1.bf16.msra.mxu0 0
      %408 = vmatprep.subr.bf16.mxu0 0
      %409 = vmatpush1.bf16.msra.mxu0 0
      %410 = vmatprep.mubr.bf16.mxu0 %v376
      %411 = vmatmul.mubr.bf16.gmra.mrb[0].mxu0 %v371
      %v412 = vpop.f32.mrb[0].mxu0
      %v413 = vadd.f32 0.0, %v412
      %v414 = vpop.f32.mrb[0].mxu0
      %v415 = vpop.f32.mrb[0].mxu0
      %v416 = vpop.f32.mrb[0].mxu0
      %417 = vdwg.mxu0
      %418 = vst [vmem:[%s163] sm:$0xff] 0
      %419 = vst [vmem:[%s163 + $0x8] sm:$0xff] 0
      %v420 = vpack.c.bf16 %v413, %v413
      %vm421 = vcmask 519168
      %422 = vst.msk [vmem:[%s163 + $0x4] sm:$0xf] %vm421, %v420
      %p423 = scmp.lt.s32.totalorder %s13, 1
      %s424 = scalar_select %p423, %s13, 1
      %s425 = smul.addr %s424, 4
      %s426 = smul.addr %s425, 4
      %s427 = scalar_lea.vmem %s2, %s426
      // Predicated region
      $region29: #{_lambda_.25} parent=27 // pred_check
        %p428 = pneg %p83
      $region30: #{_lambda_.25} parent=27 // pred_check_branch
        %430 = sbr.rel (%p428) target = $region32
      $region31: #{_lambda_.25} parent=27 // pred_region
        _
      $region32: #{_lambda_.25} parent=27 // pred_fallthru
        _
    $region28: #{_lambda_.25} parent=5 // pred_fallthru
      _
    %p431 = scmp.le.s32.totalorder 2, %s8
    // Predicated region
    $region33: #{_lambda_.25} parent=5 // pred_check
      %p432 = pneg %p431
    $region34: #{_lambda_.25} parent=5 // pred_check_branch
      %434 = sbr.rel (%p432) target = $region36
    $region35: #{_lambda_.25} parent=5 // pred_region
      %s435 = ssub.s32 %s8, 2
      // Predicated region
      $region37: #{_lambda_.25} parent=35 // pred_check
        %p436 = pneg %p89
      $region38: #{_lambda_.25} parent=35 // pred_check_branch
        %438 = sbr.rel (%p436) target = $region40
      $region39: #{_lambda_.25} parent=35 // pred_region
        %p439 = scmp.lt.s32.totalorder %s14, 1
        %s440 = scalar_select %p439, %s14, 1
        %s441 = smul.addr %s440, 4
        %s442 = smul.addr %s441, 4
        %s443 = scalar_lea.vmem %s2, %s442
      $region40: #{_lambda_.25} parent=35 // pred_fallthru
        _
    $region36: #{_lambda_.25} parent=5 // pred_fallthru
      _
  $region6: #{_lambda_.25} parent=0 // loop_footer
    %s12 = sadd.s32 1, %s8
  $region7: #{_lambda_.25} parent=0 // loop_footer_branch
    %7 = sbr.rel target = $region3
  $region8: #{_lambda_.25} parent=0 // loop_exit
    _

// kernel: _lambda_.26
$region0: #{_lambda_.26}
  #allocation0 [shape = 'u32[]', space=smem, size = 0x4, offset = 0x4, fixed_abs, tag = 'smem constant byte address 0x4 - core index']
  #allocation1 [shape = 'u32[144,128]{1,0:T(1,128)}', space=vmem, size = 0x12000, scoped, tag = 'internal scratch']
  #allocation2 [shape = 'bf16[288,64]{1,0:T(16,128)(2,1)}', space=vmem, size = 0x12000, scoped, tag = 'scratch operand']
  %s0 = inlined_call_operand.vmem [shape: bf16[2,16,256], index: 0, kind: input, shape index: {}]
  %s1 = inlined_call_operand.vmem [shape: bf16[2,16,256], index: 1, kind: input, shape index: {}]
  %s2 = inlined_call_operand.vmem [shape: bf16[1,4,288], index: 2, kind: input, shape index: {}]
  %s3 = inlined_call_operand.vmem [shape: f32[4,1], index: 3, kind: input, shape index: {}]
  %s4 = inlined_call_operand.vmem [shape: bf16[2,4,64], index: 4, kind: output, shape index: {}]
  %s5 = sld [smem:[#allocation0]]
  $region49: #{_lambda_.26} parent=0
    _
  %s7 = ssub.s32 1, %s5
  %s8 = scalar_select 0, %s7, %s5
  loop: start=0, step=1, limit=4
  $region2: #{_lambda_.26} parent=0 // loop_pre_header
    _
  $region3: #{_lambda_.26} parent=0 // loop_header
    %s10 = sphi 0, %s14
    %p11 = scmp.ge.s32.totalorder %s10, 4
    %s20 = sphi 0, %s22
    %s23 = sphi 0, %s20
    %s24 = sphi 0, %s23
    %s40 = sphi 0, %s24
    %s46 = sphi 0, %s48
    %s49 = sphi 0, %s46
    %s50 = sphi 0, %s49
    %s66 = sphi 0, %s50
    %s70 = sphi 0, %s70
    %s72 = sphi 0, %s70
    %s73 = sphi 0, %s72
    %s87 = sphi 0, %s73
    %s91 = sphi 0, %s91
    %s93 = sphi 0, %s91
    %s94 = sphi 0, %s93
    %s108 = sphi 0, %s94
    %s114 = sphi 0, %s116
    %s117 = sphi 0, %s114
    %s118 = sphi 0, %s117
    %s134 = sphi 0, %s118
  $region4: #{_lambda_.26} parent=0 // loop_header_branch
    %13 = sbr.rel (%p11) target = $region8
  $region5: #{_lambda_.26} parent=0 // loop_body
    %s15 = ssub.s32 %s10, 1
    %s16 = ssub.s32 %s10, 2
    %s17 = sadd.s32 %s10, 1
    %s18 = ssub.s32 %s10, %s17
    %p19 = scmp.eq.s32.totalorder %s18, 0
    %s21 = sadd.s32 %s20, 1
    %s22 = scalar_select %p19, %s20, %s21
    %p25 = pneg %p19
    %p26 = scmp.eq.s32.totalorder %s10, 1
    %p27 = por %p25, %p26
    %p28 = scmp.ne.s32.totalorder %s20, %s23
    %p29 = scmp.eq.s32.totalorder %s10, 0
    %p30 = por %p28, %p29
    %p31 = scmp.ne.s32.totalorder %s20, %s23
    %p32 = scmp.eq.s32.totalorder %s15, 1
    %p33 = por %p31, %p32
    %p34 = scmp.ne.s32.totalorder %s23, %s24
    %p35 = scmp.eq.s32.totalorder %s15, 0
    %p36 = por %p34, %p35
    %p37 = scmp.ne.s32.totalorder %s23, %s24
    %p38 = scmp.eq.s32.totalorder %s16, 1
    %p39 = por %p37, %p38
    %p41 = scmp.ne.s32.totalorder %s24, %s40
    %p42 = scmp.eq.s32.totalorder %s16, 0
    %p43 = por %p41, %p42
    %s44 = ssub.s32 %s10, %s17
    %p45 = scmp.eq.s32.totalorder %s44, 0
    %s47 = sadd.s32 %s46, 1
    %s48 = scalar_select %p45, %s46, %s47
    %p51 = pneg %p45
    %p52 = scmp.eq.s32.totalorder %s10, 1
    %p53 = por %p51, %p52
    %p54 = scmp.ne.s32.totalorder %s46, %s49
    %p55 = scmp.eq.s32.totalorder %s10, 0
    %p56 = por %p54, %p55
    %p57 = scmp.ne.s32.totalorder %s46, %s49
    %p58 = scmp.eq.s32.totalorder %s15, 1
    %p59 = por %p57, %p58
    %p60 = scmp.ne.s32.totalorder %s49, %s50
    %p61 = scmp.eq.s32.totalorder %s15, 0
    %p62 = por %p60, %p61
    %p63 = scmp.ne.s32.totalorder %s49, %s50
    %p64 = scmp.eq.s32.totalorder %s16, 1
    %p65 = por %p63, %p64
    %p67 = scmp.ne.s32.totalorder %s50, %s66
    %p68 = scmp.eq.s32.totalorder %s16, 0
    %p69 = por %p67, %p68
    %s71 = sadd.s32 %s70, 1
    %p74 = scmp.eq.s32.totalorder %s10, 1
    %p75 = scmp.ne.s32.totalorder %s70, %s72
    %p76 = scmp.eq.s32.totalorder %s10, 0
    %p77 = por %p75, %p76
    %p78 = scmp.ne.s32.totalorder %s70, %s72
    %p79 = scmp.eq.s32.totalorder %s15, 1
    %p80 = por %p78, %p79
    %p81 = scmp.ne.s32.totalorder %s72, %s73
    %p82 = scmp.eq.s32.totalorder %s15, 0
    %p83 = por %p81, %p82
    %p84 = scmp.ne.s32.totalorder %s72, %s73
    %p85 = scmp.eq.s32.totalorder %s16, 1
    %p86 = por %p84, %p85
    %p88 = scmp.ne.s32.totalorder %s73, %s87
    %p89 = scmp.eq.s32.totalorder %s16, 0
    %p90 = por %p88, %p89
    %s92 = sadd.s32 %s91, 1
    %p95 = scmp.eq.s32.totalorder %s10, 1
    %p96 = scmp.ne.s32.totalorder %s91, %s93
    %p97 = scmp.eq.s32.totalorder %s10, 0
    %p98 = por %p96, %p97
    %p99 = scmp.ne.s32.totalorder %s91, %s93
    %p100 = scmp.eq.s32.totalorder %s15, 1
    %p101 = por %p99, %p100
    %p102 = scmp.ne.s32.totalorder %s93, %s94
    %p103 = scmp.eq.s32.totalorder %s15, 0
    %p104 = por %p102, %p103
    %p105 = scmp.ne.s32.totalorder %s93, %s94
    %p106 = scmp.eq.s32.totalorder %s16, 1
    %p107 = por %p105, %p106
    %p109 = scmp.ne.s32.totalorder %s94, %s108
    %p110 = scmp.eq.s32.totalorder %s16, 0
    %p111 = por %p109, %p110
    %s112 = ssub.s32 %s10, %s17
    %p113 = scmp.eq.s32.totalorder %s112, 0
    %s115 = sadd.s32 %s114, 1
    %s116 = scalar_select %p113, %s114, %s115
    %p119 = pneg %p113
    %p120 = scmp.eq.s32.totalorder %s10, 1
    %p121 = por %p119, %p120
    %p122 = scmp.ne.s32.totalorder %s114, %s117
    %p123 = scmp.eq.s32.totalorder %s10, 0
    %p124 = por %p122, %p123
    %p125 = scmp.ne.s32.totalorder %s114, %s117
    %p126 = scmp.eq.s32.totalorder %s15, 1
    %p127 = por %p125, %p126
    %p128 = scmp.ne.s32.totalorder %s117, %s118
    %p129 = scmp.eq.s32.totalorder %s15, 0
    %p130 = por %p128, %p129
    %p131 = scmp.ne.s32.totalorder %s117, %s118
    %p132 = scmp.eq.s32.totalorder %s16, 1
    %p133 = por %p131, %p132
    %p135 = scmp.ne.s32.totalorder %s118, %s134
    %p136 = scmp.eq.s32.totalorder %s16, 0
    %p137 = por %p135, %p136
    %p138 = scmp.le.s32.totalorder 1, %s10
    %p139 = scmp.lt.s32.totalorder %s10, 3
    %p140 = pnand %p138, %p139
    %p141 = pneg %p140
    // Predicated region
    $region9: #{_lambda_.26} parent=5 // pred_check
      _
    $region10: #{_lambda_.26} parent=5 // pred_check_branch
      %143 = sbr.rel (%p140) target = $region12
    $region11: #{_lambda_.26} parent=5 // pred_region
      %s144 = ssub.s32 %s10, 1
      // Predicated region
      $region13: #{_lambda_.26} parent=11 // pred_check
        %p145 = pneg %p83
      $region14: #{_lambda_.26} parent=11 // pred_check_branch
        %147 = sbr.rel (%p145) target = $region16
      $region15: #{_lambda_.26} parent=11 // pred_region
        _
      $region16: #{_lambda_.26} parent=11 // pred_fallthru
        _
      // Predicated region
      $region17: #{_lambda_.26} parent=11 // pred_check
        %p148 = pneg %p104
      $region18: #{_lambda_.26} parent=11 // pred_check_branch
        %150 = sbr.rel (%p148) target = $region20
      $region19: #{_lambda_.26} parent=11 // pred_region
        _
      $region20: #{_lambda_.26} parent=11 // pred_fallthru
        _
    $region12: #{_lambda_.26} parent=5 // pred_fallthru
      _
    %p151 = scmp.lt.s32.totalorder %s10, 2
    // Predicated region
    $region21: #{_lambda_.26} parent=5 // pred_check
      %p152 = pneg %p151
    $region22: #{_lambda_.26} parent=5 // pred_check_branch
      %154 = sbr.rel (%p152) target = $region24
    $region23: #{_lambda_.26} parent=5 // pred_region
      // Predicated region
      $region25: #{_lambda_.26} parent=23 // pred_check
        %p155 = pneg %p30
      $region26: #{_lambda_.26} parent=23 // pred_check_branch
        %157 = sbr.rel (%p155) target = $region28
      $region27: #{_lambda_.26} parent=23 // pred_region
        %p158 = scmp.lt.s32.totalorder %s10, 1
        %s159 = scalar_select %p158, %s10, 1
        %s160 = smul.addr %s159, 4
        %s161 = smul.addr %s160, 4
        %s162 = scalar_lea.vmem %s0, %s161
      $region28: #{_lambda_.26} parent=23 // pred_fallthru
        _
      // Predicated region
      $region29: #{_lambda_.26} parent=23 // pred_check
        %p163 = pneg %p56
      $region30: #{_lambda_.26} parent=23 // pred_check_branch
        %165 = sbr.rel (%p163) target = $region32
      $region31: #{_lambda_.26} parent=23 // pred_region
        %p166 = scmp.lt.s32.totalorder %s10, 1
        %s167 = scalar_select %p166, %s10, 1
        %s168 = smul.addr %s167, 4
        %s169 = smul.addr %s168, 4
        %s170 = scalar_lea.vmem %s1, %s169
      $region32: #{_lambda_.26} parent=23 // pred_fallthru
        _
    $region24: #{_lambda_.26} parent=5 // pred_fallthru
      _
    %p171 = scmp.le.s32.totalorder 1, %s10
    %p172 = scmp.lt.s32.totalorder %s10, 3
    %p173 = pnand %p171, %p172
    %p174 = pneg %p173
    // Predicated region
    $region33: #{_lambda_.26} parent=5 // pred_check
      _
    $region34: #{_lambda_.26} parent=5 // pred_check_branch
      %176 = sbr.rel (%p173) target = $region36
    $region35: #{_lambda_.26} parent=5 // pred_region
      %s177 = ssub.s32 %s10, 1
      %p178 = scmp.lt.s32.totalorder %s15, 1
      %s179 = scalar_select %p178, %s15, 1
      %s180 = smul.addr %s179, 4
      %s181 = smul.addr %s180, 4
      %s182 = scalar_lea.vmem %s0, %s181
      %p183 = pneg %p36
      %p184 = pneg %p33
      %p185 = scmp.lt.s32.totalorder %s15, 1
      %s186 = scalar_select %p185, %s15, 1
      %s187 = smul.addr %s186, 4
      %s188 = smul.addr %s187, 4
      %s189 = scalar_lea.vmem %s1, %s188
      %p190 = pneg %p62
      %p191 = pneg %p59
      %p192 = pneg %p83
      %p193 = pneg %p80
      %p194 = pneg %p104
      %p195 = pneg %p101
      %p196 = pneg %p130
      %p197 = pneg %p127
      %p198 = scmp.lt.s32.totalorder %s15, 1
      %s199 = scalar_select %p198, %s15, 1
      %s200 = smul.addr %s199, 2
      %s201 = scalar_lea.vmem %s4, %s200
      %p202 = scmp.lt.s32.totalorder %s15, 1
      %s203 = scalar_select %p202, %s15, 1
      %s204 = smul.addr %s203, 4
      %s205 = smul.addr %s204, 4
      %s206 = scalar_lea.vmem %s0, %s205
      %p207 = scmp.lt.s32.totalorder %s15, 1
      %s208 = scalar_select %p207, %s15, 1
      %s209 = smul.addr %s208, 4
      %s210 = smul.addr %s209, 4
      %s211 = scalar_lea.vmem %s1, %s210
      %p212 = scmp.lt.s32.totalorder %s15, 1
      %s213 = scalar_select %p212, %s15, 1
      %s214 = smul.addr %s213, 2
      %s215 = scalar_lea.vmem %s4, %s214
      %v217 = vlaneseq
      %v218 = vand.u32 %v217, 127
      %vm219 = vcmp.lt.s32.totalorder %v218, 0
      %v220 = vsub.s32 0, %v218
      %v221 = vsel %vm219, %v220, %v218
      %v222 = vshrl.u32 %v221, 3
      %v223 = vand.u32 %v221, 7
      %v224 = vsub.s32 0, %v223
      %v225 = vsel %vm219, %v224, %v223
      %vm226 = vcmp.ne.s32.totalorder %v225, 0
      %vm227 = vcmp.lt.s32.totalorder %v225, 0
      %vm228 = vmand %vm227, %vm226
      %v229 = vadd.s32 %v225, 8
      %v230 = vsel %vm228, %v229, %v225
      %vm231 = vcmp.ge.s32.totalorder %v230, 1
      %v232 = vsel %vm231, 1, 0
      %v233 = vcvt.s32.f32 %v232
      %v234 = vpack.c.bf16 %v233, %v233
      %vm235 = vcmp.le.s32.totalorder %v230, 6
      %v236 = vsel %vm235, 1, 0
      %v237 = vcvt.s32.f32 %v236
      %v238 = vpack.c.bf16 %v237, %v237
      %v239 = vld [vmem:[%s206] sm:$0xff]
      %v240 = vld [vmem:[%s206 + $0x8] sm:$0xff]
      %v242 = vunpack.c.l.b16 %v234
      %v243 = vpack.c.b16 %v242, %v242
      %244 = vrot.lane.b32.xlu0 %v243, 119
      %v245 = vpop.permute.xlu0 %244
      %v246 = vrot.slane %v245, 4
      %vm247 = vcmask 973824
      %v248 = vsel %vm247, %v246, %v245
      %v250 = vmul.bf16 %v239, %v248
      %v251 = vmul.bf16 %v240, %v248
      %v254 = vunpack.c.l.b16 %v250
      %v255 = vunpack.c.h.b16 %v250
      %v256 = vunpack.c.l.b16 %v251
      %v257 = vunpack.c.h.b16 %v251
      %v258 = vpack.c.b16 %v256, %v254
      %v259 = vpack.c.b16 %v257, %v255
      %260 = vrot.lane.b32.xlu0 %v258, 9
      %v261 = vpop.permute.xlu0 %260
      %262 = vrot.lane.b32.xlu0 %v259, 9
      %v263 = vpop.permute.xlu0 %262
      %vm264 = vcmask 72704
      %v265 = vsel %vm264, %v261, %v263
      %vm267 = vcmask 523264
      %268 = vst.msk [vmem:[#allocation2] sm:$0xff] %vm267, %v265
      %v269 = vld [vmem:[%s206] sm:$0xff]
      %v270 = vld [vmem:[%s206 + $0x8] sm:$0xff]
      %v273 = vunpack.c.l.b16 %v269
      %v274 = vunpack.c.h.b16 %v269
      %v275 = vunpack.c.l.b16 %v270
      %v276 = vunpack.c.h.b16 %v270
      %v277 = vpack.c.b16 %v275, %v273
      %v278 = vpack.c.b16 %v276, %v274
      %279 = vrot.lane.b32.xlu0 %v277, 8
      %v280 = vpop.permute.xlu0 %279
      %281 = vrot.lane.b32.xlu0 %v278, 8
      %v282 = vpop.permute.xlu0 %281
      %vm283 = vcmask 64512
      %v284 = vsel %vm283, %v280, %v282
      %286 = vst.msk [vmem:[#allocation2 + $0x8] sm:$0xff] %vm267, %v284
      %v287 = vld [vmem:[%s206] sm:$0xff]
      %v288 = vld [vmem:[%s206 + $0x8] sm:$0xff]
      %v290 = vunpack.c.l.b16 %v238
      %v291 = vpack.c.b16 %v290, %v290
      %292 = vrot.lane.b32.xlu0 %v291, 121
      %v293 = vpop.permute.xlu0 %292
      %v294 = vrot.slane %v293, 4
      %vm295 = vcmask 990208
      %v296 = vsel %vm295, %v294, %v293
      %v298 = vmul.bf16 %v287, %v296
      %v299 = vmul.bf16 %v288, %v296
      %v302 = vunpack.c.l.b16 %v298
      %v303 = vunpack.c.h.b16 %v298
      %v304 = vunpack.c.l.b16 %v299
      %v305 = vunpack.c.h.b16 %v299
      %v306 = vpack.c.b16 %v304, %v302
      %v307 = vpack.c.b16 %v305, %v303
      %308 = vrot.lane.b32.xlu0 %v306, 7
      %v309 = vpop.permute.xlu0 %308
      %310 = vrot.lane.b32.xlu0 %v307, 7
      %v311 = vpop.permute.xlu0 %310
      %vm312 = vcmask 56320
      %v313 = vsel %vm312, %v309, %v311
      %315 = vst.msk [vmem:[#allocation2 + $0x10] sm:$0xff] %vm267, %v313
      %v316 = vld [vmem:[%s206] sm:$0xff]
      %v317 = vld [vmem:[%s206 + $0x8] sm:$0xff]
      %318 = vrot.lane.b32.xlu0 %v243, 127
      %v319 = vpop.permute.xlu0 %318
      %v320 = vrot.slane %v319, 4
      %vm321 = vcmask 1039360
      %v322 = vsel %vm321, %v320, %v319
      %v324 = vmul.bf16 %v316, %v322
      %v325 = vmul.bf16 %v317, %v322
      %v328 = vunpack.c.l.b16 %v324
      %v329 = vunpack.c.h.b16 %v324
      %v330 = vunpack.c.l.b16 %v325
      %v331 = vunpack.c.h.b16 %v325
      %v332 = vpack.c.b16 %v330, %v328
      %v333 = vpack.c.b16 %v331, %v329
      %334 = vrot.lane.b32.xlu0 %v332, 1
      %v335 = vpop.permute.xlu0 %334
      %336 = vrot.lane.b32.xlu0 %v333, 1
      %v337 = vpop.permute.xlu0 %336
      %vm338 = vcmask 7168
      %v339 = vsel %vm338, %v335, %v337
      %341 = vst.msk [vmem:[#allocation2 + $0x18] sm:$0xff] %vm267, %v339
      %v342 = vld [vmem:[%s206 + $0x4] sm:$0xf]
      %v343 = vld [vmem:[%s206 + $0xc] sm:$0xf]
      %v346 = vunpack.c.l.b16 %v342
      %v347 = vunpack.c.l.b16 %v343
      %v348 = vpack.c.b16 %v347, %v346
      %350 = vst.msk [vmem:[#allocation2 + $0x20] sm:$0xff] %vm267, %v348
      %v351 = vld [vmem:[%s206 + $0x4] sm:$0xf]
      %v352 = vld [vmem:[%s206 + $0xc] sm:$0xf]
      %353 = vrot.lane.b32.xlu0 %v291, 1
      %v354 = vpop.permute.xlu0 %353
      %v356 = vmul.bf16 %v351, %v354
      %v357 = vmul.bf16 %v352, %v354
      %v360 = vunpack.c.l.b16 %v356
      %v361 = vunpack.c.l.b16 %v357
      %v362 = vpack.c.b16 %v361, %v360
      %363 = vrot.lane.b32.xlu0 %v362, 127
      %v364 = vpop.permute.xlu0 %363
      %366 = vst.msk [vmem:[#allocation2 + $0x28] sm:$0xff] %vm267, %v364
      %v367 = vld [vmem:[%s206 + $0x4] sm:$0xf]
      %v368 = vld [vmem:[%s206 + $0xc] sm:$0xf]
      %369 = vrot.lane.b32.xlu0 %v243, 7
      %v370 = vpop.permute.xlu0 %369
      %v372 = vmul.bf16 %v367, %v370
      %v373 = vmul.bf16 %v368, %v370
      %v376 = vunpack.c.l.b16 %v372
      %v377 = vunpack.c.l.b16 %v373
      %v378 = vpack.c.b16 %v377, %v376
      %379 = vrot.lane.b32.xlu0 %v378, 121
      %v380 = vpop.permute.xlu0 %379
      %382 = vst.msk [vmem:[#allocation2 + $0x30] sm:$0xff] %vm267, %v380
      %v383 = vld [vmem:[%s206 + $0x4] sm:$0xf]
      %v384 = vld [vmem:[%s206 + $0xc] sm:$0xf]
      %v387 = vunpack.c.l.b16 %v383
      %v388 = vunpack.c.l.b16 %v384
      %v389 = vpack.c.b16 %v388, %v387
      %390 = vrot.lane.b32.xlu0 %v389, 120
      %v391 = vpop.permute.xlu0 %390
      %393 = vst.msk [vmem:[#allocation2 + $0x38] sm:$0xff] %vm267, %v391
      %v394 = vld [vmem:[%s206 + $0x4] sm:$0xf]
      %v395 = vld [vmem:[%s206 + $0xc] sm:$0xf]
      %396 = vrot.lane.b32.xlu0 %v291, 9
      %v397 = vpop.permute.xlu0 %396
      %v399 = vmul.bf16 %v394, %v397
      %v400 = vmul.bf16 %v395, %v397
      %v403 = vunpack.c.l.b16 %v399
      %v404 = vunpack.c.l.b16 %v400
      %v405 = vpack.c.b16 %v404, %v403
      %406 = vrot.lane.b32.xlu0 %v405, 119
      %v407 = vpop.permute.xlu0 %406
      %409 = vst.msk [vmem:[#allocation2 + $0x40] sm:$0xff] %vm267, %v407
      %v410 = vld [vmem:[%s211] sm:$0xff]
      %v411 = vld [vmem:[%s211 + $0x8] sm:$0xff]
      %v412 = vmul.bf16 %v410, %v248
      %v413 = vmul.bf16 %v411, %v248
      %v416 = vunpack.c.l.b16 %v412
      %v417 = vunpack.c.h.b16 %v412
      %v418 = vunpack.c.l.b16 %v413
      %v419 = vunpack.c.h.b16 %v413
      %v420 = vpack.c.b16 %v418, %v416
      %v421 = vpack.c.b16 %v419, %v417
      %422 = vrot.lane.b32.xlu0 %v420, 9
      %v423 = vpop.permute.xlu0 %422
      %424 = vrot.lane.b32.xlu0 %v421, 9
      %v425 = vpop.permute.xlu0 %424
      %v426 = vsel %vm264, %v423, %v425
      %428 = vst.msk [vmem:[#allocation2 + $0x48] sm:$0xff] %vm267, %v426
      %v429 = vld [vmem:[%s211] sm:$0xff]
      %v430 = vld [vmem:[%s211 + $0x8] sm:$0xff]
      %v433 = vunpack.c.l.b16 %v429
      %v434 = vunpack.c.h.b16 %v429
      %v435 = vunpack.c.l.b16 %v430
      %v436 = vunpack.c.h.b16 %v430
      %v437 = vpack.c.b16 %v435, %v433
      %v438 = vpack.c.b16 %v436, %v434
      %439 = vrot.lane.b32.xlu0 %v437, 8
      %v440 = vpop.permute.xlu0 %439
      %441 = vrot.lane.b32.xlu0 %v438, 8
      %v442 = vpop.permute.xlu0 %441
      %v443 = vsel %vm283, %v440, %v442
      %445 = vst.msk [vmem:[#allocation2 + $0x50] sm:$0xff] %vm267, %v443
      %v446 = vld [vmem:[%s211] sm:$0xff]
      %v447 = vld [vmem:[%s211 + $0x8] sm:$0xff]
      %v448 = vmul.bf16 %v446, %v296
      %v449 = vmul.bf16 %v447, %v296
      %v452 = vunpack.c.l.b16 %v448
      %v453 = vunpack.c.h.b16 %v448
      %v454 = vunpack.c.l.b16 %v449
      %v455 = vunpack.c.h.b16 %v449
      %v456 = vpack.c.b16 %v454, %v452
      %v457 = vpack.c.b16 %v455, %v453
      %458 = vrot.lane.b32.xlu0 %v456, 7
      %v459 = vpop.permute.xlu0 %458
      %460 = vrot.lane.b32.xlu0 %v457, 7
      %v461 = vpop.permute.xlu0 %460
      %v462 = vsel %vm312, %v459, %v461
      %464 = vst.msk [vmem:[#allocation2 + $0x58] sm:$0xff] %vm267, %v462
      %v465 = vld [vmem:[%s211] sm:$0xff]
      %v466 = vld [vmem:[%s211 + $0x8] sm:$0xff]
      %v467 = vmul.bf16 %v465, %v322
      %v468 = vmul.bf16 %v466, %v322
      %v471 = vunpack.c.l.b16 %v467
      %v472 = vunpack.c.h.b16 %v467
      %v473 = vunpack.c.l.b16 %v468
      %v474 = vunpack.c.h.b16 %v468
      %v475 = vpack.c.b16 %v473, %v471
      %v476 = vpack.c.b16 %v474, %v472
      %477 = vrot.lane.b32.xlu0 %v475, 1
      %v478 = vpop.permute.xlu0 %477
      %479 = vrot.lane.b32.xlu0 %v476, 1
      %v480 = vpop.permute.xlu0 %479
      %v481 = vsel %vm338, %v478, %v480
      %483 = vst.msk [vmem:[#allocation2 + $0x60] sm:$0xff] %vm267, %v481
      %v484 = vld [vmem:[%s211 + $0x4] sm:$0xf]
      %v485 = vld [vmem:[%s211 + $0xc] sm:$0xf]
      %v488 = vunpack.c.l.b16 %v484
      %v489 = vunpack.c.l.b16 %v485
      %v490 = vpack.c.b16 %v489, %v488
      %492 = vst.msk [vmem:[#allocation2 + $0x68] sm:$0xff] %vm267, %v490
      %v493 = vld [vmem:[%s211 + $0x4] sm:$0xf]
      %v494 = vld [vmem:[%s211 + $0xc] sm:$0xf]
      %v495 = vmul.bf16 %v493, %v354
      %v496 = vmul.bf16 %v494, %v354
      %v499 = vunpack.c.l.b16 %v495
      %v500 = vunpack.c.l.b16 %v496
      %v501 = vpack.c.b16 %v500, %v499
      %502 = vrot.lane.b32.xlu0 %v501, 127
      %v503 = vpop.permute.xlu0 %502
      %505 = vst.msk [vmem:[#allocation2 + $0x70] sm:$0xff] %vm267, %v503
      %v506 = vld [vmem:[%s211 + $0x4] sm:$0xf]
      %v507 = vld [vmem:[%s211 + $0xc] sm:$0xf]
      %v508 = vmul.bf16 %v506, %v370
      %v509 = vmul.bf16 %v507, %v370
      %v512 = vunpack.c.l.b16 %v508
      %v513 = vunpack.c.l.b16 %v509
      %v514 = vpack.c.b16 %v513, %v512
      %515 = vrot.lane.b32.xlu0 %v514, 121
      %v516 = vpop.permute.xlu0 %515
      %518 = vst.msk [vmem:[#allocation2 + $0x78] sm:$0xff] %vm267, %v516
      %v519 = vld [vmem:[%s211 + $0x4] sm:$0xf]
      %v520 = vld [vmem:[%s211 + $0xc] sm:$0xf]
      %v523 = vunpack.c.l.b16 %v519
      %v524 = vunpack.c.l.b16 %v520
      %v525 = vpack.c.b16 %v524, %v523
      %526 = vrot.lane.b32.xlu0 %v525, 120
      %v527 = vpop.permute.xlu0 %526
      %529 = vst.msk [vmem:[#allocation2 + $0x80] sm:$0xff] %vm267, %v527
      %v530 = vld [vmem:[%s211 + $0x4] sm:$0xf]
      %v531 = vld [vmem:[%s211 + $0xc] sm:$0xf]
      %v532 = vmul.bf16 %v530, %v397
      %v533 = vmul.bf16 %v531, %v397
      %v536 = vunpack.c.l.b16 %v532
      %v537 = vunpack.c.l.b16 %v533
      %v538 = vpack.c.b16 %v537, %v536
      %539 = vrot.lane.b32.xlu0 %v538, 119
      %v540 = vpop.permute.xlu0 %539
      %542 = vst.msk [vmem:[#allocation2 + $0x88] sm:$0xff] %vm267, %v540
      %v543 = vld [vmem:[%s2] sm:$0x3f]
      %v544 = vld [vmem:[#allocation2] sm:$0xff]
      %v545 = vld [vmem:[#allocation2 + $0x8] sm:$0xff]
      %v546 = vld [vmem:[#allocation2 + $0x10] sm:$0xff]
      %v547 = vld [vmem:[#allocation2 + $0x18] sm:$0xff]
      %v548 = vld [vmem:[#allocation2 + $0x20] sm:$0xff]
      %v549 = vld [vmem:[#allocation2 + $0x28] sm:$0xff]
      %v550 = vld [vmem:[#allocation2 + $0x30] sm:$0xff]
      %v551 = vld [vmem:[#allocation2 + $0x38] sm:$0xff]
      %v552 = vld [vmem:[#allocation2 + $0x40] sm:$0xff]
      %v553 = vld [vmem:[#allocation2 + $0x48] sm:$0xff]
      %v554 = vld [vmem:[#allocation2 + $0x50] sm:$0xff]
      %v555 = vld [vmem:[#allocation2 + $0x58] sm:$0xff]
      %v556 = vld [vmem:[#allocation2 + $0x60] sm:$0xff]
      %v557 = vld [vmem:[#allocation2 + $0x68] sm:$0xff]
      %v558 = vld [vmem:[#allocation2 + $0x70] sm:$0xff]
      %v559 = vld [vmem:[#allocation2 + $0x78] sm:$0xff]
      %v560 = vld [vmem:[#allocation2 + $0x80] sm:$0xff]
      %v561 = vld [vmem:[#allocation2 + $0x88] sm:$0xff]
      %v562 = vld [vmem:[%s3] sm:$0xf]
      %564 = vset.pattern.permute.xlu0 0
      %565 = vperm.xlu0 %564, %v562
      %v566 = vpop.permute.xlu0 %565
      %v569 = vcombine.high %v543, %v543
      %v571 = vunpack.c.l.s4 1983009808
      %v572 = vunpack.c.0.s8 %v571
      %v573 = vlaneseq
      %v574 = vshrl.u32 %v573, 7
      %v575 = vsub.s32 %v572, %v574
      %v576 = vrot.slane %v543, %v575
      %v578 = vunpack.c.l.s4 1983009808
      %v579 = vunpack.c.0.s8 %v578
      %v580 = vlaneseq
      %v581 = vshrl.u32 %v580, 7
      %v582 = vsub.s32 %v579, %v581
      %v583 = vrot.slane %v569, %v582
      %v584 = vcombine.high %v576, %v576
      %vm587 = vcmask 261120
      %v589 = vsel %vm587, %v583, 0
      %591 = vmatprep.subr.bf16.mxu0 0
      %592 = vmatpush1.bf16.msra.mxu0 %v544
      %593 = vmatprep.subr.bf16.mxu0 0
      %594 = vmatpush1.bf16.msra.mxu0 %v545
      %595 = vmatprep.subr.bf16.mxu0 0
      %596 = vmatpush1.bf16.msra.mxu0 %v546
      %597 = vmatprep.subr.bf16.mxu0 0
      %598 = vmatpush1.bf16.msra.mxu0 %v547
      %599 = vmatprep.subr.bf16.mxu0 0
      %600 = vmatpush1.bf16.msra.mxu0 %v548
      %601 = vmatprep.subr.bf16.mxu0 0
      %602 = vmatpush1.bf16.msra.mxu0 %v549
      %603 = vmatprep.subr.bf16.mxu0 0
      %604 = vmatpush1.bf16.msra.mxu0 %v550
      %605 = vmatprep.subr.bf16.mxu0 0
      %606 = vmatpush1.bf16.msra.mxu0 %v551
      %607 = vmatprep.subr.bf16.mxu0 0
      %608 = vmatpush1.bf16.msra.mxu0 %v552
      %609 = vmatprep.subr.bf16.mxu0 0
      %610 = vmatpush1.bf16.msra.mxu0 %v553
      %611 = vmatprep.subr.bf16.mxu0 0
      %612 = vmatpush1.bf16.msra.mxu0 %v554
      %613 = vmatprep.subr.bf16.mxu0 0
      %614 = vmatpush1.bf16.msra.mxu0 %v555
      %615 = vmatprep.subr.bf16.mxu0 0
      %616 = vmatpush1.bf16.msra.mxu0 %v556
      %617 = vmatprep.subr.bf16.mxu0 0
      %618 = vmatpush1.bf16.msra.mxu0 %v557
      %619 = vmatprep.subr.bf16.mxu0 0
      %620 = vmatpush1.bf16.msra.mxu0 %v558
      %621 = vmatprep.subr.bf16.mxu0 0
      %622 = vmatpush1.bf16.msra.mxu0 %v559
      %623 = vmatprep.mubr.bf16.mxu0 %v584
      %624 = vmatmul.mubr.bf16.gmra.mrb[0].mxu0 %v576
      %v625 = vpop.f32.mrb[0].mxu0
      %v626 = vadd.f32 %v566, %v625
      %v627 = vpop.f32.mrb[0].mxu0
      %v628 = vpop.f32.mrb[0].mxu0
      %v629 = vpop.f32.mrb[0].mxu0
      %630 = vdwg.mxu0
      %631 = vmatprep.subr.bf16.mxu0 0
      %632 = vmatpush1.bf16.msra.mxu0 %v560
      %633 = vmatprep.subr.bf16.mxu0 0
      %634 = vmatpush1.bf16.msra.mxu0 %v561
      %635 = vmatprep.subr.bf16.mxu0 0
      %636 = vmatpush1.bf16.msra.mxu0 0
      %637 = vmatprep.subr.bf16.mxu0 0
      %638 = vmatpush1.bf16.msra.mxu0 0
      %639 = vmatprep.subr.bf16.mxu0 0
      %640 = vmatpush1.bf16.msra.mxu0 0
      %641 = vmatprep.subr.bf16.mxu0 0
      %642 = vmatpush1.bf16.msra.mxu0 0
      %643 = vmatprep.subr.bf16.mxu0 0
      %644 = vmatpush1.bf16.msra.mxu0 0
      %645 = vmatprep.subr.bf16.mxu0 0
      %646 = vmatpush1.bf16.msra.mxu0 0
      %647 = vmatprep.subr.bf16.mxu0 0
      %648 = vmatpush1.bf16.msra.mxu0 0
      %649 = vmatprep.subr.bf16.mxu0 0
      %650 = vmatpush1.bf16.msra.mxu0 0
      %651 = vmatprep.subr.bf16.mxu0 0
      %652 = vmatpush1.bf16.msra.mxu0 0
      %653 = vmatprep.subr.bf16.mxu0 0
      %654 = vmatpush1.bf16.msra.mxu0 0
      %655 = vmatprep.subr.bf16.mxu0 0
      %656 = vmatpush1.bf16.msra.mxu0 0
      %657 = vmatprep.subr.bf16.mxu0 0
      %658 = vmatpush1.bf16.msra.mxu0 0
      %659 = vmatprep.subr.bf16.mxu0 0
      %660 = vmatpush1.bf16.msra.mxu0 0
      %661 = vmatprep.subr.bf16.mxu0 0
      %662 = vmatpush1.bf16.msra.mxu0 0
      %663 = vmatprep.mubr.bf16.mxu0 0
      %664 = vmatmul.mubr.bf16.gmra.mrb[0].mxu0 %v589
      %v665 = vpop.f32.mrb[0].mxu0
      %v666 = vadd.f32 %v626, %v665
      %v667 = vpop.f32.mrb[0].mxu0
      %v668 = vpop.f32.mrb[0].mxu0
      %v669 = vpop.f32.mrb[0].mxu0
      %670 = vdwg.mxu0
      %vm671 = vcmask 519168
      %v672 = vsel %vm671, %v666, 0.0
      %673 = vadd.xlane.f32.xlu0 %v672
      %v674 = vpop.xlane.xlu0 %673
      %v675 = vrcp.pop 64.0
      %v676 = vmul.f32 %v674, %v675
      %v677 = vsub.f32 %v666, %v676
      %v678 = vmul.f32 %v677, %v677
      %v679 = vsel %vm671, %v678, 0.0
      %680 = vadd.xlane.f32.xlu0 %v679
      %v681 = vpop.xlane.xlu0 %680
      %v682 = vmul.f32 %v681, %v675
      %v683 = vadd.f32 %v682, 1e-05
      %v684 = vrsqrt.pop %v683
      %v685 = vmul.f32 %v677, %v684
      %v686 = vmax.f32 %v685, 0.0
      %v687 = vpack.c.bf16 %v686, %v686
      %vm688 = vcmask 517120
      %689 = vst.msk [vmem:[%s215] sm:$0x3] %vm688, %v687
      %p690 = scmp.lt.s32.totalorder %s15, 1
      %s691 = scalar_select %p690, %s15, 1
      %s692 = smul.addr %s691, 2
      %s693 = scalar_lea.vmem %s4, %s692
      // Predicated region
      $region37: #{_lambda_.26} parent=35 // pred_check
        %p694 = pneg %p127
      $region38: #{_lambda_.26} parent=35 // pred_check_branch
        %696 = sbr.rel (%p694) target = $region40
      $region39: #{_lambda_.26} parent=35 // pred_region
        _
      $region40: #{_lambda_.26} parent=35 // pred_fallthru
        _
    $region36: #{_lambda_.26} parent=5 // pred_fallthru
      _
    %p697 = scmp.le.s32.totalorder 2, %s10
    // Predicated region
    $region41: #{_lambda_.26} parent=5 // pred_check
      %p698 = pneg %p697
    $region42: #{_lambda_.26} parent=5 // pred_check_branch
      %700 = sbr.rel (%p698) target = $region44
    $region43: #{_lambda_.26} parent=5 // pred_region
      %s701 = ssub.s32 %s10, 2
      // Predicated region
      $region45: #{_lambda_.26} parent=43 // pred_check
        %p702 = pneg %p133
      $region46: #{_lambda_.26} parent=43 // pred_check_branch
        %704 = sbr.rel (%p702) target = $region48
      $region47: #{_lambda_.26} parent=43 // pred_region
        %p705 = scmp.lt.s32.totalorder %s16, 1
        %s706 = scalar_select %p705, %s16, 1
        %s707 = smul.addr %s706, 2
        %s708 = scalar_lea.vmem %s4, %s707
      $region48: #{_lambda_.26} parent=43 // pred_fallthru
        _
    $region44: #{_lambda_.26} parent=5 // pred_fallthru
      _
  $region6: #{_lambda_.26} parent=0 // loop_footer
    %s14 = sadd.s32 1, %s10
  $region7: #{_lambda_.26} parent=0 // loop_footer_branch
    %9 = sbr.rel target = $region3
  $region8: #{_lambda_.26} parent=0 // loop_exit
    _

// kernel: _lambda_.27
$region0: #{_lambda_.27}
  #allocation0 [shape = 'u32[]', space=smem, size = 0x4, offset = 0x4, fixed_abs, tag = 'smem constant byte address 0x4 - core index']
  #allocation1 [shape = 'u32[144,128]{1,0:T(1,128)}', space=vmem, size = 0x12000, scoped, tag = 'internal scratch']
  %s0 = inlined_call_operand.vmem [shape: f32[2,32], index: 0, kind: input, shape index: {}]
  %s1 = inlined_call_operand.vmem [shape: f32[32,8], index: 1, kind: input, shape index: {}]
  %s2 = inlined_call_operand.vmem [shape: f32[1,8], index: 2, kind: input, shape index: {}]
  %s3 = inlined_call_operand.vmem [shape: f32[8,8], index: 3, kind: input, shape index: {}]
  %s4 = inlined_call_operand.vmem [shape: f32[1,8], index: 4, kind: input, shape index: {}]
  %s5 = inlined_call_operand.vmem [shape: f32[8,144], index: 5, kind: input, shape index: {}]
  %s6 = inlined_call_operand.vmem [shape: f32[1,144], index: 6, kind: input, shape index: {}]
  %s7 = inlined_call_operand.vmem [shape: f32[2,144], index: 7, kind: output, shape index: {}]
  %s8 = sld [smem:[#allocation0]]
  $region38: #{_lambda_.27} parent=0
    _
  %s10 = ssub.s32 1, %s8
  %s11 = scalar_select 0, %s10, %s8
  // Predicated region
  $region2: #{_lambda_.27} parent=0 // pred_check
    _
  $region3: #{_lambda_.27} parent=0 // pred_check_branch
    %13 = sbr.rel (0) target = $region5
  $region4: #{_lambda_.27} parent=0 // pred_region
    _
  $region5: #{_lambda_.27} parent=0 // pred_fallthru
    _
  // Predicated region
  $region6: #{_lambda_.27} parent=0 // pred_check
    _
  $region7: #{_lambda_.27} parent=0 // pred_check_branch
    %15 = sbr.rel (0) target = $region9
  $region8: #{_lambda_.27} parent=0 // pred_region
    _
  $region9: #{_lambda_.27} parent=0 // pred_fallthru
    _
  // Predicated region
  $region10: #{_lambda_.27} parent=0 // pred_check
    _
  $region11: #{_lambda_.27} parent=0 // pred_check_branch
    %17 = sbr.rel (0) target = $region13
  $region12: #{_lambda_.27} parent=0 // pred_region
    _
  $region13: #{_lambda_.27} parent=0 // pred_fallthru
    _
  // Predicated region
  $region14: #{_lambda_.27} parent=0 // pred_check
    _
  $region15: #{_lambda_.27} parent=0 // pred_check_branch
    %19 = sbr.rel (0) target = $region17
  $region16: #{_lambda_.27} parent=0 // pred_region
    _
  $region17: #{_lambda_.27} parent=0 // pred_fallthru
    _
  // Predicated region
  $region18: #{_lambda_.27} parent=0 // pred_check
    _
  $region19: #{_lambda_.27} parent=0 // pred_check_branch
    %21 = sbr.rel (0) target = $region21
  $region20: #{_lambda_.27} parent=0 // pred_region
    _
  $region21: #{_lambda_.27} parent=0 // pred_fallthru
    _
  // Predicated region
  $region22: #{_lambda_.27} parent=0 // pred_check
    _
  $region23: #{_lambda_.27} parent=0 // pred_check_branch
    %23 = sbr.rel (0) target = $region25
  $region24: #{_lambda_.27} parent=0 // pred_region
    _
  $region25: #{_lambda_.27} parent=0 // pred_fallthru
    _
  // Predicated region
  $region26: #{_lambda_.27} parent=0 // pred_check
    _
  $region27: #{_lambda_.27} parent=0 // pred_check_branch
    %25 = sbr.rel (0) target = $region29
  $region28: #{_lambda_.27} parent=0 // pred_region
    _
  $region29: #{_lambda_.27} parent=0 // pred_fallthru
    _
  %v26 = vld [vmem:[%s0] sm:$0x3]
  %v27 = vld [vmem:[%s1] sm:$0xff]
  %v28 = vld [vmem:[%s1 + $0x8] sm:$0xff]
  %v29 = vld [vmem:[%s1 + $0x10] sm:$0xff]
  %v30 = vld [vmem:[%s1 + $0x18] sm:$0xff]
  %v31 = vld [vmem:[%s2] sm:$0x1]
  %v33 = vlaneseq
  %v34 = vshrl.u32 %v33, 7
  %v35 = vsub.s32 0, %v34
  %v36 = vrot.slane %v31, %v35
  %vm38 = vcmask 261120
  %v40 = vsel %vm38, %v26, 0
  %42 = vmatprep.subr.mxu0 0.0
  %43 = vmatpush1.msra.mxu0 %v27
  %44 = vmatprep.subr.mxu0 0.0
  %45 = vmatpush1.msra.mxu0 %v28
  %46 = vmatprep.subr.mxu0 0.0
  %47 = vmatpush1.msra.mxu0 %v29
  %48 = vmatprep.subr.mxu0 0.0
  %49 = vmatpush1.msra.mxu0 %v30
  %50 = vmatprep.subr.mxu0 0.0
  %51 = vmatpush1.msra.mxu0 0.0
  %52 = vmatprep.subr.mxu0 0.0
  %53 = vmatpush1.msra.mxu0 0.0
  %54 = vmatprep.subr.mxu0 0.0
  %55 = vmatpush1.msra.mxu0 0.0
  %56 = vmatprep.subr.mxu0 0.0
  %57 = vmatpush1.msra.mxu0 0.0
  %58 = vmatprep.subr.mxu0 0.0
  %59 = vmatpush1.msra.mxu0 0.0
  %60 = vmatprep.subr.mxu0 0.0
  %61 = vmatpush1.msra.mxu0 0.0
  %62 = vmatprep.subr.mxu0 0.0
  %63 = vmatpush1.msra.mxu0 0.0
  %64 = vmatprep.subr.mxu0 0.0
  %65 = vmatpush1.msra.mxu0 0.0
  %66 = vmatprep.subr.mxu0 0.0
  %67 = vmatpush1.msra.mxu0 0.0
  %68 = vmatprep.subr.mxu0 0.0
  %69 = vmatpush1.msra.mxu0 0.0
  %70 = vmatprep.subr.mxu0 0.0
  %71 = vmatpush1.msra.mxu0 0.0
  %72 = vmatprep.subr.mxu0 0.0
  %73 = vmatpush1.msra.mxu0 0.0
  %74 = vmatprep.subr.mxu0 0.0
  %75 = vmatpush1.msra.mxu0 0.0
  %76 = vmatprep.subr.mxu0 0.0
  %77 = vmatpush1.msra.mxu0 0.0
  %78 = vmatprep.subr.mxu0 0.0
  %79 = vmatpush1.msra.mxu0 0.0
  %80 = vmatprep.subr.mxu0 0.0
  %81 = vmatpush1.msra.mxu0 0.0
  %82 = vmatprep.subr.mxu0 0.0
  %83 = vmatpush1.msra.mxu0 0.0
  %84 = vmatprep.subr.mxu0 0.0
  %85 = vmatpush1.msra.mxu0 0.0
  %86 = vmatprep.subr.mxu0 0.0
  %87 = vmatpush1.msra.mxu0 0.0
  %88 = vmatprep.subr.mxu0 0.0
  %89 = vmatpush1.msra.mxu0 0.0
  %90 = vmatprep.subr.mxu0 0.0
  %91 = vmatpush1.msra.mxu0 0.0
  %92 = vmatprep.subr.mxu0 0.0
  %93 = vmatpush1.msra.mxu0 0.0
  %94 = vmatprep.subr.mxu0 0.0
  %95 = vmatpush1.msra.mxu0 0.0
  %96 = vmatprep.subr.mxu0 0.0
  %97 = vmatpush1.msra.mxu0 0.0
  %98 = vmatprep.subr.mxu0 0.0
  %99 = vmatpush1.msra.mxu0 0.0
  %100 = vmatprep.subr.mxu0 0.0
  %101 = vmatpush1.msra.mxu0 0.0
  %102 = vmatprep.subr.mxu0 0.0
  %103 = vmatpush1.msra.mxu0 0.0
  %104 = vmatprep.subr.mxu0 0.0
  %105 = vmatpush1.msra.mxu0 0.0
  %106 = vmatprep.mubr.f32.mxu0 0.0
  %107 = vmatmul.mubr.f32.gmra.mrb[0].mxu0 %v40
  %v108 = vpop.f32.mrb[0].mxu0
  %v109 = vadd.f32 %v36, %v108
  %v110 = vpop.f32.mrb[0].mxu0
  %111 = vdwg.mxu0
  %v112 = vmax.f32 %v109, 0.0
  %v113 = vld [vmem:[%s3] sm:$0xff]
  %v114 = vld [vmem:[%s4] sm:$0x1]
  %v116 = vlaneseq
  %v117 = vshrl.u32 %v116, 7
  %v118 = vsub.s32 0, %v117
  %v119 = vrot.slane %v114, %v118
  %vm121 = vcmask 64512
  %v123 = vsel %vm121, %v112, 0
  %125 = vmatprep.subr.mxu0 0.0
  %126 = vmatpush1.msra.mxu0 %v113
  %127 = vmatprep.subr.mxu0 0.0
  %128 = vmatpush1.msra.mxu0 0.0
  %129 = vmatprep.subr.mxu0 0.0
  %130 = vmatpush1.msra.mxu0 0.0
  %131 = vmatprep.subr.mxu0 0.0
  %132 = vmatpush1.msra.mxu0 0.0
  %133 = vmatprep.subr.mxu0 0.0
  %134 = vmatpush1.msra.mxu0 0.0
  %135 = vmatprep.subr.mxu0 0.0
  %136 = vmatpush1.msra.mxu0 0.0
  %137 = vmatprep.subr.mxu0 0.0
  %138 = vmatpush1.msra.mxu0 0.0
  %139 = vmatprep.subr.mxu0 0.0
  %140 = vmatpush1.msra.mxu0 0.0
  %141 = vmatprep.subr.mxu0 0.0
  %142 = vmatpush1.msra.mxu0 0.0
  %143 = vmatprep.subr.mxu0 0.0
  %144 = vmatpush1.msra.mxu0 0.0
  %145 = vmatprep.subr.mxu0 0.0
  %146 = vmatpush1.msra.mxu0 0.0
  %147 = vmatprep.subr.mxu0 0.0
  %148 = vmatpush1.msra.mxu0 0.0
  %149 = vmatprep.subr.mxu0 0.0
  %150 = vmatpush1.msra.mxu0 0.0
  %151 = vmatprep.subr.mxu0 0.0
  %152 = vmatpush1.msra.mxu0 0.0
  %153 = vmatprep.subr.mxu0 0.0
  %154 = vmatpush1.msra.mxu0 0.0
  %155 = vmatprep.subr.mxu0 0.0
  %156 = vmatpush1.msra.mxu0 0.0
  %157 = vmatprep.subr.mxu0 0.0
  %158 = vmatpush1.msra.mxu0 0.0
  %159 = vmatprep.subr.mxu0 0.0
  %160 = vmatpush1.msra.mxu0 0.0
  %161 = vmatprep.subr.mxu0 0.0
  %162 = vmatpush1.msra.mxu0 0.0
  %163 = vmatprep.subr.mxu0 0.0
  %164 = vmatpush1.msra.mxu0 0.0
  %165 = vmatprep.subr.mxu0 0.0
  %166 = vmatpush1.msra.mxu0 0.0
  %167 = vmatprep.subr.mxu0 0.0
  %168 = vmatpush1.msra.mxu0 0.0
  %169 = vmatprep.subr.mxu0 0.0
  %170 = vmatpush1.msra.mxu0 0.0
  %171 = vmatprep.subr.mxu0 0.0
  %172 = vmatpush1.msra.mxu0 0.0
  %173 = vmatprep.subr.mxu0 0.0
  %174 = vmatpush1.msra.mxu0 0.0
  %175 = vmatprep.subr.mxu0 0.0
  %176 = vmatpush1.msra.mxu0 0.0
  %177 = vmatprep.subr.mxu0 0.0
  %178 = vmatpush1.msra.mxu0 0.0
  %179 = vmatprep.subr.mxu0 0.0
  %180 = vmatpush1.msra.mxu0 0.0
  %181 = vmatprep.subr.mxu0 0.0
  %182 = vmatpush1.msra.mxu0 0.0
  %183 = vmatprep.subr.mxu0 0.0
  %184 = vmatpush1.msra.mxu0 0.0
  %185 = vmatprep.subr.mxu0 0.0
  %186 = vmatpush1.msra.mxu0 0.0
  %187 = vmatprep.subr.mxu0 0.0
  %188 = vmatpush1.msra.mxu0 0.0
  %189 = vmatprep.mubr.f32.mxu0 0.0
  %190 = vmatmul.mubr.f32.gmra.mrb[0].mxu0 %v123
  %v191 = vpop.f32.mrb[0].mxu0
  %v192 = vadd.f32 %v119, %v191
  %v193 = vpop.f32.mrb[0].mxu0
  %194 = vdwg.mxu0
  %v195 = vmax.f32 %v192, 0.0
  %v196 = vld [vmem:[%s5] sm:$0xff]
  %v197 = vld [vmem:[%s5 + $0x8] sm:$0xff]
  %v198 = vld [vmem:[%s6] sm:$0x3]
  %v200 = vlaneseq
  %v201 = vshrl.u32 %v200, 7
  %v202 = vsub.s32 0, %v201
  %v203 = vrot.slane %v198, %v202
  %v204 = vlaneseq
  %v205 = vshrl.u32 %v204, 7
  %v206 = vsub.s32 1, %v205
  %v207 = vrot.slane %v198, %v206
  %v211 = vsel %vm121, %v195, 0
  %213 = vmatprep.subr.mxu0 %v197
  %214 = vmatpush1.msra.mxu0 %v196
  %215 = vmatprep.subr.mxu0 0.0
  %216 = vmatpush1.msra.mxu0 0.0
  %217 = vmatprep.subr.mxu0 0.0
  %218 = vmatpush1.msra.mxu0 0.0
  %219 = vmatprep.subr.mxu0 0.0
  %220 = vmatpush1.msra.mxu0 0.0
  %221 = vmatprep.subr.mxu0 0.0
  %222 = vmatpush1.msra.mxu0 0.0
  %223 = vmatprep.subr.mxu0 0.0
  %224 = vmatpush1.msra.mxu0 0.0
  %225 = vmatprep.subr.mxu0 0.0
  %226 = vmatpush1.msra.mxu0 0.0
  %227 = vmatprep.subr.mxu0 0.0
  %228 = vmatpush1.msra.mxu0 0.0
  %229 = vmatprep.subr.mxu0 0.0
  %230 = vmatpush1.msra.mxu0 0.0
  %231 = vmatprep.subr.mxu0 0.0
  %232 = vmatpush1.msra.mxu0 0.0
  %233 = vmatprep.subr.mxu0 0.0
  %234 = vmatpush1.msra.mxu0 0.0
  %235 = vmatprep.subr.mxu0 0.0
  %236 = vmatpush1.msra.mxu0 0.0
  %237 = vmatprep.subr.mxu0 0.0
  %238 = vmatpush1.msra.mxu0 0.0
  %239 = vmatprep.subr.mxu0 0.0
  %240 = vmatpush1.msra.mxu0 0.0
  %241 = vmatprep.subr.mxu0 0.0
  %242 = vmatpush1.msra.mxu0 0.0
  %243 = vmatprep.subr.mxu0 0.0
  %244 = vmatpush1.msra.mxu0 0.0
  %245 = vmatprep.subr.mxu0 0.0
  %246 = vmatpush1.msra.mxu0 0.0
  %247 = vmatprep.subr.mxu0 0.0
  %248 = vmatpush1.msra.mxu0 0.0
  %249 = vmatprep.subr.mxu0 0.0
  %250 = vmatpush1.msra.mxu0 0.0
  %251 = vmatprep.subr.mxu0 0.0
  %252 = vmatpush1.msra.mxu0 0.0
  %253 = vmatprep.subr.mxu0 0.0
  %254 = vmatpush1.msra.mxu0 0.0
  %255 = vmatprep.subr.mxu0 0.0
  %256 = vmatpush1.msra.mxu0 0.0
  %257 = vmatprep.subr.mxu0 0.0
  %258 = vmatpush1.msra.mxu0 0.0
  %259 = vmatprep.subr.mxu0 0.0
  %260 = vmatpush1.msra.mxu0 0.0
  %261 = vmatprep.subr.mxu0 0.0
  %262 = vmatpush1.msra.mxu0 0.0
  %263 = vmatprep.subr.mxu0 0.0
  %264 = vmatpush1.msra.mxu0 0.0
  %265 = vmatprep.subr.mxu0 0.0
  %266 = vmatpush1.msra.mxu0 0.0
  %267 = vmatprep.subr.mxu0 0.0
  %268 = vmatpush1.msra.mxu0 0.0
  %269 = vmatprep.subr.mxu0 0.0
  %270 = vmatpush1.msra.mxu0 0.0
  %271 = vmatprep.subr.mxu0 0.0
  %272 = vmatpush1.msra.mxu0 0.0
  %273 = vmatprep.subr.mxu0 0.0
  %274 = vmatpush1.msra.mxu0 0.0
  %275 = vmatprep.subr.mxu0 0.0
  %276 = vmatpush1.msra.mxu0 0.0
  %277 = vmatprep.mubr.f32.mxu0 0.0
  %278 = vmatmul.mubr.f32.gmra.mrb[0].mxu0 %v211
  %v279 = vpop.f32.mrb[0].mxu0
  %v280 = vadd.f32 %v203, %v279
  %v281 = vpop.f32.mrb[0].mxu0
  %v282 = vadd.f32 %v207, %v281
  %283 = vdwg.mxu0
  %v286 = vcombine.low %v280, %v282
  %v288 = vunpack.c.l.s4 1983009808
  %v289 = vunpack.c.0.s8 %v288
  %v290 = vlaneseq
  %v291 = vshrl.u32 %v290, 7
  %v292 = vsub.s32 %v289, %v291
  %v293 = vrot.slane %v286, %v292
  %vm295 = vcmask 1041408
  %vm296 = vcmask 125954
  %vm297 = vmor %vm296, %vm295
  %298 = vst.msk [vmem:[%s7] sm:$0xf] %vm297, %v293
  // Predicated region
  $region30: #{_lambda_.27} parent=0 // pred_check
    _
  $region31: #{_lambda_.27} parent=0 // pred_check_branch
    %300 = sbr.rel (0) target = $region33
  $region32: #{_lambda_.27} parent=0 // pred_region
    _
  $region33: #{_lambda_.27} parent=0 // pred_fallthru
    _
  // Predicated region
  $region34: #{_lambda_.27} parent=0 // pred_check
    _
  $region35: #{_lambda_.27} parent=0 // pred_check_branch
    %302 = sbr.rel (0) target = $region37
  $region36: #{_lambda_.27} parent=0 // pred_region
    _
  $region37: #{_lambda_.27} parent=0 // pred_fallthru
    _

// kernel: _lambda_.28
$region0: #{_lambda_.28}
  #allocation0 [shape = 'u32[]', space=smem, size = 0x4, offset = 0x4, fixed_abs, tag = 'smem constant byte address 0x4 - core index']
  #allocation1 [shape = 'u32[144,128]{1,0:T(1,128)}', space=vmem, size = 0x12000, scoped, tag = 'internal scratch']
  #allocation2 [shape = 'bf16[144,256]{1,0:T(16,128)(2,1)}', space=vmem, size = 0x12000, scoped, tag = 'scratch operand']
  %s0 = inlined_call_operand.vmem [shape: bf16[2,16,512], index: 0, kind: input, shape index: {}]
  %s1 = inlined_call_operand.vmem [shape: bf16[2,4,144], index: 1, kind: input, shape index: {}]
  %s2 = inlined_call_operand.vmem [shape: bf16[2,16,512], index: 2, kind: output, shape index: {}]
  %s3 = sld [smem:[#allocation0]]
  $region41: #{_lambda_.28} parent=0
    _
  %s5 = ssub.s32 1, %s3
  %s6 = scalar_select 0, %s5, %s3
  loop: start=0, step=1, limit=4
  $region2: #{_lambda_.28} parent=0 // loop_pre_header
    _
  $region3: #{_lambda_.28} parent=0 // loop_header
    %s8 = sphi 0, %s12
    %p9 = scmp.ge.s32.totalorder %s8, 4
    %s18 = sphi 0, %s20
    %s21 = sphi 0, %s18
    %s22 = sphi 0, %s21
    %s38 = sphi 0, %s22
    %s44 = sphi 0, %s46
    %s47 = sphi 0, %s44
    %s48 = sphi 0, %s47
    %s64 = sphi 0, %s48
    %s70 = sphi 0, %s72
    %s73 = sphi 0, %s70
    %s74 = sphi 0, %s73
    %s90 = sphi 0, %s74
  $region4: #{_lambda_.28} parent=0 // loop_header_branch
    %11 = sbr.rel (%p9) target = $region8
  $region5: #{_lambda_.28} parent=0 // loop_body
    %s13 = ssub.s32 %s8, 1
    %s14 = ssub.s32 %s8, 2
    %s15 = sadd.s32 %s8, 1
    %s16 = ssub.s32 %s8, %s15
    %p17 = scmp.eq.s32.totalorder %s16, 0
    %s19 = sadd.s32 %s18, 1
    %s20 = scalar_select %p17, %s18, %s19
    %p23 = pneg %p17
    %p24 = scmp.eq.s32.totalorder %s8, 1
    %p25 = por %p23, %p24
    %p26 = scmp.ne.s32.totalorder %s18, %s21
    %p27 = scmp.eq.s32.totalorder %s8, 0
    %p28 = por %p26, %p27
    %p29 = scmp.ne.s32.totalorder %s18, %s21
    %p30 = scmp.eq.s32.totalorder %s13, 1
    %p31 = por %p29, %p30
    %p32 = scmp.ne.s32.totalorder %s21, %s22
    %p33 = scmp.eq.s32.totalorder %s13, 0
    %p34 = por %p32, %p33
    %p35 = scmp.ne.s32.totalorder %s21, %s22
    %p36 = scmp.eq.s32.totalorder %s14, 1
    %p37 = por %p35, %p36
    %p39 = scmp.ne.s32.totalorder %s22, %s38
    %p40 = scmp.eq.s32.totalorder %s14, 0
    %p41 = por %p39, %p40
    %s42 = ssub.s32 %s8, %s15
    %p43 = scmp.eq.s32.totalorder %s42, 0
    %s45 = sadd.s32 %s44, 1
    %s46 = scalar_select %p43, %s44, %s45
    %p49 = pneg %p43
    %p50 = scmp.eq.s32.totalorder %s8, 1
    %p51 = por %p49, %p50
    %p52 = scmp.ne.s32.totalorder %s44, %s47
    %p53 = scmp.eq.s32.totalorder %s8, 0
    %p54 = por %p52, %p53
    %p55 = scmp.ne.s32.totalorder %s44, %s47
    %p56 = scmp.eq.s32.totalorder %s13, 1
    %p57 = por %p55, %p56
    %p58 = scmp.ne.s32.totalorder %s47, %s48
    %p59 = scmp.eq.s32.totalorder %s13, 0
    %p60 = por %p58, %p59
    %p61 = scmp.ne.s32.totalorder %s47, %s48
    %p62 = scmp.eq.s32.totalorder %s14, 1
    %p63 = por %p61, %p62
    %p65 = scmp.ne.s32.totalorder %s48, %s64
    %p66 = scmp.eq.s32.totalorder %s14, 0
    %p67 = por %p65, %p66
    %s68 = ssub.s32 %s8, %s15
    %p69 = scmp.eq.s32.totalorder %s68, 0
    %s71 = sadd.s32 %s70, 1
    %s72 = scalar_select %p69, %s70, %s71
    %p75 = pneg %p69
    %p76 = scmp.eq.s32.totalorder %s8, 1
    %p77 = por %p75, %p76
    %p78 = scmp.ne.s32.totalorder %s70, %s73
    %p79 = scmp.eq.s32.totalorder %s8, 0
    %p80 = por %p78, %p79
    %p81 = scmp.ne.s32.totalorder %s70, %s73
    %p82 = scmp.eq.s32.totalorder %s13, 1
    %p83 = por %p81, %p82
    %p84 = scmp.ne.s32.totalorder %s73, %s74
    %p85 = scmp.eq.s32.totalorder %s13, 0
    %p86 = por %p84, %p85
    %p87 = scmp.ne.s32.totalorder %s73, %s74
    %p88 = scmp.eq.s32.totalorder %s14, 1
    %p89 = por %p87, %p88
    %p91 = scmp.ne.s32.totalorder %s74, %s90
    %p92 = scmp.eq.s32.totalorder %s14, 0
    %p93 = por %p91, %p92
    %p94 = scmp.le.s32.totalorder 1, %s8
    %p95 = scmp.lt.s32.totalorder %s8, 3
    %p96 = pnand %p94, %p95
    %p97 = pneg %p96
    // Predicated region
    $region9: #{_lambda_.28} parent=5 // pred_check
      _
    $region10: #{_lambda_.28} parent=5 // pred_check_branch
      %99 = sbr.rel (%p96) target = $region12
    $region11: #{_lambda_.28} parent=5 // pred_region
      %s100 = ssub.s32 %s8, 1
    $region12: #{_lambda_.28} parent=5 // pred_fallthru
      _
    %p101 = scmp.lt.s32.totalorder %s8, 2
    // Predicated region
    $region13: #{_lambda_.28} parent=5 // pred_check
      %p102 = pneg %p101
    $region14: #{_lambda_.28} parent=5 // pred_check_branch
      %104 = sbr.rel (%p102) target = $region16
    $region15: #{_lambda_.28} parent=5 // pred_region
      // Predicated region
      $region17: #{_lambda_.28} parent=15 // pred_check
        %p105 = pneg %p28
      $region18: #{_lambda_.28} parent=15 // pred_check_branch
        %107 = sbr.rel (%p105) target = $region20
      $region19: #{_lambda_.28} parent=15 // pred_region
        %p108 = scmp.lt.s32.totalorder %s8, 1
        %s109 = scalar_select %p108, %s8, 1
        %s110 = smul.addr %s109, 8
        %s111 = smul.addr %s110, 4
        %s112 = scalar_lea.vmem %s0, %s111
      $region20: #{_lambda_.28} parent=15 // pred_fallthru
        _
      // Predicated region
      $region21: #{_lambda_.28} parent=15 // pred_check
        %p113 = pneg %p54
      $region22: #{_lambda_.28} parent=15 // pred_check_branch
        %115 = sbr.rel (%p113) target = $region24
      $region23: #{_lambda_.28} parent=15 // pred_region
        %p116 = scmp.lt.s32.totalorder %s8, 1
        %s117 = scalar_select %p116, %s8, 1
        %s118 = smul.addr %s117, 2
        %s119 = smul.addr %s118, 2
        %s120 = scalar_lea.vmem %s1, %s119
      $region24: #{_lambda_.28} parent=15 // pred_fallthru
        _
    $region16: #{_lambda_.28} parent=5 // pred_fallthru
      _
    %p121 = scmp.le.s32.totalorder 1, %s8
    %p122 = scmp.lt.s32.totalorder %s8, 3
    %p123 = pnand %p121, %p122
    %p124 = pneg %p123
    // Predicated region
    $region25: #{_lambda_.28} parent=5 // pred_check
      _
    $region26: #{_lambda_.28} parent=5 // pred_check_branch
      %126 = sbr.rel (%p123) target = $region28
    $region27: #{_lambda_.28} parent=5 // pred_region
      %s127 = ssub.s32 %s8, 1
      %p128 = scmp.lt.s32.totalorder %s13, 1
      %s129 = scalar_select %p128, %s13, 1
      %s130 = smul.addr %s129, 8
      %s131 = smul.addr %s130, 4
      %s132 = scalar_lea.vmem %s0, %s131
      %p133 = pneg %p34
      %p134 = pneg %p31
      %p135 = scmp.lt.s32.totalorder %s13, 1
      %s136 = scalar_select %p135, %s13, 1
      %s137 = smul.addr %s136, 2
      %s138 = smul.addr %s137, 2
      %s139 = scalar_lea.vmem %s1, %s138
      %p140 = pneg %p60
      %p141 = pneg %p57
      %p142 = pneg %p86
      %p143 = pneg %p83
      %p144 = scmp.lt.s32.totalorder %s13, 1
      %s145 = scalar_select %p144, %s13, 1
      %s146 = smul.addr %s145, 8
      %s147 = smul.addr %s146, 4
      %s148 = scalar_lea.vmem %s2, %s147
      %p149 = scmp.lt.s32.totalorder %s13, 1
      %s150 = scalar_select %p149, %s13, 1
      %s151 = smul.addr %s150, 8
      %s152 = smul.addr %s151, 4
      %s153 = scalar_lea.vmem %s0, %s152
      %p154 = scmp.lt.s32.totalorder %s13, 1
      %s155 = scalar_select %p154, %s13, 1
      %s156 = smul.addr %s155, 2
      %s157 = smul.addr %s156, 2
      %s158 = scalar_lea.vmem %s1, %s157
      %p159 = scmp.lt.s32.totalorder %s13, 1
      %s160 = scalar_select %p159, %s13, 1
      %s161 = smul.addr %s160, 8
      %s162 = smul.addr %s161, 4
      %s163 = scalar_lea.vmem %s2, %s162
      %v165 = vlaneseq
      %v166 = vand.u32 %v165, 127
      %v167 = vadd.s32 %v166, 128
      %vm168 = vcmp.lt.s32.totalorder %v166, 0
      %v169 = vsub.s32 0, %v166
      %v170 = vsel %vm168, %v169, %v166
      %v171 = vshrl.u32 %v170, 4
      %v172 = vand.u32 %v170, 15
      %v173 = vsub.s32 0, %v172
      %v174 = vsel %vm168, %v173, %v172
      %vm175 = vcmp.lt.s32.totalorder %v167, 0
      %v176 = vsub.s32 0, %v167
      %v177 = vsel %vm175, %v176, %v167
      %v178 = vshrl.u32 %v177, 4
      %v179 = vand.u32 %v177, 15
      %v180 = vsub.s32 0, %v179
      %v181 = vsel %vm175, %v180, %v179
      %vm182 = vcmp.ne.s32.totalorder %v174, 0
      %vm183 = vcmp.ne.s32.totalorder %v181, 0
      %vm184 = vcmp.lt.s32.totalorder %v174, 0
      %vm185 = vcmp.lt.s32.totalorder %v181, 0
      %vm186 = vmand %vm184, %vm182
      %vm187 = vmand %vm185, %vm183
      %v188 = vadd.s32 %v174, 16
      %v189 = vadd.s32 %v181, 16
      %v190 = vsel %vm186, %v188, %v174
      %v191 = vsel %vm187, %v189, %v181
      %vm192 = vcmp.ge.s32.totalorder %v190, 1
      %vm193 = vcmp.ge.s32.totalorder %v191, 1
      %v194 = vsel %vm192, 1, 0
      %v195 = vsel %vm193, 1, 0
      %v196 = vcvt.s32.f32 %v194
      %v197 = vcvt.s32.f32 %v195
      %v198 = vpack.c.bf16 %v196, %v196
      %v199 = vpack.c.bf16 %v197, %v197
      %vm200 = vcmp.le.s32.totalorder %v190, 14
      %vm201 = vcmp.le.s32.totalorder %v191, 14
      %v202 = vsel %vm200, 1, 0
      %v203 = vsel %vm201, 1, 0
      %v204 = vcvt.s32.f32 %v202
      %v205 = vcvt.s32.f32 %v203
      %v206 = vpack.c.bf16 %v204, %v204
      %v207 = vpack.c.bf16 %v205, %v205
      %v208 = vld [vmem:[%s153] sm:$0xff]
      %v209 = vld [vmem:[%s153 + $0x8] sm:$0xf]
      %v210 = vld [vmem:[%s153 + $0x10] sm:$0xff]
      %v211 = vld [vmem:[%s153 + $0x18] sm:$0xf]
      %v214 = vunpack.c.l.b16 %v198
      %v215 = vunpack.c.l.b16 %v199
      %v216 = vpack.c.b16 %v215, %v214
      %217 = vrot.lane.b32.xlu0 %v216, 111
      %v218 = vpop.permute.xlu0 %217
      %v219 = vrot.slane %v218, 4
      %vm220 = vcmask 908288
      %v221 = vsel %vm220, %v219, %v218
      %v224 = vmul.bf16 %v208, %v221
      %v225 = vmul.bf16 %v209, %v219
      %v226 = vmul.bf16 %v210, %v221
      %v227 = vmul.bf16 %v211, %v219
      %v232 = vunpack.c.l.b16 %v224
      %v233 = vunpack.c.h.b16 %v224
      %v234 = vunpack.c.l.b16 %v225
      %v235 = vunpack.c.l.b16 %v226
      %v236 = vunpack.c.h.b16 %v226
      %v237 = vunpack.c.l.b16 %v227
      %v238 = vpack.c.b16 %v235, %v232
      %v239 = vpack.c.b16 %v236, %v233
      %v240 = vpack.c.b16 %v237, %v234
      %241 = vrot.lane.b32.xlu0 %v238, 17
      %v242 = vpop.permute.xlu0 %241
      %243 = vrot.lane.b32.xlu0 %v239, 17
      %v244 = vpop.permute.xlu0 %243
      %245 = vrot.lane.b32.xlu0 %v240, 17
      %v246 = vpop.permute.xlu0 %245
      %vm247 = vcmask 138240
      %v248 = vsel %vm247, %v242, %v244
      %v249 = vsel %vm247, %v244, %v246
      %252 = vst [vmem:[#allocation2] sm:$0xff] %v248
      %253 = vst [vmem:[#allocation2 + $0x8] sm:$0xff] %v249
      %v254 = vld [vmem:[%s153] sm:$0xff]
      %v255 = vld [vmem:[%s153 + $0x8] sm:$0xf]
      %v256 = vld [vmem:[%s153 + $0x10] sm:$0xff]
      %v257 = vld [vmem:[%s153 + $0x18] sm:$0xf]
      %v262 = vunpack.c.l.b16 %v254
      %v263 = vunpack.c.h.b16 %v254
      %v264 = vunpack.c.l.b16 %v255
      %v265 = vunpack.c.l.b16 %v256
      %v266 = vunpack.c.h.b16 %v256
      %v267 = vunpack.c.l.b16 %v257
      %v268 = vpack.c.b16 %v265, %v262
      %v269 = vpack.c.b16 %v266, %v263
      %v270 = vpack.c.b16 %v267, %v264
      %271 = vrot.lane.b32.xlu0 %v268, 16
      %v272 = vpop.permute.xlu0 %271
      %273 = vrot.lane.b32.xlu0 %v269, 16
      %v274 = vpop.permute.xlu0 %273
      %275 = vrot.lane.b32.xlu0 %v270, 16
      %v276 = vpop.permute.xlu0 %275
      %vm277 = vcmask 130048
      %v278 = vsel %vm277, %v272, %v274
      %v279 = vsel %vm277, %v274, %v276
      %282 = vst [vmem:[#allocation2 + $0x10] sm:$0xff] %v278
      %283 = vst [vmem:[#allocation2 + $0x18] sm:$0xff] %v279
      %v284 = vld [vmem:[%s153] sm:$0xff]
      %v285 = vld [vmem:[%s153 + $0x8] sm:$0xf]
      %v286 = vld [vmem:[%s153 + $0x10] sm:$0xff]
      %v287 = vld [vmem:[%s153 + $0x18] sm:$0xf]
      %v290 = vunpack.c.l.b16 %v206
      %v291 = vunpack.c.l.b16 %v207
      %v292 = vpack.c.b16 %v291, %v290
      %293 = vrot.lane.b32.xlu0 %v292, 113
      %v294 = vpop.permute.xlu0 %293
      %v295 = vrot.slane %v294, 4
      %vm296 = vcmask 924672
      %v297 = vsel %vm296, %v295, %v294
      %v300 = vmul.bf16 %v284, %v297
      %v301 = vmul.bf16 %v285, %v295
      %v302 = vmul.bf16 %v286, %v297
      %v303 = vmul.bf16 %v287, %v295
      %v308 = vunpack.c.l.b16 %v300
      %v309 = vunpack.c.h.b16 %v300
      %v310 = vunpack.c.l.b16 %v301
      %v311 = vunpack.c.l.b16 %v302
      %v312 = vunpack.c.h.b16 %v302
      %v313 = vunpack.c.l.b16 %v303
      %v314 = vpack.c.b16 %v311, %v308
      %v315 = vpack.c.b16 %v312, %v309
      %v316 = vpack.c.b16 %v313, %v310
      %317 = vrot.lane.b32.xlu0 %v314, 15
      %v318 = vpop.permute.xlu0 %317
      %319 = vrot.lane.b32.xlu0 %v315, 15
      %v320 = vpop.permute.xlu0 %319
      %321 = vrot.lane.b32.xlu0 %v316, 15
      %v322 = vpop.permute.xlu0 %321
      %vm323 = vcmask 121856
      %v324 = vsel %vm323, %v318, %v320
      %v325 = vsel %vm323, %v320, %v322
      %328 = vst [vmem:[#allocation2 + $0x20] sm:$0xff] %v324
      %329 = vst [vmem:[#allocation2 + $0x28] sm:$0xff] %v325
      %v330 = vld [vmem:[%s153] sm:$0xff]
      %v331 = vld [vmem:[%s153 + $0x8] sm:$0xf]
      %v332 = vld [vmem:[%s153 + $0x10] sm:$0xff]
      %v333 = vld [vmem:[%s153 + $0x18] sm:$0xf]
      %334 = vrot.lane.b32.xlu0 %v216, 127
      %v335 = vpop.permute.xlu0 %334
      %v336 = vrot.slane %v335, 4
      %vm337 = vcmask 1039360
      %v338 = vsel %vm337, %v336, %v335
      %v341 = vmul.bf16 %v330, %v338
      %v342 = vmul.bf16 %v331, %v336
      %v343 = vmul.bf16 %v332, %v338
      %v344 = vmul.bf16 %v333, %v336
      %v349 = vunpack.c.l.b16 %v341
      %v350 = vunpack.c.h.b16 %v341
      %v351 = vunpack.c.l.b16 %v342
      %v352 = vunpack.c.l.b16 %v343
      %v353 = vunpack.c.h.b16 %v343
      %v354 = vunpack.c.l.b16 %v344
      %v355 = vpack.c.b16 %v352, %v349
      %v356 = vpack.c.b16 %v353, %v350
      %v357 = vpack.c.b16 %v354, %v351
      %358 = vrot.lane.b32.xlu0 %v355, 1
      %v359 = vpop.permute.xlu0 %358
      %360 = vrot.lane.b32.xlu0 %v356, 1
      %v361 = vpop.permute.xlu0 %360
      %362 = vrot.lane.b32.xlu0 %v357, 1
      %v363 = vpop.permute.xlu0 %362
      %vm364 = vcmask 7168
      %v365 = vsel %vm364, %v359, %v361
      %v366 = vsel %vm364, %v361, %v363
      %369 = vst [vmem:[#allocation2 + $0x30] sm:$0xff] %v365
      %370 = vst [vmem:[#allocation2 + $0x38] sm:$0xff] %v366
      %v371 = vld [vmem:[%s153 + $0x4] sm:$0xff]
      %v372 = vld [vmem:[%s153 + $0x14] sm:$0xff]
      %v375 = vunpack.c.l.b16 %v371
      %v376 = vunpack.c.h.b16 %v371
      %v377 = vunpack.c.l.b16 %v372
      %v378 = vunpack.c.h.b16 %v372
      %v379 = vpack.c.b16 %v377, %v375
      %v380 = vpack.c.b16 %v378, %v376
      %383 = vst [vmem:[#allocation2 + $0x40] sm:$0xff] %v379
      %384 = vst [vmem:[#allocation2 + $0x48] sm:$0xff] %v380
      %v385 = vld [vmem:[%s153 + $0x4] sm:$0xff]
      %v386 = vld [vmem:[%s153 + $0xc] sm:$0xf]
      %v387 = vld [vmem:[%s153 + $0x14] sm:$0xff]
      %v388 = vld [vmem:[%s153 + $0x1c] sm:$0xf]
      %389 = vrot.lane.b32.xlu0 %v292, 1
      %v390 = vpop.permute.xlu0 %389
      %v391 = vrot.slane %v390, 4
      %v392 = vsel %vm364, %v391, %v390
      %v395 = vmul.bf16 %v385, %v392
      %v396 = vmul.bf16 %v386, %v391
      %v397 = vmul.bf16 %v387, %v392
      %v398 = vmul.bf16 %v388, %v391
      %v403 = vunpack.c.l.b16 %v395
      %v404 = vunpack.c.h.b16 %v395
      %v405 = vunpack.c.l.b16 %v396
      %v406 = vunpack.c.l.b16 %v397
      %v407 = vunpack.c.h.b16 %v397
      %v408 = vunpack.c.l.b16 %v398
      %v409 = vpack.c.b16 %v406, %v403
      %v410 = vpack.c.b16 %v407, %v404
      %v411 = vpack.c.b16 %v408, %v405
      %412 = vrot.lane.b32.xlu0 %v409, 127
      %v413 = vpop.permute.xlu0 %412
      %414 = vrot.lane.b32.xlu0 %v410, 127
      %v415 = vpop.permute.xlu0 %414
      %416 = vrot.lane.b32.xlu0 %v411, 127
      %v417 = vpop.permute.xlu0 %416
      %v418 = vsel %vm337, %v413, %v415
      %v419 = vsel %vm337, %v415, %v417
      %422 = vst [vmem:[#allocation2 + $0x50] sm:$0xff] %v418
      %423 = vst [vmem:[#allocation2 + $0x58] sm:$0xff] %v419
      %v424 = vld [vmem:[%s153 + $0x4] sm:$0xff]
      %v425 = vld [vmem:[%s153 + $0xc] sm:$0xf]
      %v426 = vld [vmem:[%s153 + $0x14] sm:$0xff]
      %v427 = vld [vmem:[%s153 + $0x1c] sm:$0xf]
      %428 = vrot.lane.b32.xlu0 %v216, 15
      %v429 = vpop.permute.xlu0 %428
      %v430 = vrot.slane %v429, 4
      %v431 = vsel %vm323, %v430, %v429
      %v434 = vmul.bf16 %v424, %v431
      %v435 = vmul.bf16 %v425, %v430
      %v436 = vmul.bf16 %v426, %v431
      %v437 = vmul.bf16 %v427, %v430
      %v442 = vunpack.c.l.b16 %v434
      %v443 = vunpack.c.h.b16 %v434
      %v444 = vunpack.c.l.b16 %v435
      %v445 = vunpack.c.l.b16 %v436
      %v446 = vunpack.c.h.b16 %v436
      %v447 = vunpack.c.l.b16 %v437
      %v448 = vpack.c.b16 %v445, %v442
      %v449 = vpack.c.b16 %v446, %v443
      %v450 = vpack.c.b16 %v447, %v444
      %451 = vrot.lane.b32.xlu0 %v448, 113
      %v452 = vpop.permute.xlu0 %451
      %453 = vrot.lane.b32.xlu0 %v449, 113
      %v454 = vpop.permute.xlu0 %453
      %455 = vrot.lane.b32.xlu0 %v450, 113
      %v456 = vpop.permute.xlu0 %455
      %v457 = vsel %vm296, %v452, %v454
      %v458 = vsel %vm296, %v454, %v456
      %461 = vst [vmem:[#allocation2 + $0x60] sm:$0xff] %v457
      %462 = vst [vmem:[#allocation2 + $0x68] sm:$0xff] %v458
      %v463 = vld [vmem:[%s153 + $0x4] sm:$0xff]
      %v464 = vld [vmem:[%s153 + $0xc] sm:$0xf]
      %v465 = vld [vmem:[%s153 + $0x14] sm:$0xff]
      %v466 = vld [vmem:[%s153 + $0x1c] sm:$0xf]
      %v471 = vunpack.c.l.b16 %v463
      %v472 = vunpack.c.h.b16 %v463
      %v473 = vunpack.c.l.b16 %v464
      %v474 = vunpack.c.l.b16 %v465
      %v475 = vunpack.c.h.b16 %v465
      %v476 = vunpack.c.l.b16 %v466
      %v477 = vpack.c.b16 %v474, %v471
      %v478 = vpack.c.b16 %v475, %v472
      %v479 = vpack.c.b16 %v476, %v473
      %480 = vrot.lane.b32.xlu0 %v477, 112
      %v481 = vpop.permute.xlu0 %480
      %482 = vrot.lane.b32.xlu0 %v478, 112
      %v483 = vpop.permute.xlu0 %482
      %484 = vrot.lane.b32.xlu0 %v479, 112
      %v485 = vpop.permute.xlu0 %484
      %vm486 = vcmask 916480
      %v487 = vsel %vm486, %v481, %v483
      %v488 = vsel %vm486, %v483, %v485
      %491 = vst [vmem:[#allocation2 + $0x70] sm:$0xff] %v487
      %492 = vst [vmem:[#allocation2 + $0x78] sm:$0xff] %v488
      %v493 = vld [vmem:[%s153 + $0x4] sm:$0xff]
      %v494 = vld [vmem:[%s153 + $0xc] sm:$0xf]
      %v495 = vld [vmem:[%s153 + $0x14] sm:$0xff]
      %v496 = vld [vmem:[%s153 + $0x1c] sm:$0xf]
      %497 = vrot.lane.b32.xlu0 %v292, 17
      %v498 = vpop.permute.xlu0 %497
      %v499 = vrot.slane %v498, 4
      %v500 = vsel %vm247, %v499, %v498
      %v503 = vmul.bf16 %v493, %v500
      %v504 = vmul.bf16 %v494, %v499
      %v505 = vmul.bf16 %v495, %v500
      %v506 = vmul.bf16 %v496, %v499
      %v511 = vunpack.c.l.b16 %v503
      %v512 = vunpack.c.h.b16 %v503
      %v513 = vunpack.c.l.b16 %v504
      %v514 = vunpack.c.l.b16 %v505
      %v515 = vunpack.c.h.b16 %v505
      %v516 = vunpack.c.l.b16 %v506
      %v517 = vpack.c.b16 %v514, %v511
      %v518 = vpack.c.b16 %v515, %v512
      %v519 = vpack.c.b16 %v516, %v513
      %520 = vrot.lane.b32.xlu0 %v517, 111
      %v521 = vpop.permute.xlu0 %520
      %522 = vrot.lane.b32.xlu0 %v518, 111
      %v523 = vpop.permute.xlu0 %522
      %524 = vrot.lane.b32.xlu0 %v519, 111
      %v525 = vpop.permute.xlu0 %524
      %v526 = vsel %vm220, %v521, %v523
      %v527 = vsel %vm220, %v523, %v525
      %530 = vst [vmem:[#allocation2 + $0x80] sm:$0xff] %v526
      %531 = vst [vmem:[#allocation2 + $0x88] sm:$0xff] %v527
      %v532 = vld [vmem:[%s158] sm:$0xf]
      %v533 = vld [vmem:[#allocation2] sm:$0xff]
      %v534 = vld [vmem:[#allocation2 + $0x8] sm:$0xff]
      %v535 = vld [vmem:[#allocation2 + $0x10] sm:$0xff]
      %v536 = vld [vmem:[#allocation2 + $0x18] sm:$0xff]
      %v537 = vld [vmem:[#allocation2 + $0x20] sm:$0xff]
      %v538 = vld [vmem:[#allocation2 + $0x28] sm:$0xff]
      %v539 = vld [vmem:[#allocation2 + $0x30] sm:$0xff]
      %v540 = vld [vmem:[#allocation2 + $0x38] sm:$0xff]
      %v541 = vld [vmem:[#allocation2 + $0x40] sm:$0xff]
      %v542 = vld [vmem:[#allocation2 + $0x48] sm:$0xff]
      %v543 = vld [vmem:[#allocation2 + $0x50] sm:$0xff]
      %v544 = vld [vmem:[#allocation2 + $0x58] sm:$0xff]
      %v545 = vld [vmem:[#allocation2 + $0x60] sm:$0xff]
      %v546 = vld [vmem:[#allocation2 + $0x68] sm:$0xff]
      %v547 = vld [vmem:[#allocation2 + $0x70] sm:$0xff]
      %v548 = vld [vmem:[#allocation2 + $0x78] sm:$0xff]
      %v549 = vld [vmem:[#allocation2 + $0x80] sm:$0xff]
      %v550 = vld [vmem:[#allocation2 + $0x88] sm:$0xff]
      %v553 = vunpack.c.l.s4 1983009808
      %v554 = vunpack.c.0.s8 %v553
      %v555 = vlaneseq
      %v556 = vshrl.u32 %v555, 7
      %v557 = vsub.s32 %v554, %v556
      %v558 = vrot.slane %v532, %v557
      %v559 = vcombine.high %v558, %v558
      %vm561 = vcmask 130048
      %v563 = vsel %vm561, %v559, 0
      %565 = vmatprep.subr.bf16.mxu0 %v534
      %566 = vmatpush1.bf16.msra.mxu0 %v533
      %567 = vmatprep.subr.bf16.mxu0 %v536
      %568 = vmatpush1.bf16.msra.mxu0 %v535
      %569 = vmatprep.subr.bf16.mxu0 %v538
      %570 = vmatpush1.bf16.msra.mxu0 %v537
      %571 = vmatprep.subr.bf16.mxu0 %v540
      %572 = vmatpush1.bf16.msra.mxu0 %v539
      %573 = vmatprep.subr.bf16.mxu0 %v542
      %574 = vmatpush1.bf16.msra.mxu0 %v541
      %575 = vmatprep.subr.bf16.mxu0 %v544
      %576 = vmatpush1.bf16.msra.mxu0 %v543
      %577 = vmatprep.subr.bf16.mxu0 %v546
      %578 = vmatpush1.bf16.msra.mxu0 %v545
      %579 = vmatprep.subr.bf16.mxu0 %v548
      %580 = vmatpush1.bf16.msra.mxu0 %v547
      %581 = vmatprep.subr.bf16.mxu0 %v550
      %582 = vmatpush1.bf16.msra.mxu0 %v549
      %583 = vmatprep.subr.bf16.mxu0 0
      %584 = vmatpush1.bf16.msra.mxu0 0
      %585 = vmatprep.subr.bf16.mxu0 0
      %586 = vmatpush1.bf16.msra.mxu0 0
      %587 = vmatprep.subr.bf16.mxu0 0
      %588 = vmatpush1.bf16.msra.mxu0 0
      %589 = vmatprep.subr.bf16.mxu0 0
      %590 = vmatpush1.bf16.msra.mxu0 0
      %591 = vmatprep.subr.bf16.mxu0 0
      %592 = vmatpush1.bf16.msra.mxu0 0
      %593 = vmatprep.subr.bf16.mxu0 0
      %594 = vmatpush1.bf16.msra.mxu0 0
      %595 = vmatprep.subr.bf16.mxu0 0
      %596 = vmatpush1.bf16.msra.mxu0 0
      %597 = vmatprep.mubr.bf16.mxu0 %v563
      %598 = vmatmul.mubr.bf16.gmra.mrb[0].mxu0 %v558
      %v599 = vpop.f32.mrb[0].mxu0
      %v600 = vadd.f32 0.0, %v599
      %v601 = vpop.f32.mrb[0].mxu0
      %v602 = vadd.f32 0.0, %v601
      %v603 = vpop.f32.mrb[0].mxu0
      %v604 = vpop.f32.mrb[0].mxu0
      %605 = vdwg.mxu0
      %606 = vst [vmem:[%s163] sm:$0xff] 0
      %607 = vst [vmem:[%s163 + $0x8] sm:$0xff] 0
      %608 = vst [vmem:[%s163 + $0x10] sm:$0xff] 0
      %609 = vst [vmem:[%s163 + $0x18] sm:$0xff] 0
      %v610 = vpack.c.bf16 %v600, %v600
      %v611 = vpack.c.bf16 %v602, %v602
      %v614 = vunpack.c.l.b16 %v610
      %v615 = vunpack.c.l.b16 %v611
      %v616 = vpack.c.b16 %v615, %v614
      %618 = vst [vmem:[%s163 + $0x4] sm:$0x33] %v616
      %p619 = scmp.lt.s32.totalorder %s13, 1
      %s620 = scalar_select %p619, %s13, 1
      %s621 = smul.addr %s620, 8
      %s622 = smul.addr %s621, 4
      %s623 = scalar_lea.vmem %s2, %s622
      // Predicated region
      $region29: #{_lambda_.28} parent=27 // pred_check
        %p624 = pneg %p83
      $region30: #{_lambda_.28} parent=27 // pred_check_branch
        %626 = sbr.rel (%p624) target = $region32
      $region31: #{_lambda_.28} parent=27 // pred_region
        _
      $region32: #{_lambda_.28} parent=27 // pred_fallthru
        _
    $region28: #{_lambda_.28} parent=5 // pred_fallthru
      _
    %p627 = scmp.le.s32.totalorder 2, %s8
    // Predicated region
    $region33: #{_lambda_.28} parent=5 // pred_check
      %p628 = pneg %p627
    $region34: #{_lambda_.28} parent=5 // pred_check_branch
      %630 = sbr.rel (%p628) target = $region36
    $region35: #{_lambda_.28} parent=5 // pred_region
      %s631 = ssub.s32 %s8, 2
      // Predicated region
      $region37: #{_lambda_.28} parent=35 // pred_check
        %p632 = pneg %p89
      $region38: #{_lambda_.28} parent=35 // pred_check_branch
        %634 = sbr.rel (%p632) target = $region40
      $region39: #{_lambda_.28} parent=35 // pred_region
        %p635 = scmp.lt.s32.totalorder %s14, 1
        %s636 = scalar_select %p635, %s14, 1
        %s637 = smul.addr %s636, 8
        %s638 = smul.addr %s637, 4
        %s639 = scalar_lea.vmem %s2, %s638
      $region40: #{_lambda_.28} parent=35 // pred_fallthru
        _
    $region36: #{_lambda_.28} parent=5 // pred_fallthru
      _
  $region6: #{_lambda_.28} parent=0 // loop_footer
    %s12 = sadd.s32 1, %s8
  $region7: #{_lambda_.28} parent=0 // loop_footer_branch
    %7 = sbr.rel target = $region3
  $region8: #{_lambda_.28} parent=0 // loop_exit
    _

// kernel: _lambda_.29
$region0: #{_lambda_.29}
  #allocation0 [shape = 'u32[]', space=smem, size = 0x4, offset = 0x4, fixed_abs, tag = 'smem constant byte address 0x4 - core index']
  #allocation1 [shape = 'u32[144,128]{1,0:T(1,128)}', space=vmem, size = 0x12000, scoped, tag = 'internal scratch']
  #allocation2 [shape = 'bf16[288,256]{1,0:T(16,128)(2,1)}', space=vmem, size = 0x24000, scoped, tag = 'scratch operand']
  #allocation3 [shape = 'f32[1,1]{1,0:T(1,128)S(1)}', space=vmem, size = 0x200, scoped, tag = 'scoped memory for _lambda_.29']
  #allocation4 [shape = 'bf16[1,1]{1,0:T(2,128)S(1)}', space=vmem, size = 0x200, scoped, tag = 'scoped memory for _lambda_.29']
  #allocation5 [shape = 'f32[1,1]{1,0:T(1,128)S(1)}', space=vmem, size = 0x200, scoped, tag = 'scoped memory for _lambda_.29']
  %s0 = inlined_call_operand.vmem [shape: bf16[2,16,512], index: 0, kind: input, shape index: {}]
  %s1 = inlined_call_operand.vmem [shape: bf16[2,16,512], index: 1, kind: input, shape index: {}]
  %s2 = inlined_call_operand.vmem [shape: bf16[1,4,288], index: 2, kind: input, shape index: {}]
  %s3 = inlined_call_operand.vmem [shape: f32[4,1], index: 3, kind: input, shape index: {}]
  %s4 = inlined_call_operand.vmem [shape: bf16[2,4], index: 4, kind: input, shape index: {}]
  %s5 = inlined_call_operand.vmem [shape: f32[2,1], index: 5, kind: input, shape index: {}]
  %s6 = inlined_call_operand.vmem [shape: bf16[1,2], index: 6, kind: input, shape index: {}]
  %s7 = inlined_call_operand.<no memory space> [shape: f32[1,1], index: 7, kind: input, shape index: {}]
  %s8 = inlined_call_operand.<no memory space> [shape: bf16[1,1], index: 8, kind: input, shape index: {}]
  %s9 = inlined_call_operand.<no memory space> [shape: f32[1,1], index: 9, kind: input, shape index: {}]
  %s10 = inlined_call_operand.vmem [shape: f32[2,1,256], index: 10, kind: input, shape index: {}]
  %s11 = inlined_call_operand.vmem [shape: f32[2,1,256], index: 11, kind: output, shape index: {}]
  %s12 = sld [smem:[#allocation0]]
  $region77: #{_lambda_.29} parent=0
    _
  %s14 = ssub.s32 1, %s12
  %s15 = scalar_select 0, %s14, %s12
  %v16 = vstv %s7
  %17 = vst [vmem:[#allocation3] sm:$0x1] %v16
  %v18 = vstv %s8
  %19 = vst [vmem:[#allocation4] sm:$0x1] %v18
  %v20 = vstv %s9
  %21 = vst [vmem:[#allocation5] sm:$0x1] %v20
  loop: start=0, step=1, limit=4
  $region2: #{_lambda_.29} parent=0 // loop_pre_header
    _
  $region3: #{_lambda_.29} parent=0 // loop_header
    %s23 = sphi 0, %s27
    %p24 = scmp.ge.s32.totalorder %s23, 4
    %s33 = sphi 0, %s35
    %s36 = sphi 0, %s33
    %s37 = sphi 0, %s36
    %s53 = sphi 0, %s37
    %s59 = sphi 0, %s61
    %s62 = sphi 0, %s59
    %s63 = sphi 0, %s62
    %s79 = sphi 0, %s63
    %s83 = sphi 0, %s83
    %s85 = sphi 0, %s83
    %s86 = sphi 0, %s85
    %s100 = sphi 0, %s86
    %s104 = sphi 0, %s104
    %s106 = sphi 0, %s104
    %s107 = sphi 0, %s106
    %s121 = sphi 0, %s107
    %s125 = sphi 0, %s125
    %s127 = sphi 0, %s125
    %s128 = sphi 0, %s127
    %s142 = sphi 0, %s128
    %s146 = sphi 0, %s146
    %s148 = sphi 0, %s146
    %s149 = sphi 0, %s148
    %s163 = sphi 0, %s149
    %s167 = sphi 0, %s167
    %s169 = sphi 0, %s167
    %s170 = sphi 0, %s169
    %s184 = sphi 0, %s170
    %s188 = sphi 0, %s188
    %s190 = sphi 0, %s188
    %s191 = sphi 0, %s190
    %s205 = sphi 0, %s191
    %s209 = sphi 0, %s209
    %s211 = sphi 0, %s209
    %s212 = sphi 0, %s211
    %s226 = sphi 0, %s212
    %s230 = sphi 0, %s230
    %s232 = sphi 0, %s230
    %s233 = sphi 0, %s232
    %s247 = sphi 0, %s233
    %s253 = sphi 0, %s255
    %s256 = sphi 0, %s253
    %s257 = sphi 0, %s256
    %s273 = sphi 0, %s257
    %s279 = sphi 0, %s281
    %s282 = sphi 0, %s279
    %s283 = sphi 0, %s282
    %s299 = sphi 0, %s283
  $region4: #{_lambda_.29} parent=0 // loop_header_branch
    %26 = sbr.rel (%p24) target = $region8
  $region5: #{_lambda_.29} parent=0 // loop_body
    %s28 = ssub.s32 %s23, 1
    %s29 = ssub.s32 %s23, 2
    %s30 = sadd.s32 %s23, 1
    %s31 = ssub.s32 %s23, %s30
    %p32 = scmp.eq.s32.totalorder %s31, 0
    %s34 = sadd.s32 %s33, 1
    %s35 = scalar_select %p32, %s33, %s34
    %p38 = pneg %p32
    %p39 = scmp.eq.s32.totalorder %s23, 1
    %p40 = por %p38, %p39
    %p41 = scmp.ne.s32.totalorder %s33, %s36
    %p42 = scmp.eq.s32.totalorder %s23, 0
    %p43 = por %p41, %p42
    %p44 = scmp.ne.s32.totalorder %s33, %s36
    %p45 = scmp.eq.s32.totalorder %s28, 1
    %p46 = por %p44, %p45
    %p47 = scmp.ne.s32.totalorder %s36, %s37
    %p48 = scmp.eq.s32.totalorder %s28, 0
    %p49 = por %p47, %p48
    %p50 = scmp.ne.s32.totalorder %s36, %s37
    %p51 = scmp.eq.s32.totalorder %s29, 1
    %p52 = por %p50, %p51
    %p54 = scmp.ne.s32.totalorder %s37, %s53
    %p55 = scmp.eq.s32.totalorder %s29, 0
    %p56 = por %p54, %p55
    %s57 = ssub.s32 %s23, %s30
    %p58 = scmp.eq.s32.totalorder %s57, 0
    %s60 = sadd.s32 %s59, 1
    %s61 = scalar_select %p58, %s59, %s60
    %p64 = pneg %p58
    %p65 = scmp.eq.s32.totalorder %s23, 1
    %p66 = por %p64, %p65
    %p67 = scmp.ne.s32.totalorder %s59, %s62
    %p68 = scmp.eq.s32.totalorder %s23, 0
    %p69 = por %p67, %p68
    %p70 = scmp.ne.s32.totalorder %s59, %s62
    %p71 = scmp.eq.s32.totalorder %s28, 1
    %p72 = por %p70, %p71
    %p73 = scmp.ne.s32.totalorder %s62, %s63
    %p74 = scmp.eq.s32.totalorder %s28, 0
    %p75 = por %p73, %p74
    %p76 = scmp.ne.s32.totalorder %s62, %s63
    %p77 = scmp.eq.s32.totalorder %s29, 1
    %p78 = por %p76, %p77
    %p80 = scmp.ne.s32.totalorder %s63, %s79
    %p81 = scmp.eq.s32.totalorder %s29, 0
    %p82 = por %p80, %p81
    %s84 = sadd.s32 %s83, 1
    %p87 = scmp.eq.s32.totalorder %s23, 1
    %p88 = scmp.ne.s32.totalorder %s83, %s85
    %p89 = scmp.eq.s32.totalorder %s23, 0
    %p90 = por %p88, %p89
    %p91 = scmp.ne.s32.totalorder %s83, %s85
    %p92 = scmp.eq.s32.totalorder %s28, 1
    %p93 = por %p91, %p92
    %p94 = scmp.ne.s32.totalorder %s85, %s86
    %p95 = scmp.eq.s32.totalorder %s28, 0
    %p96 = por %p94, %p95
    %p97 = scmp.ne.s32.totalorder %s85, %s86
    %p98 = scmp.eq.s32.totalorder %s29, 1
    %p99 = por %p97, %p98
    %p101 = scmp.ne.s32.totalorder %s86, %s100
    %p102 = scmp.eq.s32.totalorder %s29, 0
    %p103 = por %p101, %p102
    %s105 = sadd.s32 %s104, 1
    %p108 = scmp.eq.s32.totalorder %s23, 1
    %p109 = scmp.ne.s32.totalorder %s104, %s106
    %p110 = scmp.eq.s32.totalorder %s23, 0
    %p111 = por %p109, %p110
    %p112 = scmp.ne.s32.totalorder %s104, %s106
    %p113 = scmp.eq.s32.totalorder %s28, 1
    %p114 = por %p112, %p113
    %p115 = scmp.ne.s32.totalorder %s106, %s107
    %p116 = scmp.eq.s32.totalorder %s28, 0
    %p117 = por %p115, %p116
    %p118 = scmp.ne.s32.totalorder %s106, %s107
    %p119 = scmp.eq.s32.totalorder %s29, 1
    %p120 = por %p118, %p119
    %p122 = scmp.ne.s32.totalorder %s107, %s121
    %p123 = scmp.eq.s32.totalorder %s29, 0
    %p124 = por %p122, %p123
    %s126 = sadd.s32 %s125, 1
    %p129 = scmp.eq.s32.totalorder %s23, 1
    %p130 = scmp.ne.s32.totalorder %s125, %s127
    %p131 = scmp.eq.s32.totalorder %s23, 0
    %p132 = por %p130, %p131
    %p133 = scmp.ne.s32.totalorder %s125, %s127
    %p134 = scmp.eq.s32.totalorder %s28, 1
    %p135 = por %p133, %p134
    %p136 = scmp.ne.s32.totalorder %s127, %s128
    %p137 = scmp.eq.s32.totalorder %s28, 0
    %p138 = por %p136, %p137
    %p139 = scmp.ne.s32.totalorder %s127, %s128
    %p140 = scmp.eq.s32.totalorder %s29, 1
    %p141 = por %p139, %p140
    %p143 = scmp.ne.s32.totalorder %s128, %s142
    %p144 = scmp.eq.s32.totalorder %s29, 0
    %p145 = por %p143, %p144
    %s147 = sadd.s32 %s146, 1
    %p150 = scmp.eq.s32.totalorder %s23, 1
    %p151 = scmp.ne.s32.totalorder %s146, %s148
    %p152 = scmp.eq.s32.totalorder %s23, 0
    %p153 = por %p151, %p152
    %p154 = scmp.ne.s32.totalorder %s146, %s148
    %p155 = scmp.eq.s32.totalorder %s28, 1
    %p156 = por %p154, %p155
    %p157 = scmp.ne.s32.totalorder %s148, %s149
    %p158 = scmp.eq.s32.totalorder %s28, 0
    %p159 = por %p157, %p158
    %p160 = scmp.ne.s32.totalorder %s148, %s149
    %p161 = scmp.eq.s32.totalorder %s29, 1
    %p162 = por %p160, %p161
    %p164 = scmp.ne.s32.totalorder %s149, %s163
    %p165 = scmp.eq.s32.totalorder %s29, 0
    %p166 = por %p164, %p165
    %s168 = sadd.s32 %s167, 1
    %p171 = scmp.eq.s32.totalorder %s23, 1
    %p172 = scmp.ne.s32.totalorder %s167, %s169
    %p173 = scmp.eq.s32.totalorder %s23, 0
    %p174 = por %p172, %p173
    %p175 = scmp.ne.s32.totalorder %s167, %s169
    %p176 = scmp.eq.s32.totalorder %s28, 1
    %p177 = por %p175, %p176
    %p178 = scmp.ne.s32.totalorder %s169, %s170
    %p179 = scmp.eq.s32.totalorder %s28, 0
    %p180 = por %p178, %p179
    %p181 = scmp.ne.s32.totalorder %s169, %s170
    %p182 = scmp.eq.s32.totalorder %s29, 1
    %p183 = por %p181, %p182
    %p185 = scmp.ne.s32.totalorder %s170, %s184
    %p186 = scmp.eq.s32.totalorder %s29, 0
    %p187 = por %p185, %p186
    %s189 = sadd.s32 %s188, 1
    %p192 = scmp.eq.s32.totalorder %s23, 1
    %p193 = scmp.ne.s32.totalorder %s188, %s190
    %p194 = scmp.eq.s32.totalorder %s23, 0
    %p195 = por %p193, %p194
    %p196 = scmp.ne.s32.totalorder %s188, %s190
    %p197 = scmp.eq.s32.totalorder %s28, 1
    %p198 = por %p196, %p197
    %p199 = scmp.ne.s32.totalorder %s190, %s191
    %p200 = scmp.eq.s32.totalorder %s28, 0
    %p201 = por %p199, %p200
    %p202 = scmp.ne.s32.totalorder %s190, %s191
    %p203 = scmp.eq.s32.totalorder %s29, 1
    %p204 = por %p202, %p203
    %p206 = scmp.ne.s32.totalorder %s191, %s205
    %p207 = scmp.eq.s32.totalorder %s29, 0
    %p208 = por %p206, %p207
    %s210 = sadd.s32 %s209, 1
    %p213 = scmp.eq.s32.totalorder %s23, 1
    %p214 = scmp.ne.s32.totalorder %s209, %s211
    %p215 = scmp.eq.s32.totalorder %s23, 0
    %p216 = por %p214, %p215
    %p217 = scmp.ne.s32.totalorder %s209, %s211
    %p218 = scmp.eq.s32.totalorder %s28, 1
    %p219 = por %p217, %p218
    %p220 = scmp.ne.s32.totalorder %s211, %s212
    %p221 = scmp.eq.s32.totalorder %s28, 0
    %p222 = por %p220, %p221
    %p223 = scmp.ne.s32.totalorder %s211, %s212
    %p224 = scmp.eq.s32.totalorder %s29, 1
    %p225 = por %p223, %p224
    %p227 = scmp.ne.s32.totalorder %s212, %s226
    %p228 = scmp.eq.s32.totalorder %s29, 0
    %p229 = por %p227, %p228
    %s231 = sadd.s32 %s230, 1
    %p234 = scmp.eq.s32.totalorder %s23, 1
    %p235 = scmp.ne.s32.totalorder %s230, %s232
    %p236 = scmp.eq.s32.totalorder %s23, 0
    %p237 = por %p235, %p236
    %p238 = scmp.ne.s32.totalorder %s230, %s232
    %p239 = scmp.eq.s32.totalorder %s28, 1
    %p240 = por %p238, %p239
    %p241 = scmp.ne.s32.totalorder %s232, %s233
    %p242 = scmp.eq.s32.totalorder %s28, 0
    %p243 = por %p241, %p242
    %p244 = scmp.ne.s32.totalorder %s232, %s233
    %p245 = scmp.eq.s32.totalorder %s29, 1
    %p246 = por %p244, %p245
    %p248 = scmp.ne.s32.totalorder %s233, %s247
    %p249 = scmp.eq.s32.totalorder %s29, 0
    %p250 = por %p248, %p249
    %s251 = ssub.s32 %s23, %s30
    %p252 = scmp.eq.s32.totalorder %s251, 0
    %s254 = sadd.s32 %s253, 1
    %s255 = scalar_select %p252, %s253, %s254
    %p258 = pneg %p252
    %p259 = scmp.eq.s32.totalorder %s23, 1
    %p260 = por %p258, %p259
    %p261 = scmp.ne.s32.totalorder %s253, %s256
    %p262 = scmp.eq.s32.totalorder %s23, 0
    %p263 = por %p261, %p262
    %p264 = scmp.ne.s32.totalorder %s253, %s256
    %p265 = scmp.eq.s32.totalorder %s28, 1
    %p266 = por %p264, %p265
    %p267 = scmp.ne.s32.totalorder %s256, %s257
    %p268 = scmp.eq.s32.totalorder %s28, 0
    %p269 = por %p267, %p268
    %p270 = scmp.ne.s32.totalorder %s256, %s257
    %p271 = scmp.eq.s32.totalorder %s29, 1
    %p272 = por %p270, %p271
    %p274 = scmp.ne.s32.totalorder %s257, %s273
    %p275 = scmp.eq.s32.totalorder %s29, 0
    %p276 = por %p274, %p275
    %s277 = ssub.s32 %s23, %s30
    %p278 = scmp.eq.s32.totalorder %s277, 0
    %s280 = sadd.s32 %s279, 1
    %s281 = scalar_select %p278, %s279, %s280
    %p284 = pneg %p278
    %p285 = scmp.eq.s32.totalorder %s23, 1
    %p286 = por %p284, %p285
    %p287 = scmp.ne.s32.totalorder %s279, %s282
    %p288 = scmp.eq.s32.totalorder %s23, 0
    %p289 = por %p287, %p288
    %p290 = scmp.ne.s32.totalorder %s279, %s282
    %p291 = scmp.eq.s32.totalorder %s28, 1
    %p292 = por %p290, %p291
    %p293 = scmp.ne.s32.totalorder %s282, %s283
    %p294 = scmp.eq.s32.totalorder %s28, 0
    %p295 = por %p293, %p294
    %p296 = scmp.ne.s32.totalorder %s282, %s283
    %p297 = scmp.eq.s32.totalorder %s29, 1
    %p298 = por %p296, %p297
    %p300 = scmp.ne.s32.totalorder %s283, %s299
    %p301 = scmp.eq.s32.totalorder %s29, 0
    %p302 = por %p300, %p301
    %p303 = scmp.le.s32.totalorder 1, %s23
    %p304 = scmp.lt.s32.totalorder %s23, 3
    %p305 = pnand %p303, %p304
    %p306 = pneg %p305
    // Predicated region
    $region9: #{_lambda_.29} parent=5 // pred_check
      _
    $region10: #{_lambda_.29} parent=5 // pred_check_branch
      %308 = sbr.rel (%p305) target = $region12
    $region11: #{_lambda_.29} parent=5 // pred_region
      %s309 = ssub.s32 %s23, 1
      // Predicated region
      $region13: #{_lambda_.29} parent=11 // pred_check
        %p310 = pneg %p96
      $region14: #{_lambda_.29} parent=11 // pred_check_branch
        %312 = sbr.rel (%p310) target = $region16
      $region15: #{_lambda_.29} parent=11 // pred_region
        _
      $region16: #{_lambda_.29} parent=11 // pred_fallthru
        _
      // Predicated region
      $region17: #{_lambda_.29} parent=11 // pred_check
        %p313 = pneg %p117
      $region18: #{_lambda_.29} parent=11 // pred_check_branch
        %315 = sbr.rel (%p313) target = $region20
      $region19: #{_lambda_.29} parent=11 // pred_region
        _
      $region20: #{_lambda_.29} parent=11 // pred_fallthru
        _
      // Predicated region
      $region21: #{_lambda_.29} parent=11 // pred_check
        %p316 = pneg %p138
      $region22: #{_lambda_.29} parent=11 // pred_check_branch
        %318 = sbr.rel (%p316) target = $region24
      $region23: #{_lambda_.29} parent=11 // pred_region
        _
      $region24: #{_lambda_.29} parent=11 // pred_fallthru
        _
      // Predicated region
      $region25: #{_lambda_.29} parent=11 // pred_check
        %p319 = pneg %p159
      $region26: #{_lambda_.29} parent=11 // pred_check_branch
        %321 = sbr.rel (%p319) target = $region28
      $region27: #{_lambda_.29} parent=11 // pred_region
        _
      $region28: #{_lambda_.29} parent=11 // pred_fallthru
        _
      // Predicated region
      $region29: #{_lambda_.29} parent=11 // pred_check
        %p322 = pneg %p180
      $region30: #{_lambda_.29} parent=11 // pred_check_branch
        %324 = sbr.rel (%p322) target = $region32
      $region31: #{_lambda_.29} parent=11 // pred_region
        _
      $region32: #{_lambda_.29} parent=11 // pred_fallthru
        _
      // Predicated region
      $region33: #{_lambda_.29} parent=11 // pred_check
        %p325 = pneg %p201
      $region34: #{_lambda_.29} parent=11 // pred_check_branch
        %327 = sbr.rel (%p325) target = $region36
      $region35: #{_lambda_.29} parent=11 // pred_region
        _
      $region36: #{_lambda_.29} parent=11 // pred_fallthru
        _
      // Predicated region
      $region37: #{_lambda_.29} parent=11 // pred_check
        %p328 = pneg %p222
      $region38: #{_lambda_.29} parent=11 // pred_check_branch
        %330 = sbr.rel (%p328) target = $region40
      $region39: #{_lambda_.29} parent=11 // pred_region
        _
      $region40: #{_lambda_.29} parent=11 // pred_fallthru
        _
      // Predicated region
      $region41: #{_lambda_.29} parent=11 // pred_check
        %p331 = pneg %p243
      $region42: #{_lambda_.29} parent=11 // pred_check_branch
        %333 = sbr.rel (%p331) target = $region44
      $region43: #{_lambda_.29} parent=11 // pred_region
        _
      $region44: #{_lambda_.29} parent=11 // pred_fallthru
        _
    $region12: #{_lambda_.29} parent=5 // pred_fallthru
      _
    %p334 = scmp.lt.s32.totalorder %s23, 2
    // Predicated region
    $region45: #{_lambda_.29} parent=5 // pred_check
      %p335 = pneg %p334
    $region46: #{_lambda_.29} parent=5 // pred_check_branch
      %337 = sbr.rel (%p335) target = $region48
    $region47: #{_lambda_.29} parent=5 // pred_region
      // Predicated region
      $region49: #{_lambda_.29} parent=47 // pred_check
        %p338 = pneg %p43
      $region50: #{_lambda_.29} parent=47 // pred_check_branch
        %340 = sbr.rel (%p338) target = $region52
      $region51: #{_lambda_.29} parent=47 // pred_region
        %p341 = scmp.lt.s32.totalorder %s23, 1
        %s342 = scalar_select %p341, %s23, 1
        %s343 = smul.addr %s342, 8
        %s344 = smul.addr %s343, 4
        %s345 = scalar_lea.vmem %s0, %s344
      $region52: #{_lambda_.29} parent=47 // pred_fallthru
        _
      // Predicated region
      $region53: #{_lambda_.29} parent=47 // pred_check
        %p346 = pneg %p69
      $region54: #{_lambda_.29} parent=47 // pred_check_branch
        %348 = sbr.rel (%p346) target = $region56
      $region55: #{_lambda_.29} parent=47 // pred_region
        %p349 = scmp.lt.s32.totalorder %s23, 1
        %s350 = scalar_select %p349, %s23, 1
        %s351 = smul.addr %s350, 8
        %s352 = smul.addr %s351, 4
        %s353 = scalar_lea.vmem %s1, %s352
      $region56: #{_lambda_.29} parent=47 // pred_fallthru
        _
      // Predicated region
      $region57: #{_lambda_.29} parent=47 // pred_check
        %p354 = pneg %p263
      $region58: #{_lambda_.29} parent=47 // pred_check_branch
        %356 = sbr.rel (%p354) target = $region60
      $region59: #{_lambda_.29} parent=47 // pred_region
        %p357 = scmp.lt.s32.totalorder %s23, 1
        %s358 = scalar_select %p357, %s23, 1
        %s359 = smul.addr %s358, 2
        %s360 = scalar_lea.vmem %s10, %s359
      $region60: #{_lambda_.29} parent=47 // pred_fallthru
        _
    $region48: #{_lambda_.29} parent=5 // pred_fallthru
      _
    %p361 = scmp.le.s32.totalorder 1, %s23
    %p362 = scmp.lt.s32.totalorder %s23, 3
    %p363 = pnand %p361, %p362
    %p364 = pneg %p363
    // Predicated region
    $region61: #{_lambda_.29} parent=5 // pred_check
      _
    $region62: #{_lambda_.29} parent=5 // pred_check_branch
      %366 = sbr.rel (%p363) target = $region64
    $region63: #{_lambda_.29} parent=5 // pred_region
      %s367 = ssub.s32 %s23, 1
      %p368 = scmp.lt.s32.totalorder %s28, 1
      %s369 = scalar_select %p368, %s28, 1
      %s370 = smul.addr %s369, 8
      %s371 = smul.addr %s370, 4
      %s372 = scalar_lea.vmem %s0, %s371
      %p373 = pneg %p49
      %p374 = pneg %p46
      %p375 = scmp.lt.s32.totalorder %s28, 1
      %s376 = scalar_select %p375, %s28, 1
      %s377 = smul.addr %s376, 8
      %s378 = smul.addr %s377, 4
      %s379 = scalar_lea.vmem %s1, %s378
      %p380 = pneg %p75
      %p381 = pneg %p72
      %p382 = pneg %p96
      %p383 = pneg %p93
      %p384 = pneg %p117
      %p385 = pneg %p114
      %p386 = pneg %p138
      %p387 = pneg %p135
      %p388 = pneg %p159
      %p389 = pneg %p156
      %p390 = pneg %p180
      %p391 = pneg %p177
      %p392 = pneg %p201
      %p393 = pneg %p198
      %p394 = pneg %p222
      %p395 = pneg %p219
      %p396 = pneg %p243
      %p397 = pneg %p240
      %p398 = scmp.lt.s32.totalorder %s28, 1
      %s399 = scalar_select %p398, %s28, 1
      %s400 = smul.addr %s399, 2
      %s401 = scalar_lea.vmem %s10, %s400
      %p402 = pneg %p269
      %p403 = pneg %p266
      %p404 = pneg %p295
      %p405 = pneg %p292
      %p406 = scmp.lt.s32.totalorder %s28, 1
      %s407 = scalar_select %p406, %s28, 1
      %s408 = smul.addr %s407, 2
      %s409 = scalar_lea.vmem %s11, %s408
      %p410 = scmp.lt.s32.totalorder %s28, 1
      %s411 = scalar_select %p410, %s28, 1
      %s412 = smul.addr %s411, 8
      %s413 = smul.addr %s412, 4
      %s414 = scalar_lea.vmem %s0, %s413
      %p415 = scmp.lt.s32.totalorder %s28, 1
      %s416 = scalar_select %p415, %s28, 1
      %s417 = smul.addr %s416, 8
      %s418 = smul.addr %s417, 4
      %s419 = scalar_lea.vmem %s1, %s418
      %p420 = scmp.lt.s32.totalorder %s28, 1
      %s421 = scalar_select %p420, %s28, 1
      %s422 = smul.addr %s421, 2
      %s423 = scalar_lea.vmem %s10, %s422
      %p424 = scmp.lt.s32.totalorder %s28, 1
      %s425 = scalar_select %p424, %s28, 1
      %s426 = smul.addr %s425, 2
      %s427 = scalar_lea.vmem %s11, %s426
      %v429 = vlaneseq
      %v430 = vand.u32 %v429, 127
      %v431 = vadd.s32 %v430, 128
      %vm432 = vcmp.lt.s32.totalorder %v430, 0
      %v433 = vsub.s32 0, %v430
      %v434 = vsel %vm432, %v433, %v430
      %v435 = vshrl.u32 %v434, 4
      %v436 = vand.u32 %v434, 15
      %v437 = vsub.s32 0, %v436
      %v438 = vsel %vm432, %v437, %v436
      %vm439 = vcmp.lt.s32.totalorder %v431, 0
      %v440 = vsub.s32 0, %v431
      %v441 = vsel %vm439, %v440, %v431
      %v442 = vshrl.u32 %v441, 4
      %v443 = vand.u32 %v441, 15
      %v444 = vsub.s32 0, %v443
      %v445 = vsel %vm439, %v444, %v443
      %vm446 = vcmp.ne.s32.totalorder %v438, 0
      %vm447 = vcmp.ne.s32.totalorder %v445, 0
      %vm448 = vcmp.lt.s32.totalorder %v438, 0
      %vm449 = vcmp.lt.s32.totalorder %v445, 0
      %vm450 = vmand %vm448, %vm446
      %vm451 = vmand %vm449, %vm447
      %v452 = vadd.s32 %v438, 16
      %v453 = vadd.s32 %v445, 16
      %v454 = vsel %vm450, %v452, %v438
      %v455 = vsel %vm451, %v453, %v445
      %vm456 = vcmp.ge.s32.totalorder %v454, 1
      %vm457 = vcmp.ge.s32.totalorder %v455, 1
      %v458 = vsel %vm456, 1, 0
      %v459 = vsel %vm457, 1, 0
      %v460 = vcvt.s32.f32 %v458
      %v461 = vcvt.s32.f32 %v459
      %v462 = vpack.c.bf16 %v460, %v460
      %v463 = vpack.c.bf16 %v461, %v461
      %vm464 = vcmp.le.s32.totalorder %v454, 14
      %vm465 = vcmp.le.s32.totalorder %v455, 14
      %v466 = vsel %vm464, 1, 0
      %v467 = vsel %vm465, 1, 0
      %v468 = vcvt.s32.f32 %v466
      %v469 = vcvt.s32.f32 %v467
      %v470 = vpack.c.bf16 %v468, %v468
      %v471 = vpack.c.bf16 %v469, %v469
      %v472 = vld [vmem:[%s414] sm:$0xff]
      %v473 = vld [vmem:[%s414 + $0x8] sm:$0xf]
      %v474 = vld [vmem:[%s414 + $0x10] sm:$0xff]
      %v475 = vld [vmem:[%s414 + $0x18] sm:$0xf]
      %v478 = vunpack.c.l.b16 %v462
      %v479 = vunpack.c.l.b16 %v463
      %v480 = vpack.c.b16 %v479, %v478
      %481 = vrot.lane.b32.xlu0 %v480, 111
      %v482 = vpop.permute.xlu0 %481
      %v483 = vrot.slane %v482, 4
      %vm484 = vcmask 908288
      %v485 = vsel %vm484, %v483, %v482
      %v488 = vmul.bf16 %v472, %v485
      %v489 = vmul.bf16 %v473, %v483
      %v490 = vmul.bf16 %v474, %v485
      %v491 = vmul.bf16 %v475, %v483
      %v496 = vunpack.c.l.b16 %v488
      %v497 = vunpack.c.h.b16 %v488
      %v498 = vunpack.c.l.b16 %v489
      %v499 = vunpack.c.l.b16 %v490
      %v500 = vunpack.c.h.b16 %v490
      %v501 = vunpack.c.l.b16 %v491
      %v502 = vpack.c.b16 %v499, %v496
      %v503 = vpack.c.b16 %v500, %v497
      %v504 = vpack.c.b16 %v501, %v498
      %505 = vrot.lane.b32.xlu0 %v502, 17
      %v506 = vpop.permute.xlu0 %505
      %507 = vrot.lane.b32.xlu0 %v503, 17
      %v508 = vpop.permute.xlu0 %507
      %509 = vrot.lane.b32.xlu0 %v504, 17
      %v510 = vpop.permute.xlu0 %509
      %vm511 = vcmask 138240
      %v512 = vsel %vm511, %v506, %v508
      %v513 = vsel %vm511, %v508, %v510
      %516 = vst [vmem:[#allocation2] sm:$0xff] %v512
      %517 = vst [vmem:[#allocation2 + $0x8] sm:$0xff] %v513
      %v518 = vld [vmem:[%s414] sm:$0xff]
      %v519 = vld [vmem:[%s414 + $0x8] sm:$0xf]
      %v520 = vld [vmem:[%s414 + $0x10] sm:$0xff]
      %v521 = vld [vmem:[%s414 + $0x18] sm:$0xf]
      %v526 = vunpack.c.l.b16 %v518
      %v527 = vunpack.c.h.b16 %v518
      %v528 = vunpack.c.l.b16 %v519
      %v529 = vunpack.c.l.b16 %v520
      %v530 = vunpack.c.h.b16 %v520
      %v531 = vunpack.c.l.b16 %v521
      %v532 = vpack.c.b16 %v529, %v526
      %v533 = vpack.c.b16 %v530, %v527
      %v534 = vpack.c.b16 %v531, %v528
      %535 = vrot.lane.b32.xlu0 %v532, 16
      %v536 = vpop.permute.xlu0 %535
      %537 = vrot.lane.b32.xlu0 %v533, 16
      %v538 = vpop.permute.xlu0 %537
      %539 = vrot.lane.b32.xlu0 %v534, 16
      %v540 = vpop.permute.xlu0 %539
      %vm541 = vcmask 130048
      %v542 = vsel %vm541, %v536, %v538
      %v543 = vsel %vm541, %v538, %v540
      %546 = vst [vmem:[#allocation2 + $0x10] sm:$0xff] %v542
      %547 = vst [vmem:[#allocation2 + $0x18] sm:$0xff] %v543
      %v548 = vld [vmem:[%s414] sm:$0xff]
      %v549 = vld [vmem:[%s414 + $0x8] sm:$0xf]
      %v550 = vld [vmem:[%s414 + $0x10] sm:$0xff]
      %v551 = vld [vmem:[%s414 + $0x18] sm:$0xf]
      %v554 = vunpack.c.l.b16 %v470
      %v555 = vunpack.c.l.b16 %v471
      %v556 = vpack.c.b16 %v555, %v554
      %557 = vrot.lane.b32.xlu0 %v556, 113
      %v558 = vpop.permute.xlu0 %557
      %v559 = vrot.slane %v558, 4
      %vm560 = vcmask 924672
      %v561 = vsel %vm560, %v559, %v558
      %v564 = vmul.bf16 %v548, %v561
      %v565 = vmul.bf16 %v549, %v559
      %v566 = vmul.bf16 %v550, %v561
      %v567 = vmul.bf16 %v551, %v559
      %v572 = vunpack.c.l.b16 %v564
      %v573 = vunpack.c.h.b16 %v564
      %v574 = vunpack.c.l.b16 %v565
      %v575 = vunpack.c.l.b16 %v566
      %v576 = vunpack.c.h.b16 %v566
      %v577 = vunpack.c.l.b16 %v567
      %v578 = vpack.c.b16 %v575, %v572
      %v579 = vpack.c.b16 %v576, %v573
      %v580 = vpack.c.b16 %v577, %v574
      %581 = vrot.lane.b32.xlu0 %v578, 15
      %v582 = vpop.permute.xlu0 %581
      %583 = vrot.lane.b32.xlu0 %v579, 15
      %v584 = vpop.permute.xlu0 %583
      %585 = vrot.lane.b32.xlu0 %v580, 15
      %v586 = vpop.permute.xlu0 %585
      %vm587 = vcmask 121856
      %v588 = vsel %vm587, %v582, %v584
      %v589 = vsel %vm587, %v584, %v586
      %592 = vst [vmem:[#allocation2 + $0x20] sm:$0xff] %v588
      %593 = vst [vmem:[#allocation2 + $0x28] sm:$0xff] %v589
      %v594 = vld [vmem:[%s414] sm:$0xff]
      %v595 = vld [vmem:[%s414 + $0x8] sm:$0xf]
      %v596 = vld [vmem:[%s414 + $0x10] sm:$0xff]
      %v597 = vld [vmem:[%s414 + $0x18] sm:$0xf]
      %598 = vrot.lane.b32.xlu0 %v480, 127
      %v599 = vpop.permute.xlu0 %598
      %v600 = vrot.slane %v599, 4
      %vm601 = vcmask 1039360
      %v602 = vsel %vm601, %v600, %v599
      %v605 = vmul.bf16 %v594, %v602
      %v606 = vmul.bf16 %v595, %v600
      %v607 = vmul.bf16 %v596, %v602
      %v608 = vmul.bf16 %v597, %v600
      %v613 = vunpack.c.l.b16 %v605
      %v614 = vunpack.c.h.b16 %v605
      %v615 = vunpack.c.l.b16 %v606
      %v616 = vunpack.c.l.b16 %v607
      %v617 = vunpack.c.h.b16 %v607
      %v618 = vunpack.c.l.b16 %v608
      %v619 = vpack.c.b16 %v616, %v613
      %v620 = vpack.c.b16 %v617, %v614
      %v621 = vpack.c.b16 %v618, %v615
      %622 = vrot.lane.b32.xlu0 %v619, 1
      %v623 = vpop.permute.xlu0 %622
      %624 = vrot.lane.b32.xlu0 %v620, 1
      %v625 = vpop.permute.xlu0 %624
      %626 = vrot.lane.b32.xlu0 %v621, 1
      %v627 = vpop.permute.xlu0 %626
      %vm628 = vcmask 7168
      %v629 = vsel %vm628, %v623, %v625
      %v630 = vsel %vm628, %v625, %v627
      %633 = vst [vmem:[#allocation2 + $0x30] sm:$0xff] %v629
      %634 = vst [vmem:[#allocation2 + $0x38] sm:$0xff] %v630
      %v635 = vld [vmem:[%s414 + $0x4] sm:$0xff]
      %v636 = vld [vmem:[%s414 + $0x14] sm:$0xff]
      %v639 = vunpack.c.l.b16 %v635
      %v640 = vunpack.c.h.b16 %v635
      %v641 = vunpack.c.l.b16 %v636
      %v642 = vunpack.c.h.b16 %v636
      %v643 = vpack.c.b16 %v641, %v639
      %v644 = vpack.c.b16 %v642, %v640
      %647 = vst [vmem:[#allocation2 + $0x40] sm:$0xff] %v643
      %648 = vst [vmem:[#allocation2 + $0x48] sm:$0xff] %v644
      %v649 = vld [vmem:[%s414 + $0x4] sm:$0xff]
      %v650 = vld [vmem:[%s414 + $0xc] sm:$0xf]
      %v651 = vld [vmem:[%s414 + $0x14] sm:$0xff]
      %v652 = vld [vmem:[%s414 + $0x1c] sm:$0xf]
      %653 = vrot.lane.b32.xlu0 %v556, 1
      %v654 = vpop.permute.xlu0 %653
      %v655 = vrot.slane %v654, 4
      %v656 = vsel %vm628, %v655, %v654
      %v659 = vmul.bf16 %v649, %v656
      %v660 = vmul.bf16 %v650, %v655
      %v661 = vmul.bf16 %v651, %v656
      %v662 = vmul.bf16 %v652, %v655
      %v667 = vunpack.c.l.b16 %v659
      %v668 = vunpack.c.h.b16 %v659
      %v669 = vunpack.c.l.b16 %v660
      %v670 = vunpack.c.l.b16 %v661
      %v671 = vunpack.c.h.b16 %v661
      %v672 = vunpack.c.l.b16 %v662
      %v673 = vpack.c.b16 %v670, %v667
      %v674 = vpack.c.b16 %v671, %v668
      %v675 = vpack.c.b16 %v672, %v669
      %676 = vrot.lane.b32.xlu0 %v673, 127
      %v677 = vpop.permute.xlu0 %676
      %678 = vrot.lane.b32.xlu0 %v674, 127
      %v679 = vpop.permute.xlu0 %678
      %680 = vrot.lane.b32.xlu0 %v675, 127
      %v681 = vpop.permute.xlu0 %680
      %v682 = vsel %vm601, %v677, %v679
      %v683 = vsel %vm601, %v679, %v681
      %686 = vst [vmem:[#allocation2 + $0x50] sm:$0xff] %v682
      %687 = vst [vmem:[#allocation2 + $0x58] sm:$0xff] %v683
      %v688 = vld [vmem:[%s414 + $0x4] sm:$0xff]
      %v689 = vld [vmem:[%s414 + $0xc] sm:$0xf]
      %v690 = vld [vmem:[%s414 + $0x14] sm:$0xff]
      %v691 = vld [vmem:[%s414 + $0x1c] sm:$0xf]
      %692 = vrot.lane.b32.xlu0 %v480, 15
      %v693 = vpop.permute.xlu0 %692
      %v694 = vrot.slane %v693, 4
      %v695 = vsel %vm587, %v694, %v693
      %v698 = vmul.bf16 %v688, %v695
      %v699 = vmul.bf16 %v689, %v694
      %v700 = vmul.bf16 %v690, %v695
      %v701 = vmul.bf16 %v691, %v694
      %v706 = vunpack.c.l.b16 %v698
      %v707 = vunpack.c.h.b16 %v698
      %v708 = vunpack.c.l.b16 %v699
      %v709 = vunpack.c.l.b16 %v700
      %v710 = vunpack.c.h.b16 %v700
      %v711 = vunpack.c.l.b16 %v701
      %v712 = vpack.c.b16 %v709, %v706
      %v713 = vpack.c.b16 %v710, %v707
      %v714 = vpack.c.b16 %v711, %v708
      %715 = vrot.lane.b32.xlu0 %v712, 113
      %v716 = vpop.permute.xlu0 %715
      %717 = vrot.lane.b32.xlu0 %v713, 113
      %v718 = vpop.permute.xlu0 %717
      %719 = vrot.lane.b32.xlu0 %v714, 113
      %v720 = vpop.permute.xlu0 %719
      %v721 = vsel %vm560, %v716, %v718
      %v722 = vsel %vm560, %v718, %v720
      %725 = vst [vmem:[#allocation2 + $0x60] sm:$0xff] %v721
      %726 = vst [vmem:[#allocation2 + $0x68] sm:$0xff] %v722
      %v727 = vld [vmem:[%s414 + $0x4] sm:$0xff]
      %v728 = vld [vmem:[%s414 + $0xc] sm:$0xf]
      %v729 = vld [vmem:[%s414 + $0x14] sm:$0xff]
      %v730 = vld [vmem:[%s414 + $0x1c] sm:$0xf]
      %v735 = vunpack.c.l.b16 %v727
      %v736 = vunpack.c.h.b16 %v727
      %v737 = vunpack.c.l.b16 %v728
      %v738 = vunpack.c.l.b16 %v729
      %v739 = vunpack.c.h.b16 %v729
      %v740 = vunpack.c.l.b16 %v730
      %v741 = vpack.c.b16 %v738, %v735
      %v742 = vpack.c.b16 %v739, %v736
      %v743 = vpack.c.b16 %v740, %v737
      %744 = vrot.lane.b32.xlu0 %v741, 112
      %v745 = vpop.permute.xlu0 %744
      %746 = vrot.lane.b32.xlu0 %v742, 112
      %v747 = vpop.permute.xlu0 %746
      %748 = vrot.lane.b32.xlu0 %v743, 112
      %v749 = vpop.permute.xlu0 %748
      %vm750 = vcmask 916480
      %v751 = vsel %vm750, %v745, %v747
      %v752 = vsel %vm750, %v747, %v749
      %755 = vst [vmem:[#allocation2 + $0x70] sm:$0xff] %v751
      %756 = vst [vmem:[#allocation2 + $0x78] sm:$0xff] %v752
      %v757 = vld [vmem:[%s414 + $0x4] sm:$0xff]
      %v758 = vld [vmem:[%s414 + $0xc] sm:$0xf]
      %v759 = vld [vmem:[%s414 + $0x14] sm:$0xff]
      %v760 = vld [vmem:[%s414 + $0x1c] sm:$0xf]
      %761 = vrot.lane.b32.xlu0 %v556, 17
      %v762 = vpop.permute.xlu0 %761
      %v763 = vrot.slane %v762, 4
      %v764 = vsel %vm511, %v763, %v762
      %v767 = vmul.bf16 %v757, %v764
      %v768 = vmul.bf16 %v758, %v763
      %v769 = vmul.bf16 %v759, %v764
      %v770 = vmul.bf16 %v760, %v763
      %v775 = vunpack.c.l.b16 %v767
      %v776 = vunpack.c.h.b16 %v767
      %v777 = vunpack.c.l.b16 %v768
      %v778 = vunpack.c.l.b16 %v769
      %v779 = vunpack.c.h.b16 %v769
      %v780 = vunpack.c.l.b16 %v770
      %v781 = vpack.c.b16 %v778, %v775
      %v782 = vpack.c.b16 %v779, %v776
      %v783 = vpack.c.b16 %v780, %v777
      %784 = vrot.lane.b32.xlu0 %v781, 111
      %v785 = vpop.permute.xlu0 %784
      %786 = vrot.lane.b32.xlu0 %v782, 111
      %v787 = vpop.permute.xlu0 %786
      %788 = vrot.lane.b32.xlu0 %v783, 111
      %v789 = vpop.permute.xlu0 %788
      %v790 = vsel %vm484, %v785, %v787
      %v791 = vsel %vm484, %v787, %v789
      %794 = vst [vmem:[#allocation2 + $0x80] sm:$0xff] %v790
      %795 = vst [vmem:[#allocation2 + $0x88] sm:$0xff] %v791
      %v796 = vld [vmem:[%s419] sm:$0xff]
      %v797 = vld [vmem:[%s419 + $0x8] sm:$0xf]
      %v798 = vld [vmem:[%s419 + $0x10] sm:$0xff]
      %v799 = vld [vmem:[%s419 + $0x18] sm:$0xf]
      %v800 = vmul.bf16 %v796, %v485
      %v801 = vmul.bf16 %v797, %v483
      %v802 = vmul.bf16 %v798, %v485
      %v803 = vmul.bf16 %v799, %v483
      %v808 = vunpack.c.l.b16 %v800
      %v809 = vunpack.c.h.b16 %v800
      %v810 = vunpack.c.l.b16 %v801
      %v811 = vunpack.c.l.b16 %v802
      %v812 = vunpack.c.h.b16 %v802
      %v813 = vunpack.c.l.b16 %v803
      %v814 = vpack.c.b16 %v811, %v808
      %v815 = vpack.c.b16 %v812, %v809
      %v816 = vpack.c.b16 %v813, %v810
      %817 = vrot.lane.b32.xlu0 %v814, 17
      %v818 = vpop.permute.xlu0 %817
      %819 = vrot.lane.b32.xlu0 %v815, 17
      %v820 = vpop.permute.xlu0 %819
      %821 = vrot.lane.b32.xlu0 %v816, 17
      %v822 = vpop.permute.xlu0 %821
      %v823 = vsel %vm511, %v818, %v820
      %v824 = vsel %vm511, %v820, %v822
      %827 = vst [vmem:[#allocation2 + $0x90] sm:$0xff] %v823
      %828 = vst [vmem:[#allocation2 + $0x98] sm:$0xff] %v824
      %v829 = vld [vmem:[%s419] sm:$0xff]
      %v830 = vld [vmem:[%s419 + $0x8] sm:$0xf]
      %v831 = vld [vmem:[%s419 + $0x10] sm:$0xff]
      %v832 = vld [vmem:[%s419 + $0x18] sm:$0xf]
      %v837 = vunpack.c.l.b16 %v829
      %v838 = vunpack.c.h.b16 %v829
      %v839 = vunpack.c.l.b16 %v830
      %v840 = vunpack.c.l.b16 %v831
      %v841 = vunpack.c.h.b16 %v831
      %v842 = vunpack.c.l.b16 %v832
      %v843 = vpack.c.b16 %v840, %v837
      %v844 = vpack.c.b16 %v841, %v838
      %v845 = vpack.c.b16 %v842, %v839
      %846 = vrot.lane.b32.xlu0 %v843, 16
      %v847 = vpop.permute.xlu0 %846
      %848 = vrot.lane.b32.xlu0 %v844, 16
      %v849 = vpop.permute.xlu0 %848
      %850 = vrot.lane.b32.xlu0 %v845, 16
      %v851 = vpop.permute.xlu0 %850
      %v852 = vsel %vm541, %v847, %v849
      %v853 = vsel %vm541, %v849, %v851
      %856 = vst [vmem:[#allocation2 + $0xa0] sm:$0xff] %v852
      %857 = vst [vmem:[#allocation2 + $0xa8] sm:$0xff] %v853
      %v858 = vld [vmem:[%s419] sm:$0xff]
      %v859 = vld [vmem:[%s419 + $0x8] sm:$0xf]
      %v860 = vld [vmem:[%s419 + $0x10] sm:$0xff]
      %v861 = vld [vmem:[%s419 + $0x18] sm:$0xf]
      %v862 = vmul.bf16 %v858, %v561
      %v863 = vmul.bf16 %v859, %v559
      %v864 = vmul.bf16 %v860, %v561
      %v865 = vmul.bf16 %v861, %v559
      %v870 = vunpack.c.l.b16 %v862
      %v871 = vunpack.c.h.b16 %v862
      %v872 = vunpack.c.l.b16 %v863
      %v873 = vunpack.c.l.b16 %v864
      %v874 = vunpack.c.h.b16 %v864
      %v875 = vunpack.c.l.b16 %v865
      %v876 = vpack.c.b16 %v873, %v870
      %v877 = vpack.c.b16 %v874, %v871
      %v878 = vpack.c.b16 %v875, %v872
      %879 = vrot.lane.b32.xlu0 %v876, 15
      %v880 = vpop.permute.xlu0 %879
      %881 = vrot.lane.b32.xlu0 %v877, 15
      %v882 = vpop.permute.xlu0 %881
      %883 = vrot.lane.b32.xlu0 %v878, 15
      %v884 = vpop.permute.xlu0 %883
      %v885 = vsel %vm587, %v880, %v882
      %v886 = vsel %vm587, %v882, %v884
      %889 = vst [vmem:[#allocation2 + $0xb0] sm:$0xff] %v885
      %890 = vst [vmem:[#allocation2 + $0xb8] sm:$0xff] %v886
      %v891 = vld [vmem:[%s419] sm:$0xff]
      %v892 = vld [vmem:[%s419 + $0x8] sm:$0xf]
      %v893 = vld [vmem:[%s419 + $0x10] sm:$0xff]
      %v894 = vld [vmem:[%s419 + $0x18] sm:$0xf]
      %v895 = vmul.bf16 %v891, %v602
      %v896 = vmul.bf16 %v892, %v600
      %v897 = vmul.bf16 %v893, %v602
      %v898 = vmul.bf16 %v894, %v600
      %v903 = vunpack.c.l.b16 %v895
      %v904 = vunpack.c.h.b16 %v895
      %v905 = vunpack.c.l.b16 %v896
      %v906 = vunpack.c.l.b16 %v897
      %v907 = vunpack.c.h.b16 %v897
      %v908 = vunpack.c.l.b16 %v898
      %v909 = vpack.c.b16 %v906, %v903
      %v910 = vpack.c.b16 %v907, %v904
      %v911 = vpack.c.b16 %v908, %v905
      %912 = vrot.lane.b32.xlu0 %v909, 1
      %v913 = vpop.permute.xlu0 %912
      %914 = vrot.lane.b32.xlu0 %v910, 1
      %v915 = vpop.permute.xlu0 %914
      %916 = vrot.lane.b32.xlu0 %v911, 1
      %v917 = vpop.permute.xlu0 %916
      %v918 = vsel %vm628, %v913, %v915
      %v919 = vsel %vm628, %v915, %v917
      %922 = vst [vmem:[#allocation2 + $0xc0] sm:$0xff] %v918
      %923 = vst [vmem:[#allocation2 + $0xc8] sm:$0xff] %v919
      %v924 = vld [vmem:[%s419 + $0x4] sm:$0xff]
      %v925 = vld [vmem:[%s419 + $0x14] sm:$0xff]
      %v928 = vunpack.c.l.b16 %v924
      %v929 = vunpack.c.h.b16 %v924
      %v930 = vunpack.c.l.b16 %v925
      %v931 = vunpack.c.h.b16 %v925
      %v932 = vpack.c.b16 %v930, %v928
      %v933 = vpack.c.b16 %v931, %v929
      %936 = vst [vmem:[#allocation2 + $0xd0] sm:$0xff] %v932
      %937 = vst [vmem:[#allocation2 + $0xd8] sm:$0xff] %v933
      %v938 = vld [vmem:[%s419 + $0x4] sm:$0xff]
      %v939 = vld [vmem:[%s419 + $0xc] sm:$0xf]
      %v940 = vld [vmem:[%s419 + $0x14] sm:$0xff]
      %v941 = vld [vmem:[%s419 + $0x1c] sm:$0xf]
      %v942 = vmul.bf16 %v938, %v656
      %v943 = vmul.bf16 %v939, %v655
      %v944 = vmul.bf16 %v940, %v656
      %v945 = vmul.bf16 %v941, %v655
      %v950 = vunpack.c.l.b16 %v942
      %v951 = vunpack.c.h.b16 %v942
      %v952 = vunpack.c.l.b16 %v943
      %v953 = vunpack.c.l.b16 %v944
      %v954 = vunpack.c.h.b16 %v944
      %v955 = vunpack.c.l.b16 %v945
      %v956 = vpack.c.b16 %v953, %v950
      %v957 = vpack.c.b16 %v954, %v951
      %v958 = vpack.c.b16 %v955, %v952
      %959 = vrot.lane.b32.xlu0 %v956, 127
      %v960 = vpop.permute.xlu0 %959
      %961 = vrot.lane.b32.xlu0 %v957, 127
      %v962 = vpop.permute.xlu0 %961
      %963 = vrot.lane.b32.xlu0 %v958, 127
      %v964 = vpop.permute.xlu0 %963
      %v965 = vsel %vm601, %v960, %v962
      %v966 = vsel %vm601, %v962, %v964
      %969 = vst [vmem:[#allocation2 + $0xe0] sm:$0xff] %v965
      %970 = vst [vmem:[#allocation2 + $0xe8] sm:$0xff] %v966
      %v971 = vld [vmem:[%s419 + $0x4] sm:$0xff]
      %v972 = vld [vmem:[%s419 + $0xc] sm:$0xf]
      %v973 = vld [vmem:[%s419 + $0x14] sm:$0xff]
      %v974 = vld [vmem:[%s419 + $0x1c] sm:$0xf]
      %v975 = vmul.bf16 %v971, %v695
      %v976 = vmul.bf16 %v972, %v694
      %v977 = vmul.bf16 %v973, %v695
      %v978 = vmul.bf16 %v974, %v694
      %v983 = vunpack.c.l.b16 %v975
      %v984 = vunpack.c.h.b16 %v975
      %v985 = vunpack.c.l.b16 %v976
      %v986 = vunpack.c.l.b16 %v977
      %v987 = vunpack.c.h.b16 %v977
      %v988 = vunpack.c.l.b16 %v978
      %v989 = vpack.c.b16 %v986, %v983
      %v990 = vpack.c.b16 %v987, %v984
      %v991 = vpack.c.b16 %v988, %v985
      %992 = vrot.lane.b32.xlu0 %v989, 113
      %v993 = vpop.permute.xlu0 %992
      %994 = vrot.lane.b32.xlu0 %v990, 113
      %v995 = vpop.permute.xlu0 %994
      %996 = vrot.lane.b32.xlu0 %v991, 113
      %v997 = vpop.permute.xlu0 %996
      %v998 = vsel %vm560, %v993, %v995
      %v999 = vsel %vm560, %v995, %v997
      %1002 = vst [vmem:[#allocation2 + $0xf0] sm:$0xff] %v998
      %1003 = vst [vmem:[#allocation2 + $0xf8] sm:$0xff] %v999
      %v1004 = vld [vmem:[%s419 + $0x4] sm:$0xff]
      %v1005 = vld [vmem:[%s419 + $0xc] sm:$0xf]
      %v1006 = vld [vmem:[%s419 + $0x14] sm:$0xff]
      %v1007 = vld [vmem:[%s419 + $0x1c] sm:$0xf]
      %v1012 = vunpack.c.l.b16 %v1004
      %v1013 = vunpack.c.h.b16 %v1004
      %v1014 = vunpack.c.l.b16 %v1005
      %v1015 = vunpack.c.l.b16 %v1006
      %v1016 = vunpack.c.h.b16 %v1006
      %v1017 = vunpack.c.l.b16 %v1007
      %v1018 = vpack.c.b16 %v1015, %v1012
      %v1019 = vpack.c.b16 %v1016, %v1013
      %v1020 = vpack.c.b16 %v1017, %v1014
      %1021 = vrot.lane.b32.xlu0 %v1018, 112
      %v1022 = vpop.permute.xlu0 %1021
      %1023 = vrot.lane.b32.xlu0 %v1019, 112
      %v1024 = vpop.permute.xlu0 %1023
      %1025 = vrot.lane.b32.xlu0 %v1020, 112
      %v1026 = vpop.permute.xlu0 %1025
      %v1027 = vsel %vm750, %v1022, %v1024
      %v1028 = vsel %vm750, %v1024, %v1026
      %1031 = vst [vmem:[#allocation2 + $0x100] sm:$0xff] %v1027
      %1032 = vst [vmem:[#allocation2 + $0x108] sm:$0xff] %v1028
      %v1033 = vld [vmem:[%s419 + $0x4] sm:$0xff]
      %v1034 = vld [vmem:[%s419 + $0xc] sm:$0xf]
      %v1035 = vld [vmem:[%s419 + $0x14] sm:$0xff]
      %v1036 = vld [vmem:[%s419 + $0x1c] sm:$0xf]
      %v1037 = vmul.bf16 %v1033, %v764
      %v1038 = vmul.bf16 %v1034, %v763
      %v1039 = vmul.bf16 %v1035, %v764
      %v1040 = vmul.bf16 %v1036, %v763
      %v1045 = vunpack.c.l.b16 %v1037
      %v1046 = vunpack.c.h.b16 %v1037
      %v1047 = vunpack.c.l.b16 %v1038
      %v1048 = vunpack.c.l.b16 %v1039
      %v1049 = vunpack.c.h.b16 %v1039
      %v1050 = vunpack.c.l.b16 %v1040
      %v1051 = vpack.c.b16 %v1048, %v1045
      %v1052 = vpack.c.b16 %v1049, %v1046
      %v1053 = vpack.c.b16 %v1050, %v1047
      %1054 = vrot.lane.b32.xlu0 %v1051, 111
      %v1055 = vpop.permute.xlu0 %1054
      %1056 = vrot.lane.b32.xlu0 %v1052, 111
      %v1057 = vpop.permute.xlu0 %1056
      %1058 = vrot.lane.b32.xlu0 %v1053, 111
      %v1059 = vpop.permute.xlu0 %1058
      %v1060 = vsel %vm484, %v1055, %v1057
      %v1061 = vsel %vm484, %v1057, %v1059
      %1064 = vst [vmem:[#allocation2 + $0x110] sm:$0xff] %v1060
      %1065 = vst [vmem:[#allocation2 + $0x118] sm:$0xff] %v1061
      %v1066 = vld [vmem:[%s2] sm:$0x3f]
      %v1067 = vld [vmem:[#allocation2] sm:$0xff]
      %v1068 = vld [vmem:[#allocation2 + $0x8] sm:$0xff]
      %v1069 = vld [vmem:[#allocation2 + $0x10] sm:$0xff]
      %v1070 = vld [vmem:[#allocation2 + $0x18] sm:$0xff]
      %v1071 = vld [vmem:[#allocation2 + $0x20] sm:$0xff]
      %v1072 = vld [vmem:[#allocation2 + $0x28] sm:$0xff]
      %v1073 = vld [vmem:[#allocation2 + $0x30] sm:$0xff]
      %v1074 = vld [vmem:[#allocation2 + $0x38] sm:$0xff]
      %v1075 = vld [vmem:[#allocation2 + $0x40] sm:$0xff]
      %v1076 = vld [vmem:[#allocation2 + $0x48] sm:$0xff]
      %v1077 = vld [vmem:[#allocation2 + $0x50] sm:$0xff]
      %v1078 = vld [vmem:[#allocation2 + $0x58] sm:$0xff]
      %v1079 = vld [vmem:[#allocation2 + $0x60] sm:$0xff]
      %v1080 = vld [vmem:[#allocation2 + $0x68] sm:$0xff]
      %v1081 = vld [vmem:[#allocation2 + $0x70] sm:$0xff]
      %v1082 = vld [vmem:[#allocation2 + $0x78] sm:$0xff]
      %v1083 = vld [vmem:[#allocation2 + $0x80] sm:$0xff]
      %v1084 = vld [vmem:[#allocation2 + $0x88] sm:$0xff]
      %v1085 = vld [vmem:[#allocation2 + $0x90] sm:$0xff]
      %v1086 = vld [vmem:[#allocation2 + $0x98] sm:$0xff]
      %v1087 = vld [vmem:[#allocation2 + $0xa0] sm:$0xff]
      %v1088 = vld [vmem:[#allocation2 + $0xa8] sm:$0xff]
      %v1089 = vld [vmem:[#allocation2 + $0xb0] sm:$0xff]
      %v1090 = vld [vmem:[#allocation2 + $0xb8] sm:$0xff]
      %v1091 = vld [vmem:[#allocation2 + $0xc0] sm:$0xff]
      %v1092 = vld [vmem:[#allocation2 + $0xc8] sm:$0xff]
      %v1093 = vld [vmem:[#allocation2 + $0xd0] sm:$0xff]
      %v1094 = vld [vmem:[#allocation2 + $0xd8] sm:$0xff]
      %v1095 = vld [vmem:[#allocation2 + $0xe0] sm:$0xff]
      %v1096 = vld [vmem:[#allocation2 + $0xe8] sm:$0xff]
      %v1097 = vld [vmem:[#allocation2 + $0xf0] sm:$0xff]
      %v1098 = vld [vmem:[#allocation2 + $0xf8] sm:$0xff]
      %v1099 = vld [vmem:[#allocation2 + $0x100] sm:$0xff]
      %v1100 = vld [vmem:[#allocation2 + $0x108] sm:$0xff]
      %v1101 = vld [vmem:[#allocation2 + $0x110] sm:$0xff]
      %v1102 = vld [vmem:[#allocation2 + $0x118] sm:$0xff]
      %v1103 = vld [vmem:[%s3] sm:$0xf]
      %1105 = vset.pattern.permute.xlu0 0
      %1106 = vperm.xlu0 %1105, %v1103
      %v1107 = vpop.permute.xlu0 %1106
      %v1110 = vcombine.high %v1066, %v1066
      %v1112 = vunpack.c.l.s4 1983009808
      %v1113 = vunpack.c.0.s8 %v1112
      %v1114 = vlaneseq
      %v1115 = vshrl.u32 %v1114, 7
      %v1116 = vsub.s32 %v1113, %v1115
      %v1117 = vrot.slane %v1066, %v1116
      %v1119 = vunpack.c.l.s4 1983009808
      %v1120 = vunpack.c.0.s8 %v1119
      %v1121 = vlaneseq
      %v1122 = vshrl.u32 %v1121, 7
      %v1123 = vsub.s32 %v1120, %v1122
      %v1124 = vrot.slane %v1110, %v1123
      %v1125 = vcombine.high %v1117, %v1117
      %vm1128 = vcmask 261120
      %v1130 = vsel %vm1128, %v1124, 0
      %1132 = vmatprep.subr.bf16.mxu0 %v1068
      %1133 = vmatpush1.bf16.msra.mxu0 %v1067
      %1134 = vmatprep.subr.bf16.mxu0 %v1070
      %1135 = vmatpush1.bf16.msra.mxu0 %v1069
      %1136 = vmatprep.subr.bf16.mxu0 %v1072
      %1137 = vmatpush1.bf16.msra.mxu0 %v1071
      %1138 = vmatprep.subr.bf16.mxu0 %v1074
      %1139 = vmatpush1.bf16.msra.mxu0 %v1073
      %1140 = vmatprep.subr.bf16.mxu0 %v1076
      %1141 = vmatpush1.bf16.msra.mxu0 %v1075
      %1142 = vmatprep.subr.bf16.mxu0 %v1078
      %1143 = vmatpush1.bf16.msra.mxu0 %v1077
      %1144 = vmatprep.subr.bf16.mxu0 %v1080
      %1145 = vmatpush1.bf16.msra.mxu0 %v1079
      %1146 = vmatprep.subr.bf16.mxu0 %v1082
      %1147 = vmatpush1.bf16.msra.mxu0 %v1081
      %1148 = vmatprep.subr.bf16.mxu0 %v1084
      %1149 = vmatpush1.bf16.msra.mxu0 %v1083
      %1150 = vmatprep.subr.bf16.mxu0 %v1086
      %1151 = vmatpush1.bf16.msra.mxu0 %v1085
      %1152 = vmatprep.subr.bf16.mxu0 %v1088
      %1153 = vmatpush1.bf16.msra.mxu0 %v1087
      %1154 = vmatprep.subr.bf16.mxu0 %v1090
      %1155 = vmatpush1.bf16.msra.mxu0 %v1089
      %1156 = vmatprep.subr.bf16.mxu0 %v1092
      %1157 = vmatpush1.bf16.msra.mxu0 %v1091
      %1158 = vmatprep.subr.bf16.mxu0 %v1094
      %1159 = vmatpush1.bf16.msra.mxu0 %v1093
      %1160 = vmatprep.subr.bf16.mxu0 %v1096
      %1161 = vmatpush1.bf16.msra.mxu0 %v1095
      %1162 = vmatprep.subr.bf16.mxu0 %v1098
      %1163 = vmatpush1.bf16.msra.mxu0 %v1097
      %1164 = vmatprep.mubr.bf16.mxu0 %v1125
      %1165 = vmatmul.mubr.bf16.gmra.mrb[0].mxu0 %v1117
      %v1166 = vpop.f32.mrb[0].mxu0
      %v1167 = vadd.f32 %v1107, %v1166
      %v1168 = vpop.f32.mrb[0].mxu0
      %v1169 = vadd.f32 %v1107, %v1168
      %v1170 = vpop.f32.mrb[0].mxu0
      %v1171 = vpop.f32.mrb[0].mxu0
      %1172 = vdwg.mxu0
      %1173 = vmatprep.subr.bf16.mxu0 %v1100
      %1174 = vmatpush1.bf16.msra.mxu0 %v1099
      %1175 = vmatprep.subr.bf16.mxu0 %v1102
      %1176 = vmatpush1.bf16.msra.mxu0 %v1101
      %1177 = vmatprep.subr.bf16.mxu0 0
      %1178 = vmatpush1.bf16.msra.mxu0 0
      %1179 = vmatprep.subr.bf16.mxu0 0
      %1180 = vmatpush1.bf16.msra.mxu0 0
      %1181 = vmatprep.subr.bf16.mxu0 0
      %1182 = vmatpush1.bf16.msra.mxu0 0
      %1183 = vmatprep.subr.bf16.mxu0 0
      %1184 = vmatpush1.bf16.msra.mxu0 0
      %1185 = vmatprep.subr.bf16.mxu0 0
      %1186 = vmatpush1.bf16.msra.mxu0 0
      %1187 = vmatprep.subr.bf16.mxu0 0
      %1188 = vmatpush1.bf16.msra.mxu0 0
      %1189 = vmatprep.subr.bf16.mxu0 0
      %1190 = vmatpush1.bf16.msra.mxu0 0
      %1191 = vmatprep.subr.bf16.mxu0 0
      %1192 = vmatpush1.bf16.msra.mxu0 0
      %1193 = vmatprep.subr.bf16.mxu0 0
      %1194 = vmatpush1.bf16.msra.mxu0 0
      %1195 = vmatprep.subr.bf16.mxu0 0
      %1196 = vmatpush1.bf16.msra.mxu0 0
      %1197 = vmatprep.subr.bf16.mxu0 0
      %1198 = vmatpush1.bf16.msra.mxu0 0
      %1199 = vmatprep.subr.bf16.mxu0 0
      %1200 = vmatpush1.bf16.msra.mxu0 0
      %1201 = vmatprep.subr.bf16.mxu0 0
      %1202 = vmatpush1.bf16.msra.mxu0 0
      %1203 = vmatprep.subr.bf16.mxu0 0
      %1204 = vmatpush1.bf16.msra.mxu0 0
      %1205 = vmatprep.mubr.bf16.mxu0 0
      %1206 = vmatmul.mubr.bf16.gmra.mrb[0].mxu0 %v1130
      %v1207 = vpop.f32.mrb[0].mxu0
      %v1208 = vadd.f32 %v1167, %v1207
      %v1209 = vpop.f32.mrb[0].mxu0
      %v1210 = vadd.f32 %v1169, %v1209
      %v1211 = vpop.f32.mrb[0].mxu0
      %v1212 = vpop.f32.mrb[0].mxu0
      %1213 = vdwg.mxu0
      %vm1214 = vcmask 1043456
      %v1215 = vsel %vm1214, %v1208, 0.0
      %v1216 = vsel %vm1214, %v1210, 0.0
      %v1217 = vadd.f32 %v1215, %v1216
      %1218 = vadd.xlane.f32.xlu0 %v1217
      %v1219 = vpop.xlane.xlu0 %1218
      %v1220 = vrcp.pop 256.0
      %v1221 = vmul.f32 %v1219, %v1220
      %v1222 = vsub.f32 %v1208, %v1221
      %v1223 = vsub.f32 %v1210, %v1221
      %v1224 = vmul.f32 %v1222, %v1222
      %v1225 = vmul.f32 %v1223, %v1223
      %v1226 = vsel %vm1214, %v1224, 0.0
      %v1227 = vsel %vm1214, %v1225, 0.0
      %v1228 = vadd.f32 %v1226, %v1227
      %1229 = vadd.xlane.f32.xlu0 %v1228
      %v1230 = vpop.xlane.xlu0 %1229
      %v1231 = vmul.f32 %v1230, %v1220
      %v1232 = vadd.f32 %v1231, 1e-05
      %v1233 = vrsqrt.pop %v1232
      %v1234 = vmul.f32 %v1222, %v1233
      %v1235 = vmul.f32 %v1223, %v1233
      %v1236 = vmax.f32 %v1234, 0.0
      %v1237 = vmax.f32 %v1235, 0.0
      %v1238 = vld [vmem:[%s4] sm:$0x1]
      %v1239 = vpack.c.bf16 %v1236, %v1236
      %v1240 = vpack.c.bf16 %v1237, %v1237
      %v1241 = vld [vmem:[%s5] sm:$0x3]
      %1243 = vset.pattern.permute.xlu0 0
      %1244 = vperm.xlu0 %1243, %v1241
      %v1245 = vpop.permute.xlu0 %1244
      %vm1247 = vcmask 31744
      %v1249 = vsel %vm1247, %v1238, 0
      %vm1251 = vcmask 1041408
      %v1253 = vsel %vm1251, %v1239, 0
      %v1256 = vsel %vm1251, %v1240, 0
      %1258 = vmatprep.subr.bf16.mxu0 %v1256
      %1259 = vmatpush1.bf16.msra.mxu0 %v1253
      %1260 = vmatprep.subr.bf16.mxu0 0
      %1261 = vmatpush1.bf16.msra.mxu0 0
      %1262 = vmatprep.subr.bf16.mxu0 0
      %1263 = vmatpush1.bf16.msra.mxu0 0
      %1264 = vmatprep.subr.bf16.mxu0 0
      %1265 = vmatpush1.bf16.msra.mxu0 0
      %1266 = vmatprep.subr.bf16.mxu0 0
      %1267 = vmatpush1.bf16.msra.mxu0 0
      %1268 = vmatprep.subr.bf16.mxu0 0
      %1269 = vmatpush1.bf16.msra.mxu0 0
      %1270 = vmatprep.subr.bf16.mxu0 0
      %1271 = vmatpush1.bf16.msra.mxu0 0
      %1272 = vmatprep.subr.bf16.mxu0 0
      %1273 = vmatpush1.bf16.msra.mxu0 0
      %1274 = vmatprep.subr.bf16.mxu0 0
      %1275 = vmatpush1.bf16.msra.mxu0 0
      %1276 = vmatprep.subr.bf16.mxu0 0
      %1277 = vmatpush1.bf16.msra.mxu0 0
      %1278 = vmatprep.subr.bf16.mxu0 0
      %1279 = vmatpush1.bf16.msra.mxu0 0
      %1280 = vmatprep.subr.bf16.mxu0 0
      %1281 = vmatpush1.bf16.msra.mxu0 0
      %1282 = vmatprep.subr.bf16.mxu0 0
      %1283 = vmatpush1.bf16.msra.mxu0 0
      %1284 = vmatprep.subr.bf16.mxu0 0
      %1285 = vmatpush1.bf16.msra.mxu0 0
      %1286 = vmatprep.subr.bf16.mxu0 0
      %1287 = vmatpush1.bf16.msra.mxu0 0
      %1288 = vmatprep.subr.bf16.mxu0 0
      %1289 = vmatpush1.bf16.msra.mxu0 0
      %1290 = vmatprep.mubr.bf16.mxu0 0
      %1291 = vmatmul.mubr.bf16.gmra.mrb[0].mxu0 %v1249
      %v1292 = vpop.f32.mrb[0].mxu0
      %v1293 = vadd.f32 %v1245, %v1292
      %v1294 = vpop.f32.mrb[0].mxu0
      %v1295 = vadd.f32 %v1245, %v1294
      %v1296 = vpop.f32.mrb[0].mxu0
      %v1297 = vpop.f32.mrb[0].mxu0
      %1298 = vdwg.mxu0
      %v1299 = vld [vmem:[%s6] sm:$0x1]
      %v1300 = vpack.c.bf16 %v1293, %v1293
      %v1301 = vpack.c.bf16 %v1295, %v1295
      %v1302 = vld [vmem:[#allocation3] sm:$0x1]
      %1304 = vset.pattern.permute.xlu0 0
      %1305 = vperm.xlu0 %1304, %v1302
      %v1306 = vpop.permute.xlu0 %1305
      %v1308 = vlaneseq
      %v1309 = vshrl.u32 %v1308, 7
      %v1310 = vsub.s32 0, %v1309
      %v1311 = vrot.slane %v1306, %v1310
      %vm1312 = vcmask 15360
      %v1314 = vsel %vm1312, %v1299, 0
      %vm1316 = vcmask 1040384
      %v1318 = vsel %vm1316, %v1300, 0
      %v1321 = vsel %vm1316, %v1301, 0
      %1323 = vmatprep.subr.bf16.mxu0 %v1321
      %1324 = vmatpush1.bf16.msra.mxu0 %v1318
      %1325 = vmatprep.subr.bf16.mxu0 0
      %1326 = vmatpush1.bf16.msra.mxu0 0
      %1327 = vmatprep.subr.bf16.mxu0 0
      %1328 = vmatpush1.bf16.msra.mxu0 0
      %1329 = vmatprep.subr.bf16.mxu0 0
      %1330 = vmatpush1.bf16.msra.mxu0 0
      %1331 = vmatprep.subr.bf16.mxu0 0
      %1332 = vmatpush1.bf16.msra.mxu0 0
      %1333 = vmatprep.subr.bf16.mxu0 0
      %1334 = vmatpush1.bf16.msra.mxu0 0
      %1335 = vmatprep.subr.bf16.mxu0 0
      %1336 = vmatpush1.bf16.msra.mxu0 0
      %1337 = vmatprep.subr.bf16.mxu0 0
      %1338 = vmatpush1.bf16.msra.mxu0 0
      %1339 = vmatprep.subr.bf16.mxu0 0
      %1340 = vmatpush1.bf16.msra.mxu0 0
      %1341 = vmatprep.subr.bf16.mxu0 0
      %1342 = vmatpush1.bf16.msra.mxu0 0
      %1343 = vmatprep.subr.bf16.mxu0 0
      %1344 = vmatpush1.bf16.msra.mxu0 0
      %1345 = vmatprep.subr.bf16.mxu0 0
      %1346 = vmatpush1.bf16.msra.mxu0 0
      %1347 = vmatprep.subr.bf16.mxu0 0
      %1348 = vmatpush1.bf16.msra.mxu0 0
      %1349 = vmatprep.subr.bf16.mxu0 0
      %1350 = vmatpush1.bf16.msra.mxu0 0
      %1351 = vmatprep.subr.bf16.mxu0 0
      %1352 = vmatpush1.bf16.msra.mxu0 0
      %1353 = vmatprep.subr.bf16.mxu0 0
      %1354 = vmatpush1.bf16.msra.mxu0 0
      %1355 = vmatprep.mubr.bf16.mxu0 0
      %1356 = vmatmul.mubr.bf16.gmra.mrb[0].mxu0 %v1314
      %v1357 = vpop.f32.mrb[0].mxu0
      %v1358 = vadd.f32 %v1311, %v1357
      %v1359 = vpop.f32.mrb[0].mxu0
      %v1360 = vadd.f32 %v1311, %v1359
      %v1361 = vpop.f32.mrb[0].mxu0
      %v1362 = vpop.f32.mrb[0].mxu0
      %1363 = vdwg.mxu0
      %v1364 = vld [vmem:[#allocation4] sm:$0x1]
      %v1365 = vpack.c.bf16 %v1358, %v1358
      %v1366 = vpack.c.bf16 %v1360, %v1360
      %v1367 = vld [vmem:[#allocation5] sm:$0x1]
      %1369 = vset.pattern.permute.xlu0 0
      %1370 = vperm.xlu0 %1369, %v1367
      %v1371 = vpop.permute.xlu0 %1370
      %v1373 = vlaneseq
      %v1374 = vshrl.u32 %v1373, 7
      %v1375 = vsub.s32 0, %v1374
      %v1376 = vrot.slane %v1371, %v1375
      %vm1377 = vcmask 7168
      %v1379 = vsel %vm1377, %v1364, 0
      %v1381 = vsel 0, 4294967295, 65535
      %v1382 = vsel %vm1316, %v1381, 0
      %v1384 = vand.u32 %v1365, %v1382
      %v1387 = vand.u32 %v1366, %v1382
      %1389 = vmatprep.subr.bf16.mxu0 %v1387
      %1390 = vmatpush1.bf16.msra.mxu0 %v1384
      %1391 = vmatprep.subr.bf16.mxu0 0
      %1392 = vmatpush1.bf16.msra.mxu0 0
      %1393 = vmatprep.subr.bf16.mxu0 0
      %1394 = vmatpush1.bf16.msra.mxu0 0
      %1395 = vmatprep.subr.bf16.mxu0 0
      %1396 = vmatpush1.bf16.msra.mxu0 0
      %1397 = vmatprep.subr.bf16.mxu0 0
      %1398 = vmatpush1.bf16.msra.mxu0 0
      %1399 = vmatprep.subr.bf16.mxu0 0
      %1400 = vmatpush1.bf16.msra.mxu0 0
      %1401 = vmatprep.subr.bf16.mxu0 0
      %1402 = vmatpush1.bf16.msra.mxu0 0
      %1403 = vmatprep.subr.bf16.mxu0 0
      %1404 = vmatpush1.bf16.msra.mxu0 0
      %1405 = vmatprep.subr.bf16.mxu0 0
      %1406 = vmatpush1.bf16.msra.mxu0 0
      %1407 = vmatprep.subr.bf16.mxu0 0
      %1408 = vmatpush1.bf16.msra.mxu0 0
      %1409 = vmatprep.subr.bf16.mxu0 0
      %1410 = vmatpush1.bf16.msra.mxu0 0
      %1411 = vmatprep.subr.bf16.mxu0 0
      %1412 = vmatpush1.bf16.msra.mxu0 0
      %1413 = vmatprep.subr.bf16.mxu0 0
      %1414 = vmatpush1.bf16.msra.mxu0 0
      %1415 = vmatprep.subr.bf16.mxu0 0
      %1416 = vmatpush1.bf16.msra.mxu0 0
      %1417 = vmatprep.subr.bf16.mxu0 0
      %1418 = vmatpush1.bf16.msra.mxu0 0
      %1419 = vmatprep.subr.bf16.mxu0 0
      %1420 = vmatpush1.bf16.msra.mxu0 0
      %1421 = vmatprep.mubr.bf16.mxu0 0
      %1422 = vmatmul.mubr.bf16.gmra.mrb[0].mxu0 %v1379
      %v1423 = vpop.f32.mrb[0].mxu0
      %v1424 = vadd.f32 %v1376, %v1423
      %v1425 = vpop.f32.mrb[0].mxu0
      %v1426 = vadd.f32 %v1376, %v1425
      %v1427 = vpop.f32.mrb[0].mxu0
      %v1428 = vpop.f32.mrb[0].mxu0
      %1429 = vdwg.mxu0
      %v1430 = vld [vmem:[%s423] sm:$0x3]
      %v1432 = vlaneseq
      %v1433 = vshrl.u32 %v1432, 7
      %v1434 = vsub.s32 0, %v1433
      %v1435 = vrot.slane %v1430, %v1434
      %v1436 = vlaneseq
      %v1437 = vshrl.u32 %v1436, 7
      %v1438 = vsub.s32 1, %v1437
      %v1439 = vrot.slane %v1430, %v1438
      %v1442 = vadd.f32 %v1424, %v1435
      %v1443 = vadd.f32 %v1426, %v1439
      %v1446 = vcombine.low %v1442, %v1443
      %v1448 = vunpack.c.l.s4 1966171168
      %v1449 = vunpack.c.0.s8 %v1448
      %v1450 = vlaneseq
      %v1451 = vshrl.u32 %v1450, 7
      %v1452 = vsub.s32 %v1449, %v1451
      %v1453 = vrot.slane %v1446, %v1452
      %v1455 = vunpack.c.l.s4 1966171168
      %v1456 = vunpack.c.0.s8 %v1455
      %v1457 = vlaneseq
      %v1458 = vshrl.u32 %v1457, 7
      %v1459 = vsub.s32 %v1456, %v1458
      %v1460 = vrot.slane %v1453, %v1459
      %v1462 = vlaneseq
      %vm1463 = vcmp.ge.s32.totalorder %v1462, 0
      %vm1464 = vcmp.lt.s32.totalorder %v1462, 256
      %vm1465 = vmand %vm1463, %vm1464
      %1466 = vst.msk [vmem:[%s427] sm:$0x3] %vm1465, %v1460
      %p1467 = scmp.lt.s32.totalorder %s28, 1
      %s1468 = scalar_select %p1467, %s28, 1
      %s1469 = smul.addr %s1468, 2
      %s1470 = scalar_lea.vmem %s11, %s1469
      // Predicated region
      $region65: #{_lambda_.29} parent=63 // pred_check
        %p1471 = pneg %p292
      $region66: #{_lambda_.29} parent=63 // pred_check_branch
        %1473 = sbr.rel (%p1471) target = $region68
      $region67: #{_lambda_.29} parent=63 // pred_region
        _
      $region68: #{_lambda_.29} parent=63 // pred_fallthru
        _
    $region64: #{_lambda_.29} parent=5 // pred_fallthru
      _
    %p1474 = scmp.le.s32.totalorder 2, %s23
    // Predicated region
    $region69: #{_lambda_.29} parent=5 // pred_check
      %p1475 = pneg %p1474
    $region70: #{_lambda_.29} parent=5 // pred_check_branch
      %1477 = sbr.rel (%p1475) target = $region72
    $region71: #{_lambda_.29} parent=5 // pred_region
      %s1478 = ssub.s32 %s23, 2
      // Predicated region
      $region73: #{_lambda_.29} parent=71 // pred_check
        %p1479 = pneg %p298
      $region74: #{_lambda_.29} parent=71 // pred_check_branch
        %1481 = sbr.rel (%p1479) target = $region76
      $region75: #{_lambda_.29} parent=71 // pred_region
        %p1482 = scmp.lt.s32.totalorder %s29, 1
        %s1483 = scalar_select %p1482, %s29, 1
        %s1484 = smul.addr %s1483, 2
        %s1485 = scalar_lea.vmem %s11, %s1484
      $region76: #{_lambda_.29} parent=71 // pred_fallthru
        _
    $region72: #{_lambda_.29} parent=5 // pred_fallthru
      _
  $region6: #{_lambda_.29} parent=0 // loop_footer
    %s27 = sadd.s32 1, %s23
  $region7: #{_lambda_.29} parent=0 // loop_footer_branch
    %22 = sbr.rel target = $region3
  $region8: #{_lambda_.29} parent=0 // loop_exit
    _

</llo_original>
